<compile_context>
chip_gen: v6e
topology: v6e:2x2x1
jax: 0.10.0
libtpu: 0.0.40
codegen_flags: <defaults>
</compile_context>

<pallas_src>
import functools

import jax
import jax.numpy as jnp
from jax import lax
from jax.experimental import pallas as pl
from jax.experimental.pallas import tpu as pltpu

_LANE = 128
_SUB = 8

_WEIGHT_KEYS = ["wih0", "bih0", "whh0", "bhh0",
                "wih1", "bih1", "whh1", "bhh1",
                "wfc", "bfc"]


def _round_up(x, m):
    return (x + m - 1) // m * m


def _pad_to(a, shape):
    return jnp.pad(a, [(0, s - d) for d, s in zip(a.shape, shape)])


def encoder_kernel(x_ref,
                   wih0_ref, bih0_ref, whh0_ref, bhh0_ref,
                   wih1_ref, bih1_ref, whh1_ref, bhh1_ref,
                   wfc_ref, bfc_ref,
                   out_ref, hid_ref,
                   gx_scr,
                   *, seq_len):
    """One batch-block of BB sequences, full T recurrence inside the kernel.

    x_ref:   (Tp, BB, EP)   time-major embedded inputs (lane/sublane padded)
    out_ref: (Tp, BB, HP)   layer-1 outputs per step
    hid_ref: (BB, HP)       tanh(fc_hidden(cat(h0_final, h1_final)))
    gx_scr:  (TC*BB, 3*HP)  VMEM scratch holding the bulk layer-0 input
                            projection for the current time chunk.
    All gate tensors are (BB, 3*HP) with each gate lane-aligned to 128.
    """
    Tp, BB, EP = x_ref.shape
    HP = hid_ref.shape[-1]
    TC = gx_scr.shape[0] // BB
    NC = Tp // TC

    def gru_gates(gx, gh, h_prev):
        r = jax.nn.sigmoid(gx[:, 0:HP] + gh[:, 0:HP])
        z = jax.nn.sigmoid(gx[:, HP:2 * HP] + gh[:, HP:2 * HP])
        n = jnp.tanh(gx[:, 2 * HP:3 * HP] + r * gh[:, 2 * HP:3 * HP])
        return (1.0 - z) * n + z * h_prev

    def chunk_body(c, carry):
        h0, h1 = carry
        t0 = c * TC
        if not isinstance(t0, int):
            t0 = pl.multiple_of(t0, TC)

        # Non-recurrent layer-0 input projection for the whole chunk: one
        # (TC*BB, EP) x (EP, 3HP) MXU matmul (fills the M dimension) instead
        # of TC tiny per-step matmuls.  The leading-dim merge is a tile no-op
        # because BB is a multiple of 8 and EP a multiple of 128.
        xc = x_ref[pl.ds(t0, TC)]                                  # (TC, BB, EP)
        gx_scr[...] = (jnp.dot(xc.reshape(TC * BB, EP), wih0_ref[...],
                               preferred_element_type=jnp.float32)
                       + bih0_ref[...])                            # (TC*BB, 3HP)

        def step(t, hs):
            h0, h1 = hs
            row = pl.multiple_of(t * BB, BB)
            gx0 = gx_scr[pl.ds(row, BB)]                           # (BB, 3HP)
            # Layer 0: gh0 is on the serial chain.
            gh0 = jnp.dot(h0, whh0_ref[...],
                          preferred_element_type=jnp.float32) + bhh0_ref[...]
            h0n = gru_gates(gx0, gh0, h0)
            # Layer 1: gh1 depends only on h1(t-1) -> overlaps with layer 0.
            gx1 = jnp.dot(h0n, wih1_ref[...],
                          preferred_element_type=jnp.float32) + bih1_ref[...]
            gh1 = jnp.dot(h1, whh1_ref[...],
                          preferred_element_type=jnp.float32) + bhh1_ref[...]
            h1n = gru_gates(gx1, gh1, h1)
            out_ref[t0 + t] = h1n.astype(out_ref.dtype)            # lane-dense store
            if seq_len != Tp:   # static: gate only emitted when T is padded
                valid = (t0 + t) < seq_len
                h0n = jnp.where(valid, h0n, h0)
                h1n = jnp.where(valid, h1n, h1)
            return (h0n, h1n)

        return lax.fori_loop(0, TC, step, (h0, h1),
                             unroll=True if TC <= 16 else 8)

    h0 = jnp.zeros((BB, HP), jnp.float32)
    h1 = jnp.zeros((BB, HP), jnp.float32)
    if NC == 1:
        h0, h1 = chunk_body(0, (h0, h1))
    else:
        h0, h1 = lax.fori_loop(0, NC, chunk_body, (h0, h1))

    # torch.cat((hidden[-2], hidden[-1])) -> cat(final h of layer0, layer1)
    hcat = jnp.concatenate([h0, h1], axis=-1)                      # (BB, 2*HP)
    hid_ref[...] = jnp.tanh(
        jnp.dot(hcat, wfc_ref[...], preferred_element_type=jnp.float32)
        + bfc_ref[...]).astype(hid_ref.dtype)


def _pad_params(params, H, E, HP, EP):
    """Zero-pad weights so each gate block is HP lanes wide (gate order kept)."""
    f32 = jnp.float32

    def pad_gru_w(w, in_p):                      # (in, 3H) -> (in_p, 3*HP)
        inn = w.shape[0]
        w3 = w.astype(f32).reshape(inn, 3, H)
        w3 = jnp.pad(w3, ((0, in_p - inn), (0, 0), (0, HP - H)))
        return w3.reshape(in_p, 3 * HP)

    def pad_gru_b(b):                            # (1, 3H) -> (1, 3*HP)
        b3 = b.astype(f32).reshape(1, 3, H)
        b3 = jnp.pad(b3, ((0, 0), (0, 0), (0, HP - H)))
        return b3.reshape(1, 3 * HP)

    wfc = params["wfc"].astype(f32).reshape(2, H, H)               # rows: [h0; h1]
    wfc = jnp.pad(wfc, ((0, 0), (0, HP - H), (0, HP - H))).reshape(2 * HP, HP)
    bfc = jnp.pad(params["bfc"].astype(f32), ((0, 0), (0, HP - H)))

    return {
        "wih0": pad_gru_w(params["wih0"], EP), "bih0": pad_gru_b(params["bih0"]),
        "whh0": pad_gru_w(params["whh0"], HP), "bhh0": pad_gru_b(params["bhh0"]),
        "wih1": pad_gru_w(params["wih1"], HP), "bih1": pad_gru_b(params["bih1"]),
        "whh1": pad_gru_w(params["whh1"], HP), "bhh1": pad_gru_b(params["bhh1"]),
        "wfc": wfc, "bfc": bfc,
    }


def encoder_forward(tokens, params, *, batch_block=128, gx_budget_bytes=4 << 20):
    """Returns (outputs [B,T,H], hiddens [B,H])."""
    H = params["whh0"].shape[0]
    E = params["embed"].shape[1]
    B, T = tokens.shape
    HP = _round_up(H, _LANE)
    EP = _round_up(E, _LANE)
    BB = min(_round_up(B, _SUB), _round_up(batch_block, _SUB))
    Bp = _round_up(B, BB)
    # Time chunk for the bulk input projection: bounded VMEM scratch.
    TC = max(1, min(T, gx_budget_bytes // (BB * 3 * HP * 4)))
    Tp = _round_up(T, TC)

    # Embedding lookup + (eval-mode) dropout is glue in plain JAX.
    # TODO(synk): dropout treated as eval-mode identity (no PRNG mask in kernel).
    # TODO(synk): for large E/B the gather could be fused in-kernel via scalar
    #             prefetch + DMA gather to cut HBM traffic (v5e).
    # TODO(synk): bf16 weights with f32 accumulation would halve VMEM/HBM on
    #             v6e/v7x; kept f32 here to match reference tolerances exactly.
    x = params["embed"][tokens].astype(jnp.float32)                # (B, T, E)
    x = jnp.transpose(x, (1, 0, 2))                                # (T, B, E)
    x = _pad_to(x, (Tp, Bp, EP))                                   # (Tp, Bp, EP)

    pp = _pad_params(params, H, E, HP, EP)

    x_spec = pl.BlockSpec((Tp, BB, EP), lambda b: (0, b, 0))
    out_spec = pl.BlockSpec((Tp, BB, HP), lambda b: (0, b, 0))
    hid_spec = pl.BlockSpec((BB, HP), lambda b: (b, 0))
    w_specs = [pl.BlockSpec(pp[k].shape, lambda b: (0, 0)) for k in _WEIGHT_KEYS]

    kernel = functools.partial(encoder_kernel, seq_len=T)

    outs_tm, hids_p = pl.pallas_call(
        kernel,
        out_shape=(jax.ShapeDtypeStruct((Tp, Bp, HP), jnp.float32),
                   jax.ShapeDtypeStruct((Bp, HP), jnp.float32)),
        grid_spec=pltpu.PrefetchScalarGridSpec(
            num_scalar_prefetch=0,
            grid=(Bp // BB,),
            in_specs=[x_spec] + w_specs,
            out_specs=(out_spec, hid_spec),
            scratch_shapes=[pltpu.VMEM((TC * BB, 3 * HP), jnp.float32)],
        ),
        compiler_params=pltpu.CompilerParams(
            dimension_semantics=("parallel",)),   # batch blocks are independent
    )(x, *[pp[k] for k in _WEIGHT_KEYS])

    outputs = jnp.transpose(outs_tm, (1, 0, 2))[:B, :T, :H]        # (B, T, H)
    hiddens = hids_p[:B, :H]                                       # (B, H)
    return outputs, hiddens


def make_params(key, vocab, E, H):
    ks = jax.random.split(key, 11)
    s = 1.0 / (H ** 0.5)

    def u(k, shape):
        return jax.random.uniform(k, shape, jnp.float32, -s, s)

    return {
        "embed": jax.random.normal(ks[0], (vocab, E), jnp.float32),
        # layer 0: input E -> 3H, hidden H -> 3H  (pre-transposed, gate order r|z|n)
        "wih0": u(ks[1], (E, 3 * H)), "bih0": u(ks[2], (1, 3 * H)),
        "whh0": u(ks[3], (H, 3 * H)), "bhh0": u(ks[4], (1, 3 * H)),
        # layer 1: input H -> 3H, hidden H -> 3H
        "wih1": u(ks[5], (H, 3 * H)), "bih1": u(ks[6], (1, 3 * H)),
        "whh1": u(ks[7], (H, 3 * H)), "bhh1": u(ks[8], (1, 3 * H)),
        # fc_hidden: Linear(2H -> H), stored transposed
        "wfc": u(ks[9], (2 * H, H)), "bfc": u(ks[10], (1, H)),
    }


def reference_forward(tokens, params):
    """Pure-JAX reference mirroring the PyTorch forward (eval mode)."""
    H = params["whh0"].shape[0]
    x = params["embed"][tokens].astype(jnp.float32)

    def gru_layer(xs, wih, bih, whh, bhh):
        def step(h, xt):
            gx = xt @ wih + bih[0]
            gh = h @ whh + bhh[0]
            r = jax.nn.sigmoid(gx[:H] + gh[:H])
            z = jax.nn.sigmoid(gx[H:2 * H] + gh[H:2 * H])
            n = jnp.tanh(gx[2 * H:] + r * gh[2 * H:])
            hn = (1.0 - z) * n + z * h
            return hn, hn
        h_last, ys = lax.scan(step, jnp.zeros((H,), jnp.float32), xs)
        return ys, h_last

    def one(xs):
        y0, h0 = gru_layer(xs, params["wih0"], params["bih0"],
                           params["whh0"], params["bhh0"])
        y1, h1 = gru_layer(y0, params["wih1"], params["bih1"],
                           params["whh1"], params["bhh1"])
        hid = jnp.tanh(jnp.concatenate([h0, h1]) @ params["wfc"]
                       + params["bfc"][0])
        return y1, hid

    return jax.vmap(one)(x)


if __name__ == "__main__":
    B, T, V, E, H = 2, 8, 16, 32, 32   # batch, seq len, vocab, embed dim, hidden dim
    key = jax.random.PRNGKey(0)
    pkey, tkey = jax.random.split(key)

    params = make_params(pkey, V, E, H)
    tokens = jax.random.randint(tkey, (B, T), 0, V, dtype=jnp.int32)

    outs, hids = jax.jit(encoder_forward)(tokens, params)
    (outs, hids) = jax.block_until_ready((outs, hids))

    ref_outs, ref_hids = reference_forward(tokens, params)
    assert outs.shape == (B, T, H) and hids.shape == (B, H)
    assert jnp.allclose(outs, ref_outs, atol=2e-3, rtol=2e-3)
    assert jnp.allclose(hids, ref_hids, atol=2e-3, rtol=2e-3)

    print("KERNEL_OK")
</pallas_src>

<mosaic_0001>
module attributes {stable_mosaic.version = 11 : i64} {
  func.func @encoder_kernel(%arg0: i32, %arg1: memref<8x8x128xf32, #tpu.memory_space<vmem>>, %arg2: memref<128x384xf32, #tpu.memory_space<vmem>>, %arg3: memref<1x384xf32, #tpu.memory_space<vmem>>, %arg4: memref<128x384xf32, #tpu.memory_space<vmem>>, %arg5: memref<1x384xf32, #tpu.memory_space<vmem>>, %arg6: memref<128x384xf32, #tpu.memory_space<vmem>>, %arg7: memref<1x384xf32, #tpu.memory_space<vmem>>, %arg8: memref<128x384xf32, #tpu.memory_space<vmem>>, %arg9: memref<1x384xf32, #tpu.memory_space<vmem>>, %arg10: memref<256x128xf32, #tpu.memory_space<vmem>>, %arg11: memref<1x128xf32, #tpu.memory_space<vmem>>, %arg12: memref<8x8x128xf32, #tpu.memory_space<vmem>>, %arg13: memref<8x128xf32, #tpu.memory_space<vmem>>, %arg14: memref<64x384xf32, #tpu.memory_space<vmem>>) attributes {dimension_semantics = [#tpu.dimension_semantics<parallel>], iteration_bounds = array<i64: 1>, scalar_prefetch = 0 : i64, scratch_operands = 1 : i64, tpu.core_type = #tpu.core_type<tc>, window_params = [{transform_indices = @transform_0, window_bounds = array<i64: 8, 8, 128>}, {pipeline_mode = #tpu.pipeline_mode<synchronous>, transform_indices = @transform_1, window_bounds = array<i64: 128, 384>}, {pipeline_mode = #tpu.pipeline_mode<synchronous>, transform_indices = @transform_2, window_bounds = array<i64: 1, 384>}, {pipeline_mode = #tpu.pipeline_mode<synchronous>, transform_indices = @transform_3, window_bounds = array<i64: 128, 384>}, {pipeline_mode = #tpu.pipeline_mode<synchronous>, transform_indices = @transform_4, window_bounds = array<i64: 1, 384>}, {pipeline_mode = #tpu.pipeline_mode<synchronous>, transform_indices = @transform_5, window_bounds = array<i64: 128, 384>}, {pipeline_mode = #tpu.pipeline_mode<synchronous>, transform_indices = @transform_6, window_bounds = array<i64: 1, 384>}, {pipeline_mode = #tpu.pipeline_mode<synchronous>, transform_indices = @transform_7, window_bounds = array<i64: 128, 384>}, {pipeline_mode = #tpu.pipeline_mode<synchronous>, transform_indices = @transform_8, window_bounds = array<i64: 1, 384>}, {pipeline_mode = #tpu.pipeline_mode<synchronous>, transform_indices = @transform_9, window_bounds = array<i64: 256, 128>}, {pipeline_mode = #tpu.pipeline_mode<synchronous>, transform_indices = @transform_10, window_bounds = array<i64: 1, 128>}, {transform_indices = @transform_11, window_bounds = array<i64: 8, 8, 128>}, {transform_indices = @transform_12, window_bounds = array<i64: 8, 128>}]} {
    %cst = arith.constant 0.000000e+00 : f32
    %0 = vector.broadcast %cst : f32 to vector<8x128xf32>
    %cst_0 = arith.constant 0.000000e+00 : f32
    %1 = vector.broadcast %cst_0 : f32 to vector<8x128xf32>
    %c0 = arith.constant 0 : index
    %c0_1 = arith.constant 0 : index
    %c0_2 = arith.constant 0 : index
    %2 = vector.load %arg1[%c0, %c0_1, %c0_2] : memref<8x8x128xf32, #tpu.memory_space<vmem>>, vector<8x8x128xf32>
    %3 = vector.shape_cast %2 : vector<8x8x128xf32> to vector<64x128xf32>
    %c0_3 = arith.constant 0 : index
    %c0_4 = arith.constant 0 : index
    %4 = vector.load %arg2[%c0_3, %c0_4] : memref<128x384xf32, #tpu.memory_space<vmem>>, vector<128x384xf32>
    %cst_5 = arith.constant dense<0.000000e+00> : vector<64x384xf32>
    %5 = tpu.matmul %3, %4, %cst_5 {dimension_numbers = #tpu.dot_dimension_numbers<[1], [0], [0], [1], [0, 0, 1, 1], [], []>} : vector<64x128xf32>, vector<128x384xf32>, vector<64x384xf32> -> vector<64x384xf32>
    %c0_6 = arith.constant 0 : index
    %c0_7 = arith.constant 0 : index
    %6 = vector.load %arg3[%c0_6, %c0_7] : memref<1x384xf32, #tpu.memory_space<vmem>>, vector<1x384xf32>
    %7 = vector.broadcast %6 : vector<1x384xf32> to vector<64x384xf32>
    %8 = arith.addf %5, %7 : vector<64x384xf32>
    %c0_8 = arith.constant 0 : index
    %c0_9 = arith.constant 0 : index
    %9 = vector.load %arg14[%c0_8, %c0_9] : memref<64x384xf32, #tpu.memory_space<vmem>>, vector<64x384xf32>
    tpu.vector_store %arg14[%c0_8, %c0_9], %8 {strides = array<i32>} : memref<64x384xf32, #tpu.memory_space<vmem>>, vector<64x384xf32>,
    %c0_i32 = arith.constant 0 : i32
    %c8_i32 = arith.constant 8 : i32
    %10 = arith.muli %c0_i32, %c8_i32 : i32
    %11 = tpu.assume_multiple %10, 8 : i32
    %12 = arith.index_cast %11 : i32 to index
    %c0_10 = arith.constant 0 : index
    %13 = vector.load %arg14[%12, %c0_10] : memref<64x384xf32, #tpu.memory_space<vmem>>, vector<8x384xf32>
    %c0_11 = arith.constant 0 : index
    %c0_12 = arith.constant 0 : index
    %14 = vector.load %arg4[%c0_11, %c0_12] : memref<128x384xf32, #tpu.memory_space<vmem>>, vector<128x384xf32>
    %cst_13 = arith.constant dense<0.000000e+00> : vector<8x384xf32>
    %15 = tpu.matmul %0, %14, %cst_13 {dimension_numbers = #tpu.dot_dimension_numbers<[1], [0], [0], [1], [0, 0, 1, 1], [], []>} : vector<8x128xf32>, vector<128x384xf32>, vector<8x384xf32> -> vector<8x384xf32>
    %c0_14 = arith.constant 0 : index
    %c0_15 = arith.constant 0 : index
    %16 = vector.load %arg5[%c0_14, %c0_15] : memref<1x384xf32, #tpu.memory_space<vmem>>, vector<1x384xf32>
    %17 = vector.broadcast %16 : vector<1x384xf32> to vector<8x384xf32>
    %18 = arith.addf %15, %17 : vector<8x384xf32>
    %19 = vector.extract_strided_slice %13 {offsets = [0, 0], sizes = [8, 128], strides = [1, 1]} : vector<8x384xf32> to vector<8x128xf32>
    %20 = vector.extract_strided_slice %18 {offsets = [0, 0], sizes = [8, 128], strides = [1, 1]} : vector<8x384xf32> to vector<8x128xf32>
    %21 = arith.addf %19, %20 : vector<8x128xf32>
    %22 = arith.negf %21 : vector<8x128xf32>
    %23 = math.exp %22 : vector<8x128xf32>
    %cst_16 = arith.constant 1.000000e+00 : f32
    %24 = vector.broadcast %cst_16 : f32 to vector<8x128xf32>
    %25 = arith.addf %24, %23 : vector<8x128xf32>
    %26 = arith.divf %24, %25 : vector<8x128xf32>
    %27 = vector.extract_strided_slice %13 {offsets = [0, 128], sizes = [8, 128], strides = [1, 1]} : vector<8x384xf32> to vector<8x128xf32>
    %28 = vector.extract_strided_slice %18 {offsets = [0, 128], sizes = [8, 128], strides = [1, 1]} : vector<8x384xf32> to vector<8x128xf32>
    %29 = arith.addf %27, %28 : vector<8x128xf32>
    %30 = arith.negf %29 : vector<8x128xf32>
    %31 = math.exp %30 : vector<8x128xf32>
    %cst_17 = arith.constant 1.000000e+00 : f32
    %32 = vector.broadcast %cst_17 : f32 to vector<8x128xf32>
    %33 = arith.addf %32, %31 : vector<8x128xf32>
    %34 = arith.divf %32, %33 : vector<8x128xf32>
    %35 = vector.extract_strided_slice %13 {offsets = [0, 256], sizes = [8, 128], strides = [1, 1]} : vector<8x384xf32> to vector<8x128xf32>
    %36 = vector.extract_strided_slice %18 {offsets = [0, 256], sizes = [8, 128], strides = [1, 1]} : vector<8x384xf32> to vector<8x128xf32>
    %37 = arith.mulf %26, %36 : vector<8x128xf32>
    %38 = arith.addf %35, %37 : vector<8x128xf32>
    %39 = math.tanh %38 : vector<8x128xf32>
    %cst_18 = arith.constant 1.000000e+00 : f32
    %40 = vector.broadcast %cst_18 : f32 to vector<8x128xf32>
    %41 = arith.subf %40, %34 : vector<8x128xf32>
    %42 = arith.mulf %41, %39 : vector<8x128xf32>
    %43 = arith.mulf %34, %0 : vector<8x128xf32>
    %44 = arith.addf %42, %43 : vector<8x128xf32>
    %c0_19 = arith.constant 0 : index
    %c0_20 = arith.constant 0 : index
    %45 = vector.load %arg6[%c0_19, %c0_20] : memref<128x384xf32, #tpu.memory_space<vmem>>, vector<128x384xf32>
    %cst_21 = arith.constant dense<0.000000e+00> : vector<8x384xf32>
    %46 = tpu.matmul %44, %45, %cst_21 {dimension_numbers = #tpu.dot_dimension_numbers<[1], [0], [0], [1], [0, 0, 1, 1], [], []>} : vector<8x128xf32>, vector<128x384xf32>, vector<8x384xf32> -> vector<8x384xf32>
    %c0_22 = arith.constant 0 : index
    %c0_23 = arith.constant 0 : index
    %47 = vector.load %arg7[%c0_22, %c0_23] : memref<1x384xf32, #tpu.memory_space<vmem>>, vector<1x384xf32>
    %48 = vector.broadcast %47 : vector<1x384xf32> to vector<8x384xf32>
    %49 = arith.addf %46, %48 : vector<8x384xf32>
    %c0_24 = arith.constant 0 : index
    %c0_25 = arith.constant 0 : index
    %50 = vector.load %arg8[%c0_24, %c0_25] : memref<128x384xf32, #tpu.memory_space<vmem>>, vector<128x384xf32>
    %cst_26 = arith.constant dense<0.000000e+00> : vector<8x384xf32>
    %51 = tpu.matmul %1, %50, %cst_26 {dimension_numbers = #tpu.dot_dimension_numbers<[1], [0], [0], [1], [0, 0, 1, 1], [], []>} : vector<8x128xf32>, vector<128x384xf32>, vector<8x384xf32> -> vector<8x384xf32>
    %c0_27 = arith.constant 0 : index
    %c0_28 = arith.constant 0 : index
    %52 = vector.load %arg9[%c0_27, %c0_28] : memref<1x384xf32, #tpu.memory_space<vmem>>, vector<1x384xf32>
    %53 = vector.broadcast %52 : vector<1x384xf32> to vector<8x384xf32>
    %54 = arith.addf %51, %53 : vector<8x384xf32>
    %55 = vector.extract_strided_slice %49 {offsets = [0, 0], sizes = [8, 128], strides = [1, 1]} : vector<8x384xf32> to vector<8x128xf32>
    %56 = vector.extract_strided_slice %54 {offsets = [0, 0], sizes = [8, 128], strides = [1, 1]} : vector<8x384xf32> to vector<8x128xf32>
    %57 = arith.addf %55, %56 : vector<8x128xf32>
    %58 = arith.negf %57 : vector<8x128xf32>
    %59 = math.exp %58 : vector<8x128xf32>
    %cst_29 = arith.constant 1.000000e+00 : f32
    %60 = vector.broadcast %cst_29 : f32 to vector<8x128xf32>
    %61 = arith.addf %60, %59 : vector<8x128xf32>
    %62 = arith.divf %60, %61 : vector<8x128xf32>
    %63 = vector.extract_strided_slice %49 {offsets = [0, 128], sizes = [8, 128], strides = [1, 1]} : vector<8x384xf32> to vector<8x128xf32>
    %64 = vector.extract_strided_slice %54 {offsets = [0, 128], sizes = [8, 128], strides = [1, 1]} : vector<8x384xf32> to vector<8x128xf32>
    %65 = arith.addf %63, %64 : vector<8x128xf32>
    %66 = arith.negf %65 : vector<8x128xf32>
    %67 = math.exp %66 : vector<8x128xf32>
    %cst_30 = arith.constant 1.000000e+00 : f32
    %68 = vector.broadcast %cst_30 : f32 to vector<8x128xf32>
    %69 = arith.addf %68, %67 : vector<8x128xf32>
    %70 = arith.divf %68, %69 : vector<8x128xf32>
    %71 = vector.extract_strided_slice %49 {offsets = [0, 256], sizes = [8, 128], strides = [1, 1]} : vector<8x384xf32> to vector<8x128xf32>
    %72 = vector.extract_strided_slice %54 {offsets = [0, 256], sizes = [8, 128], strides = [1, 1]} : vector<8x384xf32> to vector<8x128xf32>
    %73 = arith.mulf %62, %72 : vector<8x128xf32>
    %74 = arith.addf %71, %73 : vector<8x128xf32>
    %75 = math.tanh %74 : vector<8x128xf32>
    %cst_31 = arith.constant 1.000000e+00 : f32
    %76 = vector.broadcast %cst_31 : f32 to vector<8x128xf32>
    %77 = arith.subf %76, %70 : vector<8x128xf32>
    %78 = arith.mulf %77, %75 : vector<8x128xf32>
    %79 = arith.mulf %70, %1 : vector<8x128xf32>
    %80 = arith.addf %78, %79 : vector<8x128xf32>
    %c0_i32_32 = arith.constant 0 : i32
    %81 = arith.addi %c0_i32_32, %c0_i32 : i32
    %82 = arith.index_cast %81 : i32 to index
    %c0_33 = arith.constant 0 : index
    %c0_34 = arith.constant 0 : index
    %83 = vector.load %arg12[%82, %c0_33, %c0_34] : memref<8x8x128xf32, #tpu.memory_space<vmem>>, vector<1x8x128xf32>
    %84 = vector.shape_cast %83 : vector<1x8x128xf32> to vector<8x128xf32>
    %85 = vector.shape_cast %80 : vector<8x128xf32> to vector<1x8x128xf32>
    tpu.vector_store %arg12[%82, %c0_33, %c0_34], %85 {strides = array<i32>} : memref<8x8x128xf32, #tpu.memory_space<vmem>>, vector<1x8x128xf32>,
    %c1_i32 = arith.constant 1 : i32
    %c8_i32_35 = arith.constant 8 : i32
    %86 = arith.muli %c1_i32, %c8_i32_35 : i32
    %87 = tpu.assume_multiple %86, 8 : i32
    %88 = arith.index_cast %87 : i32 to index
    %c0_36 = arith.constant 0 : index
    %89 = vector.load %arg14[%88, %c0_36] : memref<64x384xf32, #tpu.memory_space<vmem>>, vector<8x384xf32>
    %c0_37 = arith.constant 0 : index
    %c0_38 = arith.constant 0 : index
    %90 = vector.load %arg4[%c0_37, %c0_38] : memref<128x384xf32, #tpu.memory_space<vmem>>, vector<128x384xf32>
    %cst_39 = arith.constant dense<0.000000e+00> : vector<8x384xf32>
    %91 = tpu.matmul %44, %90, %cst_39 {dimension_numbers = #tpu.dot_dimension_numbers<[1], [0], [0], [1], [0, 0, 1, 1], [], []>} : vector<8x128xf32>, vector<128x384xf32>, vector<8x384xf32> -> vector<8x384xf32>
    %c0_40 = arith.constant 0 : index
    %c0_41 = arith.constant 0 : index
    %92 = vector.load %arg5[%c0_40, %c0_41] : memref<1x384xf32, #tpu.memory_space<vmem>>, vector<1x384xf32>
    %93 = vector.broadcast %92 : vector<1x384xf32> to vector<8x384xf32>
    %94 = arith.addf %91, %93 : vector<8x384xf32>
    %95 = vector.extract_strided_slice %89 {offsets = [0, 0], sizes = [8, 128], strides = [1, 1]} : vector<8x384xf32> to vector<8x128xf32>
    %96 = vector.extract_strided_slice %94 {offsets = [0, 0], sizes = [8, 128], strides = [1, 1]} : vector<8x384xf32> to vector<8x128xf32>
    %97 = arith.addf %95, %96 : vector<8x128xf32>
    %98 = arith.negf %97 : vector<8x128xf32>
    %99 = math.exp %98 : vector<8x128xf32>
    %cst_42 = arith.constant 1.000000e+00 : f32
    %100 = vector.broadcast %cst_42 : f32 to vector<8x128xf32>
    %101 = arith.addf %100, %99 : vector<8x128xf32>
    %102 = arith.divf %100, %101 : vector<8x128xf32>
    %103 = vector.extract_strided_slice %89 {offsets = [0, 128], sizes = [8, 128], strides = [1, 1]} : vector<8x384xf32> to vector<8x128xf32>
    %104 = vector.extract_strided_slice %94 {offsets = [0, 128], sizes = [8, 128], strides = [1, 1]} : vector<8x384xf32> to vector<8x128xf32>
    %105 = arith.addf %103, %104 : vector<8x128xf32>
    %106 = arith.negf %105 : vector<8x128xf32>
    %107 = math.exp %106 : vector<8x128xf32>
    %cst_43 = arith.constant 1.000000e+00 : f32
    %108 = vector.broadcast %cst_43 : f32 to vector<8x128xf32>
    %109 = arith.addf %108, %107 : vector<8x128xf32>
    %110 = arith.divf %108, %109 : vector<8x128xf32>
    %111 = vector.extract_strided_slice %89 {offsets = [0, 256], sizes = [8, 128], strides = [1, 1]} : vector<8x384xf32> to vector<8x128xf32>
    %112 = vector.extract_strided_slice %94 {offsets = [0, 256], sizes = [8, 128], strides = [1, 1]} : vector<8x384xf32> to vector<8x128xf32>
    %113 = arith.mulf %102, %112 : vector<8x128xf32>
    %114 = arith.addf %111, %113 : vector<8x128xf32>
    %115 = math.tanh %114 : vector<8x128xf32>
    %cst_44 = arith.constant 1.000000e+00 : f32
    %116 = vector.broadcast %cst_44 : f32 to vector<8x128xf32>
    %117 = arith.subf %116, %110 : vector<8x128xf32>
    %118 = arith.mulf %117, %115 : vector<8x128xf32>
    %119 = arith.mulf %110, %44 : vector<8x128xf32>
    %120 = arith.addf %118, %119 : vector<8x128xf32>
    %c0_45 = arith.constant 0 : index
    %c0_46 = arith.constant 0 : index
    %121 = vector.load %arg6[%c0_45, %c0_46] : memref<128x384xf32, #tpu.memory_space<vmem>>, vector<128x384xf32>
    %cst_47 = arith.constant dense<0.000000e+00> : vector<8x384xf32>
    %122 = tpu.matmul %120, %121, %cst_47 {dimension_numbers = #tpu.dot_dimension_numbers<[1], [0], [0], [1], [0, 0, 1, 1], [], []>} : vector<8x128xf32>, vector<128x384xf32>, vector<8x384xf32> -> vector<8x384xf32>
    %c0_48 = arith.constant 0 : index
    %c0_49 = arith.constant 0 : index
    %123 = vector.load %arg7[%c0_48, %c0_49] : memref<1x384xf32, #tpu.memory_space<vmem>>, vector<1x384xf32>
    %124 = vector.broadcast %123 : vector<1x384xf32> to vector<8x384xf32>
    %125 = arith.addf %122, %124 : vector<8x384xf32>
    %c0_50 = arith.constant 0 : index
    %c0_51 = arith.constant 0 : index
    %126 = vector.load %arg8[%c0_50, %c0_51] : memref<128x384xf32, #tpu.memory_space<vmem>>, vector<128x384xf32>
    %cst_52 = arith.constant dense<0.000000e+00> : vector<8x384xf32>
    %127 = tpu.matmul %80, %126, %cst_52 {dimension_numbers = #tpu.dot_dimension_numbers<[1], [0], [0], [1], [0, 0, 1, 1], [], []>} : vector<8x128xf32>, vector<128x384xf32>, vector<8x384xf32> -> vector<8x384xf32>
    %c0_53 = arith.constant 0 : index
    %c0_54 = arith.constant 0 : index
    %128 = vector.load %arg9[%c0_53, %c0_54] : memref<1x384xf32, #tpu.memory_space<vmem>>, vector<1x384xf32>
    %129 = vector.broadcast %128 : vector<1x384xf32> to vector<8x384xf32>
    %130 = arith.addf %127, %129 : vector<8x384xf32>
    %131 = vector.extract_strided_slice %125 {offsets = [0, 0], sizes = [8, 128], strides = [1, 1]} : vector<8x384xf32> to vector<8x128xf32>
    %132 = vector.extract_strided_slice %130 {offsets = [0, 0], sizes = [8, 128], strides = [1, 1]} : vector<8x384xf32> to vector<8x128xf32>
    %133 = arith.addf %131, %132 : vector<8x128xf32>
    %134 = arith.negf %133 : vector<8x128xf32>
    %135 = math.exp %134 : vector<8x128xf32>
    %cst_55 = arith.constant 1.000000e+00 : f32
    %136 = vector.broadcast %cst_55 : f32 to vector<8x128xf32>
    %137 = arith.addf %136, %135 : vector<8x128xf32>
    %138 = arith.divf %136, %137 : vector<8x128xf32>
    %139 = vector.extract_strided_slice %125 {offsets = [0, 128], sizes = [8, 128], strides = [1, 1]} : vector<8x384xf32> to vector<8x128xf32>
    %140 = vector.extract_strided_slice %130 {offsets = [0, 128], sizes = [8, 128], strides = [1, 1]} : vector<8x384xf32> to vector<8x128xf32>
    %141 = arith.addf %139, %140 : vector<8x128xf32>
    %142 = arith.negf %141 : vector<8x128xf32>
    %143 = math.exp %142 : vector<8x128xf32>
    %cst_56 = arith.constant 1.000000e+00 : f32
    %144 = vector.broadcast %cst_56 : f32 to vector<8x128xf32>
    %145 = arith.addf %144, %143 : vector<8x128xf32>
    %146 = arith.divf %144, %145 : vector<8x128xf32>
    %147 = vector.extract_strided_slice %125 {offsets = [0, 256], sizes = [8, 128], strides = [1, 1]} : vector<8x384xf32> to vector<8x128xf32>
    %148 = vector.extract_strided_slice %130 {offsets = [0, 256], sizes = [8, 128], strides = [1, 1]} : vector<8x384xf32> to vector<8x128xf32>
    %149 = arith.mulf %138, %148 : vector<8x128xf32>
    %150 = arith.addf %147, %149 : vector<8x128xf32>
    %151 = math.tanh %150 : vector<8x128xf32>
    %cst_57 = arith.constant 1.000000e+00 : f32
    %152 = vector.broadcast %cst_57 : f32 to vector<8x128xf32>
    %153 = arith.subf %152, %146 : vector<8x128xf32>
    %154 = arith.mulf %153, %151 : vector<8x128xf32>
    %155 = arith.mulf %146, %80 : vector<8x128xf32>
    %156 = arith.addf %154, %155 : vector<8x128xf32>
    %c0_i32_58 = arith.constant 0 : i32
    %157 = arith.addi %c0_i32_58, %c1_i32 : i32
    %158 = arith.index_cast %157 : i32 to index
    %c0_59 = arith.constant 0 : index
    %c0_60 = arith.constant 0 : index
    %159 = vector.load %arg12[%158, %c0_59, %c0_60] : memref<8x8x128xf32, #tpu.memory_space<vmem>>, vector<1x8x128xf32>
    %160 = vector.shape_cast %159 : vector<1x8x128xf32> to vector<8x128xf32>
    %161 = vector.shape_cast %156 : vector<8x128xf32> to vector<1x8x128xf32>
    tpu.vector_store %arg12[%158, %c0_59, %c0_60], %161 {strides = array<i32>} : memref<8x8x128xf32, #tpu.memory_space<vmem>>, vector<1x8x128xf32>,
    %c2_i32 = arith.constant 2 : i32
    %c8_i32_61 = arith.constant 8 : i32
    %162 = arith.muli %c2_i32, %c8_i32_61 : i32
    %163 = tpu.assume_multiple %162, 8 : i32
    %164 = arith.index_cast %163 : i32 to index
    %c0_62 = arith.constant 0 : index
    %165 = vector.load %arg14[%164, %c0_62] : memref<64x384xf32, #tpu.memory_space<vmem>>, vector<8x384xf32>
    %c0_63 = arith.constant 0 : index
    %c0_64 = arith.constant 0 : index
    %166 = vector.load %arg4[%c0_63, %c0_64] : memref<128x384xf32, #tpu.memory_space<vmem>>, vector<128x384xf32>
    %cst_65 = arith.constant dense<0.000000e+00> : vector<8x384xf32>
    %167 = tpu.matmul %120, %166, %cst_65 {dimension_numbers = #tpu.dot_dimension_numbers<[1], [0], [0], [1], [0, 0, 1, 1], [], []>} : vector<8x128xf32>, vector<128x384xf32>, vector<8x384xf32> -> vector<8x384xf32>
    %c0_66 = arith.constant 0 : index
    %c0_67 = arith.constant 0 : index
    %168 = vector.load %arg5[%c0_66, %c0_67] : memref<1x384xf32, #tpu.memory_space<vmem>>, vector<1x384xf32>
    %169 = vector.broadcast %168 : vector<1x384xf32> to vector<8x384xf32>
    %170 = arith.addf %167, %169 : vector<8x384xf32>
    %171 = vector.extract_strided_slice %165 {offsets = [0, 0], sizes = [8, 128], strides = [1, 1]} : vector<8x384xf32> to vector<8x128xf32>
    %172 = vector.extract_strided_slice %170 {offsets = [0, 0], sizes = [8, 128], strides = [1, 1]} : vector<8x384xf32> to vector<8x128xf32>
    %173 = arith.addf %171, %172 : vector<8x128xf32>
    %174 = arith.negf %173 : vector<8x128xf32>
    %175 = math.exp %174 : vector<8x128xf32>
    %cst_68 = arith.constant 1.000000e+00 : f32
    %176 = vector.broadcast %cst_68 : f32 to vector<8x128xf32>
    %177 = arith.addf %176, %175 : vector<8x128xf32>
    %178 = arith.divf %176, %177 : vector<8x128xf32>
    %179 = vector.extract_strided_slice %165 {offsets = [0, 128], sizes = [8, 128], strides = [1, 1]} : vector<8x384xf32> to vector<8x128xf32>
    %180 = vector.extract_strided_slice %170 {offsets = [0, 128], sizes = [8, 128], strides = [1, 1]} : vector<8x384xf32> to vector<8x128xf32>
    %181 = arith.addf %179, %180 : vector<8x128xf32>
    %182 = arith.negf %181 : vector<8x128xf32>
    %183 = math.exp %182 : vector<8x128xf32>
    %cst_69 = arith.constant 1.000000e+00 : f32
    %184 = vector.broadcast %cst_69 : f32 to vector<8x128xf32>
    %185 = arith.addf %184, %183 : vector<8x128xf32>
    %186 = arith.divf %184, %185 : vector<8x128xf32>
    %187 = vector.extract_strided_slice %165 {offsets = [0, 256], sizes = [8, 128], strides = [1, 1]} : vector<8x384xf32> to vector<8x128xf32>
    %188 = vector.extract_strided_slice %170 {offsets = [0, 256], sizes = [8, 128], strides = [1, 1]} : vector<8x384xf32> to vector<8x128xf32>
    %189 = arith.mulf %178, %188 : vector<8x128xf32>
    %190 = arith.addf %187, %189 : vector<8x128xf32>
    %191 = math.tanh %190 : vector<8x128xf32>
    %cst_70 = arith.constant 1.000000e+00 : f32
    %192 = vector.broadcast %cst_70 : f32 to vector<8x128xf32>
    %193 = arith.subf %192, %186 : vector<8x128xf32>
    %194 = arith.mulf %193, %191 : vector<8x128xf32>
    %195 = arith.mulf %186, %120 : vector<8x128xf32>
    %196 = arith.addf %194, %195 : vector<8x128xf32>
    %c0_71 = arith.constant 0 : index
    %c0_72 = arith.constant 0 : index
    %197 = vector.load %arg6[%c0_71, %c0_72] : memref<128x384xf32, #tpu.memory_space<vmem>>, vector<128x384xf32>
    %cst_73 = arith.constant dense<0.000000e+00> : vector<8x384xf32>
    %198 = tpu.matmul %196, %197, %cst_73 {dimension_numbers = #tpu.dot_dimension_numbers<[1], [0], [0], [1], [0, 0, 1, 1], [], []>} : vector<8x128xf32>, vector<128x384xf32>, vector<8x384xf32> -> vector<8x384xf32>
    %c0_74 = arith.constant 0 : index
    %c0_75 = arith.constant 0 : index
    %199 = vector.load %arg7[%c0_74, %c0_75] : memref<1x384xf32, #tpu.memory_space<vmem>>, vector<1x384xf32>
    %200 = vector.broadcast %199 : vector<1x384xf32> to vector<8x384xf32>
    %201 = arith.addf %198, %200 : vector<8x384xf32>
    %c0_76 = arith.constant 0 : index
    %c0_77 = arith.constant 0 : index
    %202 = vector.load %arg8[%c0_76, %c0_77] : memref<128x384xf32, #tpu.memory_space<vmem>>, vector<128x384xf32>
    %cst_78 = arith.constant dense<0.000000e+00> : vector<8x384xf32>
    %203 = tpu.matmul %156, %202, %cst_78 {dimension_numbers = #tpu.dot_dimension_numbers<[1], [0], [0], [1], [0, 0, 1, 1], [], []>} : vector<8x128xf32>, vector<128x384xf32>, vector<8x384xf32> -> vector<8x384xf32>
    %c0_79 = arith.constant 0 : index
    %c0_80 = arith.constant 0 : index
    %204 = vector.load %arg9[%c0_79, %c0_80] : memref<1x384xf32, #tpu.memory_space<vmem>>, vector<1x384xf32>
    %205 = vector.broadcast %204 : vector<1x384xf32> to vector<8x384xf32>
    %206 = arith.addf %203, %205 : vector<8x384xf32>
    %207 = vector.extract_strided_slice %201 {offsets = [0, 0], sizes = [8, 128], strides = [1, 1]} : vector<8x384xf32> to vector<8x128xf32>
    %208 = vector.extract_strided_slice %206 {offsets = [0, 0], sizes = [8, 128], strides = [1, 1]} : vector<8x384xf32> to vector<8x128xf32>
    %209 = arith.addf %207, %208 : vector<8x128xf32>
    %210 = arith.negf %209 : vector<8x128xf32>
    %211 = math.exp %210 : vector<8x128xf32>
    %cst_81 = arith.constant 1.000000e+00 : f32
    %212 = vector.broadcast %cst_81 : f32 to vector<8x128xf32>
    %213 = arith.addf %212, %211 : vector<8x128xf32>
    %214 = arith.divf %212, %213 : vector<8x128xf32>
    %215 = vector.extract_strided_slice %201 {offsets = [0, 128], sizes = [8, 128], strides = [1, 1]} : vector<8x384xf32> to vector<8x128xf32>
    %216 = vector.extract_strided_slice %206 {offsets = [0, 128], sizes = [8, 128], strides = [1, 1]} : vector<8x384xf32> to vector<8x128xf32>
    %217 = arith.addf %215, %216 : vector<8x128xf32>
    %218 = arith.negf %217 : vector<8x128xf32>
    %219 = math.exp %218 : vector<8x128xf32>
    %cst_82 = arith.constant 1.000000e+00 : f32
    %220 = vector.broadcast %cst_82 : f32 to vector<8x128xf32>
    %221 = arith.addf %220, %219 : vector<8x128xf32>
    %222 = arith.divf %220, %221 : vector<8x128xf32>
    %223 = vector.extract_strided_slice %201 {offsets = [0, 256], sizes = [8, 128], strides = [1, 1]} : vector<8x384xf32> to vector<8x128xf32>
    %224 = vector.extract_strided_slice %206 {offsets = [0, 256], sizes = [8, 128], strides = [1, 1]} : vector<8x384xf32> to vector<8x128xf32>
    %225 = arith.mulf %214, %224 : vector<8x128xf32>
    %226 = arith.addf %223, %225 : vector<8x128xf32>
    %227 = math.tanh %226 : vector<8x128xf32>
    %cst_83 = arith.constant 1.000000e+00 : f32
    %228 = vector.broadcast %cst_83 : f32 to vector<8x128xf32>
    %229 = arith.subf %228, %222 : vector<8x128xf32>
    %230 = arith.mulf %229, %227 : vector<8x128xf32>
    %231 = arith.mulf %222, %156 : vector<8x128xf32>
    %232 = arith.addf %230, %231 : vector<8x128xf32>
    %c0_i32_84 = arith.constant 0 : i32
    %233 = arith.addi %c0_i32_84, %c2_i32 : i32
    %234 = arith.index_cast %233 : i32 to index
    %c0_85 = arith.constant 0 : index
    %c0_86 = arith.constant 0 : index
    %235 = vector.load %arg12[%234, %c0_85, %c0_86] : memref<8x8x128xf32, #tpu.memory_space<vmem>>, vector<1x8x128xf32>
    %236 = vector.shape_cast %235 : vector<1x8x128xf32> to vector<8x128xf32>
    %237 = vector.shape_cast %232 : vector<8x128xf32> to vector<1x8x128xf32>
    tpu.vector_store %arg12[%234, %c0_85, %c0_86], %237 {strides = array<i32>} : memref<8x8x128xf32, #tpu.memory_space<vmem>>, vector<1x8x128xf32>,
    %c3_i32 = arith.constant 3 : i32
    %c8_i32_87 = arith.constant 8 : i32
    %238 = arith.muli %c3_i32, %c8_i32_87 : i32
    %239 = tpu.assume_multiple %238, 8 : i32
    %240 = arith.index_cast %239 : i32 to index
    %c0_88 = arith.constant 0 : index
    %241 = vector.load %arg14[%240, %c0_88] : memref<64x384xf32, #tpu.memory_space<vmem>>, vector<8x384xf32>
    %c0_89 = arith.constant 0 : index
    %c0_90 = arith.constant 0 : index
    %242 = vector.load %arg4[%c0_89, %c0_90] : memref<128x384xf32, #tpu.memory_space<vmem>>, vector<128x384xf32>
    %cst_91 = arith.constant dense<0.000000e+00> : vector<8x384xf32>
    %243 = tpu.matmul %196, %242, %cst_91 {dimension_numbers = #tpu.dot_dimension_numbers<[1], [0], [0], [1], [0, 0, 1, 1], [], []>} : vector<8x128xf32>, vector<128x384xf32>, vector<8x384xf32> -> vector<8x384xf32>
    %c0_92 = arith.constant 0 : index
    %c0_93 = arith.constant 0 : index
    %244 = vector.load %arg5[%c0_92, %c0_93] : memref<1x384xf32, #tpu.memory_space<vmem>>, vector<1x384xf32>
    %245 = vector.broadcast %244 : vector<1x384xf32> to vector<8x384xf32>
    %246 = arith.addf %243, %245 : vector<8x384xf32>
    %247 = vector.extract_strided_slice %241 {offsets = [0, 0], sizes = [8, 128], strides = [1, 1]} : vector<8x384xf32> to vector<8x128xf32>
    %248 = vector.extract_strided_slice %246 {offsets = [0, 0], sizes = [8, 128], strides = [1, 1]} : vector<8x384xf32> to vector<8x128xf32>
    %249 = arith.addf %247, %248 : vector<8x128xf32>
    %250 = arith.negf %249 : vector<8x128xf32>
    %251 = math.exp %250 : vector<8x128xf32>
    %cst_94 = arith.constant 1.000000e+00 : f32
    %252 = vector.broadcast %cst_94 : f32 to vector<8x128xf32>
    %253 = arith.addf %252, %251 : vector<8x128xf32>
    %254 = arith.divf %252, %253 : vector<8x128xf32>
    %255 = vector.extract_strided_slice %241 {offsets = [0, 128], sizes = [8, 128], strides = [1, 1]} : vector<8x384xf32> to vector<8x128xf32>
    %256 = vector.extract_strided_slice %246 {offsets = [0, 128], sizes = [8, 128], strides = [1, 1]} : vector<8x384xf32> to vector<8x128xf32>
    %257 = arith.addf %255, %256 : vector<8x128xf32>
    %258 = arith.negf %257 : vector<8x128xf32>
    %259 = math.exp %258 : vector<8x128xf32>
    %cst_95 = arith.constant 1.000000e+00 : f32
    %260 = vector.broadcast %cst_95 : f32 to vector<8x128xf32>
    %261 = arith.addf %260, %259 : vector<8x128xf32>
    %262 = arith.divf %260, %261 : vector<8x128xf32>
    %263 = vector.extract_strided_slice %241 {offsets = [0, 256], sizes = [8, 128], strides = [1, 1]} : vector<8x384xf32> to vector<8x128xf32>
    %264 = vector.extract_strided_slice %246 {offsets = [0, 256], sizes = [8, 128], strides = [1, 1]} : vector<8x384xf32> to vector<8x128xf32>
    %265 = arith.mulf %254, %264 : vector<8x128xf32>
    %266 = arith.addf %263, %265 : vector<8x128xf32>
    %267 = math.tanh %266 : vector<8x128xf32>
    %cst_96 = arith.constant 1.000000e+00 : f32
    %268 = vector.broadcast %cst_96 : f32 to vector<8x128xf32>
    %269 = arith.subf %268, %262 : vector<8x128xf32>
    %270 = arith.mulf %269, %267 : vector<8x128xf32>
    %271 = arith.mulf %262, %196 : vector<8x128xf32>
    %272 = arith.addf %270, %271 : vector<8x128xf32>
    %c0_97 = arith.constant 0 : index
    %c0_98 = arith.constant 0 : index
    %273 = vector.load %arg6[%c0_97, %c0_98] : memref<128x384xf32, #tpu.memory_space<vmem>>, vector<128x384xf32>
    %cst_99 = arith.constant dense<0.000000e+00> : vector<8x384xf32>
    %274 = tpu.matmul %272, %273, %cst_99 {dimension_numbers = #tpu.dot_dimension_numbers<[1], [0], [0], [1], [0, 0, 1, 1], [], []>} : vector<8x128xf32>, vector<128x384xf32>, vector<8x384xf32> -> vector<8x384xf32>
    %c0_100 = arith.constant 0 : index
    %c0_101 = arith.constant 0 : index
    %275 = vector.load %arg7[%c0_100, %c0_101] : memref<1x384xf32, #tpu.memory_space<vmem>>, vector<1x384xf32>
    %276 = vector.broadcast %275 : vector<1x384xf32> to vector<8x384xf32>
    %277 = arith.addf %274, %276 : vector<8x384xf32>
    %c0_102 = arith.constant 0 : index
    %c0_103 = arith.constant 0 : index
    %278 = vector.load %arg8[%c0_102, %c0_103] : memref<128x384xf32, #tpu.memory_space<vmem>>, vector<128x384xf32>
    %cst_104 = arith.constant dense<0.000000e+00> : vector<8x384xf32>
    %279 = tpu.matmul %232, %278, %cst_104 {dimension_numbers = #tpu.dot_dimension_numbers<[1], [0], [0], [1], [0, 0, 1, 1], [], []>} : vector<8x128xf32>, vector<128x384xf32>, vector<8x384xf32> -> vector<8x384xf32>
    %c0_105 = arith.constant 0 : index
    %c0_106 = arith.constant 0 : index
    %280 = vector.load %arg9[%c0_105, %c0_106] : memref<1x384xf32, #tpu.memory_space<vmem>>, vector<1x384xf32>
    %281 = vector.broadcast %280 : vector<1x384xf32> to vector<8x384xf32>
    %282 = arith.addf %279, %281 : vector<8x384xf32>
    %283 = vector.extract_strided_slice %277 {offsets = [0, 0], sizes = [8, 128], strides = [1, 1]} : vector<8x384xf32> to vector<8x128xf32>
    %284 = vector.extract_strided_slice %282 {offsets = [0, 0], sizes = [8, 128], strides = [1, 1]} : vector<8x384xf32> to vector<8x128xf32>
    %285 = arith.addf %283, %284 : vector<8x128xf32>
    %286 = arith.negf %285 : vector<8x128xf32>
    %287 = math.exp %286 : vector<8x128xf32>
    %cst_107 = arith.constant 1.000000e+00 : f32
    %288 = vector.broadcast %cst_107 : f32 to vector<8x128xf32>
    %289 = arith.addf %288, %287 : vector<8x128xf32>
    %290 = arith.divf %288, %289 : vector<8x128xf32>
    %291 = vector.extract_strided_slice %277 {offsets = [0, 128], sizes = [8, 128], strides = [1, 1]} : vector<8x384xf32> to vector<8x128xf32>
    %292 = vector.extract_strided_slice %282 {offsets = [0, 128], sizes = [8, 128], strides = [1, 1]} : vector<8x384xf32> to vector<8x128xf32>
    %293 = arith.addf %291, %292 : vector<8x128xf32>
    %294 = arith.negf %293 : vector<8x128xf32>
    %295 = math.exp %294 : vector<8x128xf32>
    %cst_108 = arith.constant 1.000000e+00 : f32
    %296 = vector.broadcast %cst_108 : f32 to vector<8x128xf32>
    %297 = arith.addf %296, %295 : vector<8x128xf32>
    %298 = arith.divf %296, %297 : vector<8x128xf32>
    %299 = vector.extract_strided_slice %277 {offsets = [0, 256], sizes = [8, 128], strides = [1, 1]} : vector<8x384xf32> to vector<8x128xf32>
    %300 = vector.extract_strided_slice %282 {offsets = [0, 256], sizes = [8, 128], strides = [1, 1]} : vector<8x384xf32> to vector<8x128xf32>
    %301 = arith.mulf %290, %300 : vector<8x128xf32>
    %302 = arith.addf %299, %301 : vector<8x128xf32>
    %303 = math.tanh %302 : vector<8x128xf32>
    %cst_109 = arith.constant 1.000000e+00 : f32
    %304 = vector.broadcast %cst_109 : f32 to vector<8x128xf32>
    %305 = arith.subf %304, %298 : vector<8x128xf32>
    %306 = arith.mulf %305, %303 : vector<8x128xf32>
    %307 = arith.mulf %298, %232 : vector<8x128xf32>
    %308 = arith.addf %306, %307 : vector<8x128xf32>
    %c0_i32_110 = arith.constant 0 : i32
    %309 = arith.addi %c0_i32_110, %c3_i32 : i32
    %310 = arith.index_cast %309 : i32 to index
    %c0_111 = arith.constant 0 : index
    %c0_112 = arith.constant 0 : index
    %311 = vector.load %arg12[%310, %c0_111, %c0_112] : memref<8x8x128xf32, #tpu.memory_space<vmem>>, vector<1x8x128xf32>
    %312 = vector.shape_cast %311 : vector<1x8x128xf32> to vector<8x128xf32>
    %313 = vector.shape_cast %308 : vector<8x128xf32> to vector<1x8x128xf32>
    tpu.vector_store %arg12[%310, %c0_111, %c0_112], %313 {strides = array<i32>} : memref<8x8x128xf32, #tpu.memory_space<vmem>>, vector<1x8x128xf32>,
    %c4_i32 = arith.constant 4 : i32
    %c8_i32_113 = arith.constant 8 : i32
    %314 = arith.muli %c4_i32, %c8_i32_113 : i32
    %315 = tpu.assume_multiple %314, 8 : i32
    %316 = arith.index_cast %315 : i32 to index
    %c0_114 = arith.constant 0 : index
    %317 = vector.load %arg14[%316, %c0_114] : memref<64x384xf32, #tpu.memory_space<vmem>>, vector<8x384xf32>
    %c0_115 = arith.constant 0 : index
    %c0_116 = arith.constant 0 : index
    %318 = vector.load %arg4[%c0_115, %c0_116] : memref<128x384xf32, #tpu.memory_space<vmem>>, vector<128x384xf32>
    %cst_117 = arith.constant dense<0.000000e+00> : vector<8x384xf32>
    %319 = tpu.matmul %272, %318, %cst_117 {dimension_numbers = #tpu.dot_dimension_numbers<[1], [0], [0], [1], [0, 0, 1, 1], [], []>} : vector<8x128xf32>, vector<128x384xf32>, vector<8x384xf32> -> vector<8x384xf32>
    %c0_118 = arith.constant 0 : index
    %c0_119 = arith.constant 0 : index
    %320 = vector.load %arg5[%c0_118, %c0_119] : memref<1x384xf32, #tpu.memory_space<vmem>>, vector<1x384xf32>
    %321 = vector.broadcast %320 : vector<1x384xf32> to vector<8x384xf32>
    %322 = arith.addf %319, %321 : vector<8x384xf32>
    %323 = vector.extract_strided_slice %317 {offsets = [0, 0], sizes = [8, 128], strides = [1, 1]} : vector<8x384xf32> to vector<8x128xf32>
    %324 = vector.extract_strided_slice %322 {offsets = [0, 0], sizes = [8, 128], strides = [1, 1]} : vector<8x384xf32> to vector<8x128xf32>
    %325 = arith.addf %323, %324 : vector<8x128xf32>
    %326 = arith.negf %325 : vector<8x128xf32>
    %327 = math.exp %326 : vector<8x128xf32>
    %cst_120 = arith.constant 1.000000e+00 : f32
    %328 = vector.broadcast %cst_120 : f32 to vector<8x128xf32>
    %329 = arith.addf %328, %327 : vector<8x128xf32>
    %330 = arith.divf %328, %329 : vector<8x128xf32>
    %331 = vector.extract_strided_slice %317 {offsets = [0, 128], sizes = [8, 128], strides = [1, 1]} : vector<8x384xf32> to vector<8x128xf32>
    %332 = vector.extract_strided_slice %322 {offsets = [0, 128], sizes = [8, 128], strides = [1, 1]} : vector<8x384xf32> to vector<8x128xf32>
    %333 = arith.addf %331, %332 : vector<8x128xf32>
    %334 = arith.negf %333 : vector<8x128xf32>
    %335 = math.exp %334 : vector<8x128xf32>
    %cst_121 = arith.constant 1.000000e+00 : f32
    %336 = vector.broadcast %cst_121 : f32 to vector<8x128xf32>
    %337 = arith.addf %336, %335 : vector<8x128xf32>
    %338 = arith.divf %336, %337 : vector<8x128xf32>
    %339 = vector.extract_strided_slice %317 {offsets = [0, 256], sizes = [8, 128], strides = [1, 1]} : vector<8x384xf32> to vector<8x128xf32>
    %340 = vector.extract_strided_slice %322 {offsets = [0, 256], sizes = [8, 128], strides = [1, 1]} : vector<8x384xf32> to vector<8x128xf32>
    %341 = arith.mulf %330, %340 : vector<8x128xf32>
    %342 = arith.addf %339, %341 : vector<8x128xf32>
    %343 = math.tanh %342 : vector<8x128xf32>
    %cst_122 = arith.constant 1.000000e+00 : f32
    %344 = vector.broadcast %cst_122 : f32 to vector<8x128xf32>
    %345 = arith.subf %344, %338 : vector<8x128xf32>
    %346 = arith.mulf %345, %343 : vector<8x128xf32>
    %347 = arith.mulf %338, %272 : vector<8x128xf32>
    %348 = arith.addf %346, %347 : vector<8x128xf32>
    %c0_123 = arith.constant 0 : index
    %c0_124 = arith.constant 0 : index
    %349 = vector.load %arg6[%c0_123, %c0_124] : memref<128x384xf32, #tpu.memory_space<vmem>>, vector<128x384xf32>
    %cst_125 = arith.constant dense<0.000000e+00> : vector<8x384xf32>
    %350 = tpu.matmul %348, %349, %cst_125 {dimension_numbers = #tpu.dot_dimension_numbers<[1], [0], [0], [1], [0, 0, 1, 1], [], []>} : vector<8x128xf32>, vector<128x384xf32>, vector<8x384xf32> -> vector<8x384xf32>
    %c0_126 = arith.constant 0 : index
    %c0_127 = arith.constant 0 : index
    %351 = vector.load %arg7[%c0_126, %c0_127] : memref<1x384xf32, #tpu.memory_space<vmem>>, vector<1x384xf32>
    %352 = vector.broadcast %351 : vector<1x384xf32> to vector<8x384xf32>
    %353 = arith.addf %350, %352 : vector<8x384xf32>
    %c0_128 = arith.constant 0 : index
    %c0_129 = arith.constant 0 : index
    %354 = vector.load %arg8[%c0_128, %c0_129] : memref<128x384xf32, #tpu.memory_space<vmem>>, vector<128x384xf32>
    %cst_130 = arith.constant dense<0.000000e+00> : vector<8x384xf32>
    %355 = tpu.matmul %308, %354, %cst_130 {dimension_numbers = #tpu.dot_dimension_numbers<[1], [0], [0], [1], [0, 0, 1, 1], [], []>} : vector<8x128xf32>, vector<128x384xf32>, vector<8x384xf32> -> vector<8x384xf32>
    %c0_131 = arith.constant 0 : index
    %c0_132 = arith.constant 0 : index
    %356 = vector.load %arg9[%c0_131, %c0_132] : memref<1x384xf32, #tpu.memory_space<vmem>>, vector<1x384xf32>
    %357 = vector.broadcast %356 : vector<1x384xf32> to vector<8x384xf32>
    %358 = arith.addf %355, %357 : vector<8x384xf32>
    %359 = vector.extract_strided_slice %353 {offsets = [0, 0], sizes = [8, 128], strides = [1, 1]} : vector<8x384xf32> to vector<8x128xf32>
    %360 = vector.extract_strided_slice %358 {offsets = [0, 0], sizes = [8, 128], strides = [1, 1]} : vector<8x384xf32> to vector<8x128xf32>
    %361 = arith.addf %359, %360 : vector<8x128xf32>
    %362 = arith.negf %361 : vector<8x128xf32>
    %363 = math.exp %362 : vector<8x128xf32>
    %cst_133 = arith.constant 1.000000e+00 : f32
    %364 = vector.broadcast %cst_133 : f32 to vector<8x128xf32>
    %365 = arith.addf %364, %363 : vector<8x128xf32>
    %366 = arith.divf %364, %365 : vector<8x128xf32>
    %367 = vector.extract_strided_slice %353 {offsets = [0, 128], sizes = [8, 128], strides = [1, 1]} : vector<8x384xf32> to vector<8x128xf32>
    %368 = vector.extract_strided_slice %358 {offsets = [0, 128], sizes = [8, 128], strides = [1, 1]} : vector<8x384xf32> to vector<8x128xf32>
    %369 = arith.addf %367, %368 : vector<8x128xf32>
    %370 = arith.negf %369 : vector<8x128xf32>
    %371 = math.exp %370 : vector<8x128xf32>
    %cst_134 = arith.constant 1.000000e+00 : f32
    %372 = vector.broadcast %cst_134 : f32 to vector<8x128xf32>
    %373 = arith.addf %372, %371 : vector<8x128xf32>
    %374 = arith.divf %372, %373 : vector<8x128xf32>
    %375 = vector.extract_strided_slice %353 {offsets = [0, 256], sizes = [8, 128], strides = [1, 1]} : vector<8x384xf32> to vector<8x128xf32>
    %376 = vector.extract_strided_slice %358 {offsets = [0, 256], sizes = [8, 128], strides = [1, 1]} : vector<8x384xf32> to vector<8x128xf32>
    %377 = arith.mulf %366, %376 : vector<8x128xf32>
    %378 = arith.addf %375, %377 : vector<8x128xf32>
    %379 = math.tanh %378 : vector<8x128xf32>
    %cst_135 = arith.constant 1.000000e+00 : f32
    %380 = vector.broadcast %cst_135 : f32 to vector<8x128xf32>
    %381 = arith.subf %380, %374 : vector<8x128xf32>
    %382 = arith.mulf %381, %379 : vector<8x128xf32>
    %383 = arith.mulf %374, %308 : vector<8x128xf32>
    %384 = arith.addf %382, %383 : vector<8x128xf32>
    %c0_i32_136 = arith.constant 0 : i32
    %385 = arith.addi %c0_i32_136, %c4_i32 : i32
    %386 = arith.index_cast %385 : i32 to index
    %c0_137 = arith.constant 0 : index
    %c0_138 = arith.constant 0 : index
    %387 = vector.load %arg12[%386, %c0_137, %c0_138] : memref<8x8x128xf32, #tpu.memory_space<vmem>>, vector<1x8x128xf32>
    %388 = vector.shape_cast %387 : vector<1x8x128xf32> to vector<8x128xf32>
    %389 = vector.shape_cast %384 : vector<8x128xf32> to vector<1x8x128xf32>
    tpu.vector_store %arg12[%386, %c0_137, %c0_138], %389 {strides = array<i32>} : memref<8x8x128xf32, #tpu.memory_space<vmem>>, vector<1x8x128xf32>,
    %c5_i32 = arith.constant 5 : i32
    %c8_i32_139 = arith.constant 8 : i32
    %390 = arith.muli %c5_i32, %c8_i32_139 : i32
    %391 = tpu.assume_multiple %390, 8 : i32
    %392 = arith.index_cast %391 : i32 to index
    %c0_140 = arith.constant 0 : index
    %393 = vector.load %arg14[%392, %c0_140] : memref<64x384xf32, #tpu.memory_space<vmem>>, vector<8x384xf32>
    %c0_141 = arith.constant 0 : index
    %c0_142 = arith.constant 0 : index
    %394 = vector.load %arg4[%c0_141, %c0_142] : memref<128x384xf32, #tpu.memory_space<vmem>>, vector<128x384xf32>
    %cst_143 = arith.constant dense<0.000000e+00> : vector<8x384xf32>
    %395 = tpu.matmul %348, %394, %cst_143 {dimension_numbers = #tpu.dot_dimension_numbers<[1], [0], [0], [1], [0, 0, 1, 1], [], []>} : vector<8x128xf32>, vector<128x384xf32>, vector<8x384xf32> -> vector<8x384xf32>
    %c0_144 = arith.constant 0 : index
    %c0_145 = arith.constant 0 : index
    %396 = vector.load %arg5[%c0_144, %c0_145] : memref<1x384xf32, #tpu.memory_space<vmem>>, vector<1x384xf32>
    %397 = vector.broadcast %396 : vector<1x384xf32> to vector<8x384xf32>
    %398 = arith.addf %395, %397 : vector<8x384xf32>
    %399 = vector.extract_strided_slice %393 {offsets = [0, 0], sizes = [8, 128], strides = [1, 1]} : vector<8x384xf32> to vector<8x128xf32>
    %400 = vector.extract_strided_slice %398 {offsets = [0, 0], sizes = [8, 128], strides = [1, 1]} : vector<8x384xf32> to vector<8x128xf32>
    %401 = arith.addf %399, %400 : vector<8x128xf32>
    %402 = arith.negf %401 : vector<8x128xf32>
    %403 = math.exp %402 : vector<8x128xf32>
    %cst_146 = arith.constant 1.000000e+00 : f32
    %404 = vector.broadcast %cst_146 : f32 to vector<8x128xf32>
    %405 = arith.addf %404, %403 : vector<8x128xf32>
    %406 = arith.divf %404, %405 : vector<8x128xf32>
    %407 = vector.extract_strided_slice %393 {offsets = [0, 128], sizes = [8, 128], strides = [1, 1]} : vector<8x384xf32> to vector<8x128xf32>
    %408 = vector.extract_strided_slice %398 {offsets = [0, 128], sizes = [8, 128], strides = [1, 1]} : vector<8x384xf32> to vector<8x128xf32>
    %409 = arith.addf %407, %408 : vector<8x128xf32>
    %410 = arith.negf %409 : vector<8x128xf32>
    %411 = math.exp %410 : vector<8x128xf32>
    %cst_147 = arith.constant 1.000000e+00 : f32
    %412 = vector.broadcast %cst_147 : f32 to vector<8x128xf32>
    %413 = arith.addf %412, %411 : vector<8x128xf32>
    %414 = arith.divf %412, %413 : vector<8x128xf32>
    %415 = vector.extract_strided_slice %393 {offsets = [0, 256], sizes = [8, 128], strides = [1, 1]} : vector<8x384xf32> to vector<8x128xf32>
    %416 = vector.extract_strided_slice %398 {offsets = [0, 256], sizes = [8, 128], strides = [1, 1]} : vector<8x384xf32> to vector<8x128xf32>
    %417 = arith.mulf %406, %416 : vector<8x128xf32>
    %418 = arith.addf %415, %417 : vector<8x128xf32>
    %419 = math.tanh %418 : vector<8x128xf32>
    %cst_148 = arith.constant 1.000000e+00 : f32
    %420 = vector.broadcast %cst_148 : f32 to vector<8x128xf32>
    %421 = arith.subf %420, %414 : vector<8x128xf32>
    %422 = arith.mulf %421, %419 : vector<8x128xf32>
    %423 = arith.mulf %414, %348 : vector<8x128xf32>
    %424 = arith.addf %422, %423 : vector<8x128xf32>
    %c0_149 = arith.constant 0 : index
    %c0_150 = arith.constant 0 : index
    %425 = vector.load %arg6[%c0_149, %c0_150] : memref<128x384xf32, #tpu.memory_space<vmem>>, vector<128x384xf32>
    %cst_151 = arith.constant dense<0.000000e+00> : vector<8x384xf32>
    %426 = tpu.matmul %424, %425, %cst_151 {dimension_numbers = #tpu.dot_dimension_numbers<[1], [0], [0], [1], [0, 0, 1, 1], [], []>} : vector<8x128xf32>, vector<128x384xf32>, vector<8x384xf32> -> vector<8x384xf32>
    %c0_152 = arith.constant 0 : index
    %c0_153 = arith.constant 0 : index
    %427 = vector.load %arg7[%c0_152, %c0_153] : memref<1x384xf32, #tpu.memory_space<vmem>>, vector<1x384xf32>
    %428 = vector.broadcast %427 : vector<1x384xf32> to vector<8x384xf32>
    %429 = arith.addf %426, %428 : vector<8x384xf32>
    %c0_154 = arith.constant 0 : index
    %c0_155 = arith.constant 0 : index
    %430 = vector.load %arg8[%c0_154, %c0_155] : memref<128x384xf32, #tpu.memory_space<vmem>>, vector<128x384xf32>
    %cst_156 = arith.constant dense<0.000000e+00> : vector<8x384xf32>
    %431 = tpu.matmul %384, %430, %cst_156 {dimension_numbers = #tpu.dot_dimension_numbers<[1], [0], [0], [1], [0, 0, 1, 1], [], []>} : vector<8x128xf32>, vector<128x384xf32>, vector<8x384xf32> -> vector<8x384xf32>
    %c0_157 = arith.constant 0 : index
    %c0_158 = arith.constant 0 : index
    %432 = vector.load %arg9[%c0_157, %c0_158] : memref<1x384xf32, #tpu.memory_space<vmem>>, vector<1x384xf32>
    %433 = vector.broadcast %432 : vector<1x384xf32> to vector<8x384xf32>
    %434 = arith.addf %431, %433 : vector<8x384xf32>
    %435 = vector.extract_strided_slice %429 {offsets = [0, 0], sizes = [8, 128], strides = [1, 1]} : vector<8x384xf32> to vector<8x128xf32>
    %436 = vector.extract_strided_slice %434 {offsets = [0, 0], sizes = [8, 128], strides = [1, 1]} : vector<8x384xf32> to vector<8x128xf32>
    %437 = arith.addf %435, %436 : vector<8x128xf32>
    %438 = arith.negf %437 : vector<8x128xf32>
    %439 = math.exp %438 : vector<8x128xf32>
    %cst_159 = arith.constant 1.000000e+00 : f32
    %440 = vector.broadcast %cst_159 : f32 to vector<8x128xf32>
    %441 = arith.addf %440, %439 : vector<8x128xf32>
    %442 = arith.divf %440, %441 : vector<8x128xf32>
    %443 = vector.extract_strided_slice %429 {offsets = [0, 128], sizes = [8, 128], strides = [1, 1]} : vector<8x384xf32> to vector<8x128xf32>
    %444 = vector.extract_strided_slice %434 {offsets = [0, 128], sizes = [8, 128], strides = [1, 1]} : vector<8x384xf32> to vector<8x128xf32>
    %445 = arith.addf %443, %444 : vector<8x128xf32>
    %446 = arith.negf %445 : vector<8x128xf32>
    %447 = math.exp %446 : vector<8x128xf32>
    %cst_160 = arith.constant 1.000000e+00 : f32
    %448 = vector.broadcast %cst_160 : f32 to vector<8x128xf32>
    %449 = arith.addf %448, %447 : vector<8x128xf32>
    %450 = arith.divf %448, %449 : vector<8x128xf32>
    %451 = vector.extract_strided_slice %429 {offsets = [0, 256], sizes = [8, 128], strides = [1, 1]} : vector<8x384xf32> to vector<8x128xf32>
    %452 = vector.extract_strided_slice %434 {offsets = [0, 256], sizes = [8, 128], strides = [1, 1]} : vector<8x384xf32> to vector<8x128xf32>
    %453 = arith.mulf %442, %452 : vector<8x128xf32>
    %454 = arith.addf %451, %453 : vector<8x128xf32>
    %455 = math.tanh %454 : vector<8x128xf32>
    %cst_161 = arith.constant 1.000000e+00 : f32
    %456 = vector.broadcast %cst_161 : f32 to vector<8x128xf32>
    %457 = arith.subf %456, %450 : vector<8x128xf32>
    %458 = arith.mulf %457, %455 : vector<8x128xf32>
    %459 = arith.mulf %450, %384 : vector<8x128xf32>
    %460 = arith.addf %458, %459 : vector<8x128xf32>
    %c0_i32_162 = arith.constant 0 : i32
    %461 = arith.addi %c0_i32_162, %c5_i32 : i32
    %462 = arith.index_cast %461 : i32 to index
    %c0_163 = arith.constant 0 : index
    %c0_164 = arith.constant 0 : index
    %463 = vector.load %arg12[%462, %c0_163, %c0_164] : memref<8x8x128xf32, #tpu.memory_space<vmem>>, vector<1x8x128xf32>
    %464 = vector.shape_cast %463 : vector<1x8x128xf32> to vector<8x128xf32>
    %465 = vector.shape_cast %460 : vector<8x128xf32> to vector<1x8x128xf32>
    tpu.vector_store %arg12[%462, %c0_163, %c0_164], %465 {strides = array<i32>} : memref<8x8x128xf32, #tpu.memory_space<vmem>>, vector<1x8x128xf32>,
    %c6_i32 = arith.constant 6 : i32
    %c8_i32_165 = arith.constant 8 : i32
    %466 = arith.muli %c6_i32, %c8_i32_165 : i32
    %467 = tpu.assume_multiple %466, 8 : i32
    %468 = arith.index_cast %467 : i32 to index
    %c0_166 = arith.constant 0 : index
    %469 = vector.load %arg14[%468, %c0_166] : memref<64x384xf32, #tpu.memory_space<vmem>>, vector<8x384xf32>
    %c0_167 = arith.constant 0 : index
    %c0_168 = arith.constant 0 : index
    %470 = vector.load %arg4[%c0_167, %c0_168] : memref<128x384xf32, #tpu.memory_space<vmem>>, vector<128x384xf32>
    %cst_169 = arith.constant dense<0.000000e+00> : vector<8x384xf32>
    %471 = tpu.matmul %424, %470, %cst_169 {dimension_numbers = #tpu.dot_dimension_numbers<[1], [0], [0], [1], [0, 0, 1, 1], [], []>} : vector<8x128xf32>, vector<128x384xf32>, vector<8x384xf32> -> vector<8x384xf32>
    %c0_170 = arith.constant 0 : index
    %c0_171 = arith.constant 0 : index
    %472 = vector.load %arg5[%c0_170, %c0_171] : memref<1x384xf32, #tpu.memory_space<vmem>>, vector<1x384xf32>
    %473 = vector.broadcast %472 : vector<1x384xf32> to vector<8x384xf32>
    %474 = arith.addf %471, %473 : vector<8x384xf32>
    %475 = vector.extract_strided_slice %469 {offsets = [0, 0], sizes = [8, 128], strides = [1, 1]} : vector<8x384xf32> to vector<8x128xf32>
    %476 = vector.extract_strided_slice %474 {offsets = [0, 0], sizes = [8, 128], strides = [1, 1]} : vector<8x384xf32> to vector<8x128xf32>
    %477 = arith.addf %475, %476 : vector<8x128xf32>
    %478 = arith.negf %477 : vector<8x128xf32>
    %479 = math.exp %478 : vector<8x128xf32>
    %cst_172 = arith.constant 1.000000e+00 : f32
    %480 = vector.broadcast %cst_172 : f32 to vector<8x128xf32>
    %481 = arith.addf %480, %479 : vector<8x128xf32>
    %482 = arith.divf %480, %481 : vector<8x128xf32>
    %483 = vector.extract_strided_slice %469 {offsets = [0, 128], sizes = [8, 128], strides = [1, 1]} : vector<8x384xf32> to vector<8x128xf32>
    %484 = vector.extract_strided_slice %474 {offsets = [0, 128], sizes = [8, 128], strides = [1, 1]} : vector<8x384xf32> to vector<8x128xf32>
    %485 = arith.addf %483, %484 : vector<8x128xf32>
    %486 = arith.negf %485 : vector<8x128xf32>
    %487 = math.exp %486 : vector<8x128xf32>
    %cst_173 = arith.constant 1.000000e+00 : f32
    %488 = vector.broadcast %cst_173 : f32 to vector<8x128xf32>
    %489 = arith.addf %488, %487 : vector<8x128xf32>
    %490 = arith.divf %488, %489 : vector<8x128xf32>
    %491 = vector.extract_strided_slice %469 {offsets = [0, 256], sizes = [8, 128], strides = [1, 1]} : vector<8x384xf32> to vector<8x128xf32>
    %492 = vector.extract_strided_slice %474 {offsets = [0, 256], sizes = [8, 128], strides = [1, 1]} : vector<8x384xf32> to vector<8x128xf32>
    %493 = arith.mulf %482, %492 : vector<8x128xf32>
    %494 = arith.addf %491, %493 : vector<8x128xf32>
    %495 = math.tanh %494 : vector<8x128xf32>
    %cst_174 = arith.constant 1.000000e+00 : f32
    %496 = vector.broadcast %cst_174 : f32 to vector<8x128xf32>
    %497 = arith.subf %496, %490 : vector<8x128xf32>
    %498 = arith.mulf %497, %495 : vector<8x128xf32>
    %499 = arith.mulf %490, %424 : vector<8x128xf32>
    %500 = arith.addf %498, %499 : vector<8x128xf32>
    %c0_175 = arith.constant 0 : index
    %c0_176 = arith.constant 0 : index
    %501 = vector.load %arg6[%c0_175, %c0_176] : memref<128x384xf32, #tpu.memory_space<vmem>>, vector<128x384xf32>
    %cst_177 = arith.constant dense<0.000000e+00> : vector<8x384xf32>
    %502 = tpu.matmul %500, %501, %cst_177 {dimension_numbers = #tpu.dot_dimension_numbers<[1], [0], [0], [1], [0, 0, 1, 1], [], []>} : vector<8x128xf32>, vector<128x384xf32>, vector<8x384xf32> -> vector<8x384xf32>
    %c0_178 = arith.constant 0 : index
    %c0_179 = arith.constant 0 : index
    %503 = vector.load %arg7[%c0_178, %c0_179] : memref<1x384xf32, #tpu.memory_space<vmem>>, vector<1x384xf32>
    %504 = vector.broadcast %503 : vector<1x384xf32> to vector<8x384xf32>
    %505 = arith.addf %502, %504 : vector<8x384xf32>
    %c0_180 = arith.constant 0 : index
    %c0_181 = arith.constant 0 : index
    %506 = vector.load %arg8[%c0_180, %c0_181] : memref<128x384xf32, #tpu.memory_space<vmem>>, vector<128x384xf32>
    %cst_182 = arith.constant dense<0.000000e+00> : vector<8x384xf32>
    %507 = tpu.matmul %460, %506, %cst_182 {dimension_numbers = #tpu.dot_dimension_numbers<[1], [0], [0], [1], [0, 0, 1, 1], [], []>} : vector<8x128xf32>, vector<128x384xf32>, vector<8x384xf32> -> vector<8x384xf32>
    %c0_183 = arith.constant 0 : index
    %c0_184 = arith.constant 0 : index
    %508 = vector.load %arg9[%c0_183, %c0_184] : memref<1x384xf32, #tpu.memory_space<vmem>>, vector<1x384xf32>
    %509 = vector.broadcast %508 : vector<1x384xf32> to vector<8x384xf32>
    %510 = arith.addf %507, %509 : vector<8x384xf32>
    %511 = vector.extract_strided_slice %505 {offsets = [0, 0], sizes = [8, 128], strides = [1, 1]} : vector<8x384xf32> to vector<8x128xf32>
    %512 = vector.extract_strided_slice %510 {offsets = [0, 0], sizes = [8, 128], strides = [1, 1]} : vector<8x384xf32> to vector<8x128xf32>
    %513 = arith.addf %511, %512 : vector<8x128xf32>
    %514 = arith.negf %513 : vector<8x128xf32>
    %515 = math.exp %514 : vector<8x128xf32>
    %cst_185 = arith.constant 1.000000e+00 : f32
    %516 = vector.broadcast %cst_185 : f32 to vector<8x128xf32>
    %517 = arith.addf %516, %515 : vector<8x128xf32>
    %518 = arith.divf %516, %517 : vector<8x128xf32>
    %519 = vector.extract_strided_slice %505 {offsets = [0, 128], sizes = [8, 128], strides = [1, 1]} : vector<8x384xf32> to vector<8x128xf32>
    %520 = vector.extract_strided_slice %510 {offsets = [0, 128], sizes = [8, 128], strides = [1, 1]} : vector<8x384xf32> to vector<8x128xf32>
    %521 = arith.addf %519, %520 : vector<8x128xf32>
    %522 = arith.negf %521 : vector<8x128xf32>
    %523 = math.exp %522 : vector<8x128xf32>
    %cst_186 = arith.constant 1.000000e+00 : f32
    %524 = vector.broadcast %cst_186 : f32 to vector<8x128xf32>
    %525 = arith.addf %524, %523 : vector<8x128xf32>
    %526 = arith.divf %524, %525 : vector<8x128xf32>
    %527 = vector.extract_strided_slice %505 {offsets = [0, 256], sizes = [8, 128], strides = [1, 1]} : vector<8x384xf32> to vector<8x128xf32>
    %528 = vector.extract_strided_slice %510 {offsets = [0, 256], sizes = [8, 128], strides = [1, 1]} : vector<8x384xf32> to vector<8x128xf32>
    %529 = arith.mulf %518, %528 : vector<8x128xf32>
    %530 = arith.addf %527, %529 : vector<8x128xf32>
    %531 = math.tanh %530 : vector<8x128xf32>
    %cst_187 = arith.constant 1.000000e+00 : f32
    %532 = vector.broadcast %cst_187 : f32 to vector<8x128xf32>
    %533 = arith.subf %532, %526 : vector<8x128xf32>
    %534 = arith.mulf %533, %531 : vector<8x128xf32>
    %535 = arith.mulf %526, %460 : vector<8x128xf32>
    %536 = arith.addf %534, %535 : vector<8x128xf32>
    %c0_i32_188 = arith.constant 0 : i32
    %537 = arith.addi %c0_i32_188, %c6_i32 : i32
    %538 = arith.index_cast %537 : i32 to index
    %c0_189 = arith.constant 0 : index
    %c0_190 = arith.constant 0 : index
    %539 = vector.load %arg12[%538, %c0_189, %c0_190] : memref<8x8x128xf32, #tpu.memory_space<vmem>>, vector<1x8x128xf32>
    %540 = vector.shape_cast %539 : vector<1x8x128xf32> to vector<8x128xf32>
    %541 = vector.shape_cast %536 : vector<8x128xf32> to vector<1x8x128xf32>
    tpu.vector_store %arg12[%538, %c0_189, %c0_190], %541 {strides = array<i32>} : memref<8x8x128xf32, #tpu.memory_space<vmem>>, vector<1x8x128xf32>,
    %c7_i32 = arith.constant 7 : i32
    %c8_i32_191 = arith.constant 8 : i32
    %542 = arith.muli %c7_i32, %c8_i32_191 : i32
    %543 = tpu.assume_multiple %542, 8 : i32
    %544 = arith.index_cast %543 : i32 to index
    %c0_192 = arith.constant 0 : index
    %545 = vector.load %arg14[%544, %c0_192] : memref<64x384xf32, #tpu.memory_space<vmem>>, vector<8x384xf32>
    %c0_193 = arith.constant 0 : index
    %c0_194 = arith.constant 0 : index
    %546 = vector.load %arg4[%c0_193, %c0_194] : memref<128x384xf32, #tpu.memory_space<vmem>>, vector<128x384xf32>
    %cst_195 = arith.constant dense<0.000000e+00> : vector<8x384xf32>
    %547 = tpu.matmul %500, %546, %cst_195 {dimension_numbers = #tpu.dot_dimension_numbers<[1], [0], [0], [1], [0, 0, 1, 1], [], []>} : vector<8x128xf32>, vector<128x384xf32>, vector<8x384xf32> -> vector<8x384xf32>
    %c0_196 = arith.constant 0 : index
    %c0_197 = arith.constant 0 : index
    %548 = vector.load %arg5[%c0_196, %c0_197] : memref<1x384xf32, #tpu.memory_space<vmem>>, vector<1x384xf32>
    %549 = vector.broadcast %548 : vector<1x384xf32> to vector<8x384xf32>
    %550 = arith.addf %547, %549 : vector<8x384xf32>
    %551 = vector.extract_strided_slice %545 {offsets = [0, 0], sizes = [8, 128], strides = [1, 1]} : vector<8x384xf32> to vector<8x128xf32>
    %552 = vector.extract_strided_slice %550 {offsets = [0, 0], sizes = [8, 128], strides = [1, 1]} : vector<8x384xf32> to vector<8x128xf32>
    %553 = arith.addf %551, %552 : vector<8x128xf32>
    %554 = arith.negf %553 : vector<8x128xf32>
    %555 = math.exp %554 : vector<8x128xf32>
    %cst_198 = arith.constant 1.000000e+00 : f32
    %556 = vector.broadcast %cst_198 : f32 to vector<8x128xf32>
    %557 = arith.addf %556, %555 : vector<8x128xf32>
    %558 = arith.divf %556, %557 : vector<8x128xf32>
    %559 = vector.extract_strided_slice %545 {offsets = [0, 128], sizes = [8, 128], strides = [1, 1]} : vector<8x384xf32> to vector<8x128xf32>
    %560 = vector.extract_strided_slice %550 {offsets = [0, 128], sizes = [8, 128], strides = [1, 1]} : vector<8x384xf32> to vector<8x128xf32>
    %561 = arith.addf %559, %560 : vector<8x128xf32>
    %562 = arith.negf %561 : vector<8x128xf32>
    %563 = math.exp %562 : vector<8x128xf32>
    %cst_199 = arith.constant 1.000000e+00 : f32
    %564 = vector.broadcast %cst_199 : f32 to vector<8x128xf32>
    %565 = arith.addf %564, %563 : vector<8x128xf32>
    %566 = arith.divf %564, %565 : vector<8x128xf32>
    %567 = vector.extract_strided_slice %545 {offsets = [0, 256], sizes = [8, 128], strides = [1, 1]} : vector<8x384xf32> to vector<8x128xf32>
    %568 = vector.extract_strided_slice %550 {offsets = [0, 256], sizes = [8, 128], strides = [1, 1]} : vector<8x384xf32> to vector<8x128xf32>
    %569 = arith.mulf %558, %568 : vector<8x128xf32>
    %570 = arith.addf %567, %569 : vector<8x128xf32>
    %571 = math.tanh %570 : vector<8x128xf32>
    %cst_200 = arith.constant 1.000000e+00 : f32
    %572 = vector.broadcast %cst_200 : f32 to vector<8x128xf32>
    %573 = arith.subf %572, %566 : vector<8x128xf32>
    %574 = arith.mulf %573, %571 : vector<8x128xf32>
    %575 = arith.mulf %566, %500 : vector<8x128xf32>
    %576 = arith.addf %574, %575 : vector<8x128xf32>
    %c0_201 = arith.constant 0 : index
    %c0_202 = arith.constant 0 : index
    %577 = vector.load %arg6[%c0_201, %c0_202] : memref<128x384xf32, #tpu.memory_space<vmem>>, vector<128x384xf32>
    %cst_203 = arith.constant dense<0.000000e+00> : vector<8x384xf32>
    %578 = tpu.matmul %576, %577, %cst_203 {dimension_numbers = #tpu.dot_dimension_numbers<[1], [0], [0], [1], [0, 0, 1, 1], [], []>} : vector<8x128xf32>, vector<128x384xf32>, vector<8x384xf32> -> vector<8x384xf32>
    %c0_204 = arith.constant 0 : index
    %c0_205 = arith.constant 0 : index
    %579 = vector.load %arg7[%c0_204, %c0_205] : memref<1x384xf32, #tpu.memory_space<vmem>>, vector<1x384xf32>
    %580 = vector.broadcast %579 : vector<1x384xf32> to vector<8x384xf32>
    %581 = arith.addf %578, %580 : vector<8x384xf32>
    %c0_206 = arith.constant 0 : index
    %c0_207 = arith.constant 0 : index
    %582 = vector.load %arg8[%c0_206, %c0_207] : memref<128x384xf32, #tpu.memory_space<vmem>>, vector<128x384xf32>
    %cst_208 = arith.constant dense<0.000000e+00> : vector<8x384xf32>
    %583 = tpu.matmul %536, %582, %cst_208 {dimension_numbers = #tpu.dot_dimension_numbers<[1], [0], [0], [1], [0, 0, 1, 1], [], []>} : vector<8x128xf32>, vector<128x384xf32>, vector<8x384xf32> -> vector<8x384xf32>
    %c0_209 = arith.constant 0 : index
    %c0_210 = arith.constant 0 : index
    %584 = vector.load %arg9[%c0_209, %c0_210] : memref<1x384xf32, #tpu.memory_space<vmem>>, vector<1x384xf32>
    %585 = vector.broadcast %584 : vector<1x384xf32> to vector<8x384xf32>
    %586 = arith.addf %583, %585 : vector<8x384xf32>
    %587 = vector.extract_strided_slice %581 {offsets = [0, 0], sizes = [8, 128], strides = [1, 1]} : vector<8x384xf32> to vector<8x128xf32>
    %588 = vector.extract_strided_slice %586 {offsets = [0, 0], sizes = [8, 128], strides = [1, 1]} : vector<8x384xf32> to vector<8x128xf32>
    %589 = arith.addf %587, %588 : vector<8x128xf32>
    %590 = arith.negf %589 : vector<8x128xf32>
    %591 = math.exp %590 : vector<8x128xf32>
    %cst_211 = arith.constant 1.000000e+00 : f32
    %592 = vector.broadcast %cst_211 : f32 to vector<8x128xf32>
    %593 = arith.addf %592, %591 : vector<8x128xf32>
    %594 = arith.divf %592, %593 : vector<8x128xf32>
    %595 = vector.extract_strided_slice %581 {offsets = [0, 128], sizes = [8, 128], strides = [1, 1]} : vector<8x384xf32> to vector<8x128xf32>
    %596 = vector.extract_strided_slice %586 {offsets = [0, 128], sizes = [8, 128], strides = [1, 1]} : vector<8x384xf32> to vector<8x128xf32>
    %597 = arith.addf %595, %596 : vector<8x128xf32>
    %598 = arith.negf %597 : vector<8x128xf32>
    %599 = math.exp %598 : vector<8x128xf32>
    %cst_212 = arith.constant 1.000000e+00 : f32
    %600 = vector.broadcast %cst_212 : f32 to vector<8x128xf32>
    %601 = arith.addf %600, %599 : vector<8x128xf32>
    %602 = arith.divf %600, %601 : vector<8x128xf32>
    %603 = vector.extract_strided_slice %581 {offsets = [0, 256], sizes = [8, 128], strides = [1, 1]} : vector<8x384xf32> to vector<8x128xf32>
    %604 = vector.extract_strided_slice %586 {offsets = [0, 256], sizes = [8, 128], strides = [1, 1]} : vector<8x384xf32> to vector<8x128xf32>
    %605 = arith.mulf %594, %604 : vector<8x128xf32>
    %606 = arith.addf %603, %605 : vector<8x128xf32>
    %607 = math.tanh %606 : vector<8x128xf32>
    %cst_213 = arith.constant 1.000000e+00 : f32
    %608 = vector.broadcast %cst_213 : f32 to vector<8x128xf32>
    %609 = arith.subf %608, %602 : vector<8x128xf32>
    %610 = arith.mulf %609, %607 : vector<8x128xf32>
    %611 = arith.mulf %602, %536 : vector<8x128xf32>
    %612 = arith.addf %610, %611 : vector<8x128xf32>
    %c0_i32_214 = arith.constant 0 : i32
    %613 = arith.addi %c0_i32_214, %c7_i32 : i32
    %614 = arith.index_cast %613 : i32 to index
    %c0_215 = arith.constant 0 : index
    %c0_216 = arith.constant 0 : index
    %615 = vector.load %arg12[%614, %c0_215, %c0_216] : memref<8x8x128xf32, #tpu.memory_space<vmem>>, vector<1x8x128xf32>
    %616 = vector.shape_cast %615 : vector<1x8x128xf32> to vector<8x128xf32>
    %617 = vector.shape_cast %612 : vector<8x128xf32> to vector<1x8x128xf32>
    tpu.vector_store %arg12[%614, %c0_215, %c0_216], %617 {strides = array<i32>} : memref<8x8x128xf32, #tpu.memory_space<vmem>>, vector<1x8x128xf32>,
    %c8_i32_217 = arith.constant 8 : i32
    %618 = tpu.concatenate %576, %612 in 1 : vector<8x128xf32>, vector<8x128xf32> -> vector<8x256xf32>
    %c0_218 = arith.constant 0 : index
    %c0_219 = arith.constant 0 : index
    %619 = vector.load %arg10[%c0_218, %c0_219] : memref<256x128xf32, #tpu.memory_space<vmem>>, vector<256x128xf32>
    %cst_220 = arith.constant dense<0.000000e+00> : vector<8x128xf32>
    %620 = tpu.matmul %618, %619, %cst_220 {dimension_numbers = #tpu.dot_dimension_numbers<[1], [0], [0], [1], [0, 0, 1, 1], [], []>} : vector<8x256xf32>, vector<256x128xf32>, vector<8x128xf32> -> vector<8x128xf32>
    %c0_221 = arith.constant 0 : index
    %c0_222 = arith.constant 0 : index
    %621 = vector.load %arg11[%c0_221, %c0_222] : memref<1x128xf32, #tpu.memory_space<vmem>>, vector<1x128xf32>
    %622 = vector.broadcast %621 : vector<1x128xf32> to vector<8x128xf32>
    %623 = arith.addf %620, %622 : vector<8x128xf32>
    %624 = math.tanh %623 : vector<8x128xf32>
    %c0_223 = arith.constant 0 : index
    %c0_224 = arith.constant 0 : index
    %625 = vector.load %arg13[%c0_223, %c0_224] : memref<8x128xf32, #tpu.memory_space<vmem>>, vector<8x128xf32>
    tpu.vector_store %arg13[%c0_223, %c0_224], %624 {strides = array<i32>} : memref<8x128xf32, #tpu.memory_space<vmem>>, vector<8x128xf32>,
    return
  }
  func.func @transform_0(%arg0: i32) -> (i32, i32, i32) {
    %c0_i32 = arith.constant 0 : i32
    %c0_i32_0 = arith.constant 0 : i32
    %c0_i32_1 = arith.constant 0 : i32
    return %c0_i32, %arg0, %c0_i32_0 : i32, i32, i32
  }
  func.func @transform_1(%arg0: i32) -> (i32, i32) {
    %c0_i32 = arith.constant 0 : i32
    %c0_i32_0 = arith.constant 0 : i32
    %c0_i32_1 = arith.constant 0 : i32
    return %c0_i32, %c0_i32_0 : i32, i32
  }
  func.func @transform_2(%arg0: i32) -> (i32, i32) {
    %c0_i32 = arith.constant 0 : i32
    %c0_i32_0 = arith.constant 0 : i32
    %c0_i32_1 = arith.constant 0 : i32
    return %c0_i32, %c0_i32_0 : i32, i32
  }
  func.func @transform_3(%arg0: i32) -> (i32, i32) {
    %c0_i32 = arith.constant 0 : i32
    %c0_i32_0 = arith.constant 0 : i32
    %c0_i32_1 = arith.constant 0 : i32
    return %c0_i32, %c0_i32_0 : i32, i32
  }
  func.func @transform_4(%arg0: i32) -> (i32, i32) {
    %c0_i32 = arith.constant 0 : i32
    %c0_i32_0 = arith.constant 0 : i32
    %c0_i32_1 = arith.constant 0 : i32
    return %c0_i32, %c0_i32_0 : i32, i32
  }
  func.func @transform_5(%arg0: i32) -> (i32, i32) {
    %c0_i32 = arith.constant 0 : i32
    %c0_i32_0 = arith.constant 0 : i32
    %c0_i32_1 = arith.constant 0 : i32
    return %c0_i32, %c0_i32_0 : i32, i32
  }
  func.func @transform_6(%arg0: i32) -> (i32, i32) {
    %c0_i32 = arith.constant 0 : i32
    %c0_i32_0 = arith.constant 0 : i32
    %c0_i32_1 = arith.constant 0 : i32
    return %c0_i32, %c0_i32_0 : i32, i32
  }
  func.func @transform_7(%arg0: i32) -> (i32, i32) {
    %c0_i32 = arith.constant 0 : i32
    %c0_i32_0 = arith.constant 0 : i32
    %c0_i32_1 = arith.constant 0 : i32
    return %c0_i32, %c0_i32_0 : i32, i32
  }
  func.func @transform_8(%arg0: i32) -> (i32, i32) {
    %c0_i32 = arith.constant 0 : i32
    %c0_i32_0 = arith.constant 0 : i32
    %c0_i32_1 = arith.constant 0 : i32
    return %c0_i32, %c0_i32_0 : i32, i32
  }
  func.func @transform_9(%arg0: i32) -> (i32, i32) {
    %c0_i32 = arith.constant 0 : i32
    %c0_i32_0 = arith.constant 0 : i32
    %c0_i32_1 = arith.constant 0 : i32
    return %c0_i32, %c0_i32_0 : i32, i32
  }
  func.func @transform_10(%arg0: i32) -> (i32, i32) {
    %c0_i32 = arith.constant 0 : i32
    %c0_i32_0 = arith.constant 0 : i32
    %c0_i32_1 = arith.constant 0 : i32
    return %c0_i32, %c0_i32_0 : i32, i32
  }
  func.func @transform_11(%arg0: i32) -> (i32, i32, i32) {
    %c0_i32 = arith.constant 0 : i32
    %c0_i32_0 = arith.constant 0 : i32
    %c0_i32_1 = arith.constant 0 : i32
    return %c0_i32, %arg0, %c0_i32_0 : i32, i32, i32
  }
  func.func @transform_12(%arg0: i32) -> (i32, i32) {
    %c0_i32 = arith.constant 0 : i32
    %c0_i32_0 = arith.constant 0 : i32
    return %arg0, %c0_i32 : i32, i32
  }
}

</mosaic_0001>

<llo_original>
// kernel: encoder_forward.1
$region0: #{encoder_forward.1}
  #allocation0 [shape = 'u32[]', space=smem, size = 0x4, offset = 0x4, fixed_abs, tag = 'smem constant byte address 0x4 - core index']
  #allocation1 [shape = 'u32[144,128]{1,0:T(1,128)}', space=vmem, size = 0x12000, scoped, tag = 'internal scratch']
  #allocation2 [shape = 'f32[64,384]{1,0:T(8,128)}', space=vmem, size = 0x18000, scoped, tag = 'scratch operand']
  %s0 = inlined_call_operand.vmem [shape: f32[8,8,128], index: 0, kind: input, shape index: {}]
  %s1 = inlined_call_operand.vmem [shape: f32[128,384], index: 1, kind: input, shape index: {}]
  %s2 = inlined_call_operand.vmem [shape: f32[1,384], index: 2, kind: input, shape index: {}]
  %s3 = inlined_call_operand.vmem [shape: f32[128,384], index: 3, kind: input, shape index: {}]
  %s4 = inlined_call_operand.vmem [shape: f32[1,384], index: 4, kind: input, shape index: {}]
  %s5 = inlined_call_operand.vmem [shape: f32[128,384], index: 5, kind: input, shape index: {}]
  %s6 = inlined_call_operand.vmem [shape: f32[1,384], index: 6, kind: input, shape index: {}]
  %s7 = inlined_call_operand.vmem [shape: f32[128,384], index: 7, kind: input, shape index: {}]
  %s8 = inlined_call_operand.vmem [shape: f32[1,384], index: 8, kind: input, shape index: {}]
  %s9 = inlined_call_operand.vmem [shape: f32[256,128], index: 9, kind: input, shape index: {}]
  %s10 = inlined_call_operand.vmem [shape: f32[1,128], index: 10, kind: input, shape index: {}]
  %s11 = inlined_call_operand.vmem [shape: f32[8,8,128], index: 11, kind: output, shape index: {0}]
  %s12 = inlined_call_operand.vmem [shape: f32[8,128], index: 12, kind: output, shape index: {1}]
  %13 = xla_tuple %s11, %s12
  %s14 = sld [smem:[#allocation0]]
  $region62: #{encoder_forward.1} parent=0
    _
  %s16 = ssub.s32 1, %s14
  %s17 = scalar_select 0, %s16, %s14
  // Predicated region
  $region2: #{encoder_forward.1} parent=0 // pred_check
    _
  $region3: #{encoder_forward.1} parent=0 // pred_check_branch
    %19 = sbr.rel (0) target = $region5
  $region4: #{encoder_forward.1} parent=0 // pred_region
    _
  $region5: #{encoder_forward.1} parent=0 // pred_fallthru
    _
  // Predicated region
  $region6: #{encoder_forward.1} parent=0 // pred_check
    _
  $region7: #{encoder_forward.1} parent=0 // pred_check_branch
    %21 = sbr.rel (0) target = $region9
  $region8: #{encoder_forward.1} parent=0 // pred_region
    _
  $region9: #{encoder_forward.1} parent=0 // pred_fallthru
    _
  // Predicated region
  $region10: #{encoder_forward.1} parent=0 // pred_check
    _
  $region11: #{encoder_forward.1} parent=0 // pred_check_branch
    %23 = sbr.rel (0) target = $region13
  $region12: #{encoder_forward.1} parent=0 // pred_region
    _
  $region13: #{encoder_forward.1} parent=0 // pred_fallthru
    _
  // Predicated region
  $region14: #{encoder_forward.1} parent=0 // pred_check
    _
  $region15: #{encoder_forward.1} parent=0 // pred_check_branch
    %25 = sbr.rel (0) target = $region17
  $region16: #{encoder_forward.1} parent=0 // pred_region
    _
  $region17: #{encoder_forward.1} parent=0 // pred_fallthru
    _
  // Predicated region
  $region18: #{encoder_forward.1} parent=0 // pred_check
    _
  $region19: #{encoder_forward.1} parent=0 // pred_check_branch
    %27 = sbr.rel (0) target = $region21
  $region20: #{encoder_forward.1} parent=0 // pred_region
    _
  $region21: #{encoder_forward.1} parent=0 // pred_fallthru
    _
  // Predicated region
  $region22: #{encoder_forward.1} parent=0 // pred_check
    _
  $region23: #{encoder_forward.1} parent=0 // pred_check_branch
    %29 = sbr.rel (0) target = $region25
  $region24: #{encoder_forward.1} parent=0 // pred_region
    _
  $region25: #{encoder_forward.1} parent=0 // pred_fallthru
    _
  // Predicated region
  $region26: #{encoder_forward.1} parent=0 // pred_check
    _
  $region27: #{encoder_forward.1} parent=0 // pred_check_branch
    %31 = sbr.rel (0) target = $region29
  $region28: #{encoder_forward.1} parent=0 // pred_region
    _
  $region29: #{encoder_forward.1} parent=0 // pred_fallthru
    _
  // Predicated region
  $region30: #{encoder_forward.1} parent=0 // pred_check
    _
  $region31: #{encoder_forward.1} parent=0 // pred_check_branch
    %33 = sbr.rel (0) target = $region33
  $region32: #{encoder_forward.1} parent=0 // pred_region
    _
  $region33: #{encoder_forward.1} parent=0 // pred_fallthru
    _
  // Predicated region
  $region34: #{encoder_forward.1} parent=0 // pred_check
    _
  $region35: #{encoder_forward.1} parent=0 // pred_check_branch
    %35 = sbr.rel (0) target = $region37
  $region36: #{encoder_forward.1} parent=0 // pred_region
    _
  $region37: #{encoder_forward.1} parent=0 // pred_fallthru
    _
  // Predicated region
  $region38: #{encoder_forward.1} parent=0 // pred_check
    _
  $region39: #{encoder_forward.1} parent=0 // pred_check_branch
    %37 = sbr.rel (0) target = $region41
  $region40: #{encoder_forward.1} parent=0 // pred_region
    _
  $region41: #{encoder_forward.1} parent=0 // pred_fallthru
    _
  // Predicated region
  $region42: #{encoder_forward.1} parent=0 // pred_check
    _
  $region43: #{encoder_forward.1} parent=0 // pred_check_branch
    %39 = sbr.rel (0) target = $region45
  $region44: #{encoder_forward.1} parent=0 // pred_region
    _
  $region45: #{encoder_forward.1} parent=0 // pred_fallthru
    _
  %v40 = vld [vmem:[%s0] sm:$0xff]
  %v41 = vld [vmem:[%s0 + $0x8] sm:$0xff]
  %v42 = vld [vmem:[%s0 + $0x10] sm:$0xff]
  %v43 = vld [vmem:[%s0 + $0x18] sm:$0xff]
  %v44 = vld [vmem:[%s0 + $0x20] sm:$0xff]
  %v45 = vld [vmem:[%s0 + $0x28] sm:$0xff]
  %v46 = vld [vmem:[%s0 + $0x30] sm:$0xff]
  %v47 = vld [vmem:[%s0 + $0x38] sm:$0xff]
  %v48 = vld [vmem:[%s1] sm:$0xff]
  %v49 = vld [vmem:[%s1 + $0x8] sm:$0xff]
  %v50 = vld [vmem:[%s1 + $0x10] sm:$0xff]
  %v51 = vld [vmem:[%s1 + $0x18] sm:$0xff]
  %v52 = vld [vmem:[%s1 + $0x20] sm:$0xff]
  %v53 = vld [vmem:[%s1 + $0x28] sm:$0xff]
  %v54 = vld [vmem:[%s1 + $0x30] sm:$0xff]
  %v55 = vld [vmem:[%s1 + $0x38] sm:$0xff]
  %v56 = vld [vmem:[%s1 + $0x40] sm:$0xff]
  %v57 = vld [vmem:[%s1 + $0x48] sm:$0xff]
  %v58 = vld [vmem:[%s1 + $0x50] sm:$0xff]
  %v59 = vld [vmem:[%s1 + $0x58] sm:$0xff]
  %v60 = vld [vmem:[%s1 + $0x60] sm:$0xff]
  %v61 = vld [vmem:[%s1 + $0x68] sm:$0xff]
  %v62 = vld [vmem:[%s1 + $0x70] sm:$0xff]
  %v63 = vld [vmem:[%s1 + $0x78] sm:$0xff]
  %v64 = vld [vmem:[%s1 + $0x80] sm:$0xff]
  %v65 = vld [vmem:[%s1 + $0x88] sm:$0xff]
  %v66 = vld [vmem:[%s1 + $0x90] sm:$0xff]
  %v67 = vld [vmem:[%s1 + $0x98] sm:$0xff]
  %v68 = vld [vmem:[%s1 + $0xa0] sm:$0xff]
  %v69 = vld [vmem:[%s1 + $0xa8] sm:$0xff]
  %v70 = vld [vmem:[%s1 + $0xb0] sm:$0xff]
  %v71 = vld [vmem:[%s1 + $0xb8] sm:$0xff]
  %v72 = vld [vmem:[%s1 + $0xc0] sm:$0xff]
  %v73 = vld [vmem:[%s1 + $0xc8] sm:$0xff]
  %v74 = vld [vmem:[%s1 + $0xd0] sm:$0xff]
  %v75 = vld [vmem:[%s1 + $0xd8] sm:$0xff]
  %v76 = vld [vmem:[%s1 + $0xe0] sm:$0xff]
  %v77 = vld [vmem:[%s1 + $0xe8] sm:$0xff]
  %v78 = vld [vmem:[%s1 + $0xf0] sm:$0xff]
  %v79 = vld [vmem:[%s1 + $0xf8] sm:$0xff]
  %v80 = vld [vmem:[%s1 + $0x100] sm:$0xff]
  %v81 = vld [vmem:[%s1 + $0x108] sm:$0xff]
  %v82 = vld [vmem:[%s1 + $0x110] sm:$0xff]
  %v83 = vld [vmem:[%s1 + $0x118] sm:$0xff]
  %v84 = vld [vmem:[%s1 + $0x120] sm:$0xff]
  %v85 = vld [vmem:[%s1 + $0x128] sm:$0xff]
  %v86 = vld [vmem:[%s1 + $0x130] sm:$0xff]
  %v87 = vld [vmem:[%s1 + $0x138] sm:$0xff]
  %v88 = vld [vmem:[%s1 + $0x140] sm:$0xff]
  %v89 = vld [vmem:[%s1 + $0x148] sm:$0xff]
  %v90 = vld [vmem:[%s1 + $0x150] sm:$0xff]
  %v91 = vld [vmem:[%s1 + $0x158] sm:$0xff]
  %v92 = vld [vmem:[%s1 + $0x160] sm:$0xff]
  %v93 = vld [vmem:[%s1 + $0x168] sm:$0xff]
  %v94 = vld [vmem:[%s1 + $0x170] sm:$0xff]
  %v95 = vld [vmem:[%s1 + $0x178] sm:$0xff]
  %v96 = vld [vmem:[%s2] sm:$0x7]
  %v98 = vlaneseq
  %v99 = vshrl.u32 %v98, 7
  %v100 = vsub.s32 0, %v99
  %v101 = vrot.slane %v96, %v100
  %v102 = vlaneseq
  %v103 = vshrl.u32 %v102, 7
  %v104 = vsub.s32 1, %v103
  %v105 = vrot.slane %v96, %v104
  %v106 = vlaneseq
  %v107 = vshrl.u32 %v106, 7
  %v108 = vsub.s32 2, %v107
  %v109 = vrot.slane %v96, %v108
  %113 = vmatprep.subr.mxu0 %v94
  %114 = vmatpush1.msra.mxu0 %v93
  %115 = vmatprep.subr.mxu0 %v91
  %116 = vmatpush1.msra.mxu0 %v90
  %117 = vmatprep.subr.mxu0 %v88
  %118 = vmatpush1.msra.mxu0 %v87
  %119 = vmatprep.subr.mxu0 %v85
  %120 = vmatpush1.msra.mxu0 %v84
  %121 = vmatprep.subr.mxu0 %v82
  %122 = vmatpush1.msra.mxu0 %v81
  %123 = vmatprep.subr.mxu0 %v79
  %124 = vmatpush1.msra.mxu0 %v78
  %125 = vmatprep.subr.mxu0 %v76
  %126 = vmatpush1.msra.mxu0 %v75
  %127 = vmatprep.subr.mxu0 %v73
  %128 = vmatpush1.msra.mxu0 %v72
  %129 = vmatprep.subr.mxu0 %v70
  %130 = vmatpush1.msra.mxu0 %v69
  %131 = vmatprep.subr.mxu0 %v67
  %132 = vmatpush1.msra.mxu0 %v66
  %133 = vmatprep.subr.mxu0 %v64
  %134 = vmatpush1.msra.mxu0 %v63
  %135 = vmatprep.subr.mxu0 %v61
  %136 = vmatpush1.msra.mxu0 %v60
  %137 = vmatprep.subr.mxu0 %v58
  %138 = vmatpush1.msra.mxu0 %v57
  %139 = vmatprep.subr.mxu0 %v55
  %140 = vmatpush1.msra.mxu0 %v54
  %141 = vmatprep.subr.mxu0 %v52
  %142 = vmatpush1.msra.mxu0 %v51
  %143 = vmatprep.subr.mxu0 %v49
  %144 = vmatpush1.msra.mxu0 %v48
  %145 = vmatprep.subr.mxu0 0.0
  %146 = vmatpush2.msra.mxu0 0.0
  %147 = vmatprep.subr.mxu0 0.0
  %148 = vmatpush2.msra.mxu0 0.0
  %149 = vmatprep.subr.mxu0 0.0
  %150 = vmatpush2.msra.mxu0 0.0
  %151 = vmatprep.subr.mxu0 0.0
  %152 = vmatpush2.msra.mxu0 0.0
  %153 = vmatprep.subr.mxu0 0.0
  %154 = vmatpush2.msra.mxu0 0.0
  %155 = vmatprep.subr.mxu0 0.0
  %156 = vmatpush2.msra.mxu0 0.0
  %157 = vmatprep.subr.mxu0 0.0
  %158 = vmatpush2.msra.mxu0 0.0
  %159 = vmatprep.subr.mxu0 0.0
  %160 = vmatpush2.msra.mxu0 0.0
  %161 = vmatprep.subr.mxu0 0.0
  %162 = vmatpush2.msra.mxu0 0.0
  %163 = vmatprep.subr.mxu0 0.0
  %164 = vmatpush2.msra.mxu0 0.0
  %165 = vmatprep.subr.mxu0 0.0
  %166 = vmatpush2.msra.mxu0 0.0
  %167 = vmatprep.subr.mxu0 0.0
  %168 = vmatpush2.msra.mxu0 0.0
  %169 = vmatprep.subr.mxu0 0.0
  %170 = vmatpush2.msra.mxu0 0.0
  %171 = vmatprep.subr.mxu0 0.0
  %172 = vmatpush2.msra.mxu0 0.0
  %173 = vmatprep.subr.mxu0 0.0
  %174 = vmatpush2.msra.mxu0 0.0
  %175 = vmatprep.subr.mxu0 0.0
  %176 = vmatpush2.msra.mxu0 0.0
  %177 = vmatprep.mubr.f32.mxu0 0.0
  %178 = vmatmul.mubr.f32.gmra.mxu0 %v40
  %v179 = vpop.f32.mrf.mxu0
  %v180 = vadd.f32 %v101, %v179
  %v181 = vpop.f32.mrf.mxu0
  %v182 = vadd.f32 %v105, %v181
  %183 = vmatprep.mubr.f32.mxu0 0.0
  %184 = vmatmul.mubr.f32.gmra.mxu0 %v41
  %v185 = vpop.f32.mrf.mxu0
  %v186 = vadd.f32 %v101, %v185
  %v187 = vpop.f32.mrf.mxu0
  %v188 = vadd.f32 %v105, %v187
  %189 = vmatprep.mubr.f32.mxu0 0.0
  %190 = vmatmul.mubr.f32.gmra.mxu0 %v42
  %v191 = vpop.f32.mrf.mxu0
  %v192 = vadd.f32 %v101, %v191
  %v193 = vpop.f32.mrf.mxu0
  %v194 = vadd.f32 %v105, %v193
  %195 = vmatprep.mubr.f32.mxu0 0.0
  %196 = vmatmul.mubr.f32.gmra.mxu0 %v43
  %v197 = vpop.f32.mrf.mxu0
  %v198 = vadd.f32 %v101, %v197
  %v199 = vpop.f32.mrf.mxu0
  %v200 = vadd.f32 %v105, %v199
  %201 = vmatprep.mubr.f32.mxu0 0.0
  %202 = vmatmul.mubr.f32.gmra.mxu0 %v44
  %v203 = vpop.f32.mrf.mxu0
  %v204 = vadd.f32 %v101, %v203
  %v205 = vpop.f32.mrf.mxu0
  %v206 = vadd.f32 %v105, %v205
  %207 = vmatprep.mubr.f32.mxu0 0.0
  %208 = vmatmul.mubr.f32.gmra.mxu0 %v45
  %v209 = vpop.f32.mrf.mxu0
  %v210 = vadd.f32 %v101, %v209
  %v211 = vpop.f32.mrf.mxu0
  %v212 = vadd.f32 %v105, %v211
  %213 = vmatprep.mubr.f32.mxu0 0.0
  %214 = vmatmul.mubr.f32.gmra.mxu0 %v46
  %v215 = vpop.f32.mrf.mxu0
  %v216 = vadd.f32 %v101, %v215
  %v217 = vpop.f32.mrf.mxu0
  %v218 = vadd.f32 %v105, %v217
  %219 = vmatprep.mubr.f32.mxu0 0.0
  %220 = vmatmul.mubr.f32.gmra.mxu0 %v47
  %v221 = vpop.f32.mrf.mxu0
  %v222 = vadd.f32 %v101, %v221
  %v223 = vpop.f32.mrf.mxu0
  %v224 = vadd.f32 %v105, %v223
  %225 = vdwg.mxu0
  %226 = vmatprep.subr.mxu0 0.0
  %227 = vmatpush1.msra.mxu0 %v95
  %228 = vmatprep.subr.mxu0 0.0
  %229 = vmatpush1.msra.mxu0 %v92
  %230 = vmatprep.subr.mxu0 0.0
  %231 = vmatpush1.msra.mxu0 %v89
  %232 = vmatprep.subr.mxu0 0.0
  %233 = vmatpush1.msra.mxu0 %v86
  %234 = vmatprep.subr.mxu0 0.0
  %235 = vmatpush1.msra.mxu0 %v83
  %236 = vmatprep.subr.mxu0 0.0
  %237 = vmatpush1.msra.mxu0 %v80
  %238 = vmatprep.subr.mxu0 0.0
  %239 = vmatpush1.msra.mxu0 %v77
  %240 = vmatprep.subr.mxu0 0.0
  %241 = vmatpush1.msra.mxu0 %v74
  %242 = vmatprep.subr.mxu0 0.0
  %243 = vmatpush1.msra.mxu0 %v71
  %244 = vmatprep.subr.mxu0 0.0
  %245 = vmatpush1.msra.mxu0 %v68
  %246 = vmatprep.subr.mxu0 0.0
  %247 = vmatpush1.msra.mxu0 %v65
  %248 = vmatprep.subr.mxu0 0.0
  %249 = vmatpush1.msra.mxu0 %v62
  %250 = vmatprep.subr.mxu0 0.0
  %251 = vmatpush1.msra.mxu0 %v59
  %252 = vmatprep.subr.mxu0 0.0
  %253 = vmatpush1.msra.mxu0 %v56
  %254 = vmatprep.subr.mxu0 0.0
  %255 = vmatpush1.msra.mxu0 %v53
  %256 = vmatprep.subr.mxu0 0.0
  %257 = vmatpush1.msra.mxu0 %v50
  %258 = vmatprep.subr.mxu0 0.0
  %259 = vmatpush2.msra.mxu0 0.0
  %260 = vmatprep.subr.mxu0 0.0
  %261 = vmatpush2.msra.mxu0 0.0
  %262 = vmatprep.subr.mxu0 0.0
  %263 = vmatpush2.msra.mxu0 0.0
  %264 = vmatprep.subr.mxu0 0.0
  %265 = vmatpush2.msra.mxu0 0.0
  %266 = vmatprep.subr.mxu0 0.0
  %267 = vmatpush2.msra.mxu0 0.0
  %268 = vmatprep.subr.mxu0 0.0
  %269 = vmatpush2.msra.mxu0 0.0
  %270 = vmatprep.subr.mxu0 0.0
  %271 = vmatpush2.msra.mxu0 0.0
  %272 = vmatprep.subr.mxu0 0.0
  %273 = vmatpush2.msra.mxu0 0.0
  %274 = vmatprep.subr.mxu0 0.0
  %275 = vmatpush2.msra.mxu0 0.0
  %276 = vmatprep.subr.mxu0 0.0
  %277 = vmatpush2.msra.mxu0 0.0
  %278 = vmatprep.subr.mxu0 0.0
  %279 = vmatpush2.msra.mxu0 0.0
  %280 = vmatprep.subr.mxu0 0.0
  %281 = vmatpush2.msra.mxu0 0.0
  %282 = vmatprep.subr.mxu0 0.0
  %283 = vmatpush2.msra.mxu0 0.0
  %284 = vmatprep.subr.mxu0 0.0
  %285 = vmatpush2.msra.mxu0 0.0
  %286 = vmatprep.subr.mxu0 0.0
  %287 = vmatpush2.msra.mxu0 0.0
  %288 = vmatprep.subr.mxu0 0.0
  %289 = vmatpush2.msra.mxu0 0.0
  %290 = vmatprep.mubr.f32.mxu0 0.0
  %291 = vmatmul.mubr.f32.gmra.mxu0 %v40
  %v292 = vpop.f32.mrf.mxu0
  %v293 = vadd.f32 %v109, %v292
  %v294 = vpop.f32.mrf.mxu0
  %295 = vmatprep.mubr.f32.mxu0 0.0
  %296 = vmatmul.mubr.f32.gmra.mxu0 %v41
  %v297 = vpop.f32.mrf.mxu0
  %v298 = vadd.f32 %v109, %v297
  %v299 = vpop.f32.mrf.mxu0
  %300 = vmatprep.mubr.f32.mxu0 0.0
  %301 = vmatmul.mubr.f32.gmra.mxu0 %v42
  %v302 = vpop.f32.mrf.mxu0
  %v303 = vadd.f32 %v109, %v302
  %v304 = vpop.f32.mrf.mxu0
  %305 = vmatprep.mubr.f32.mxu0 0.0
  %306 = vmatmul.mubr.f32.gmra.mxu0 %v43
  %v307 = vpop.f32.mrf.mxu0
  %v308 = vadd.f32 %v109, %v307
  %v309 = vpop.f32.mrf.mxu0
  %310 = vmatprep.mubr.f32.mxu0 0.0
  %311 = vmatmul.mubr.f32.gmra.mxu0 %v44
  %v312 = vpop.f32.mrf.mxu0
  %v313 = vadd.f32 %v109, %v312
  %v314 = vpop.f32.mrf.mxu0
  %315 = vmatprep.mubr.f32.mxu0 0.0
  %316 = vmatmul.mubr.f32.gmra.mxu0 %v45
  %v317 = vpop.f32.mrf.mxu0
  %v318 = vadd.f32 %v109, %v317
  %v319 = vpop.f32.mrf.mxu0
  %320 = vmatprep.mubr.f32.mxu0 0.0
  %321 = vmatmul.mubr.f32.gmra.mxu0 %v46
  %v322 = vpop.f32.mrf.mxu0
  %v323 = vadd.f32 %v109, %v322
  %v324 = vpop.f32.mrf.mxu0
  %325 = vmatprep.mubr.f32.mxu0 0.0
  %326 = vmatmul.mubr.f32.gmra.mxu0 %v47
  %v327 = vpop.f32.mrf.mxu0
  %v328 = vadd.f32 %v109, %v327
  %v329 = vpop.f32.mrf.mxu0
  %330 = vdwg.mxu0
  %331 = vst [vmem:[#allocation2] sm:$0xff] %v180
  %332 = vst [vmem:[#allocation2 + $0x8] sm:$0xff] %v182
  %333 = vst [vmem:[#allocation2 + $0x10] sm:$0xff] %v293
  %334 = vst [vmem:[#allocation2 + $0x18] sm:$0xff] %v186
  %335 = vst [vmem:[#allocation2 + $0x20] sm:$0xff] %v188
  %336 = vst [vmem:[#allocation2 + $0x28] sm:$0xff] %v298
  %337 = vst [vmem:[#allocation2 + $0x30] sm:$0xff] %v192
  %338 = vst [vmem:[#allocation2 + $0x38] sm:$0xff] %v194
  %339 = vst [vmem:[#allocation2 + $0x40] sm:$0xff] %v303
  %340 = vst [vmem:[#allocation2 + $0x48] sm:$0xff] %v198
  %341 = vst [vmem:[#allocation2 + $0x50] sm:$0xff] %v200
  %342 = vst [vmem:[#allocation2 + $0x58] sm:$0xff] %v308
  %343 = vst [vmem:[#allocation2 + $0x60] sm:$0xff] %v204
  %344 = vst [vmem:[#allocation2 + $0x68] sm:$0xff] %v206
  %345 = vst [vmem:[#allocation2 + $0x70] sm:$0xff] %v313
  %346 = vst [vmem:[#allocation2 + $0x78] sm:$0xff] %v210
  %347 = vst [vmem:[#allocation2 + $0x80] sm:$0xff] %v212
  %348 = vst [vmem:[#allocation2 + $0x88] sm:$0xff] %v318
  %349 = vst [vmem:[#allocation2 + $0x90] sm:$0xff] %v216
  %350 = vst [vmem:[#allocation2 + $0x98] sm:$0xff] %v218
  %351 = vst [vmem:[#allocation2 + $0xa0] sm:$0xff] %v323
  %352 = vst [vmem:[#allocation2 + $0xa8] sm:$0xff] %v222
  %353 = vst [vmem:[#allocation2 + $0xb0] sm:$0xff] %v224
  %354 = vst [vmem:[#allocation2 + $0xb8] sm:$0xff] %v328
  %s355 = smul.u32 0, 3
  %s356 = smul.addr %s355, 8
  %s357 = scalar_lea.vmem [#allocation2], %s356
  %v358 = vld [vmem:[%s357] sm:$0xff]
  %v359 = vld [vmem:[%s357 + $0x8] sm:$0xff]
  %v360 = vld [vmem:[%s357 + $0x10] sm:$0xff]
  %v361 = vld [vmem:[%s3] sm:$0xff]
  %v362 = vld [vmem:[%s3 + $0x8] sm:$0xff]
  %v363 = vld [vmem:[%s3 + $0x10] sm:$0xff]
  %v364 = vld [vmem:[%s3 + $0x18] sm:$0xff]
  %v365 = vld [vmem:[%s3 + $0x20] sm:$0xff]
  %v366 = vld [vmem:[%s3 + $0x28] sm:$0xff]
  %v367 = vld [vmem:[%s3 + $0x30] sm:$0xff]
  %v368 = vld [vmem:[%s3 + $0x38] sm:$0xff]
  %v369 = vld [vmem:[%s3 + $0x40] sm:$0xff]
  %v370 = vld [vmem:[%s3 + $0x48] sm:$0xff]
  %v371 = vld [vmem:[%s3 + $0x50] sm:$0xff]
  %v372 = vld [vmem:[%s3 + $0x58] sm:$0xff]
  %v373 = vld [vmem:[%s3 + $0x60] sm:$0xff]
  %v374 = vld [vmem:[%s3 + $0x68] sm:$0xff]
  %v375 = vld [vmem:[%s3 + $0x70] sm:$0xff]
  %v376 = vld [vmem:[%s3 + $0x78] sm:$0xff]
  %v377 = vld [vmem:[%s3 + $0x80] sm:$0xff]
  %v378 = vld [vmem:[%s3 + $0x88] sm:$0xff]
  %v379 = vld [vmem:[%s3 + $0x90] sm:$0xff]
  %v380 = vld [vmem:[%s3 + $0x98] sm:$0xff]
  %v381 = vld [vmem:[%s3 + $0xa0] sm:$0xff]
  %v382 = vld [vmem:[%s3 + $0xa8] sm:$0xff]
  %v383 = vld [vmem:[%s3 + $0xb0] sm:$0xff]
  %v384 = vld [vmem:[%s3 + $0xb8] sm:$0xff]
  %v385 = vld [vmem:[%s3 + $0xc0] sm:$0xff]
  %v386 = vld [vmem:[%s3 + $0xc8] sm:$0xff]
  %v387 = vld [vmem:[%s3 + $0xd0] sm:$0xff]
  %v388 = vld [vmem:[%s3 + $0xd8] sm:$0xff]
  %v389 = vld [vmem:[%s3 + $0xe0] sm:$0xff]
  %v390 = vld [vmem:[%s3 + $0xe8] sm:$0xff]
  %v391 = vld [vmem:[%s3 + $0xf0] sm:$0xff]
  %v392 = vld [vmem:[%s3 + $0xf8] sm:$0xff]
  %v393 = vld [vmem:[%s3 + $0x100] sm:$0xff]
  %v394 = vld [vmem:[%s3 + $0x108] sm:$0xff]
  %v395 = vld [vmem:[%s3 + $0x110] sm:$0xff]
  %v396 = vld [vmem:[%s3 + $0x118] sm:$0xff]
  %v397 = vld [vmem:[%s3 + $0x120] sm:$0xff]
  %v398 = vld [vmem:[%s3 + $0x128] sm:$0xff]
  %v399 = vld [vmem:[%s3 + $0x130] sm:$0xff]
  %v400 = vld [vmem:[%s3 + $0x138] sm:$0xff]
  %v401 = vld [vmem:[%s3 + $0x140] sm:$0xff]
  %v402 = vld [vmem:[%s3 + $0x148] sm:$0xff]
  %v403 = vld [vmem:[%s3 + $0x150] sm:$0xff]
  %v404 = vld [vmem:[%s3 + $0x158] sm:$0xff]
  %v405 = vld [vmem:[%s3 + $0x160] sm:$0xff]
  %v406 = vld [vmem:[%s3 + $0x168] sm:$0xff]
  %v407 = vld [vmem:[%s3 + $0x170] sm:$0xff]
  %v408 = vld [vmem:[%s3 + $0x178] sm:$0xff]
  %v409 = vld [vmem:[%s4] sm:$0x7]
  %v411 = vlaneseq
  %v412 = vshrl.u32 %v411, 7
  %v413 = vsub.s32 0, %v412
  %v414 = vrot.slane %v409, %v413
  %v415 = vlaneseq
  %v416 = vshrl.u32 %v415, 7
  %v417 = vsub.s32 1, %v416
  %v418 = vrot.slane %v409, %v417
  %v419 = vlaneseq
  %v420 = vshrl.u32 %v419, 7
  %v421 = vsub.s32 2, %v420
  %v422 = vrot.slane %v409, %v421
  %426 = vmatprep.subr.mxu0 %v407
  %427 = vmatpush1.msra.mxu0 %v406
  %428 = vmatprep.subr.mxu0 %v404
  %429 = vmatpush1.msra.mxu0 %v403
  %430 = vmatprep.subr.mxu0 %v401
  %431 = vmatpush1.msra.mxu0 %v400
  %432 = vmatprep.subr.mxu0 %v398
  %433 = vmatpush1.msra.mxu0 %v397
  %434 = vmatprep.subr.mxu0 %v395
  %435 = vmatpush1.msra.mxu0 %v394
  %436 = vmatprep.subr.mxu0 %v392
  %437 = vmatpush1.msra.mxu0 %v391
  %438 = vmatprep.subr.mxu0 %v389
  %439 = vmatpush1.msra.mxu0 %v388
  %440 = vmatprep.subr.mxu0 %v386
  %441 = vmatpush1.msra.mxu0 %v385
  %442 = vmatprep.subr.mxu0 %v383
  %443 = vmatpush1.msra.mxu0 %v382
  %444 = vmatprep.subr.mxu0 %v380
  %445 = vmatpush1.msra.mxu0 %v379
  %446 = vmatprep.subr.mxu0 %v377
  %447 = vmatpush1.msra.mxu0 %v376
  %448 = vmatprep.subr.mxu0 %v374
  %449 = vmatpush1.msra.mxu0 %v373
  %450 = vmatprep.subr.mxu0 %v371
  %451 = vmatpush1.msra.mxu0 %v370
  %452 = vmatprep.subr.mxu0 %v368
  %453 = vmatpush1.msra.mxu0 %v367
  %454 = vmatprep.subr.mxu0 %v365
  %455 = vmatpush1.msra.mxu0 %v364
  %456 = vmatprep.subr.mxu0 %v362
  %457 = vmatpush1.msra.mxu0 %v361
  %458 = vmatprep.subr.mxu0 0.0
  %459 = vmatpush2.msra.mxu0 0.0
  %460 = vmatprep.subr.mxu0 0.0
  %461 = vmatpush2.msra.mxu0 0.0
  %462 = vmatprep.subr.mxu0 0.0
  %463 = vmatpush2.msra.mxu0 0.0
  %464 = vmatprep.subr.mxu0 0.0
  %465 = vmatpush2.msra.mxu0 0.0
  %466 = vmatprep.subr.mxu0 0.0
  %467 = vmatpush2.msra.mxu0 0.0
  %468 = vmatprep.subr.mxu0 0.0
  %469 = vmatpush2.msra.mxu0 0.0
  %470 = vmatprep.subr.mxu0 0.0
  %471 = vmatpush2.msra.mxu0 0.0
  %472 = vmatprep.subr.mxu0 0.0
  %473 = vmatpush2.msra.mxu0 0.0
  %474 = vmatprep.subr.mxu0 0.0
  %475 = vmatpush2.msra.mxu0 0.0
  %476 = vmatprep.subr.mxu0 0.0
  %477 = vmatpush2.msra.mxu0 0.0
  %478 = vmatprep.subr.mxu0 0.0
  %479 = vmatpush2.msra.mxu0 0.0
  %480 = vmatprep.subr.mxu0 0.0
  %481 = vmatpush2.msra.mxu0 0.0
  %482 = vmatprep.subr.mxu0 0.0
  %483 = vmatpush2.msra.mxu0 0.0
  %484 = vmatprep.subr.mxu0 0.0
  %485 = vmatpush2.msra.mxu0 0.0
  %486 = vmatprep.subr.mxu0 0.0
  %487 = vmatpush2.msra.mxu0 0.0
  %488 = vmatprep.subr.mxu0 0.0
  %489 = vmatpush2.msra.mxu0 0.0
  %490 = vmatprep.mubr.f32.mxu0 0.0
  %491 = vmatmul.mubr.f32.gmra.mxu0 0.0
  %v492 = vpop.f32.mrf.mxu0
  %v493 = vadd.f32 %v414, %v492
  %v494 = vpop.f32.mrf.mxu0
  %v495 = vadd.f32 %v418, %v494
  %496 = vdwg.mxu0
  %497 = vmatprep.subr.mxu0 0.0
  %498 = vmatpush1.msra.mxu0 %v408
  %499 = vmatprep.subr.mxu0 0.0
  %500 = vmatpush1.msra.mxu0 %v405
  %501 = vmatprep.subr.mxu0 0.0
  %502 = vmatpush1.msra.mxu0 %v402
  %503 = vmatprep.subr.mxu0 0.0
  %504 = vmatpush1.msra.mxu0 %v399
  %505 = vmatprep.subr.mxu0 0.0
  %506 = vmatpush1.msra.mxu0 %v396
  %507 = vmatprep.subr.mxu0 0.0
  %508 = vmatpush1.msra.mxu0 %v393
  %509 = vmatprep.subr.mxu0 0.0
  %510 = vmatpush1.msra.mxu0 %v390
  %511 = vmatprep.subr.mxu0 0.0
  %512 = vmatpush1.msra.mxu0 %v387
  %513 = vmatprep.subr.mxu0 0.0
  %514 = vmatpush1.msra.mxu0 %v384
  %515 = vmatprep.subr.mxu0 0.0
  %516 = vmatpush1.msra.mxu0 %v381
  %517 = vmatprep.subr.mxu0 0.0
  %518 = vmatpush1.msra.mxu0 %v378
  %519 = vmatprep.subr.mxu0 0.0
  %520 = vmatpush1.msra.mxu0 %v375
  %521 = vmatprep.subr.mxu0 0.0
  %522 = vmatpush1.msra.mxu0 %v372
  %523 = vmatprep.subr.mxu0 0.0
  %524 = vmatpush1.msra.mxu0 %v369
  %525 = vmatprep.subr.mxu0 0.0
  %526 = vmatpush1.msra.mxu0 %v366
  %527 = vmatprep.subr.mxu0 0.0
  %528 = vmatpush1.msra.mxu0 %v363
  %529 = vmatprep.subr.mxu0 0.0
  %530 = vmatpush2.msra.mxu0 0.0
  %531 = vmatprep.subr.mxu0 0.0
  %532 = vmatpush2.msra.mxu0 0.0
  %533 = vmatprep.subr.mxu0 0.0
  %534 = vmatpush2.msra.mxu0 0.0
  %535 = vmatprep.subr.mxu0 0.0
  %536 = vmatpush2.msra.mxu0 0.0
  %537 = vmatprep.subr.mxu0 0.0
  %538 = vmatpush2.msra.mxu0 0.0
  %539 = vmatprep.subr.mxu0 0.0
  %540 = vmatpush2.msra.mxu0 0.0
  %541 = vmatprep.subr.mxu0 0.0
  %542 = vmatpush2.msra.mxu0 0.0
  %543 = vmatprep.subr.mxu0 0.0
  %544 = vmatpush2.msra.mxu0 0.0
  %545 = vmatprep.subr.mxu0 0.0
  %546 = vmatpush2.msra.mxu0 0.0
  %547 = vmatprep.subr.mxu0 0.0
  %548 = vmatpush2.msra.mxu0 0.0
  %549 = vmatprep.subr.mxu0 0.0
  %550 = vmatpush2.msra.mxu0 0.0
  %551 = vmatprep.subr.mxu0 0.0
  %552 = vmatpush2.msra.mxu0 0.0
  %553 = vmatprep.subr.mxu0 0.0
  %554 = vmatpush2.msra.mxu0 0.0
  %555 = vmatprep.subr.mxu0 0.0
  %556 = vmatpush2.msra.mxu0 0.0
  %557 = vmatprep.subr.mxu0 0.0
  %558 = vmatpush2.msra.mxu0 0.0
  %559 = vmatprep.subr.mxu0 0.0
  %560 = vmatpush2.msra.mxu0 0.0
  %561 = vmatprep.mubr.f32.mxu0 0.0
  %562 = vmatmul.mubr.f32.gmra.mxu0 0.0
  %v563 = vpop.f32.mrf.mxu0
  %v564 = vadd.f32 %v422, %v563
  %v565 = vpop.f32.mrf.mxu0
  %566 = vdwg.mxu0
  %v567 = vadd.f32 %v358, %v493
  %v568 = vxor.u32 %v567, 2147483648
  %v569 = vmul.f32 %v568, 1.442695
  %v570 = vpow.pop %v569
  %v571 = vadd.f32 %v570, 1.0
  %v572 = vrcp.pop %v571
  %v573 = vmul.f32 1.0, %v572
  %v574 = vadd.f32 %v359, %v495
  %v575 = vxor.u32 %v574, 2147483648
  %v576 = vmul.f32 %v575, 1.442695
  %v577 = vpow.pop %v576
  %v578 = vadd.f32 %v577, 1.0
  %v579 = vrcp.pop %v578
  %v580 = vmul.f32 1.0, %v579
  %v581 = vmul.f32 %v573, %v564
  %v582 = vadd.f32 %v360, %v581
  %v583 = vtanh.pop %v582
  %v584 = vsub.f32 1.0, %v580
  %v585 = vmul.f32 %v584, %v583
  %v586 = vmul.f32 %v580, 0.0
  %v587 = vadd.f32 %v585, %v586
  %v588 = vld [vmem:[%s5] sm:$0xff]
  %v589 = vld [vmem:[%s5 + $0x8] sm:$0xff]
  %v590 = vld [vmem:[%s5 + $0x10] sm:$0xff]
  %v591 = vld [vmem:[%s5 + $0x18] sm:$0xff]
  %v592 = vld [vmem:[%s5 + $0x20] sm:$0xff]
  %v593 = vld [vmem:[%s5 + $0x28] sm:$0xff]
  %v594 = vld [vmem:[%s5 + $0x30] sm:$0xff]
  %v595 = vld [vmem:[%s5 + $0x38] sm:$0xff]
  %v596 = vld [vmem:[%s5 + $0x40] sm:$0xff]
  %v597 = vld [vmem:[%s5 + $0x48] sm:$0xff]
  %v598 = vld [vmem:[%s5 + $0x50] sm:$0xff]
  %v599 = vld [vmem:[%s5 + $0x58] sm:$0xff]
  %v600 = vld [vmem:[%s5 + $0x60] sm:$0xff]
  %v601 = vld [vmem:[%s5 + $0x68] sm:$0xff]
  %v602 = vld [vmem:[%s5 + $0x70] sm:$0xff]
  %v603 = vld [vmem:[%s5 + $0x78] sm:$0xff]
  %v604 = vld [vmem:[%s5 + $0x80] sm:$0xff]
  %v605 = vld [vmem:[%s5 + $0x88] sm:$0xff]
  %v606 = vld [vmem:[%s5 + $0x90] sm:$0xff]
  %v607 = vld [vmem:[%s5 + $0x98] sm:$0xff]
  %v608 = vld [vmem:[%s5 + $0xa0] sm:$0xff]
  %v609 = vld [vmem:[%s5 + $0xa8] sm:$0xff]
  %v610 = vld [vmem:[%s5 + $0xb0] sm:$0xff]
  %v611 = vld [vmem:[%s5 + $0xb8] sm:$0xff]
  %v612 = vld [vmem:[%s5 + $0xc0] sm:$0xff]
  %v613 = vld [vmem:[%s5 + $0xc8] sm:$0xff]
  %v614 = vld [vmem:[%s5 + $0xd0] sm:$0xff]
  %v615 = vld [vmem:[%s5 + $0xd8] sm:$0xff]
  %v616 = vld [vmem:[%s5 + $0xe0] sm:$0xff]
  %v617 = vld [vmem:[%s5 + $0xe8] sm:$0xff]
  %v618 = vld [vmem:[%s5 + $0xf0] sm:$0xff]
  %v619 = vld [vmem:[%s5 + $0xf8] sm:$0xff]
  %v620 = vld [vmem:[%s5 + $0x100] sm:$0xff]
  %v621 = vld [vmem:[%s5 + $0x108] sm:$0xff]
  %v622 = vld [vmem:[%s5 + $0x110] sm:$0xff]
  %v623 = vld [vmem:[%s5 + $0x118] sm:$0xff]
  %v624 = vld [vmem:[%s5 + $0x120] sm:$0xff]
  %v625 = vld [vmem:[%s5 + $0x128] sm:$0xff]
  %v626 = vld [vmem:[%s5 + $0x130] sm:$0xff]
  %v627 = vld [vmem:[%s5 + $0x138] sm:$0xff]
  %v628 = vld [vmem:[%s5 + $0x140] sm:$0xff]
  %v629 = vld [vmem:[%s5 + $0x148] sm:$0xff]
  %v630 = vld [vmem:[%s5 + $0x150] sm:$0xff]
  %v631 = vld [vmem:[%s5 + $0x158] sm:$0xff]
  %v632 = vld [vmem:[%s5 + $0x160] sm:$0xff]
  %v633 = vld [vmem:[%s5 + $0x168] sm:$0xff]
  %v634 = vld [vmem:[%s5 + $0x170] sm:$0xff]
  %v635 = vld [vmem:[%s5 + $0x178] sm:$0xff]
  %v636 = vld [vmem:[%s6] sm:$0x7]
  %v638 = vlaneseq
  %v639 = vshrl.u32 %v638, 7
  %v640 = vsub.s32 0, %v639
  %v641 = vrot.slane %v636, %v640
  %v642 = vlaneseq
  %v643 = vshrl.u32 %v642, 7
  %v644 = vsub.s32 1, %v643
  %v645 = vrot.slane %v636, %v644
  %v646 = vlaneseq
  %v647 = vshrl.u32 %v646, 7
  %v648 = vsub.s32 2, %v647
  %v649 = vrot.slane %v636, %v648
  %653 = vmatprep.subr.mxu0 %v634
  %654 = vmatpush1.msra.mxu0 %v633
  %655 = vmatprep.subr.mxu0 %v631
  %656 = vmatpush1.msra.mxu0 %v630
  %657 = vmatprep.subr.mxu0 %v628
  %658 = vmatpush1.msra.mxu0 %v627
  %659 = vmatprep.subr.mxu0 %v625
  %660 = vmatpush1.msra.mxu0 %v624
  %661 = vmatprep.subr.mxu0 %v622
  %662 = vmatpush1.msra.mxu0 %v621
  %663 = vmatprep.subr.mxu0 %v619
  %664 = vmatpush1.msra.mxu0 %v618
  %665 = vmatprep.subr.mxu0 %v616
  %666 = vmatpush1.msra.mxu0 %v615
  %667 = vmatprep.subr.mxu0 %v613
  %668 = vmatpush1.msra.mxu0 %v612
  %669 = vmatprep.subr.mxu0 %v610
  %670 = vmatpush1.msra.mxu0 %v609
  %671 = vmatprep.subr.mxu0 %v607
  %672 = vmatpush1.msra.mxu0 %v606
  %673 = vmatprep.subr.mxu0 %v604
  %674 = vmatpush1.msra.mxu0 %v603
  %675 = vmatprep.subr.mxu0 %v601
  %676 = vmatpush1.msra.mxu0 %v600
  %677 = vmatprep.subr.mxu0 %v598
  %678 = vmatpush1.msra.mxu0 %v597
  %679 = vmatprep.subr.mxu0 %v595
  %680 = vmatpush1.msra.mxu0 %v594
  %681 = vmatprep.subr.mxu0 %v592
  %682 = vmatpush1.msra.mxu0 %v591
  %683 = vmatprep.subr.mxu0 %v589
  %684 = vmatpush1.msra.mxu0 %v588
  %685 = vmatprep.subr.mxu0 0.0
  %686 = vmatpush2.msra.mxu0 0.0
  %687 = vmatprep.subr.mxu0 0.0
  %688 = vmatpush2.msra.mxu0 0.0
  %689 = vmatprep.subr.mxu0 0.0
  %690 = vmatpush2.msra.mxu0 0.0
  %691 = vmatprep.subr.mxu0 0.0
  %692 = vmatpush2.msra.mxu0 0.0
  %693 = vmatprep.subr.mxu0 0.0
  %694 = vmatpush2.msra.mxu0 0.0
  %695 = vmatprep.subr.mxu0 0.0
  %696 = vmatpush2.msra.mxu0 0.0
  %697 = vmatprep.subr.mxu0 0.0
  %698 = vmatpush2.msra.mxu0 0.0
  %699 = vmatprep.subr.mxu0 0.0
  %700 = vmatpush2.msra.mxu0 0.0
  %701 = vmatprep.subr.mxu0 0.0
  %702 = vmatpush2.msra.mxu0 0.0
  %703 = vmatprep.subr.mxu0 0.0
  %704 = vmatpush2.msra.mxu0 0.0
  %705 = vmatprep.subr.mxu0 0.0
  %706 = vmatpush2.msra.mxu0 0.0
  %707 = vmatprep.subr.mxu0 0.0
  %708 = vmatpush2.msra.mxu0 0.0
  %709 = vmatprep.subr.mxu0 0.0
  %710 = vmatpush2.msra.mxu0 0.0
  %711 = vmatprep.subr.mxu0 0.0
  %712 = vmatpush2.msra.mxu0 0.0
  %713 = vmatprep.subr.mxu0 0.0
  %714 = vmatpush2.msra.mxu0 0.0
  %715 = vmatprep.subr.mxu0 0.0
  %716 = vmatpush2.msra.mxu0 0.0
  %717 = vmatprep.mubr.f32.mxu0 0.0
  %718 = vmatmul.mubr.f32.gmra.mxu0 %v587
  %v719 = vpop.f32.mrf.mxu0
  %v720 = vadd.f32 %v641, %v719
  %v721 = vpop.f32.mrf.mxu0
  %v722 = vadd.f32 %v645, %v721
  %723 = vdwg.mxu0
  %724 = vmatprep.subr.mxu0 0.0
  %725 = vmatpush1.msra.mxu0 %v635
  %726 = vmatprep.subr.mxu0 0.0
  %727 = vmatpush1.msra.mxu0 %v632
  %728 = vmatprep.subr.mxu0 0.0
  %729 = vmatpush1.msra.mxu0 %v629
  %730 = vmatprep.subr.mxu0 0.0
  %731 = vmatpush1.msra.mxu0 %v626
  %732 = vmatprep.subr.mxu0 0.0
  %733 = vmatpush1.msra.mxu0 %v623
  %734 = vmatprep.subr.mxu0 0.0
  %735 = vmatpush1.msra.mxu0 %v620
  %736 = vmatprep.subr.mxu0 0.0
  %737 = vmatpush1.msra.mxu0 %v617
  %738 = vmatprep.subr.mxu0 0.0
  %739 = vmatpush1.msra.mxu0 %v614
  %740 = vmatprep.subr.mxu0 0.0
  %741 = vmatpush1.msra.mxu0 %v611
  %742 = vmatprep.subr.mxu0 0.0
  %743 = vmatpush1.msra.mxu0 %v608
  %744 = vmatprep.subr.mxu0 0.0
  %745 = vmatpush1.msra.mxu0 %v605
  %746 = vmatprep.subr.mxu0 0.0
  %747 = vmatpush1.msra.mxu0 %v602
  %748 = vmatprep.subr.mxu0 0.0
  %749 = vmatpush1.msra.mxu0 %v599
  %750 = vmatprep.subr.mxu0 0.0
  %751 = vmatpush1.msra.mxu0 %v596
  %752 = vmatprep.subr.mxu0 0.0
  %753 = vmatpush1.msra.mxu0 %v593
  %754 = vmatprep.subr.mxu0 0.0
  %755 = vmatpush1.msra.mxu0 %v590
  %756 = vmatprep.subr.mxu0 0.0
  %757 = vmatpush2.msra.mxu0 0.0
  %758 = vmatprep.subr.mxu0 0.0
  %759 = vmatpush2.msra.mxu0 0.0
  %760 = vmatprep.subr.mxu0 0.0
  %761 = vmatpush2.msra.mxu0 0.0
  %762 = vmatprep.subr.mxu0 0.0
  %763 = vmatpush2.msra.mxu0 0.0
  %764 = vmatprep.subr.mxu0 0.0
  %765 = vmatpush2.msra.mxu0 0.0
  %766 = vmatprep.subr.mxu0 0.0
  %767 = vmatpush2.msra.mxu0 0.0
  %768 = vmatprep.subr.mxu0 0.0
  %769 = vmatpush2.msra.mxu0 0.0
  %770 = vmatprep.subr.mxu0 0.0
  %771 = vmatpush2.msra.mxu0 0.0
  %772 = vmatprep.subr.mxu0 0.0
  %773 = vmatpush2.msra.mxu0 0.0
  %774 = vmatprep.subr.mxu0 0.0
  %775 = vmatpush2.msra.mxu0 0.0
  %776 = vmatprep.subr.mxu0 0.0
  %777 = vmatpush2.msra.mxu0 0.0
  %778 = vmatprep.subr.mxu0 0.0
  %779 = vmatpush2.msra.mxu0 0.0
  %780 = vmatprep.subr.mxu0 0.0
  %781 = vmatpush2.msra.mxu0 0.0
  %782 = vmatprep.subr.mxu0 0.0
  %783 = vmatpush2.msra.mxu0 0.0
  %784 = vmatprep.subr.mxu0 0.0
  %785 = vmatpush2.msra.mxu0 0.0
  %786 = vmatprep.subr.mxu0 0.0
  %787 = vmatpush2.msra.mxu0 0.0
  %788 = vmatprep.mubr.f32.mxu0 0.0
  %789 = vmatmul.mubr.f32.gmra.mxu0 %v587
  %v790 = vpop.f32.mrf.mxu0
  %v791 = vadd.f32 %v649, %v790
  %v792 = vpop.f32.mrf.mxu0
  %793 = vdwg.mxu0
  %v794 = vld [vmem:[%s7] sm:$0xff]
  %v795 = vld [vmem:[%s7 + $0x8] sm:$0xff]
  %v796 = vld [vmem:[%s7 + $0x10] sm:$0xff]
  %v797 = vld [vmem:[%s7 + $0x18] sm:$0xff]
  %v798 = vld [vmem:[%s7 + $0x20] sm:$0xff]
  %v799 = vld [vmem:[%s7 + $0x28] sm:$0xff]
  %v800 = vld [vmem:[%s7 + $0x30] sm:$0xff]
  %v801 = vld [vmem:[%s7 + $0x38] sm:$0xff]
  %v802 = vld [vmem:[%s7 + $0x40] sm:$0xff]
  %v803 = vld [vmem:[%s7 + $0x48] sm:$0xff]
  %v804 = vld [vmem:[%s7 + $0x50] sm:$0xff]
  %v805 = vld [vmem:[%s7 + $0x58] sm:$0xff]
  %v806 = vld [vmem:[%s7 + $0x60] sm:$0xff]
  %v807 = vld [vmem:[%s7 + $0x68] sm:$0xff]
  %v808 = vld [vmem:[%s7 + $0x70] sm:$0xff]
  %v809 = vld [vmem:[%s7 + $0x78] sm:$0xff]
  %v810 = vld [vmem:[%s7 + $0x80] sm:$0xff]
  %v811 = vld [vmem:[%s7 + $0x88] sm:$0xff]
  %v812 = vld [vmem:[%s7 + $0x90] sm:$0xff]
  %v813 = vld [vmem:[%s7 + $0x98] sm:$0xff]
  %v814 = vld [vmem:[%s7 + $0xa0] sm:$0xff]
  %v815 = vld [vmem:[%s7 + $0xa8] sm:$0xff]
  %v816 = vld [vmem:[%s7 + $0xb0] sm:$0xff]
  %v817 = vld [vmem:[%s7 + $0xb8] sm:$0xff]
  %v818 = vld [vmem:[%s7 + $0xc0] sm:$0xff]
  %v819 = vld [vmem:[%s7 + $0xc8] sm:$0xff]
  %v820 = vld [vmem:[%s7 + $0xd0] sm:$0xff]
  %v821 = vld [vmem:[%s7 + $0xd8] sm:$0xff]
  %v822 = vld [vmem:[%s7 + $0xe0] sm:$0xff]
  %v823 = vld [vmem:[%s7 + $0xe8] sm:$0xff]
  %v824 = vld [vmem:[%s7 + $0xf0] sm:$0xff]
  %v825 = vld [vmem:[%s7 + $0xf8] sm:$0xff]
  %v826 = vld [vmem:[%s7 + $0x100] sm:$0xff]
  %v827 = vld [vmem:[%s7 + $0x108] sm:$0xff]
  %v828 = vld [vmem:[%s7 + $0x110] sm:$0xff]
  %v829 = vld [vmem:[%s7 + $0x118] sm:$0xff]
  %v830 = vld [vmem:[%s7 + $0x120] sm:$0xff]
  %v831 = vld [vmem:[%s7 + $0x128] sm:$0xff]
  %v832 = vld [vmem:[%s7 + $0x130] sm:$0xff]
  %v833 = vld [vmem:[%s7 + $0x138] sm:$0xff]
  %v834 = vld [vmem:[%s7 + $0x140] sm:$0xff]
  %v835 = vld [vmem:[%s7 + $0x148] sm:$0xff]
  %v836 = vld [vmem:[%s7 + $0x150] sm:$0xff]
  %v837 = vld [vmem:[%s7 + $0x158] sm:$0xff]
  %v838 = vld [vmem:[%s7 + $0x160] sm:$0xff]
  %v839 = vld [vmem:[%s7 + $0x168] sm:$0xff]
  %v840 = vld [vmem:[%s7 + $0x170] sm:$0xff]
  %v841 = vld [vmem:[%s7 + $0x178] sm:$0xff]
  %v842 = vld [vmem:[%s8] sm:$0x7]
  %v844 = vlaneseq
  %v845 = vshrl.u32 %v844, 7
  %v846 = vsub.s32 0, %v845
  %v847 = vrot.slane %v842, %v846
  %v848 = vlaneseq
  %v849 = vshrl.u32 %v848, 7
  %v850 = vsub.s32 1, %v849
  %v851 = vrot.slane %v842, %v850
  %v852 = vlaneseq
  %v853 = vshrl.u32 %v852, 7
  %v854 = vsub.s32 2, %v853
  %v855 = vrot.slane %v842, %v854
  %859 = vmatprep.subr.mxu0 %v840
  %860 = vmatpush1.msra.mxu0 %v839
  %861 = vmatprep.subr.mxu0 %v837
  %862 = vmatpush1.msra.mxu0 %v836
  %863 = vmatprep.subr.mxu0 %v834
  %864 = vmatpush1.msra.mxu0 %v833
  %865 = vmatprep.subr.mxu0 %v831
  %866 = vmatpush1.msra.mxu0 %v830
  %867 = vmatprep.subr.mxu0 %v828
  %868 = vmatpush1.msra.mxu0 %v827
  %869 = vmatprep.subr.mxu0 %v825
  %870 = vmatpush1.msra.mxu0 %v824
  %871 = vmatprep.subr.mxu0 %v822
  %872 = vmatpush1.msra.mxu0 %v821
  %873 = vmatprep.subr.mxu0 %v819
  %874 = vmatpush1.msra.mxu0 %v818
  %875 = vmatprep.subr.mxu0 %v816
  %876 = vmatpush1.msra.mxu0 %v815
  %877 = vmatprep.subr.mxu0 %v813
  %878 = vmatpush1.msra.mxu0 %v812
  %879 = vmatprep.subr.mxu0 %v810
  %880 = vmatpush1.msra.mxu0 %v809
  %881 = vmatprep.subr.mxu0 %v807
  %882 = vmatpush1.msra.mxu0 %v806
  %883 = vmatprep.subr.mxu0 %v804
  %884 = vmatpush1.msra.mxu0 %v803
  %885 = vmatprep.subr.mxu0 %v801
  %886 = vmatpush1.msra.mxu0 %v800
  %887 = vmatprep.subr.mxu0 %v798
  %888 = vmatpush1.msra.mxu0 %v797
  %889 = vmatprep.subr.mxu0 %v795
  %890 = vmatpush1.msra.mxu0 %v794
  %891 = vmatprep.subr.mxu0 0.0
  %892 = vmatpush2.msra.mxu0 0.0
  %893 = vmatprep.subr.mxu0 0.0
  %894 = vmatpush2.msra.mxu0 0.0
  %895 = vmatprep.subr.mxu0 0.0
  %896 = vmatpush2.msra.mxu0 0.0
  %897 = vmatprep.subr.mxu0 0.0
  %898 = vmatpush2.msra.mxu0 0.0
  %899 = vmatprep.subr.mxu0 0.0
  %900 = vmatpush2.msra.mxu0 0.0
  %901 = vmatprep.subr.mxu0 0.0
  %902 = vmatpush2.msra.mxu0 0.0
  %903 = vmatprep.subr.mxu0 0.0
  %904 = vmatpush2.msra.mxu0 0.0
  %905 = vmatprep.subr.mxu0 0.0
  %906 = vmatpush2.msra.mxu0 0.0
  %907 = vmatprep.subr.mxu0 0.0
  %908 = vmatpush2.msra.mxu0 0.0
  %909 = vmatprep.subr.mxu0 0.0
  %910 = vmatpush2.msra.mxu0 0.0
  %911 = vmatprep.subr.mxu0 0.0
  %912 = vmatpush2.msra.mxu0 0.0
  %913 = vmatprep.subr.mxu0 0.0
  %914 = vmatpush2.msra.mxu0 0.0
  %915 = vmatprep.subr.mxu0 0.0
  %916 = vmatpush2.msra.mxu0 0.0
  %917 = vmatprep.subr.mxu0 0.0
  %918 = vmatpush2.msra.mxu0 0.0
  %919 = vmatprep.subr.mxu0 0.0
  %920 = vmatpush2.msra.mxu0 0.0
  %921 = vmatprep.subr.mxu0 0.0
  %922 = vmatpush2.msra.mxu0 0.0
  %923 = vmatprep.mubr.f32.mxu0 0.0
  %924 = vmatmul.mubr.f32.gmra.mxu0 0.0
  %v925 = vpop.f32.mrf.mxu0
  %v926 = vadd.f32 %v847, %v925
  %v927 = vpop.f32.mrf.mxu0
  %v928 = vadd.f32 %v851, %v927
  %929 = vdwg.mxu0
  %930 = vmatprep.subr.mxu0 0.0
  %931 = vmatpush1.msra.mxu0 %v841
  %932 = vmatprep.subr.mxu0 0.0
  %933 = vmatpush1.msra.mxu0 %v838
  %934 = vmatprep.subr.mxu0 0.0
  %935 = vmatpush1.msra.mxu0 %v835
  %936 = vmatprep.subr.mxu0 0.0
  %937 = vmatpush1.msra.mxu0 %v832
  %938 = vmatprep.subr.mxu0 0.0
  %939 = vmatpush1.msra.mxu0 %v829
  %940 = vmatprep.subr.mxu0 0.0
  %941 = vmatpush1.msra.mxu0 %v826
  %942 = vmatprep.subr.mxu0 0.0
  %943 = vmatpush1.msra.mxu0 %v823
  %944 = vmatprep.subr.mxu0 0.0
  %945 = vmatpush1.msra.mxu0 %v820
  %946 = vmatprep.subr.mxu0 0.0
  %947 = vmatpush1.msra.mxu0 %v817
  %948 = vmatprep.subr.mxu0 0.0
  %949 = vmatpush1.msra.mxu0 %v814
  %950 = vmatprep.subr.mxu0 0.0
  %951 = vmatpush1.msra.mxu0 %v811
  %952 = vmatprep.subr.mxu0 0.0
  %953 = vmatpush1.msra.mxu0 %v808
  %954 = vmatprep.subr.mxu0 0.0
  %955 = vmatpush1.msra.mxu0 %v805
  %956 = vmatprep.subr.mxu0 0.0
  %957 = vmatpush1.msra.mxu0 %v802
  %958 = vmatprep.subr.mxu0 0.0
  %959 = vmatpush1.msra.mxu0 %v799
  %960 = vmatprep.subr.mxu0 0.0
  %961 = vmatpush1.msra.mxu0 %v796
  %962 = vmatprep.subr.mxu0 0.0
  %963 = vmatpush2.msra.mxu0 0.0
  %964 = vmatprep.subr.mxu0 0.0
  %965 = vmatpush2.msra.mxu0 0.0
  %966 = vmatprep.subr.mxu0 0.0
  %967 = vmatpush2.msra.mxu0 0.0
  %968 = vmatprep.subr.mxu0 0.0
  %969 = vmatpush2.msra.mxu0 0.0
  %970 = vmatprep.subr.mxu0 0.0
  %971 = vmatpush2.msra.mxu0 0.0
  %972 = vmatprep.subr.mxu0 0.0
  %973 = vmatpush2.msra.mxu0 0.0
  %974 = vmatprep.subr.mxu0 0.0
  %975 = vmatpush2.msra.mxu0 0.0
  %976 = vmatprep.subr.mxu0 0.0
  %977 = vmatpush2.msra.mxu0 0.0
  %978 = vmatprep.subr.mxu0 0.0
  %979 = vmatpush2.msra.mxu0 0.0
  %980 = vmatprep.subr.mxu0 0.0
  %981 = vmatpush2.msra.mxu0 0.0
  %982 = vmatprep.subr.mxu0 0.0
  %983 = vmatpush2.msra.mxu0 0.0
  %984 = vmatprep.subr.mxu0 0.0
  %985 = vmatpush2.msra.mxu0 0.0
  %986 = vmatprep.subr.mxu0 0.0
  %987 = vmatpush2.msra.mxu0 0.0
  %988 = vmatprep.subr.mxu0 0.0
  %989 = vmatpush2.msra.mxu0 0.0
  %990 = vmatprep.subr.mxu0 0.0
  %991 = vmatpush2.msra.mxu0 0.0
  %992 = vmatprep.subr.mxu0 0.0
  %993 = vmatpush2.msra.mxu0 0.0
  %994 = vmatprep.mubr.f32.mxu0 0.0
  %995 = vmatmul.mubr.f32.gmra.mxu0 0.0
  %v996 = vpop.f32.mrf.mxu0
  %v997 = vadd.f32 %v855, %v996
  %v998 = vpop.f32.mrf.mxu0
  %999 = vdwg.mxu0
  %v1000 = vadd.f32 %v720, %v926
  %v1001 = vxor.u32 %v1000, 2147483648
  %v1002 = vmul.f32 %v1001, 1.442695
  %v1003 = vpow.pop %v1002
  %v1004 = vadd.f32 %v1003, 1.0
  %v1005 = vrcp.pop %v1004
  %v1006 = vmul.f32 1.0, %v1005
  %v1007 = vadd.f32 %v722, %v928
  %v1008 = vxor.u32 %v1007, 2147483648
  %v1009 = vmul.f32 %v1008, 1.442695
  %v1010 = vpow.pop %v1009
  %v1011 = vadd.f32 %v1010, 1.0
  %v1012 = vrcp.pop %v1011
  %v1013 = vmul.f32 1.0, %v1012
  %v1014 = vmul.f32 %v1006, %v997
  %v1015 = vadd.f32 %v791, %v1014
  %v1016 = vtanh.pop %v1015
  %v1017 = vsub.f32 1.0, %v1013
  %v1018 = vmul.f32 %v1017, %v1016
  %v1019 = vmul.f32 %v1013, 0.0
  %v1020 = vadd.f32 %v1018, %v1019
  %1021 = vst [vmem:[%s11] sm:$0xff] %v1020
  %s1022 = smul.u32 1, 3
  %s1023 = smul.addr %s1022, 8
  %s1024 = scalar_lea.vmem [#allocation2], %s1023
  %v1025 = vld [vmem:[%s1024] sm:$0xff]
  %v1026 = vld [vmem:[%s1024 + $0x8] sm:$0xff]
  %v1027 = vld [vmem:[%s1024 + $0x10] sm:$0xff]
  %v1028 = vld [vmem:[%s3] sm:$0xff]
  %v1029 = vld [vmem:[%s3 + $0x8] sm:$0xff]
  %v1030 = vld [vmem:[%s3 + $0x10] sm:$0xff]
  %v1031 = vld [vmem:[%s3 + $0x18] sm:$0xff]
  %v1032 = vld [vmem:[%s3 + $0x20] sm:$0xff]
  %v1033 = vld [vmem:[%s3 + $0x28] sm:$0xff]
  %v1034 = vld [vmem:[%s3 + $0x30] sm:$0xff]
  %v1035 = vld [vmem:[%s3 + $0x38] sm:$0xff]
  %v1036 = vld [vmem:[%s3 + $0x40] sm:$0xff]
  %v1037 = vld [vmem:[%s3 + $0x48] sm:$0xff]
  %v1038 = vld [vmem:[%s3 + $0x50] sm:$0xff]
  %v1039 = vld [vmem:[%s3 + $0x58] sm:$0xff]
  %v1040 = vld [vmem:[%s3 + $0x60] sm:$0xff]
  %v1041 = vld [vmem:[%s3 + $0x68] sm:$0xff]
  %v1042 = vld [vmem:[%s3 + $0x70] sm:$0xff]
  %v1043 = vld [vmem:[%s3 + $0x78] sm:$0xff]
  %v1044 = vld [vmem:[%s3 + $0x80] sm:$0xff]
  %v1045 = vld [vmem:[%s3 + $0x88] sm:$0xff]
  %v1046 = vld [vmem:[%s3 + $0x90] sm:$0xff]
  %v1047 = vld [vmem:[%s3 + $0x98] sm:$0xff]
  %v1048 = vld [vmem:[%s3 + $0xa0] sm:$0xff]
  %v1049 = vld [vmem:[%s3 + $0xa8] sm:$0xff]
  %v1050 = vld [vmem:[%s3 + $0xb0] sm:$0xff]
  %v1051 = vld [vmem:[%s3 + $0xb8] sm:$0xff]
  %v1052 = vld [vmem:[%s3 + $0xc0] sm:$0xff]
  %v1053 = vld [vmem:[%s3 + $0xc8] sm:$0xff]
  %v1054 = vld [vmem:[%s3 + $0xd0] sm:$0xff]
  %v1055 = vld [vmem:[%s3 + $0xd8] sm:$0xff]
  %v1056 = vld [vmem:[%s3 + $0xe0] sm:$0xff]
  %v1057 = vld [vmem:[%s3 + $0xe8] sm:$0xff]
  %v1058 = vld [vmem:[%s3 + $0xf0] sm:$0xff]
  %v1059 = vld [vmem:[%s3 + $0xf8] sm:$0xff]
  %v1060 = vld [vmem:[%s3 + $0x100] sm:$0xff]
  %v1061 = vld [vmem:[%s3 + $0x108] sm:$0xff]
  %v1062 = vld [vmem:[%s3 + $0x110] sm:$0xff]
  %v1063 = vld [vmem:[%s3 + $0x118] sm:$0xff]
  %v1064 = vld [vmem:[%s3 + $0x120] sm:$0xff]
  %v1065 = vld [vmem:[%s3 + $0x128] sm:$0xff]
  %v1066 = vld [vmem:[%s3 + $0x130] sm:$0xff]
  %v1067 = vld [vmem:[%s3 + $0x138] sm:$0xff]
  %v1068 = vld [vmem:[%s3 + $0x140] sm:$0xff]
  %v1069 = vld [vmem:[%s3 + $0x148] sm:$0xff]
  %v1070 = vld [vmem:[%s3 + $0x150] sm:$0xff]
  %v1071 = vld [vmem:[%s3 + $0x158] sm:$0xff]
  %v1072 = vld [vmem:[%s3 + $0x160] sm:$0xff]
  %v1073 = vld [vmem:[%s3 + $0x168] sm:$0xff]
  %v1074 = vld [vmem:[%s3 + $0x170] sm:$0xff]
  %v1075 = vld [vmem:[%s3 + $0x178] sm:$0xff]
  %v1076 = vld [vmem:[%s4] sm:$0x7]
  %v1078 = vlaneseq
  %v1079 = vshrl.u32 %v1078, 7
  %v1080 = vsub.s32 0, %v1079
  %v1081 = vrot.slane %v1076, %v1080
  %v1082 = vlaneseq
  %v1083 = vshrl.u32 %v1082, 7
  %v1084 = vsub.s32 1, %v1083
  %v1085 = vrot.slane %v1076, %v1084
  %v1086 = vlaneseq
  %v1087 = vshrl.u32 %v1086, 7
  %v1088 = vsub.s32 2, %v1087
  %v1089 = vrot.slane %v1076, %v1088
  %1093 = vmatprep.subr.mxu0 %v1074
  %1094 = vmatpush1.msra.mxu0 %v1073
  %1095 = vmatprep.subr.mxu0 %v1071
  %1096 = vmatpush1.msra.mxu0 %v1070
  %1097 = vmatprep.subr.mxu0 %v1068
  %1098 = vmatpush1.msra.mxu0 %v1067
  %1099 = vmatprep.subr.mxu0 %v1065
  %1100 = vmatpush1.msra.mxu0 %v1064
  %1101 = vmatprep.subr.mxu0 %v1062
  %1102 = vmatpush1.msra.mxu0 %v1061
  %1103 = vmatprep.subr.mxu0 %v1059
  %1104 = vmatpush1.msra.mxu0 %v1058
  %1105 = vmatprep.subr.mxu0 %v1056
  %1106 = vmatpush1.msra.mxu0 %v1055
  %1107 = vmatprep.subr.mxu0 %v1053
  %1108 = vmatpush1.msra.mxu0 %v1052
  %1109 = vmatprep.subr.mxu0 %v1050
  %1110 = vmatpush1.msra.mxu0 %v1049
  %1111 = vmatprep.subr.mxu0 %v1047
  %1112 = vmatpush1.msra.mxu0 %v1046
  %1113 = vmatprep.subr.mxu0 %v1044
  %1114 = vmatpush1.msra.mxu0 %v1043
  %1115 = vmatprep.subr.mxu0 %v1041
  %1116 = vmatpush1.msra.mxu0 %v1040
  %1117 = vmatprep.subr.mxu0 %v1038
  %1118 = vmatpush1.msra.mxu0 %v1037
  %1119 = vmatprep.subr.mxu0 %v1035
  %1120 = vmatpush1.msra.mxu0 %v1034
  %1121 = vmatprep.subr.mxu0 %v1032
  %1122 = vmatpush1.msra.mxu0 %v1031
  %1123 = vmatprep.subr.mxu0 %v1029
  %1124 = vmatpush1.msra.mxu0 %v1028
  %1125 = vmatprep.subr.mxu0 0.0
  %1126 = vmatpush2.msra.mxu0 0.0
  %1127 = vmatprep.subr.mxu0 0.0
  %1128 = vmatpush2.msra.mxu0 0.0
  %1129 = vmatprep.subr.mxu0 0.0
  %1130 = vmatpush2.msra.mxu0 0.0
  %1131 = vmatprep.subr.mxu0 0.0
  %1132 = vmatpush2.msra.mxu0 0.0
  %1133 = vmatprep.subr.mxu0 0.0
  %1134 = vmatpush2.msra.mxu0 0.0
  %1135 = vmatprep.subr.mxu0 0.0
  %1136 = vmatpush2.msra.mxu0 0.0
  %1137 = vmatprep.subr.mxu0 0.0
  %1138 = vmatpush2.msra.mxu0 0.0
  %1139 = vmatprep.subr.mxu0 0.0
  %1140 = vmatpush2.msra.mxu0 0.0
  %1141 = vmatprep.subr.mxu0 0.0
  %1142 = vmatpush2.msra.mxu0 0.0
  %1143 = vmatprep.subr.mxu0 0.0
  %1144 = vmatpush2.msra.mxu0 0.0
  %1145 = vmatprep.subr.mxu0 0.0
  %1146 = vmatpush2.msra.mxu0 0.0
  %1147 = vmatprep.subr.mxu0 0.0
  %1148 = vmatpush2.msra.mxu0 0.0
  %1149 = vmatprep.subr.mxu0 0.0
  %1150 = vmatpush2.msra.mxu0 0.0
  %1151 = vmatprep.subr.mxu0 0.0
  %1152 = vmatpush2.msra.mxu0 0.0
  %1153 = vmatprep.subr.mxu0 0.0
  %1154 = vmatpush2.msra.mxu0 0.0
  %1155 = vmatprep.subr.mxu0 0.0
  %1156 = vmatpush2.msra.mxu0 0.0
  %1157 = vmatprep.mubr.f32.mxu0 0.0
  %1158 = vmatmul.mubr.f32.gmra.mxu0 %v587
  %v1159 = vpop.f32.mrf.mxu0
  %v1160 = vadd.f32 %v1081, %v1159
  %v1161 = vpop.f32.mrf.mxu0
  %v1162 = vadd.f32 %v1085, %v1161
  %1163 = vdwg.mxu0
  %1164 = vmatprep.subr.mxu0 0.0
  %1165 = vmatpush1.msra.mxu0 %v1075
  %1166 = vmatprep.subr.mxu0 0.0
  %1167 = vmatpush1.msra.mxu0 %v1072
  %1168 = vmatprep.subr.mxu0 0.0
  %1169 = vmatpush1.msra.mxu0 %v1069
  %1170 = vmatprep.subr.mxu0 0.0
  %1171 = vmatpush1.msra.mxu0 %v1066
  %1172 = vmatprep.subr.mxu0 0.0
  %1173 = vmatpush1.msra.mxu0 %v1063
  %1174 = vmatprep.subr.mxu0 0.0
  %1175 = vmatpush1.msra.mxu0 %v1060
  %1176 = vmatprep.subr.mxu0 0.0
  %1177 = vmatpush1.msra.mxu0 %v1057
  %1178 = vmatprep.subr.mxu0 0.0
  %1179 = vmatpush1.msra.mxu0 %v1054
  %1180 = vmatprep.subr.mxu0 0.0
  %1181 = vmatpush1.msra.mxu0 %v1051
  %1182 = vmatprep.subr.mxu0 0.0
  %1183 = vmatpush1.msra.mxu0 %v1048
  %1184 = vmatprep.subr.mxu0 0.0
  %1185 = vmatpush1.msra.mxu0 %v1045
  %1186 = vmatprep.subr.mxu0 0.0
  %1187 = vmatpush1.msra.mxu0 %v1042
  %1188 = vmatprep.subr.mxu0 0.0
  %1189 = vmatpush1.msra.mxu0 %v1039
  %1190 = vmatprep.subr.mxu0 0.0
  %1191 = vmatpush1.msra.mxu0 %v1036
  %1192 = vmatprep.subr.mxu0 0.0
  %1193 = vmatpush1.msra.mxu0 %v1033
  %1194 = vmatprep.subr.mxu0 0.0
  %1195 = vmatpush1.msra.mxu0 %v1030
  %1196 = vmatprep.subr.mxu0 0.0
  %1197 = vmatpush2.msra.mxu0 0.0
  %1198 = vmatprep.subr.mxu0 0.0
  %1199 = vmatpush2.msra.mxu0 0.0
  %1200 = vmatprep.subr.mxu0 0.0
  %1201 = vmatpush2.msra.mxu0 0.0
  %1202 = vmatprep.subr.mxu0 0.0
  %1203 = vmatpush2.msra.mxu0 0.0
  %1204 = vmatprep.subr.mxu0 0.0
  %1205 = vmatpush2.msra.mxu0 0.0
  %1206 = vmatprep.subr.mxu0 0.0
  %1207 = vmatpush2.msra.mxu0 0.0
  %1208 = vmatprep.subr.mxu0 0.0
  %1209 = vmatpush2.msra.mxu0 0.0
  %1210 = vmatprep.subr.mxu0 0.0
  %1211 = vmatpush2.msra.mxu0 0.0
  %1212 = vmatprep.subr.mxu0 0.0
  %1213 = vmatpush2.msra.mxu0 0.0
  %1214 = vmatprep.subr.mxu0 0.0
  %1215 = vmatpush2.msra.mxu0 0.0
  %1216 = vmatprep.subr.mxu0 0.0
  %1217 = vmatpush2.msra.mxu0 0.0
  %1218 = vmatprep.subr.mxu0 0.0
  %1219 = vmatpush2.msra.mxu0 0.0
  %1220 = vmatprep.subr.mxu0 0.0
  %1221 = vmatpush2.msra.mxu0 0.0
  %1222 = vmatprep.subr.mxu0 0.0
  %1223 = vmatpush2.msra.mxu0 0.0
  %1224 = vmatprep.subr.mxu0 0.0
  %1225 = vmatpush2.msra.mxu0 0.0
  %1226 = vmatprep.subr.mxu0 0.0
  %1227 = vmatpush2.msra.mxu0 0.0
  %1228 = vmatprep.mubr.f32.mxu0 0.0
  %1229 = vmatmul.mubr.f32.gmra.mxu0 %v587
  %v1230 = vpop.f32.mrf.mxu0
  %v1231 = vadd.f32 %v1089, %v1230
  %v1232 = vpop.f32.mrf.mxu0
  %1233 = vdwg.mxu0
  %v1234 = vadd.f32 %v1025, %v1160
  %v1235 = vxor.u32 %v1234, 2147483648
  %v1236 = vmul.f32 %v1235, 1.442695
  %v1237 = vpow.pop %v1236
  %v1238 = vadd.f32 %v1237, 1.0
  %v1239 = vrcp.pop %v1238
  %v1240 = vmul.f32 1.0, %v1239
  %v1241 = vadd.f32 %v1026, %v1162
  %v1242 = vxor.u32 %v1241, 2147483648
  %v1243 = vmul.f32 %v1242, 1.442695
  %v1244 = vpow.pop %v1243
  %v1245 = vadd.f32 %v1244, 1.0
  %v1246 = vrcp.pop %v1245
  %v1247 = vmul.f32 1.0, %v1246
  %v1248 = vmul.f32 %v1240, %v1231
  %v1249 = vadd.f32 %v1027, %v1248
  %v1250 = vtanh.pop %v1249
  %v1251 = vsub.f32 1.0, %v1247
  %v1252 = vmul.f32 %v1251, %v1250
  %v1253 = vmul.f32 %v1247, %v587
  %v1254 = vadd.f32 %v1252, %v1253
  %v1255 = vld [vmem:[%s5] sm:$0xff]
  %v1256 = vld [vmem:[%s5 + $0x8] sm:$0xff]
  %v1257 = vld [vmem:[%s5 + $0x10] sm:$0xff]
  %v1258 = vld [vmem:[%s5 + $0x18] sm:$0xff]
  %v1259 = vld [vmem:[%s5 + $0x20] sm:$0xff]
  %v1260 = vld [vmem:[%s5 + $0x28] sm:$0xff]
  %v1261 = vld [vmem:[%s5 + $0x30] sm:$0xff]
  %v1262 = vld [vmem:[%s5 + $0x38] sm:$0xff]
  %v1263 = vld [vmem:[%s5 + $0x40] sm:$0xff]
  %v1264 = vld [vmem:[%s5 + $0x48] sm:$0xff]
  %v1265 = vld [vmem:[%s5 + $0x50] sm:$0xff]
  %v1266 = vld [vmem:[%s5 + $0x58] sm:$0xff]
  %v1267 = vld [vmem:[%s5 + $0x60] sm:$0xff]
  %v1268 = vld [vmem:[%s5 + $0x68] sm:$0xff]
  %v1269 = vld [vmem:[%s5 + $0x70] sm:$0xff]
  %v1270 = vld [vmem:[%s5 + $0x78] sm:$0xff]
  %v1271 = vld [vmem:[%s5 + $0x80] sm:$0xff]
  %v1272 = vld [vmem:[%s5 + $0x88] sm:$0xff]
  %v1273 = vld [vmem:[%s5 + $0x90] sm:$0xff]
  %v1274 = vld [vmem:[%s5 + $0x98] sm:$0xff]
  %v1275 = vld [vmem:[%s5 + $0xa0] sm:$0xff]
  %v1276 = vld [vmem:[%s5 + $0xa8] sm:$0xff]
  %v1277 = vld [vmem:[%s5 + $0xb0] sm:$0xff]
  %v1278 = vld [vmem:[%s5 + $0xb8] sm:$0xff]
  %v1279 = vld [vmem:[%s5 + $0xc0] sm:$0xff]
  %v1280 = vld [vmem:[%s5 + $0xc8] sm:$0xff]
  %v1281 = vld [vmem:[%s5 + $0xd0] sm:$0xff]
  %v1282 = vld [vmem:[%s5 + $0xd8] sm:$0xff]
  %v1283 = vld [vmem:[%s5 + $0xe0] sm:$0xff]
  %v1284 = vld [vmem:[%s5 + $0xe8] sm:$0xff]
  %v1285 = vld [vmem:[%s5 + $0xf0] sm:$0xff]
  %v1286 = vld [vmem:[%s5 + $0xf8] sm:$0xff]
  %v1287 = vld [vmem:[%s5 + $0x100] sm:$0xff]
  %v1288 = vld [vmem:[%s5 + $0x108] sm:$0xff]
  %v1289 = vld [vmem:[%s5 + $0x110] sm:$0xff]
  %v1290 = vld [vmem:[%s5 + $0x118] sm:$0xff]
  %v1291 = vld [vmem:[%s5 + $0x120] sm:$0xff]
  %v1292 = vld [vmem:[%s5 + $0x128] sm:$0xff]
  %v1293 = vld [vmem:[%s5 + $0x130] sm:$0xff]
  %v1294 = vld [vmem:[%s5 + $0x138] sm:$0xff]
  %v1295 = vld [vmem:[%s5 + $0x140] sm:$0xff]
  %v1296 = vld [vmem:[%s5 + $0x148] sm:$0xff]
  %v1297 = vld [vmem:[%s5 + $0x150] sm:$0xff]
  %v1298 = vld [vmem:[%s5 + $0x158] sm:$0xff]
  %v1299 = vld [vmem:[%s5 + $0x160] sm:$0xff]
  %v1300 = vld [vmem:[%s5 + $0x168] sm:$0xff]
  %v1301 = vld [vmem:[%s5 + $0x170] sm:$0xff]
  %v1302 = vld [vmem:[%s5 + $0x178] sm:$0xff]
  %v1303 = vld [vmem:[%s6] sm:$0x7]
  %v1305 = vlaneseq
  %v1306 = vshrl.u32 %v1305, 7
  %v1307 = vsub.s32 0, %v1306
  %v1308 = vrot.slane %v1303, %v1307
  %v1309 = vlaneseq
  %v1310 = vshrl.u32 %v1309, 7
  %v1311 = vsub.s32 1, %v1310
  %v1312 = vrot.slane %v1303, %v1311
  %v1313 = vlaneseq
  %v1314 = vshrl.u32 %v1313, 7
  %v1315 = vsub.s32 2, %v1314
  %v1316 = vrot.slane %v1303, %v1315
  %1320 = vmatprep.subr.mxu0 %v1301
  %1321 = vmatpush1.msra.mxu0 %v1300
  %1322 = vmatprep.subr.mxu0 %v1298
  %1323 = vmatpush1.msra.mxu0 %v1297
  %1324 = vmatprep.subr.mxu0 %v1295
  %1325 = vmatpush1.msra.mxu0 %v1294
  %1326 = vmatprep.subr.mxu0 %v1292
  %1327 = vmatpush1.msra.mxu0 %v1291
  %1328 = vmatprep.subr.mxu0 %v1289
  %1329 = vmatpush1.msra.mxu0 %v1288
  %1330 = vmatprep.subr.mxu0 %v1286
  %1331 = vmatpush1.msra.mxu0 %v1285
  %1332 = vmatprep.subr.mxu0 %v1283
  %1333 = vmatpush1.msra.mxu0 %v1282
  %1334 = vmatprep.subr.mxu0 %v1280
  %1335 = vmatpush1.msra.mxu0 %v1279
  %1336 = vmatprep.subr.mxu0 %v1277
  %1337 = vmatpush1.msra.mxu0 %v1276
  %1338 = vmatprep.subr.mxu0 %v1274
  %1339 = vmatpush1.msra.mxu0 %v1273
  %1340 = vmatprep.subr.mxu0 %v1271
  %1341 = vmatpush1.msra.mxu0 %v1270
  %1342 = vmatprep.subr.mxu0 %v1268
  %1343 = vmatpush1.msra.mxu0 %v1267
  %1344 = vmatprep.subr.mxu0 %v1265
  %1345 = vmatpush1.msra.mxu0 %v1264
  %1346 = vmatprep.subr.mxu0 %v1262
  %1347 = vmatpush1.msra.mxu0 %v1261
  %1348 = vmatprep.subr.mxu0 %v1259
  %1349 = vmatpush1.msra.mxu0 %v1258
  %1350 = vmatprep.subr.mxu0 %v1256
  %1351 = vmatpush1.msra.mxu0 %v1255
  %1352 = vmatprep.subr.mxu0 0.0
  %1353 = vmatpush2.msra.mxu0 0.0
  %1354 = vmatprep.subr.mxu0 0.0
  %1355 = vmatpush2.msra.mxu0 0.0
  %1356 = vmatprep.subr.mxu0 0.0
  %1357 = vmatpush2.msra.mxu0 0.0
  %1358 = vmatprep.subr.mxu0 0.0
  %1359 = vmatpush2.msra.mxu0 0.0
  %1360 = vmatprep.subr.mxu0 0.0
  %1361 = vmatpush2.msra.mxu0 0.0
  %1362 = vmatprep.subr.mxu0 0.0
  %1363 = vmatpush2.msra.mxu0 0.0
  %1364 = vmatprep.subr.mxu0 0.0
  %1365 = vmatpush2.msra.mxu0 0.0
  %1366 = vmatprep.subr.mxu0 0.0
  %1367 = vmatpush2.msra.mxu0 0.0
  %1368 = vmatprep.subr.mxu0 0.0
  %1369 = vmatpush2.msra.mxu0 0.0
  %1370 = vmatprep.subr.mxu0 0.0
  %1371 = vmatpush2.msra.mxu0 0.0
  %1372 = vmatprep.subr.mxu0 0.0
  %1373 = vmatpush2.msra.mxu0 0.0
  %1374 = vmatprep.subr.mxu0 0.0
  %1375 = vmatpush2.msra.mxu0 0.0
  %1376 = vmatprep.subr.mxu0 0.0
  %1377 = vmatpush2.msra.mxu0 0.0
  %1378 = vmatprep.subr.mxu0 0.0
  %1379 = vmatpush2.msra.mxu0 0.0
  %1380 = vmatprep.subr.mxu0 0.0
  %1381 = vmatpush2.msra.mxu0 0.0
  %1382 = vmatprep.subr.mxu0 0.0
  %1383 = vmatpush2.msra.mxu0 0.0
  %1384 = vmatprep.mubr.f32.mxu0 0.0
  %1385 = vmatmul.mubr.f32.gmra.mxu0 %v1254
  %v1386 = vpop.f32.mrf.mxu0
  %v1387 = vadd.f32 %v1308, %v1386
  %v1388 = vpop.f32.mrf.mxu0
  %v1389 = vadd.f32 %v1312, %v1388
  %1390 = vdwg.mxu0
  %1391 = vmatprep.subr.mxu0 0.0
  %1392 = vmatpush1.msra.mxu0 %v1302
  %1393 = vmatprep.subr.mxu0 0.0
  %1394 = vmatpush1.msra.mxu0 %v1299
  %1395 = vmatprep.subr.mxu0 0.0
  %1396 = vmatpush1.msra.mxu0 %v1296
  %1397 = vmatprep.subr.mxu0 0.0
  %1398 = vmatpush1.msra.mxu0 %v1293
  %1399 = vmatprep.subr.mxu0 0.0
  %1400 = vmatpush1.msra.mxu0 %v1290
  %1401 = vmatprep.subr.mxu0 0.0
  %1402 = vmatpush1.msra.mxu0 %v1287
  %1403 = vmatprep.subr.mxu0 0.0
  %1404 = vmatpush1.msra.mxu0 %v1284
  %1405 = vmatprep.subr.mxu0 0.0
  %1406 = vmatpush1.msra.mxu0 %v1281
  %1407 = vmatprep.subr.mxu0 0.0
  %1408 = vmatpush1.msra.mxu0 %v1278
  %1409 = vmatprep.subr.mxu0 0.0
  %1410 = vmatpush1.msra.mxu0 %v1275
  %1411 = vmatprep.subr.mxu0 0.0
  %1412 = vmatpush1.msra.mxu0 %v1272
  %1413 = vmatprep.subr.mxu0 0.0
  %1414 = vmatpush1.msra.mxu0 %v1269
  %1415 = vmatprep.subr.mxu0 0.0
  %1416 = vmatpush1.msra.mxu0 %v1266
  %1417 = vmatprep.subr.mxu0 0.0
  %1418 = vmatpush1.msra.mxu0 %v1263
  %1419 = vmatprep.subr.mxu0 0.0
  %1420 = vmatpush1.msra.mxu0 %v1260
  %1421 = vmatprep.subr.mxu0 0.0
  %1422 = vmatpush1.msra.mxu0 %v1257
  %1423 = vmatprep.subr.mxu0 0.0
  %1424 = vmatpush2.msra.mxu0 0.0
  %1425 = vmatprep.subr.mxu0 0.0
  %1426 = vmatpush2.msra.mxu0 0.0
  %1427 = vmatprep.subr.mxu0 0.0
  %1428 = vmatpush2.msra.mxu0 0.0
  %1429 = vmatprep.subr.mxu0 0.0
  %1430 = vmatpush2.msra.mxu0 0.0
  %1431 = vmatprep.subr.mxu0 0.0
  %1432 = vmatpush2.msra.mxu0 0.0
  %1433 = vmatprep.subr.mxu0 0.0
  %1434 = vmatpush2.msra.mxu0 0.0
  %1435 = vmatprep.subr.mxu0 0.0
  %1436 = vmatpush2.msra.mxu0 0.0
  %1437 = vmatprep.subr.mxu0 0.0
  %1438 = vmatpush2.msra.mxu0 0.0
  %1439 = vmatprep.subr.mxu0 0.0
  %1440 = vmatpush2.msra.mxu0 0.0
  %1441 = vmatprep.subr.mxu0 0.0
  %1442 = vmatpush2.msra.mxu0 0.0
  %1443 = vmatprep.subr.mxu0 0.0
  %1444 = vmatpush2.msra.mxu0 0.0
  %1445 = vmatprep.subr.mxu0 0.0
  %1446 = vmatpush2.msra.mxu0 0.0
  %1447 = vmatprep.subr.mxu0 0.0
  %1448 = vmatpush2.msra.mxu0 0.0
  %1449 = vmatprep.subr.mxu0 0.0
  %1450 = vmatpush2.msra.mxu0 0.0
  %1451 = vmatprep.subr.mxu0 0.0
  %1452 = vmatpush2.msra.mxu0 0.0
  %1453 = vmatprep.subr.mxu0 0.0
  %1454 = vmatpush2.msra.mxu0 0.0
  %1455 = vmatprep.mubr.f32.mxu0 0.0
  %1456 = vmatmul.mubr.f32.gmra.mxu0 %v1254
  %v1457 = vpop.f32.mrf.mxu0
  %v1458 = vadd.f32 %v1316, %v1457
  %v1459 = vpop.f32.mrf.mxu0
  %1460 = vdwg.mxu0
  %v1461 = vld [vmem:[%s7] sm:$0xff]
  %v1462 = vld [vmem:[%s7 + $0x8] sm:$0xff]
  %v1463 = vld [vmem:[%s7 + $0x10] sm:$0xff]
  %v1464 = vld [vmem:[%s7 + $0x18] sm:$0xff]
  %v1465 = vld [vmem:[%s7 + $0x20] sm:$0xff]
  %v1466 = vld [vmem:[%s7 + $0x28] sm:$0xff]
  %v1467 = vld [vmem:[%s7 + $0x30] sm:$0xff]
  %v1468 = vld [vmem:[%s7 + $0x38] sm:$0xff]
  %v1469 = vld [vmem:[%s7 + $0x40] sm:$0xff]
  %v1470 = vld [vmem:[%s7 + $0x48] sm:$0xff]
  %v1471 = vld [vmem:[%s7 + $0x50] sm:$0xff]
  %v1472 = vld [vmem:[%s7 + $0x58] sm:$0xff]
  %v1473 = vld [vmem:[%s7 + $0x60] sm:$0xff]
  %v1474 = vld [vmem:[%s7 + $0x68] sm:$0xff]
  %v1475 = vld [vmem:[%s7 + $0x70] sm:$0xff]
  %v1476 = vld [vmem:[%s7 + $0x78] sm:$0xff]
  %v1477 = vld [vmem:[%s7 + $0x80] sm:$0xff]
  %v1478 = vld [vmem:[%s7 + $0x88] sm:$0xff]
  %v1479 = vld [vmem:[%s7 + $0x90] sm:$0xff]
  %v1480 = vld [vmem:[%s7 + $0x98] sm:$0xff]
  %v1481 = vld [vmem:[%s7 + $0xa0] sm:$0xff]
  %v1482 = vld [vmem:[%s7 + $0xa8] sm:$0xff]
  %v1483 = vld [vmem:[%s7 + $0xb0] sm:$0xff]
  %v1484 = vld [vmem:[%s7 + $0xb8] sm:$0xff]
  %v1485 = vld [vmem:[%s7 + $0xc0] sm:$0xff]
  %v1486 = vld [vmem:[%s7 + $0xc8] sm:$0xff]
  %v1487 = vld [vmem:[%s7 + $0xd0] sm:$0xff]
  %v1488 = vld [vmem:[%s7 + $0xd8] sm:$0xff]
  %v1489 = vld [vmem:[%s7 + $0xe0] sm:$0xff]
  %v1490 = vld [vmem:[%s7 + $0xe8] sm:$0xff]
  %v1491 = vld [vmem:[%s7 + $0xf0] sm:$0xff]
  %v1492 = vld [vmem:[%s7 + $0xf8] sm:$0xff]
  %v1493 = vld [vmem:[%s7 + $0x100] sm:$0xff]
  %v1494 = vld [vmem:[%s7 + $0x108] sm:$0xff]
  %v1495 = vld [vmem:[%s7 + $0x110] sm:$0xff]
  %v1496 = vld [vmem:[%s7 + $0x118] sm:$0xff]
  %v1497 = vld [vmem:[%s7 + $0x120] sm:$0xff]
  %v1498 = vld [vmem:[%s7 + $0x128] sm:$0xff]
  %v1499 = vld [vmem:[%s7 + $0x130] sm:$0xff]
  %v1500 = vld [vmem:[%s7 + $0x138] sm:$0xff]
  %v1501 = vld [vmem:[%s7 + $0x140] sm:$0xff]
  %v1502 = vld [vmem:[%s7 + $0x148] sm:$0xff]
  %v1503 = vld [vmem:[%s7 + $0x150] sm:$0xff]
  %v1504 = vld [vmem:[%s7 + $0x158] sm:$0xff]
  %v1505 = vld [vmem:[%s7 + $0x160] sm:$0xff]
  %v1506 = vld [vmem:[%s7 + $0x168] sm:$0xff]
  %v1507 = vld [vmem:[%s7 + $0x170] sm:$0xff]
  %v1508 = vld [vmem:[%s7 + $0x178] sm:$0xff]
  %v1509 = vld [vmem:[%s8] sm:$0x7]
  %v1511 = vlaneseq
  %v1512 = vshrl.u32 %v1511, 7
  %v1513 = vsub.s32 0, %v1512
  %v1514 = vrot.slane %v1509, %v1513
  %v1515 = vlaneseq
  %v1516 = vshrl.u32 %v1515, 7
  %v1517 = vsub.s32 1, %v1516
  %v1518 = vrot.slane %v1509, %v1517
  %v1519 = vlaneseq
  %v1520 = vshrl.u32 %v1519, 7
  %v1521 = vsub.s32 2, %v1520
  %v1522 = vrot.slane %v1509, %v1521
  %1526 = vmatprep.subr.mxu0 %v1507
  %1527 = vmatpush1.msra.mxu0 %v1506
  %1528 = vmatprep.subr.mxu0 %v1504
  %1529 = vmatpush1.msra.mxu0 %v1503
  %1530 = vmatprep.subr.mxu0 %v1501
  %1531 = vmatpush1.msra.mxu0 %v1500
  %1532 = vmatprep.subr.mxu0 %v1498
  %1533 = vmatpush1.msra.mxu0 %v1497
  %1534 = vmatprep.subr.mxu0 %v1495
  %1535 = vmatpush1.msra.mxu0 %v1494
  %1536 = vmatprep.subr.mxu0 %v1492
  %1537 = vmatpush1.msra.mxu0 %v1491
  %1538 = vmatprep.subr.mxu0 %v1489
  %1539 = vmatpush1.msra.mxu0 %v1488
  %1540 = vmatprep.subr.mxu0 %v1486
  %1541 = vmatpush1.msra.mxu0 %v1485
  %1542 = vmatprep.subr.mxu0 %v1483
  %1543 = vmatpush1.msra.mxu0 %v1482
  %1544 = vmatprep.subr.mxu0 %v1480
  %1545 = vmatpush1.msra.mxu0 %v1479
  %1546 = vmatprep.subr.mxu0 %v1477
  %1547 = vmatpush1.msra.mxu0 %v1476
  %1548 = vmatprep.subr.mxu0 %v1474
  %1549 = vmatpush1.msra.mxu0 %v1473
  %1550 = vmatprep.subr.mxu0 %v1471
  %1551 = vmatpush1.msra.mxu0 %v1470
  %1552 = vmatprep.subr.mxu0 %v1468
  %1553 = vmatpush1.msra.mxu0 %v1467
  %1554 = vmatprep.subr.mxu0 %v1465
  %1555 = vmatpush1.msra.mxu0 %v1464
  %1556 = vmatprep.subr.mxu0 %v1462
  %1557 = vmatpush1.msra.mxu0 %v1461
  %1558 = vmatprep.subr.mxu0 0.0
  %1559 = vmatpush2.msra.mxu0 0.0
  %1560 = vmatprep.subr.mxu0 0.0
  %1561 = vmatpush2.msra.mxu0 0.0
  %1562 = vmatprep.subr.mxu0 0.0
  %1563 = vmatpush2.msra.mxu0 0.0
  %1564 = vmatprep.subr.mxu0 0.0
  %1565 = vmatpush2.msra.mxu0 0.0
  %1566 = vmatprep.subr.mxu0 0.0
  %1567 = vmatpush2.msra.mxu0 0.0
  %1568 = vmatprep.subr.mxu0 0.0
  %1569 = vmatpush2.msra.mxu0 0.0
  %1570 = vmatprep.subr.mxu0 0.0
  %1571 = vmatpush2.msra.mxu0 0.0
  %1572 = vmatprep.subr.mxu0 0.0
  %1573 = vmatpush2.msra.mxu0 0.0
  %1574 = vmatprep.subr.mxu0 0.0
  %1575 = vmatpush2.msra.mxu0 0.0
  %1576 = vmatprep.subr.mxu0 0.0
  %1577 = vmatpush2.msra.mxu0 0.0
  %1578 = vmatprep.subr.mxu0 0.0
  %1579 = vmatpush2.msra.mxu0 0.0
  %1580 = vmatprep.subr.mxu0 0.0
  %1581 = vmatpush2.msra.mxu0 0.0
  %1582 = vmatprep.subr.mxu0 0.0
  %1583 = vmatpush2.msra.mxu0 0.0
  %1584 = vmatprep.subr.mxu0 0.0
  %1585 = vmatpush2.msra.mxu0 0.0
  %1586 = vmatprep.subr.mxu0 0.0
  %1587 = vmatpush2.msra.mxu0 0.0
  %1588 = vmatprep.subr.mxu0 0.0
  %1589 = vmatpush2.msra.mxu0 0.0
  %1590 = vmatprep.mubr.f32.mxu0 0.0
  %1591 = vmatmul.mubr.f32.gmra.mxu0 %v1020
  %v1592 = vpop.f32.mrf.mxu0
  %v1593 = vadd.f32 %v1514, %v1592
  %v1594 = vpop.f32.mrf.mxu0
  %v1595 = vadd.f32 %v1518, %v1594
  %1596 = vdwg.mxu0
  %1597 = vmatprep.subr.mxu0 0.0
  %1598 = vmatpush1.msra.mxu0 %v1508
  %1599 = vmatprep.subr.mxu0 0.0
  %1600 = vmatpush1.msra.mxu0 %v1505
  %1601 = vmatprep.subr.mxu0 0.0
  %1602 = vmatpush1.msra.mxu0 %v1502
  %1603 = vmatprep.subr.mxu0 0.0
  %1604 = vmatpush1.msra.mxu0 %v1499
  %1605 = vmatprep.subr.mxu0 0.0
  %1606 = vmatpush1.msra.mxu0 %v1496
  %1607 = vmatprep.subr.mxu0 0.0
  %1608 = vmatpush1.msra.mxu0 %v1493
  %1609 = vmatprep.subr.mxu0 0.0
  %1610 = vmatpush1.msra.mxu0 %v1490
  %1611 = vmatprep.subr.mxu0 0.0
  %1612 = vmatpush1.msra.mxu0 %v1487
  %1613 = vmatprep.subr.mxu0 0.0
  %1614 = vmatpush1.msra.mxu0 %v1484
  %1615 = vmatprep.subr.mxu0 0.0
  %1616 = vmatpush1.msra.mxu0 %v1481
  %1617 = vmatprep.subr.mxu0 0.0
  %1618 = vmatpush1.msra.mxu0 %v1478
  %1619 = vmatprep.subr.mxu0 0.0
  %1620 = vmatpush1.msra.mxu0 %v1475
  %1621 = vmatprep.subr.mxu0 0.0
  %1622 = vmatpush1.msra.mxu0 %v1472
  %1623 = vmatprep.subr.mxu0 0.0
  %1624 = vmatpush1.msra.mxu0 %v1469
  %1625 = vmatprep.subr.mxu0 0.0
  %1626 = vmatpush1.msra.mxu0 %v1466
  %1627 = vmatprep.subr.mxu0 0.0
  %1628 = vmatpush1.msra.mxu0 %v1463
  %1629 = vmatprep.subr.mxu0 0.0
  %1630 = vmatpush2.msra.mxu0 0.0
  %1631 = vmatprep.subr.mxu0 0.0
  %1632 = vmatpush2.msra.mxu0 0.0
  %1633 = vmatprep.subr.mxu0 0.0
  %1634 = vmatpush2.msra.mxu0 0.0
  %1635 = vmatprep.subr.mxu0 0.0
  %1636 = vmatpush2.msra.mxu0 0.0
  %1637 = vmatprep.subr.mxu0 0.0
  %1638 = vmatpush2.msra.mxu0 0.0
  %1639 = vmatprep.subr.mxu0 0.0
  %1640 = vmatpush2.msra.mxu0 0.0
  %1641 = vmatprep.subr.mxu0 0.0
  %1642 = vmatpush2.msra.mxu0 0.0
  %1643 = vmatprep.subr.mxu0 0.0
  %1644 = vmatpush2.msra.mxu0 0.0
  %1645 = vmatprep.subr.mxu0 0.0
  %1646 = vmatpush2.msra.mxu0 0.0
  %1647 = vmatprep.subr.mxu0 0.0
  %1648 = vmatpush2.msra.mxu0 0.0
  %1649 = vmatprep.subr.mxu0 0.0
  %1650 = vmatpush2.msra.mxu0 0.0
  %1651 = vmatprep.subr.mxu0 0.0
  %1652 = vmatpush2.msra.mxu0 0.0
  %1653 = vmatprep.subr.mxu0 0.0
  %1654 = vmatpush2.msra.mxu0 0.0
  %1655 = vmatprep.subr.mxu0 0.0
  %1656 = vmatpush2.msra.mxu0 0.0
  %1657 = vmatprep.subr.mxu0 0.0
  %1658 = vmatpush2.msra.mxu0 0.0
  %1659 = vmatprep.subr.mxu0 0.0
  %1660 = vmatpush2.msra.mxu0 0.0
  %1661 = vmatprep.mubr.f32.mxu0 0.0
  %1662 = vmatmul.mubr.f32.gmra.mxu0 %v1020
  %v1663 = vpop.f32.mrf.mxu0
  %v1664 = vadd.f32 %v1522, %v1663
  %v1665 = vpop.f32.mrf.mxu0
  %1666 = vdwg.mxu0
  %v1667 = vadd.f32 %v1387, %v1593
  %v1668 = vxor.u32 %v1667, 2147483648
  %v1669 = vmul.f32 %v1668, 1.442695
  %v1670 = vpow.pop %v1669
  %v1671 = vadd.f32 %v1670, 1.0
  %v1672 = vrcp.pop %v1671
  %v1673 = vmul.f32 1.0, %v1672
  %v1674 = vadd.f32 %v1389, %v1595
  %v1675 = vxor.u32 %v1674, 2147483648
  %v1676 = vmul.f32 %v1675, 1.442695
  %v1677 = vpow.pop %v1676
  %v1678 = vadd.f32 %v1677, 1.0
  %v1679 = vrcp.pop %v1678
  %v1680 = vmul.f32 1.0, %v1679
  %v1681 = vmul.f32 %v1673, %v1664
  %v1682 = vadd.f32 %v1458, %v1681
  %v1683 = vtanh.pop %v1682
  %v1684 = vsub.f32 1.0, %v1680
  %v1685 = vmul.f32 %v1684, %v1683
  %v1686 = vmul.f32 %v1680, %v1020
  %v1687 = vadd.f32 %v1685, %v1686
  %s1688 = scalar_lea.vmem %s11, 8
  %1689 = vst [vmem:[%s1688] sm:$0xff] %v1687
  %s1690 = smul.u32 2, 3
  %s1691 = smul.addr %s1690, 8
  %s1692 = scalar_lea.vmem [#allocation2], %s1691
  %v1693 = vld [vmem:[%s1692] sm:$0xff]
  %v1694 = vld [vmem:[%s1692 + $0x8] sm:$0xff]
  %v1695 = vld [vmem:[%s1692 + $0x10] sm:$0xff]
  %v1696 = vld [vmem:[%s3] sm:$0xff]
  %v1697 = vld [vmem:[%s3 + $0x8] sm:$0xff]
  %v1698 = vld [vmem:[%s3 + $0x10] sm:$0xff]
  %v1699 = vld [vmem:[%s3 + $0x18] sm:$0xff]
  %v1700 = vld [vmem:[%s3 + $0x20] sm:$0xff]
  %v1701 = vld [vmem:[%s3 + $0x28] sm:$0xff]
  %v1702 = vld [vmem:[%s3 + $0x30] sm:$0xff]
  %v1703 = vld [vmem:[%s3 + $0x38] sm:$0xff]
  %v1704 = vld [vmem:[%s3 + $0x40] sm:$0xff]
  %v1705 = vld [vmem:[%s3 + $0x48] sm:$0xff]
  %v1706 = vld [vmem:[%s3 + $0x50] sm:$0xff]
  %v1707 = vld [vmem:[%s3 + $0x58] sm:$0xff]
  %v1708 = vld [vmem:[%s3 + $0x60] sm:$0xff]
  %v1709 = vld [vmem:[%s3 + $0x68] sm:$0xff]
  %v1710 = vld [vmem:[%s3 + $0x70] sm:$0xff]
  %v1711 = vld [vmem:[%s3 + $0x78] sm:$0xff]
  %v1712 = vld [vmem:[%s3 + $0x80] sm:$0xff]
  %v1713 = vld [vmem:[%s3 + $0x88] sm:$0xff]
  %v1714 = vld [vmem:[%s3 + $0x90] sm:$0xff]
  %v1715 = vld [vmem:[%s3 + $0x98] sm:$0xff]
  %v1716 = vld [vmem:[%s3 + $0xa0] sm:$0xff]
  %v1717 = vld [vmem:[%s3 + $0xa8] sm:$0xff]
  %v1718 = vld [vmem:[%s3 + $0xb0] sm:$0xff]
  %v1719 = vld [vmem:[%s3 + $0xb8] sm:$0xff]
  %v1720 = vld [vmem:[%s3 + $0xc0] sm:$0xff]
  %v1721 = vld [vmem:[%s3 + $0xc8] sm:$0xff]
  %v1722 = vld [vmem:[%s3 + $0xd0] sm:$0xff]
  %v1723 = vld [vmem:[%s3 + $0xd8] sm:$0xff]
  %v1724 = vld [vmem:[%s3 + $0xe0] sm:$0xff]
  %v1725 = vld [vmem:[%s3 + $0xe8] sm:$0xff]
  %v1726 = vld [vmem:[%s3 + $0xf0] sm:$0xff]
  %v1727 = vld [vmem:[%s3 + $0xf8] sm:$0xff]
  %v1728 = vld [vmem:[%s3 + $0x100] sm:$0xff]
  %v1729 = vld [vmem:[%s3 + $0x108] sm:$0xff]
  %v1730 = vld [vmem:[%s3 + $0x110] sm:$0xff]
  %v1731 = vld [vmem:[%s3 + $0x118] sm:$0xff]
  %v1732 = vld [vmem:[%s3 + $0x120] sm:$0xff]
  %v1733 = vld [vmem:[%s3 + $0x128] sm:$0xff]
  %v1734 = vld [vmem:[%s3 + $0x130] sm:$0xff]
  %v1735 = vld [vmem:[%s3 + $0x138] sm:$0xff]
  %v1736 = vld [vmem:[%s3 + $0x140] sm:$0xff]
  %v1737 = vld [vmem:[%s3 + $0x148] sm:$0xff]
  %v1738 = vld [vmem:[%s3 + $0x150] sm:$0xff]
  %v1739 = vld [vmem:[%s3 + $0x158] sm:$0xff]
  %v1740 = vld [vmem:[%s3 + $0x160] sm:$0xff]
  %v1741 = vld [vmem:[%s3 + $0x168] sm:$0xff]
  %v1742 = vld [vmem:[%s3 + $0x170] sm:$0xff]
  %v1743 = vld [vmem:[%s3 + $0x178] sm:$0xff]
  %v1744 = vld [vmem:[%s4] sm:$0x7]
  %v1746 = vlaneseq
  %v1747 = vshrl.u32 %v1746, 7
  %v1748 = vsub.s32 0, %v1747
  %v1749 = vrot.slane %v1744, %v1748
  %v1750 = vlaneseq
  %v1751 = vshrl.u32 %v1750, 7
  %v1752 = vsub.s32 1, %v1751
  %v1753 = vrot.slane %v1744, %v1752
  %v1754 = vlaneseq
  %v1755 = vshrl.u32 %v1754, 7
  %v1756 = vsub.s32 2, %v1755
  %v1757 = vrot.slane %v1744, %v1756
  %1761 = vmatprep.subr.mxu0 %v1742
  %1762 = vmatpush1.msra.mxu0 %v1741
  %1763 = vmatprep.subr.mxu0 %v1739
  %1764 = vmatpush1.msra.mxu0 %v1738
  %1765 = vmatprep.subr.mxu0 %v1736
  %1766 = vmatpush1.msra.mxu0 %v1735
  %1767 = vmatprep.subr.mxu0 %v1733
  %1768 = vmatpush1.msra.mxu0 %v1732
  %1769 = vmatprep.subr.mxu0 %v1730
  %1770 = vmatpush1.msra.mxu0 %v1729
  %1771 = vmatprep.subr.mxu0 %v1727
  %1772 = vmatpush1.msra.mxu0 %v1726
  %1773 = vmatprep.subr.mxu0 %v1724
  %1774 = vmatpush1.msra.mxu0 %v1723
  %1775 = vmatprep.subr.mxu0 %v1721
  %1776 = vmatpush1.msra.mxu0 %v1720
  %1777 = vmatprep.subr.mxu0 %v1718
  %1778 = vmatpush1.msra.mxu0 %v1717
  %1779 = vmatprep.subr.mxu0 %v1715
  %1780 = vmatpush1.msra.mxu0 %v1714
  %1781 = vmatprep.subr.mxu0 %v1712
  %1782 = vmatpush1.msra.mxu0 %v1711
  %1783 = vmatprep.subr.mxu0 %v1709
  %1784 = vmatpush1.msra.mxu0 %v1708
  %1785 = vmatprep.subr.mxu0 %v1706
  %1786 = vmatpush1.msra.mxu0 %v1705
  %1787 = vmatprep.subr.mxu0 %v1703
  %1788 = vmatpush1.msra.mxu0 %v1702
  %1789 = vmatprep.subr.mxu0 %v1700
  %1790 = vmatpush1.msra.mxu0 %v1699
  %1791 = vmatprep.subr.mxu0 %v1697
  %1792 = vmatpush1.msra.mxu0 %v1696
  %1793 = vmatprep.subr.mxu0 0.0
  %1794 = vmatpush2.msra.mxu0 0.0
  %1795 = vmatprep.subr.mxu0 0.0
  %1796 = vmatpush2.msra.mxu0 0.0
  %1797 = vmatprep.subr.mxu0 0.0
  %1798 = vmatpush2.msra.mxu0 0.0
  %1799 = vmatprep.subr.mxu0 0.0
  %1800 = vmatpush2.msra.mxu0 0.0
  %1801 = vmatprep.subr.mxu0 0.0
  %1802 = vmatpush2.msra.mxu0 0.0
  %1803 = vmatprep.subr.mxu0 0.0
  %1804 = vmatpush2.msra.mxu0 0.0
  %1805 = vmatprep.subr.mxu0 0.0
  %1806 = vmatpush2.msra.mxu0 0.0
  %1807 = vmatprep.subr.mxu0 0.0
  %1808 = vmatpush2.msra.mxu0 0.0
  %1809 = vmatprep.subr.mxu0 0.0
  %1810 = vmatpush2.msra.mxu0 0.0
  %1811 = vmatprep.subr.mxu0 0.0
  %1812 = vmatpush2.msra.mxu0 0.0
  %1813 = vmatprep.subr.mxu0 0.0
  %1814 = vmatpush2.msra.mxu0 0.0
  %1815 = vmatprep.subr.mxu0 0.0
  %1816 = vmatpush2.msra.mxu0 0.0
  %1817 = vmatprep.subr.mxu0 0.0
  %1818 = vmatpush2.msra.mxu0 0.0
  %1819 = vmatprep.subr.mxu0 0.0
  %1820 = vmatpush2.msra.mxu0 0.0
  %1821 = vmatprep.subr.mxu0 0.0
  %1822 = vmatpush2.msra.mxu0 0.0
  %1823 = vmatprep.subr.mxu0 0.0
  %1824 = vmatpush2.msra.mxu0 0.0
  %1825 = vmatprep.mubr.f32.mxu0 0.0
  %1826 = vmatmul.mubr.f32.gmra.mxu0 %v1254
  %v1827 = vpop.f32.mrf.mxu0
  %v1828 = vadd.f32 %v1749, %v1827
  %v1829 = vpop.f32.mrf.mxu0
  %v1830 = vadd.f32 %v1753, %v1829
  %1831 = vdwg.mxu0
  %1832 = vmatprep.subr.mxu0 0.0
  %1833 = vmatpush1.msra.mxu0 %v1743
  %1834 = vmatprep.subr.mxu0 0.0
  %1835 = vmatpush1.msra.mxu0 %v1740
  %1836 = vmatprep.subr.mxu0 0.0
  %1837 = vmatpush1.msra.mxu0 %v1737
  %1838 = vmatprep.subr.mxu0 0.0
  %1839 = vmatpush1.msra.mxu0 %v1734
  %1840 = vmatprep.subr.mxu0 0.0
  %1841 = vmatpush1.msra.mxu0 %v1731
  %1842 = vmatprep.subr.mxu0 0.0
  %1843 = vmatpush1.msra.mxu0 %v1728
  %1844 = vmatprep.subr.mxu0 0.0
  %1845 = vmatpush1.msra.mxu0 %v1725
  %1846 = vmatprep.subr.mxu0 0.0
  %1847 = vmatpush1.msra.mxu0 %v1722
  %1848 = vmatprep.subr.mxu0 0.0
  %1849 = vmatpush1.msra.mxu0 %v1719
  %1850 = vmatprep.subr.mxu0 0.0
  %1851 = vmatpush1.msra.mxu0 %v1716
  %1852 = vmatprep.subr.mxu0 0.0
  %1853 = vmatpush1.msra.mxu0 %v1713
  %1854 = vmatprep.subr.mxu0 0.0
  %1855 = vmatpush1.msra.mxu0 %v1710
  %1856 = vmatprep.subr.mxu0 0.0
  %1857 = vmatpush1.msra.mxu0 %v1707
  %1858 = vmatprep.subr.mxu0 0.0
  %1859 = vmatpush1.msra.mxu0 %v1704
  %1860 = vmatprep.subr.mxu0 0.0
  %1861 = vmatpush1.msra.mxu0 %v1701
  %1862 = vmatprep.subr.mxu0 0.0
  %1863 = vmatpush1.msra.mxu0 %v1698
  %1864 = vmatprep.subr.mxu0 0.0
  %1865 = vmatpush2.msra.mxu0 0.0
  %1866 = vmatprep.subr.mxu0 0.0
  %1867 = vmatpush2.msra.mxu0 0.0
  %1868 = vmatprep.subr.mxu0 0.0
  %1869 = vmatpush2.msra.mxu0 0.0
  %1870 = vmatprep.subr.mxu0 0.0
  %1871 = vmatpush2.msra.mxu0 0.0
  %1872 = vmatprep.subr.mxu0 0.0
  %1873 = vmatpush2.msra.mxu0 0.0
  %1874 = vmatprep.subr.mxu0 0.0
  %1875 = vmatpush2.msra.mxu0 0.0
  %1876 = vmatprep.subr.mxu0 0.0
  %1877 = vmatpush2.msra.mxu0 0.0
  %1878 = vmatprep.subr.mxu0 0.0
  %1879 = vmatpush2.msra.mxu0 0.0
  %1880 = vmatprep.subr.mxu0 0.0
  %1881 = vmatpush2.msra.mxu0 0.0
  %1882 = vmatprep.subr.mxu0 0.0
  %1883 = vmatpush2.msra.mxu0 0.0
  %1884 = vmatprep.subr.mxu0 0.0
  %1885 = vmatpush2.msra.mxu0 0.0
  %1886 = vmatprep.subr.mxu0 0.0
  %1887 = vmatpush2.msra.mxu0 0.0
  %1888 = vmatprep.subr.mxu0 0.0
  %1889 = vmatpush2.msra.mxu0 0.0
  %1890 = vmatprep.subr.mxu0 0.0
  %1891 = vmatpush2.msra.mxu0 0.0
  %1892 = vmatprep.subr.mxu0 0.0
  %1893 = vmatpush2.msra.mxu0 0.0
  %1894 = vmatprep.subr.mxu0 0.0
  %1895 = vmatpush2.msra.mxu0 0.0
  %1896 = vmatprep.mubr.f32.mxu0 0.0
  %1897 = vmatmul.mubr.f32.gmra.mxu0 %v1254
  %v1898 = vpop.f32.mrf.mxu0
  %v1899 = vadd.f32 %v1757, %v1898
  %v1900 = vpop.f32.mrf.mxu0
  %1901 = vdwg.mxu0
  %v1902 = vadd.f32 %v1693, %v1828
  %v1903 = vxor.u32 %v1902, 2147483648
  %v1904 = vmul.f32 %v1903, 1.442695
  %v1905 = vpow.pop %v1904
  %v1906 = vadd.f32 %v1905, 1.0
  %v1907 = vrcp.pop %v1906
  %v1908 = vmul.f32 1.0, %v1907
  %v1909 = vadd.f32 %v1694, %v1830
  %v1910 = vxor.u32 %v1909, 2147483648
  %v1911 = vmul.f32 %v1910, 1.442695
  %v1912 = vpow.pop %v1911
  %v1913 = vadd.f32 %v1912, 1.0
  %v1914 = vrcp.pop %v1913
  %v1915 = vmul.f32 1.0, %v1914
  %v1916 = vmul.f32 %v1908, %v1899
  %v1917 = vadd.f32 %v1695, %v1916
  %v1918 = vtanh.pop %v1917
  %v1919 = vsub.f32 1.0, %v1915
  %v1920 = vmul.f32 %v1919, %v1918
  %v1921 = vmul.f32 %v1915, %v1254
  %v1922 = vadd.f32 %v1920, %v1921
  %v1923 = vld [vmem:[%s5] sm:$0xff]
  %v1924 = vld [vmem:[%s5 + $0x8] sm:$0xff]
  %v1925 = vld [vmem:[%s5 + $0x10] sm:$0xff]
  %v1926 = vld [vmem:[%s5 + $0x18] sm:$0xff]
  %v1927 = vld [vmem:[%s5 + $0x20] sm:$0xff]
  %v1928 = vld [vmem:[%s5 + $0x28] sm:$0xff]
  %v1929 = vld [vmem:[%s5 + $0x30] sm:$0xff]
  %v1930 = vld [vmem:[%s5 + $0x38] sm:$0xff]
  %v1931 = vld [vmem:[%s5 + $0x40] sm:$0xff]
  %v1932 = vld [vmem:[%s5 + $0x48] sm:$0xff]
  %v1933 = vld [vmem:[%s5 + $0x50] sm:$0xff]
  %v1934 = vld [vmem:[%s5 + $0x58] sm:$0xff]
  %v1935 = vld [vmem:[%s5 + $0x60] sm:$0xff]
  %v1936 = vld [vmem:[%s5 + $0x68] sm:$0xff]
  %v1937 = vld [vmem:[%s5 + $0x70] sm:$0xff]
  %v1938 = vld [vmem:[%s5 + $0x78] sm:$0xff]
  %v1939 = vld [vmem:[%s5 + $0x80] sm:$0xff]
  %v1940 = vld [vmem:[%s5 + $0x88] sm:$0xff]
  %v1941 = vld [vmem:[%s5 + $0x90] sm:$0xff]
  %v1942 = vld [vmem:[%s5 + $0x98] sm:$0xff]
  %v1943 = vld [vmem:[%s5 + $0xa0] sm:$0xff]
  %v1944 = vld [vmem:[%s5 + $0xa8] sm:$0xff]
  %v1945 = vld [vmem:[%s5 + $0xb0] sm:$0xff]
  %v1946 = vld [vmem:[%s5 + $0xb8] sm:$0xff]
  %v1947 = vld [vmem:[%s5 + $0xc0] sm:$0xff]
  %v1948 = vld [vmem:[%s5 + $0xc8] sm:$0xff]
  %v1949 = vld [vmem:[%s5 + $0xd0] sm:$0xff]
  %v1950 = vld [vmem:[%s5 + $0xd8] sm:$0xff]
  %v1951 = vld [vmem:[%s5 + $0xe0] sm:$0xff]
  %v1952 = vld [vmem:[%s5 + $0xe8] sm:$0xff]
  %v1953 = vld [vmem:[%s5 + $0xf0] sm:$0xff]
  %v1954 = vld [vmem:[%s5 + $0xf8] sm:$0xff]
  %v1955 = vld [vmem:[%s5 + $0x100] sm:$0xff]
  %v1956 = vld [vmem:[%s5 + $0x108] sm:$0xff]
  %v1957 = vld [vmem:[%s5 + $0x110] sm:$0xff]
  %v1958 = vld [vmem:[%s5 + $0x118] sm:$0xff]
  %v1959 = vld [vmem:[%s5 + $0x120] sm:$0xff]
  %v1960 = vld [vmem:[%s5 + $0x128] sm:$0xff]
  %v1961 = vld [vmem:[%s5 + $0x130] sm:$0xff]
  %v1962 = vld [vmem:[%s5 + $0x138] sm:$0xff]
  %v1963 = vld [vmem:[%s5 + $0x140] sm:$0xff]
  %v1964 = vld [vmem:[%s5 + $0x148] sm:$0xff]
  %v1965 = vld [vmem:[%s5 + $0x150] sm:$0xff]
  %v1966 = vld [vmem:[%s5 + $0x158] sm:$0xff]
  %v1967 = vld [vmem:[%s5 + $0x160] sm:$0xff]
  %v1968 = vld [vmem:[%s5 + $0x168] sm:$0xff]
  %v1969 = vld [vmem:[%s5 + $0x170] sm:$0xff]
  %v1970 = vld [vmem:[%s5 + $0x178] sm:$0xff]
  %v1971 = vld [vmem:[%s6] sm:$0x7]
  %v1973 = vlaneseq
  %v1974 = vshrl.u32 %v1973, 7
  %v1975 = vsub.s32 0, %v1974
  %v1976 = vrot.slane %v1971, %v1975
  %v1977 = vlaneseq
  %v1978 = vshrl.u32 %v1977, 7
  %v1979 = vsub.s32 1, %v1978
  %v1980 = vrot.slane %v1971, %v1979
  %v1981 = vlaneseq
  %v1982 = vshrl.u32 %v1981, 7
  %v1983 = vsub.s32 2, %v1982
  %v1984 = vrot.slane %v1971, %v1983
  %1988 = vmatprep.subr.mxu0 %v1969
  %1989 = vmatpush1.msra.mxu0 %v1968
  %1990 = vmatprep.subr.mxu0 %v1966
  %1991 = vmatpush1.msra.mxu0 %v1965
  %1992 = vmatprep.subr.mxu0 %v1963
  %1993 = vmatpush1.msra.mxu0 %v1962
  %1994 = vmatprep.subr.mxu0 %v1960
  %1995 = vmatpush1.msra.mxu0 %v1959
  %1996 = vmatprep.subr.mxu0 %v1957
  %1997 = vmatpush1.msra.mxu0 %v1956
  %1998 = vmatprep.subr.mxu0 %v1954
  %1999 = vmatpush1.msra.mxu0 %v1953
  %2000 = vmatprep.subr.mxu0 %v1951
  %2001 = vmatpush1.msra.mxu0 %v1950
  %2002 = vmatprep.subr.mxu0 %v1948
  %2003 = vmatpush1.msra.mxu0 %v1947
  %2004 = vmatprep.subr.mxu0 %v1945
  %2005 = vmatpush1.msra.mxu0 %v1944
  %2006 = vmatprep.subr.mxu0 %v1942
  %2007 = vmatpush1.msra.mxu0 %v1941
  %2008 = vmatprep.subr.mxu0 %v1939
  %2009 = vmatpush1.msra.mxu0 %v1938
  %2010 = vmatprep.subr.mxu0 %v1936
  %2011 = vmatpush1.msra.mxu0 %v1935
  %2012 = vmatprep.subr.mxu0 %v1933
  %2013 = vmatpush1.msra.mxu0 %v1932
  %2014 = vmatprep.subr.mxu0 %v1930
  %2015 = vmatpush1.msra.mxu0 %v1929
  %2016 = vmatprep.subr.mxu0 %v1927
  %2017 = vmatpush1.msra.mxu0 %v1926
  %2018 = vmatprep.subr.mxu0 %v1924
  %2019 = vmatpush1.msra.mxu0 %v1923
  %2020 = vmatprep.subr.mxu0 0.0
  %2021 = vmatpush2.msra.mxu0 0.0
  %2022 = vmatprep.subr.mxu0 0.0
  %2023 = vmatpush2.msra.mxu0 0.0
  %2024 = vmatprep.subr.mxu0 0.0
  %2025 = vmatpush2.msra.mxu0 0.0
  %2026 = vmatprep.subr.mxu0 0.0
  %2027 = vmatpush2.msra.mxu0 0.0
  %2028 = vmatprep.subr.mxu0 0.0
  %2029 = vmatpush2.msra.mxu0 0.0
  %2030 = vmatprep.subr.mxu0 0.0
  %2031 = vmatpush2.msra.mxu0 0.0
  %2032 = vmatprep.subr.mxu0 0.0
  %2033 = vmatpush2.msra.mxu0 0.0
  %2034 = vmatprep.subr.mxu0 0.0
  %2035 = vmatpush2.msra.mxu0 0.0
  %2036 = vmatprep.subr.mxu0 0.0
  %2037 = vmatpush2.msra.mxu0 0.0
  %2038 = vmatprep.subr.mxu0 0.0
  %2039 = vmatpush2.msra.mxu0 0.0
  %2040 = vmatprep.subr.mxu0 0.0
  %2041 = vmatpush2.msra.mxu0 0.0
  %2042 = vmatprep.subr.mxu0 0.0
  %2043 = vmatpush2.msra.mxu0 0.0
  %2044 = vmatprep.subr.mxu0 0.0
  %2045 = vmatpush2.msra.mxu0 0.0
  %2046 = vmatprep.subr.mxu0 0.0
  %2047 = vmatpush2.msra.mxu0 0.0
  %2048 = vmatprep.subr.mxu0 0.0
  %2049 = vmatpush2.msra.mxu0 0.0
  %2050 = vmatprep.subr.mxu0 0.0
  %2051 = vmatpush2.msra.mxu0 0.0
  %2052 = vmatprep.mubr.f32.mxu0 0.0
  %2053 = vmatmul.mubr.f32.gmra.mxu0 %v1922
  %v2054 = vpop.f32.mrf.mxu0
  %v2055 = vadd.f32 %v1976, %v2054
  %v2056 = vpop.f32.mrf.mxu0
  %v2057 = vadd.f32 %v1980, %v2056
  %2058 = vdwg.mxu0
  %2059 = vmatprep.subr.mxu0 0.0
  %2060 = vmatpush1.msra.mxu0 %v1970
  %2061 = vmatprep.subr.mxu0 0.0
  %2062 = vmatpush1.msra.mxu0 %v1967
  %2063 = vmatprep.subr.mxu0 0.0
  %2064 = vmatpush1.msra.mxu0 %v1964
  %2065 = vmatprep.subr.mxu0 0.0
  %2066 = vmatpush1.msra.mxu0 %v1961
  %2067 = vmatprep.subr.mxu0 0.0
  %2068 = vmatpush1.msra.mxu0 %v1958
  %2069 = vmatprep.subr.mxu0 0.0
  %2070 = vmatpush1.msra.mxu0 %v1955
  %2071 = vmatprep.subr.mxu0 0.0
  %2072 = vmatpush1.msra.mxu0 %v1952
  %2073 = vmatprep.subr.mxu0 0.0
  %2074 = vmatpush1.msra.mxu0 %v1949
  %2075 = vmatprep.subr.mxu0 0.0
  %2076 = vmatpush1.msra.mxu0 %v1946
  %2077 = vmatprep.subr.mxu0 0.0
  %2078 = vmatpush1.msra.mxu0 %v1943
  %2079 = vmatprep.subr.mxu0 0.0
  %2080 = vmatpush1.msra.mxu0 %v1940
  %2081 = vmatprep.subr.mxu0 0.0
  %2082 = vmatpush1.msra.mxu0 %v1937
  %2083 = vmatprep.subr.mxu0 0.0
  %2084 = vmatpush1.msra.mxu0 %v1934
  %2085 = vmatprep.subr.mxu0 0.0
  %2086 = vmatpush1.msra.mxu0 %v1931
  %2087 = vmatprep.subr.mxu0 0.0
  %2088 = vmatpush1.msra.mxu0 %v1928
  %2089 = vmatprep.subr.mxu0 0.0
  %2090 = vmatpush1.msra.mxu0 %v1925
  %2091 = vmatprep.subr.mxu0 0.0
  %2092 = vmatpush2.msra.mxu0 0.0
  %2093 = vmatprep.subr.mxu0 0.0
  %2094 = vmatpush2.msra.mxu0 0.0
  %2095 = vmatprep.subr.mxu0 0.0
  %2096 = vmatpush2.msra.mxu0 0.0
  %2097 = vmatprep.subr.mxu0 0.0
  %2098 = vmatpush2.msra.mxu0 0.0
  %2099 = vmatprep.subr.mxu0 0.0
  %2100 = vmatpush2.msra.mxu0 0.0
  %2101 = vmatprep.subr.mxu0 0.0
  %2102 = vmatpush2.msra.mxu0 0.0
  %2103 = vmatprep.subr.mxu0 0.0
  %2104 = vmatpush2.msra.mxu0 0.0
  %2105 = vmatprep.subr.mxu0 0.0
  %2106 = vmatpush2.msra.mxu0 0.0
  %2107 = vmatprep.subr.mxu0 0.0
  %2108 = vmatpush2.msra.mxu0 0.0
  %2109 = vmatprep.subr.mxu0 0.0
  %2110 = vmatpush2.msra.mxu0 0.0
  %2111 = vmatprep.subr.mxu0 0.0
  %2112 = vmatpush2.msra.mxu0 0.0
  %2113 = vmatprep.subr.mxu0 0.0
  %2114 = vmatpush2.msra.mxu0 0.0
  %2115 = vmatprep.subr.mxu0 0.0
  %2116 = vmatpush2.msra.mxu0 0.0
  %2117 = vmatprep.subr.mxu0 0.0
  %2118 = vmatpush2.msra.mxu0 0.0
  %2119 = vmatprep.subr.mxu0 0.0
  %2120 = vmatpush2.msra.mxu0 0.0
  %2121 = vmatprep.subr.mxu0 0.0
  %2122 = vmatpush2.msra.mxu0 0.0
  %2123 = vmatprep.mubr.f32.mxu0 0.0
  %2124 = vmatmul.mubr.f32.gmra.mxu0 %v1922
  %v2125 = vpop.f32.mrf.mxu0
  %v2126 = vadd.f32 %v1984, %v2125
  %v2127 = vpop.f32.mrf.mxu0
  %2128 = vdwg.mxu0
  %v2129 = vld [vmem:[%s7] sm:$0xff]
  %v2130 = vld [vmem:[%s7 + $0x8] sm:$0xff]
  %v2131 = vld [vmem:[%s7 + $0x10] sm:$0xff]
  %v2132 = vld [vmem:[%s7 + $0x18] sm:$0xff]
  %v2133 = vld [vmem:[%s7 + $0x20] sm:$0xff]
  %v2134 = vld [vmem:[%s7 + $0x28] sm:$0xff]
  %v2135 = vld [vmem:[%s7 + $0x30] sm:$0xff]
  %v2136 = vld [vmem:[%s7 + $0x38] sm:$0xff]
  %v2137 = vld [vmem:[%s7 + $0x40] sm:$0xff]
  %v2138 = vld [vmem:[%s7 + $0x48] sm:$0xff]
  %v2139 = vld [vmem:[%s7 + $0x50] sm:$0xff]
  %v2140 = vld [vmem:[%s7 + $0x58] sm:$0xff]
  %v2141 = vld [vmem:[%s7 + $0x60] sm:$0xff]
  %v2142 = vld [vmem:[%s7 + $0x68] sm:$0xff]
  %v2143 = vld [vmem:[%s7 + $0x70] sm:$0xff]
  %v2144 = vld [vmem:[%s7 + $0x78] sm:$0xff]
  %v2145 = vld [vmem:[%s7 + $0x80] sm:$0xff]
  %v2146 = vld [vmem:[%s7 + $0x88] sm:$0xff]
  %v2147 = vld [vmem:[%s7 + $0x90] sm:$0xff]
  %v2148 = vld [vmem:[%s7 + $0x98] sm:$0xff]
  %v2149 = vld [vmem:[%s7 + $0xa0] sm:$0xff]
  %v2150 = vld [vmem:[%s7 + $0xa8] sm:$0xff]
  %v2151 = vld [vmem:[%s7 + $0xb0] sm:$0xff]
  %v2152 = vld [vmem:[%s7 + $0xb8] sm:$0xff]
  %v2153 = vld [vmem:[%s7 + $0xc0] sm:$0xff]
  %v2154 = vld [vmem:[%s7 + $0xc8] sm:$0xff]
  %v2155 = vld [vmem:[%s7 + $0xd0] sm:$0xff]
  %v2156 = vld [vmem:[%s7 + $0xd8] sm:$0xff]
  %v2157 = vld [vmem:[%s7 + $0xe0] sm:$0xff]
  %v2158 = vld [vmem:[%s7 + $0xe8] sm:$0xff]
  %v2159 = vld [vmem:[%s7 + $0xf0] sm:$0xff]
  %v2160 = vld [vmem:[%s7 + $0xf8] sm:$0xff]
  %v2161 = vld [vmem:[%s7 + $0x100] sm:$0xff]
  %v2162 = vld [vmem:[%s7 + $0x108] sm:$0xff]
  %v2163 = vld [vmem:[%s7 + $0x110] sm:$0xff]
  %v2164 = vld [vmem:[%s7 + $0x118] sm:$0xff]
  %v2165 = vld [vmem:[%s7 + $0x120] sm:$0xff]
  %v2166 = vld [vmem:[%s7 + $0x128] sm:$0xff]
  %v2167 = vld [vmem:[%s7 + $0x130] sm:$0xff]
  %v2168 = vld [vmem:[%s7 + $0x138] sm:$0xff]
  %v2169 = vld [vmem:[%s7 + $0x140] sm:$0xff]
  %v2170 = vld [vmem:[%s7 + $0x148] sm:$0xff]
  %v2171 = vld [vmem:[%s7 + $0x150] sm:$0xff]
  %v2172 = vld [vmem:[%s7 + $0x158] sm:$0xff]
  %v2173 = vld [vmem:[%s7 + $0x160] sm:$0xff]
  %v2174 = vld [vmem:[%s7 + $0x168] sm:$0xff]
  %v2175 = vld [vmem:[%s7 + $0x170] sm:$0xff]
  %v2176 = vld [vmem:[%s7 + $0x178] sm:$0xff]
  %v2177 = vld [vmem:[%s8] sm:$0x7]
  %v2179 = vlaneseq
  %v2180 = vshrl.u32 %v2179, 7
  %v2181 = vsub.s32 0, %v2180
  %v2182 = vrot.slane %v2177, %v2181
  %v2183 = vlaneseq
  %v2184 = vshrl.u32 %v2183, 7
  %v2185 = vsub.s32 1, %v2184
  %v2186 = vrot.slane %v2177, %v2185
  %v2187 = vlaneseq
  %v2188 = vshrl.u32 %v2187, 7
  %v2189 = vsub.s32 2, %v2188
  %v2190 = vrot.slane %v2177, %v2189
  %2194 = vmatprep.subr.mxu0 %v2175
  %2195 = vmatpush1.msra.mxu0 %v2174
  %2196 = vmatprep.subr.mxu0 %v2172
  %2197 = vmatpush1.msra.mxu0 %v2171
  %2198 = vmatprep.subr.mxu0 %v2169
  %2199 = vmatpush1.msra.mxu0 %v2168
  %2200 = vmatprep.subr.mxu0 %v2166
  %2201 = vmatpush1.msra.mxu0 %v2165
  %2202 = vmatprep.subr.mxu0 %v2163
  %2203 = vmatpush1.msra.mxu0 %v2162
  %2204 = vmatprep.subr.mxu0 %v2160
  %2205 = vmatpush1.msra.mxu0 %v2159
  %2206 = vmatprep.subr.mxu0 %v2157
  %2207 = vmatpush1.msra.mxu0 %v2156
  %2208 = vmatprep.subr.mxu0 %v2154
  %2209 = vmatpush1.msra.mxu0 %v2153
  %2210 = vmatprep.subr.mxu0 %v2151
  %2211 = vmatpush1.msra.mxu0 %v2150
  %2212 = vmatprep.subr.mxu0 %v2148
  %2213 = vmatpush1.msra.mxu0 %v2147
  %2214 = vmatprep.subr.mxu0 %v2145
  %2215 = vmatpush1.msra.mxu0 %v2144
  %2216 = vmatprep.subr.mxu0 %v2142
  %2217 = vmatpush1.msra.mxu0 %v2141
  %2218 = vmatprep.subr.mxu0 %v2139
  %2219 = vmatpush1.msra.mxu0 %v2138
  %2220 = vmatprep.subr.mxu0 %v2136
  %2221 = vmatpush1.msra.mxu0 %v2135
  %2222 = vmatprep.subr.mxu0 %v2133
  %2223 = vmatpush1.msra.mxu0 %v2132
  %2224 = vmatprep.subr.mxu0 %v2130
  %2225 = vmatpush1.msra.mxu0 %v2129
  %2226 = vmatprep.subr.mxu0 0.0
  %2227 = vmatpush2.msra.mxu0 0.0
  %2228 = vmatprep.subr.mxu0 0.0
  %2229 = vmatpush2.msra.mxu0 0.0
  %2230 = vmatprep.subr.mxu0 0.0
  %2231 = vmatpush2.msra.mxu0 0.0
  %2232 = vmatprep.subr.mxu0 0.0
  %2233 = vmatpush2.msra.mxu0 0.0
  %2234 = vmatprep.subr.mxu0 0.0
  %2235 = vmatpush2.msra.mxu0 0.0
  %2236 = vmatprep.subr.mxu0 0.0
  %2237 = vmatpush2.msra.mxu0 0.0
  %2238 = vmatprep.subr.mxu0 0.0
  %2239 = vmatpush2.msra.mxu0 0.0
  %2240 = vmatprep.subr.mxu0 0.0
  %2241 = vmatpush2.msra.mxu0 0.0
  %2242 = vmatprep.subr.mxu0 0.0
  %2243 = vmatpush2.msra.mxu0 0.0
  %2244 = vmatprep.subr.mxu0 0.0
  %2245 = vmatpush2.msra.mxu0 0.0
  %2246 = vmatprep.subr.mxu0 0.0
  %2247 = vmatpush2.msra.mxu0 0.0
  %2248 = vmatprep.subr.mxu0 0.0
  %2249 = vmatpush2.msra.mxu0 0.0
  %2250 = vmatprep.subr.mxu0 0.0
  %2251 = vmatpush2.msra.mxu0 0.0
  %2252 = vmatprep.subr.mxu0 0.0
  %2253 = vmatpush2.msra.mxu0 0.0
  %2254 = vmatprep.subr.mxu0 0.0
  %2255 = vmatpush2.msra.mxu0 0.0
  %2256 = vmatprep.subr.mxu0 0.0
  %2257 = vmatpush2.msra.mxu0 0.0
  %2258 = vmatprep.mubr.f32.mxu0 0.0
  %2259 = vmatmul.mubr.f32.gmra.mxu0 %v1687
  %v2260 = vpop.f32.mrf.mxu0
  %v2261 = vadd.f32 %v2182, %v2260
  %v2262 = vpop.f32.mrf.mxu0
  %v2263 = vadd.f32 %v2186, %v2262
  %2264 = vdwg.mxu0
  %2265 = vmatprep.subr.mxu0 0.0
  %2266 = vmatpush1.msra.mxu0 %v2176
  %2267 = vmatprep.subr.mxu0 0.0
  %2268 = vmatpush1.msra.mxu0 %v2173
  %2269 = vmatprep.subr.mxu0 0.0
  %2270 = vmatpush1.msra.mxu0 %v2170
  %2271 = vmatprep.subr.mxu0 0.0
  %2272 = vmatpush1.msra.mxu0 %v2167
  %2273 = vmatprep.subr.mxu0 0.0
  %2274 = vmatpush1.msra.mxu0 %v2164
  %2275 = vmatprep.subr.mxu0 0.0
  %2276 = vmatpush1.msra.mxu0 %v2161
  %2277 = vmatprep.subr.mxu0 0.0
  %2278 = vmatpush1.msra.mxu0 %v2158
  %2279 = vmatprep.subr.mxu0 0.0
  %2280 = vmatpush1.msra.mxu0 %v2155
  %2281 = vmatprep.subr.mxu0 0.0
  %2282 = vmatpush1.msra.mxu0 %v2152
  %2283 = vmatprep.subr.mxu0 0.0
  %2284 = vmatpush1.msra.mxu0 %v2149
  %2285 = vmatprep.subr.mxu0 0.0
  %2286 = vmatpush1.msra.mxu0 %v2146
  %2287 = vmatprep.subr.mxu0 0.0
  %2288 = vmatpush1.msra.mxu0 %v2143
  %2289 = vmatprep.subr.mxu0 0.0
  %2290 = vmatpush1.msra.mxu0 %v2140
  %2291 = vmatprep.subr.mxu0 0.0
  %2292 = vmatpush1.msra.mxu0 %v2137
  %2293 = vmatprep.subr.mxu0 0.0
  %2294 = vmatpush1.msra.mxu0 %v2134
  %2295 = vmatprep.subr.mxu0 0.0
  %2296 = vmatpush1.msra.mxu0 %v2131
  %2297 = vmatprep.subr.mxu0 0.0
  %2298 = vmatpush2.msra.mxu0 0.0
  %2299 = vmatprep.subr.mxu0 0.0
  %2300 = vmatpush2.msra.mxu0 0.0
  %2301 = vmatprep.subr.mxu0 0.0
  %2302 = vmatpush2.msra.mxu0 0.0
  %2303 = vmatprep.subr.mxu0 0.0
  %2304 = vmatpush2.msra.mxu0 0.0
  %2305 = vmatprep.subr.mxu0 0.0
  %2306 = vmatpush2.msra.mxu0 0.0
  %2307 = vmatprep.subr.mxu0 0.0
  %2308 = vmatpush2.msra.mxu0 0.0
  %2309 = vmatprep.subr.mxu0 0.0
  %2310 = vmatpush2.msra.mxu0 0.0
  %2311 = vmatprep.subr.mxu0 0.0
  %2312 = vmatpush2.msra.mxu0 0.0
  %2313 = vmatprep.subr.mxu0 0.0
  %2314 = vmatpush2.msra.mxu0 0.0
  %2315 = vmatprep.subr.mxu0 0.0
  %2316 = vmatpush2.msra.mxu0 0.0
  %2317 = vmatprep.subr.mxu0 0.0
  %2318 = vmatpush2.msra.mxu0 0.0
  %2319 = vmatprep.subr.mxu0 0.0
  %2320 = vmatpush2.msra.mxu0 0.0
  %2321 = vmatprep.subr.mxu0 0.0
  %2322 = vmatpush2.msra.mxu0 0.0
  %2323 = vmatprep.subr.mxu0 0.0
  %2324 = vmatpush2.msra.mxu0 0.0
  %2325 = vmatprep.subr.mxu0 0.0
  %2326 = vmatpush2.msra.mxu0 0.0
  %2327 = vmatprep.subr.mxu0 0.0
  %2328 = vmatpush2.msra.mxu0 0.0
  %2329 = vmatprep.mubr.f32.mxu0 0.0
  %2330 = vmatmul.mubr.f32.gmra.mxu0 %v1687
  %v2331 = vpop.f32.mrf.mxu0
  %v2332 = vadd.f32 %v2190, %v2331
  %v2333 = vpop.f32.mrf.mxu0
  %2334 = vdwg.mxu0
  %v2335 = vadd.f32 %v2055, %v2261
  %v2336 = vxor.u32 %v2335, 2147483648
  %v2337 = vmul.f32 %v2336, 1.442695
  %v2338 = vpow.pop %v2337
  %v2339 = vadd.f32 %v2338, 1.0
  %v2340 = vrcp.pop %v2339
  %v2341 = vmul.f32 1.0, %v2340
  %v2342 = vadd.f32 %v2057, %v2263
  %v2343 = vxor.u32 %v2342, 2147483648
  %v2344 = vmul.f32 %v2343, 1.442695
  %v2345 = vpow.pop %v2344
  %v2346 = vadd.f32 %v2345, 1.0
  %v2347 = vrcp.pop %v2346
  %v2348 = vmul.f32 1.0, %v2347
  %v2349 = vmul.f32 %v2341, %v2332
  %v2350 = vadd.f32 %v2126, %v2349
  %v2351 = vtanh.pop %v2350
  %v2352 = vsub.f32 1.0, %v2348
  %v2353 = vmul.f32 %v2352, %v2351
  %v2354 = vmul.f32 %v2348, %v1687
  %v2355 = vadd.f32 %v2353, %v2354
  %s2356 = scalar_lea.vmem %s11, 16
  %2357 = vst [vmem:[%s2356] sm:$0xff] %v2355
  %s2358 = smul.u32 3, 3
  %s2359 = smul.addr %s2358, 8
  %s2360 = scalar_lea.vmem [#allocation2], %s2359
  %v2361 = vld [vmem:[%s2360] sm:$0xff]
  %v2362 = vld [vmem:[%s2360 + $0x8] sm:$0xff]
  %v2363 = vld [vmem:[%s2360 + $0x10] sm:$0xff]
  %v2364 = vld [vmem:[%s3] sm:$0xff]
  %v2365 = vld [vmem:[%s3 + $0x8] sm:$0xff]
  %v2366 = vld [vmem:[%s3 + $0x10] sm:$0xff]
  %v2367 = vld [vmem:[%s3 + $0x18] sm:$0xff]
  %v2368 = vld [vmem:[%s3 + $0x20] sm:$0xff]
  %v2369 = vld [vmem:[%s3 + $0x28] sm:$0xff]
  %v2370 = vld [vmem:[%s3 + $0x30] sm:$0xff]
  %v2371 = vld [vmem:[%s3 + $0x38] sm:$0xff]
  %v2372 = vld [vmem:[%s3 + $0x40] sm:$0xff]
  %v2373 = vld [vmem:[%s3 + $0x48] sm:$0xff]
  %v2374 = vld [vmem:[%s3 + $0x50] sm:$0xff]
  %v2375 = vld [vmem:[%s3 + $0x58] sm:$0xff]
  %v2376 = vld [vmem:[%s3 + $0x60] sm:$0xff]
  %v2377 = vld [vmem:[%s3 + $0x68] sm:$0xff]
  %v2378 = vld [vmem:[%s3 + $0x70] sm:$0xff]
  %v2379 = vld [vmem:[%s3 + $0x78] sm:$0xff]
  %v2380 = vld [vmem:[%s3 + $0x80] sm:$0xff]
  %v2381 = vld [vmem:[%s3 + $0x88] sm:$0xff]
  %v2382 = vld [vmem:[%s3 + $0x90] sm:$0xff]
  %v2383 = vld [vmem:[%s3 + $0x98] sm:$0xff]
  %v2384 = vld [vmem:[%s3 + $0xa0] sm:$0xff]
  %v2385 = vld [vmem:[%s3 + $0xa8] sm:$0xff]
  %v2386 = vld [vmem:[%s3 + $0xb0] sm:$0xff]
  %v2387 = vld [vmem:[%s3 + $0xb8] sm:$0xff]
  %v2388 = vld [vmem:[%s3 + $0xc0] sm:$0xff]
  %v2389 = vld [vmem:[%s3 + $0xc8] sm:$0xff]
  %v2390 = vld [vmem:[%s3 + $0xd0] sm:$0xff]
  %v2391 = vld [vmem:[%s3 + $0xd8] sm:$0xff]
  %v2392 = vld [vmem:[%s3 + $0xe0] sm:$0xff]
  %v2393 = vld [vmem:[%s3 + $0xe8] sm:$0xff]
  %v2394 = vld [vmem:[%s3 + $0xf0] sm:$0xff]
  %v2395 = vld [vmem:[%s3 + $0xf8] sm:$0xff]
  %v2396 = vld [vmem:[%s3 + $0x100] sm:$0xff]
  %v2397 = vld [vmem:[%s3 + $0x108] sm:$0xff]
  %v2398 = vld [vmem:[%s3 + $0x110] sm:$0xff]
  %v2399 = vld [vmem:[%s3 + $0x118] sm:$0xff]
  %v2400 = vld [vmem:[%s3 + $0x120] sm:$0xff]
  %v2401 = vld [vmem:[%s3 + $0x128] sm:$0xff]
  %v2402 = vld [vmem:[%s3 + $0x130] sm:$0xff]
  %v2403 = vld [vmem:[%s3 + $0x138] sm:$0xff]
  %v2404 = vld [vmem:[%s3 + $0x140] sm:$0xff]
  %v2405 = vld [vmem:[%s3 + $0x148] sm:$0xff]
  %v2406 = vld [vmem:[%s3 + $0x150] sm:$0xff]
  %v2407 = vld [vmem:[%s3 + $0x158] sm:$0xff]
  %v2408 = vld [vmem:[%s3 + $0x160] sm:$0xff]
  %v2409 = vld [vmem:[%s3 + $0x168] sm:$0xff]
  %v2410 = vld [vmem:[%s3 + $0x170] sm:$0xff]
  %v2411 = vld [vmem:[%s3 + $0x178] sm:$0xff]
  %v2412 = vld [vmem:[%s4] sm:$0x7]
  %v2414 = vlaneseq
  %v2415 = vshrl.u32 %v2414, 7
  %v2416 = vsub.s32 0, %v2415
  %v2417 = vrot.slane %v2412, %v2416
  %v2418 = vlaneseq
  %v2419 = vshrl.u32 %v2418, 7
  %v2420 = vsub.s32 1, %v2419
  %v2421 = vrot.slane %v2412, %v2420
  %v2422 = vlaneseq
  %v2423 = vshrl.u32 %v2422, 7
  %v2424 = vsub.s32 2, %v2423
  %v2425 = vrot.slane %v2412, %v2424
  %2429 = vmatprep.subr.mxu0 %v2410
  %2430 = vmatpush1.msra.mxu0 %v2409
  %2431 = vmatprep.subr.mxu0 %v2407
  %2432 = vmatpush1.msra.mxu0 %v2406
  %2433 = vmatprep.subr.mxu0 %v2404
  %2434 = vmatpush1.msra.mxu0 %v2403
  %2435 = vmatprep.subr.mxu0 %v2401
  %2436 = vmatpush1.msra.mxu0 %v2400
  %2437 = vmatprep.subr.mxu0 %v2398
  %2438 = vmatpush1.msra.mxu0 %v2397
  %2439 = vmatprep.subr.mxu0 %v2395
  %2440 = vmatpush1.msra.mxu0 %v2394
  %2441 = vmatprep.subr.mxu0 %v2392
  %2442 = vmatpush1.msra.mxu0 %v2391
  %2443 = vmatprep.subr.mxu0 %v2389
  %2444 = vmatpush1.msra.mxu0 %v2388
  %2445 = vmatprep.subr.mxu0 %v2386
  %2446 = vmatpush1.msra.mxu0 %v2385
  %2447 = vmatprep.subr.mxu0 %v2383
  %2448 = vmatpush1.msra.mxu0 %v2382
  %2449 = vmatprep.subr.mxu0 %v2380
  %2450 = vmatpush1.msra.mxu0 %v2379
  %2451 = vmatprep.subr.mxu0 %v2377
  %2452 = vmatpush1.msra.mxu0 %v2376
  %2453 = vmatprep.subr.mxu0 %v2374
  %2454 = vmatpush1.msra.mxu0 %v2373
  %2455 = vmatprep.subr.mxu0 %v2371
  %2456 = vmatpush1.msra.mxu0 %v2370
  %2457 = vmatprep.subr.mxu0 %v2368
  %2458 = vmatpush1.msra.mxu0 %v2367
  %2459 = vmatprep.subr.mxu0 %v2365
  %2460 = vmatpush1.msra.mxu0 %v2364
  %2461 = vmatprep.subr.mxu0 0.0
  %2462 = vmatpush2.msra.mxu0 0.0
  %2463 = vmatprep.subr.mxu0 0.0
  %2464 = vmatpush2.msra.mxu0 0.0
  %2465 = vmatprep.subr.mxu0 0.0
  %2466 = vmatpush2.msra.mxu0 0.0
  %2467 = vmatprep.subr.mxu0 0.0
  %2468 = vmatpush2.msra.mxu0 0.0
  %2469 = vmatprep.subr.mxu0 0.0
  %2470 = vmatpush2.msra.mxu0 0.0
  %2471 = vmatprep.subr.mxu0 0.0
  %2472 = vmatpush2.msra.mxu0 0.0
  %2473 = vmatprep.subr.mxu0 0.0
  %2474 = vmatpush2.msra.mxu0 0.0
  %2475 = vmatprep.subr.mxu0 0.0
  %2476 = vmatpush2.msra.mxu0 0.0
  %2477 = vmatprep.subr.mxu0 0.0
  %2478 = vmatpush2.msra.mxu0 0.0
  %2479 = vmatprep.subr.mxu0 0.0
  %2480 = vmatpush2.msra.mxu0 0.0
  %2481 = vmatprep.subr.mxu0 0.0
  %2482 = vmatpush2.msra.mxu0 0.0
  %2483 = vmatprep.subr.mxu0 0.0
  %2484 = vmatpush2.msra.mxu0 0.0
  %2485 = vmatprep.subr.mxu0 0.0
  %2486 = vmatpush2.msra.mxu0 0.0
  %2487 = vmatprep.subr.mxu0 0.0
  %2488 = vmatpush2.msra.mxu0 0.0
  %2489 = vmatprep.subr.mxu0 0.0
  %2490 = vmatpush2.msra.mxu0 0.0
  %2491 = vmatprep.subr.mxu0 0.0
  %2492 = vmatpush2.msra.mxu0 0.0
  %2493 = vmatprep.mubr.f32.mxu0 0.0
  %2494 = vmatmul.mubr.f32.gmra.mxu0 %v1922
  %v2495 = vpop.f32.mrf.mxu0
  %v2496 = vadd.f32 %v2417, %v2495
  %v2497 = vpop.f32.mrf.mxu0
  %v2498 = vadd.f32 %v2421, %v2497
  %2499 = vdwg.mxu0
  %2500 = vmatprep.subr.mxu0 0.0
  %2501 = vmatpush1.msra.mxu0 %v2411
  %2502 = vmatprep.subr.mxu0 0.0
  %2503 = vmatpush1.msra.mxu0 %v2408
  %2504 = vmatprep.subr.mxu0 0.0
  %2505 = vmatpush1.msra.mxu0 %v2405
  %2506 = vmatprep.subr.mxu0 0.0
  %2507 = vmatpush1.msra.mxu0 %v2402
  %2508 = vmatprep.subr.mxu0 0.0
  %2509 = vmatpush1.msra.mxu0 %v2399
  %2510 = vmatprep.subr.mxu0 0.0
  %2511 = vmatpush1.msra.mxu0 %v2396
  %2512 = vmatprep.subr.mxu0 0.0
  %2513 = vmatpush1.msra.mxu0 %v2393
  %2514 = vmatprep.subr.mxu0 0.0
  %2515 = vmatpush1.msra.mxu0 %v2390
  %2516 = vmatprep.subr.mxu0 0.0
  %2517 = vmatpush1.msra.mxu0 %v2387
  %2518 = vmatprep.subr.mxu0 0.0
  %2519 = vmatpush1.msra.mxu0 %v2384
  %2520 = vmatprep.subr.mxu0 0.0
  %2521 = vmatpush1.msra.mxu0 %v2381
  %2522 = vmatprep.subr.mxu0 0.0
  %2523 = vmatpush1.msra.mxu0 %v2378
  %2524 = vmatprep.subr.mxu0 0.0
  %2525 = vmatpush1.msra.mxu0 %v2375
  %2526 = vmatprep.subr.mxu0 0.0
  %2527 = vmatpush1.msra.mxu0 %v2372
  %2528 = vmatprep.subr.mxu0 0.0
  %2529 = vmatpush1.msra.mxu0 %v2369
  %2530 = vmatprep.subr.mxu0 0.0
  %2531 = vmatpush1.msra.mxu0 %v2366
  %2532 = vmatprep.subr.mxu0 0.0
  %2533 = vmatpush2.msra.mxu0 0.0
  %2534 = vmatprep.subr.mxu0 0.0
  %2535 = vmatpush2.msra.mxu0 0.0
  %2536 = vmatprep.subr.mxu0 0.0
  %2537 = vmatpush2.msra.mxu0 0.0
  %2538 = vmatprep.subr.mxu0 0.0
  %2539 = vmatpush2.msra.mxu0 0.0
  %2540 = vmatprep.subr.mxu0 0.0
  %2541 = vmatpush2.msra.mxu0 0.0
  %2542 = vmatprep.subr.mxu0 0.0
  %2543 = vmatpush2.msra.mxu0 0.0
  %2544 = vmatprep.subr.mxu0 0.0
  %2545 = vmatpush2.msra.mxu0 0.0
  %2546 = vmatprep.subr.mxu0 0.0
  %2547 = vmatpush2.msra.mxu0 0.0
  %2548 = vmatprep.subr.mxu0 0.0
  %2549 = vmatpush2.msra.mxu0 0.0
  %2550 = vmatprep.subr.mxu0 0.0
  %2551 = vmatpush2.msra.mxu0 0.0
  %2552 = vmatprep.subr.mxu0 0.0
  %2553 = vmatpush2.msra.mxu0 0.0
  %2554 = vmatprep.subr.mxu0 0.0
  %2555 = vmatpush2.msra.mxu0 0.0
  %2556 = vmatprep.subr.mxu0 0.0
  %2557 = vmatpush2.msra.mxu0 0.0
  %2558 = vmatprep.subr.mxu0 0.0
  %2559 = vmatpush2.msra.mxu0 0.0
  %2560 = vmatprep.subr.mxu0 0.0
  %2561 = vmatpush2.msra.mxu0 0.0
  %2562 = vmatprep.subr.mxu0 0.0
  %2563 = vmatpush2.msra.mxu0 0.0
  %2564 = vmatprep.mubr.f32.mxu0 0.0
  %2565 = vmatmul.mubr.f32.gmra.mxu0 %v1922
  %v2566 = vpop.f32.mrf.mxu0
  %v2567 = vadd.f32 %v2425, %v2566
  %v2568 = vpop.f32.mrf.mxu0
  %2569 = vdwg.mxu0
  %v2570 = vadd.f32 %v2361, %v2496
  %v2571 = vxor.u32 %v2570, 2147483648
  %v2572 = vmul.f32 %v2571, 1.442695
  %v2573 = vpow.pop %v2572
  %v2574 = vadd.f32 %v2573, 1.0
  %v2575 = vrcp.pop %v2574
  %v2576 = vmul.f32 1.0, %v2575
  %v2577 = vadd.f32 %v2362, %v2498
  %v2578 = vxor.u32 %v2577, 2147483648
  %v2579 = vmul.f32 %v2578, 1.442695
  %v2580 = vpow.pop %v2579
  %v2581 = vadd.f32 %v2580, 1.0
  %v2582 = vrcp.pop %v2581
  %v2583 = vmul.f32 1.0, %v2582
  %v2584 = vmul.f32 %v2576, %v2567
  %v2585 = vadd.f32 %v2363, %v2584
  %v2586 = vtanh.pop %v2585
  %v2587 = vsub.f32 1.0, %v2583
  %v2588 = vmul.f32 %v2587, %v2586
  %v2589 = vmul.f32 %v2583, %v1922
  %v2590 = vadd.f32 %v2588, %v2589
  %v2591 = vld [vmem:[%s5] sm:$0xff]
  %v2592 = vld [vmem:[%s5 + $0x8] sm:$0xff]
  %v2593 = vld [vmem:[%s5 + $0x10] sm:$0xff]
  %v2594 = vld [vmem:[%s5 + $0x18] sm:$0xff]
  %v2595 = vld [vmem:[%s5 + $0x20] sm:$0xff]
  %v2596 = vld [vmem:[%s5 + $0x28] sm:$0xff]
  %v2597 = vld [vmem:[%s5 + $0x30] sm:$0xff]
  %v2598 = vld [vmem:[%s5 + $0x38] sm:$0xff]
  %v2599 = vld [vmem:[%s5 + $0x40] sm:$0xff]
  %v2600 = vld [vmem:[%s5 + $0x48] sm:$0xff]
  %v2601 = vld [vmem:[%s5 + $0x50] sm:$0xff]
  %v2602 = vld [vmem:[%s5 + $0x58] sm:$0xff]
  %v2603 = vld [vmem:[%s5 + $0x60] sm:$0xff]
  %v2604 = vld [vmem:[%s5 + $0x68] sm:$0xff]
  %v2605 = vld [vmem:[%s5 + $0x70] sm:$0xff]
  %v2606 = vld [vmem:[%s5 + $0x78] sm:$0xff]
  %v2607 = vld [vmem:[%s5 + $0x80] sm:$0xff]
  %v2608 = vld [vmem:[%s5 + $0x88] sm:$0xff]
  %v2609 = vld [vmem:[%s5 + $0x90] sm:$0xff]
  %v2610 = vld [vmem:[%s5 + $0x98] sm:$0xff]
  %v2611 = vld [vmem:[%s5 + $0xa0] sm:$0xff]
  %v2612 = vld [vmem:[%s5 + $0xa8] sm:$0xff]
  %v2613 = vld [vmem:[%s5 + $0xb0] sm:$0xff]
  %v2614 = vld [vmem:[%s5 + $0xb8] sm:$0xff]
  %v2615 = vld [vmem:[%s5 + $0xc0] sm:$0xff]
  %v2616 = vld [vmem:[%s5 + $0xc8] sm:$0xff]
  %v2617 = vld [vmem:[%s5 + $0xd0] sm:$0xff]
  %v2618 = vld [vmem:[%s5 + $0xd8] sm:$0xff]
  %v2619 = vld [vmem:[%s5 + $0xe0] sm:$0xff]
  %v2620 = vld [vmem:[%s5 + $0xe8] sm:$0xff]
  %v2621 = vld [vmem:[%s5 + $0xf0] sm:$0xff]
  %v2622 = vld [vmem:[%s5 + $0xf8] sm:$0xff]
  %v2623 = vld [vmem:[%s5 + $0x100] sm:$0xff]
  %v2624 = vld [vmem:[%s5 + $0x108] sm:$0xff]
  %v2625 = vld [vmem:[%s5 + $0x110] sm:$0xff]
  %v2626 = vld [vmem:[%s5 + $0x118] sm:$0xff]
  %v2627 = vld [vmem:[%s5 + $0x120] sm:$0xff]
  %v2628 = vld [vmem:[%s5 + $0x128] sm:$0xff]
  %v2629 = vld [vmem:[%s5 + $0x130] sm:$0xff]
  %v2630 = vld [vmem:[%s5 + $0x138] sm:$0xff]
  %v2631 = vld [vmem:[%s5 + $0x140] sm:$0xff]
  %v2632 = vld [vmem:[%s5 + $0x148] sm:$0xff]
  %v2633 = vld [vmem:[%s5 + $0x150] sm:$0xff]
  %v2634 = vld [vmem:[%s5 + $0x158] sm:$0xff]
  %v2635 = vld [vmem:[%s5 + $0x160] sm:$0xff]
  %v2636 = vld [vmem:[%s5 + $0x168] sm:$0xff]
  %v2637 = vld [vmem:[%s5 + $0x170] sm:$0xff]
  %v2638 = vld [vmem:[%s5 + $0x178] sm:$0xff]
  %v2639 = vld [vmem:[%s6] sm:$0x7]
  %v2641 = vlaneseq
  %v2642 = vshrl.u32 %v2641, 7
  %v2643 = vsub.s32 0, %v2642
  %v2644 = vrot.slane %v2639, %v2643
  %v2645 = vlaneseq
  %v2646 = vshrl.u32 %v2645, 7
  %v2647 = vsub.s32 1, %v2646
  %v2648 = vrot.slane %v2639, %v2647
  %v2649 = vlaneseq
  %v2650 = vshrl.u32 %v2649, 7
  %v2651 = vsub.s32 2, %v2650
  %v2652 = vrot.slane %v2639, %v2651
  %2656 = vmatprep.subr.mxu0 %v2637
  %2657 = vmatpush1.msra.mxu0 %v2636
  %2658 = vmatprep.subr.mxu0 %v2634
  %2659 = vmatpush1.msra.mxu0 %v2633
  %2660 = vmatprep.subr.mxu0 %v2631
  %2661 = vmatpush1.msra.mxu0 %v2630
  %2662 = vmatprep.subr.mxu0 %v2628
  %2663 = vmatpush1.msra.mxu0 %v2627
  %2664 = vmatprep.subr.mxu0 %v2625
  %2665 = vmatpush1.msra.mxu0 %v2624
  %2666 = vmatprep.subr.mxu0 %v2622
  %2667 = vmatpush1.msra.mxu0 %v2621
  %2668 = vmatprep.subr.mxu0 %v2619
  %2669 = vmatpush1.msra.mxu0 %v2618
  %2670 = vmatprep.subr.mxu0 %v2616
  %2671 = vmatpush1.msra.mxu0 %v2615
  %2672 = vmatprep.subr.mxu0 %v2613
  %2673 = vmatpush1.msra.mxu0 %v2612
  %2674 = vmatprep.subr.mxu0 %v2610
  %2675 = vmatpush1.msra.mxu0 %v2609
  %2676 = vmatprep.subr.mxu0 %v2607
  %2677 = vmatpush1.msra.mxu0 %v2606
  %2678 = vmatprep.subr.mxu0 %v2604
  %2679 = vmatpush1.msra.mxu0 %v2603
  %2680 = vmatprep.subr.mxu0 %v2601
  %2681 = vmatpush1.msra.mxu0 %v2600
  %2682 = vmatprep.subr.mxu0 %v2598
  %2683 = vmatpush1.msra.mxu0 %v2597
  %2684 = vmatprep.subr.mxu0 %v2595
  %2685 = vmatpush1.msra.mxu0 %v2594
  %2686 = vmatprep.subr.mxu0 %v2592
  %2687 = vmatpush1.msra.mxu0 %v2591
  %2688 = vmatprep.subr.mxu0 0.0
  %2689 = vmatpush2.msra.mxu0 0.0
  %2690 = vmatprep.subr.mxu0 0.0
  %2691 = vmatpush2.msra.mxu0 0.0
  %2692 = vmatprep.subr.mxu0 0.0
  %2693 = vmatpush2.msra.mxu0 0.0
  %2694 = vmatprep.subr.mxu0 0.0
  %2695 = vmatpush2.msra.mxu0 0.0
  %2696 = vmatprep.subr.mxu0 0.0
  %2697 = vmatpush2.msra.mxu0 0.0
  %2698 = vmatprep.subr.mxu0 0.0
  %2699 = vmatpush2.msra.mxu0 0.0
  %2700 = vmatprep.subr.mxu0 0.0
  %2701 = vmatpush2.msra.mxu0 0.0
  %2702 = vmatprep.subr.mxu0 0.0
  %2703 = vmatpush2.msra.mxu0 0.0
  %2704 = vmatprep.subr.mxu0 0.0
  %2705 = vmatpush2.msra.mxu0 0.0
  %2706 = vmatprep.subr.mxu0 0.0
  %2707 = vmatpush2.msra.mxu0 0.0
  %2708 = vmatprep.subr.mxu0 0.0
  %2709 = vmatpush2.msra.mxu0 0.0
  %2710 = vmatprep.subr.mxu0 0.0
  %2711 = vmatpush2.msra.mxu0 0.0
  %2712 = vmatprep.subr.mxu0 0.0
  %2713 = vmatpush2.msra.mxu0 0.0
  %2714 = vmatprep.subr.mxu0 0.0
  %2715 = vmatpush2.msra.mxu0 0.0
  %2716 = vmatprep.subr.mxu0 0.0
  %2717 = vmatpush2.msra.mxu0 0.0
  %2718 = vmatprep.subr.mxu0 0.0
  %2719 = vmatpush2.msra.mxu0 0.0
  %2720 = vmatprep.mubr.f32.mxu0 0.0
  %2721 = vmatmul.mubr.f32.gmra.mxu0 %v2590
  %v2722 = vpop.f32.mrf.mxu0
  %v2723 = vadd.f32 %v2644, %v2722
  %v2724 = vpop.f32.mrf.mxu0
  %v2725 = vadd.f32 %v2648, %v2724
  %2726 = vdwg.mxu0
  %2727 = vmatprep.subr.mxu0 0.0
  %2728 = vmatpush1.msra.mxu0 %v2638
  %2729 = vmatprep.subr.mxu0 0.0
  %2730 = vmatpush1.msra.mxu0 %v2635
  %2731 = vmatprep.subr.mxu0 0.0
  %2732 = vmatpush1.msra.mxu0 %v2632
  %2733 = vmatprep.subr.mxu0 0.0
  %2734 = vmatpush1.msra.mxu0 %v2629
  %2735 = vmatprep.subr.mxu0 0.0
  %2736 = vmatpush1.msra.mxu0 %v2626
  %2737 = vmatprep.subr.mxu0 0.0
  %2738 = vmatpush1.msra.mxu0 %v2623
  %2739 = vmatprep.subr.mxu0 0.0
  %2740 = vmatpush1.msra.mxu0 %v2620
  %2741 = vmatprep.subr.mxu0 0.0
  %2742 = vmatpush1.msra.mxu0 %v2617
  %2743 = vmatprep.subr.mxu0 0.0
  %2744 = vmatpush1.msra.mxu0 %v2614
  %2745 = vmatprep.subr.mxu0 0.0
  %2746 = vmatpush1.msra.mxu0 %v2611
  %2747 = vmatprep.subr.mxu0 0.0
  %2748 = vmatpush1.msra.mxu0 %v2608
  %2749 = vmatprep.subr.mxu0 0.0
  %2750 = vmatpush1.msra.mxu0 %v2605
  %2751 = vmatprep.subr.mxu0 0.0
  %2752 = vmatpush1.msra.mxu0 %v2602
  %2753 = vmatprep.subr.mxu0 0.0
  %2754 = vmatpush1.msra.mxu0 %v2599
  %2755 = vmatprep.subr.mxu0 0.0
  %2756 = vmatpush1.msra.mxu0 %v2596
  %2757 = vmatprep.subr.mxu0 0.0
  %2758 = vmatpush1.msra.mxu0 %v2593
  %2759 = vmatprep.subr.mxu0 0.0
  %2760 = vmatpush2.msra.mxu0 0.0
  %2761 = vmatprep.subr.mxu0 0.0
  %2762 = vmatpush2.msra.mxu0 0.0
  %2763 = vmatprep.subr.mxu0 0.0
  %2764 = vmatpush2.msra.mxu0 0.0
  %2765 = vmatprep.subr.mxu0 0.0
  %2766 = vmatpush2.msra.mxu0 0.0
  %2767 = vmatprep.subr.mxu0 0.0
  %2768 = vmatpush2.msra.mxu0 0.0
  %2769 = vmatprep.subr.mxu0 0.0
  %2770 = vmatpush2.msra.mxu0 0.0
  %2771 = vmatprep.subr.mxu0 0.0
  %2772 = vmatpush2.msra.mxu0 0.0
  %2773 = vmatprep.subr.mxu0 0.0
  %2774 = vmatpush2.msra.mxu0 0.0
  %2775 = vmatprep.subr.mxu0 0.0
  %2776 = vmatpush2.msra.mxu0 0.0
  %2777 = vmatprep.subr.mxu0 0.0
  %2778 = vmatpush2.msra.mxu0 0.0
  %2779 = vmatprep.subr.mxu0 0.0
  %2780 = vmatpush2.msra.mxu0 0.0
  %2781 = vmatprep.subr.mxu0 0.0
  %2782 = vmatpush2.msra.mxu0 0.0
  %2783 = vmatprep.subr.mxu0 0.0
  %2784 = vmatpush2.msra.mxu0 0.0
  %2785 = vmatprep.subr.mxu0 0.0
  %2786 = vmatpush2.msra.mxu0 0.0
  %2787 = vmatprep.subr.mxu0 0.0
  %2788 = vmatpush2.msra.mxu0 0.0
  %2789 = vmatprep.subr.mxu0 0.0
  %2790 = vmatpush2.msra.mxu0 0.0
  %2791 = vmatprep.mubr.f32.mxu0 0.0
  %2792 = vmatmul.mubr.f32.gmra.mxu0 %v2590
  %v2793 = vpop.f32.mrf.mxu0
  %v2794 = vadd.f32 %v2652, %v2793
  %v2795 = vpop.f32.mrf.mxu0
  %2796 = vdwg.mxu0
  %v2797 = vld [vmem:[%s7] sm:$0xff]
  %v2798 = vld [vmem:[%s7 + $0x8] sm:$0xff]
  %v2799 = vld [vmem:[%s7 + $0x10] sm:$0xff]
  %v2800 = vld [vmem:[%s7 + $0x18] sm:$0xff]
  %v2801 = vld [vmem:[%s7 + $0x20] sm:$0xff]
  %v2802 = vld [vmem:[%s7 + $0x28] sm:$0xff]
  %v2803 = vld [vmem:[%s7 + $0x30] sm:$0xff]
  %v2804 = vld [vmem:[%s7 + $0x38] sm:$0xff]
  %v2805 = vld [vmem:[%s7 + $0x40] sm:$0xff]
  %v2806 = vld [vmem:[%s7 + $0x48] sm:$0xff]
  %v2807 = vld [vmem:[%s7 + $0x50] sm:$0xff]
  %v2808 = vld [vmem:[%s7 + $0x58] sm:$0xff]
  %v2809 = vld [vmem:[%s7 + $0x60] sm:$0xff]
  %v2810 = vld [vmem:[%s7 + $0x68] sm:$0xff]
  %v2811 = vld [vmem:[%s7 + $0x70] sm:$0xff]
  %v2812 = vld [vmem:[%s7 + $0x78] sm:$0xff]
  %v2813 = vld [vmem:[%s7 + $0x80] sm:$0xff]
  %v2814 = vld [vmem:[%s7 + $0x88] sm:$0xff]
  %v2815 = vld [vmem:[%s7 + $0x90] sm:$0xff]
  %v2816 = vld [vmem:[%s7 + $0x98] sm:$0xff]
  %v2817 = vld [vmem:[%s7 + $0xa0] sm:$0xff]
  %v2818 = vld [vmem:[%s7 + $0xa8] sm:$0xff]
  %v2819 = vld [vmem:[%s7 + $0xb0] sm:$0xff]
  %v2820 = vld [vmem:[%s7 + $0xb8] sm:$0xff]
  %v2821 = vld [vmem:[%s7 + $0xc0] sm:$0xff]
  %v2822 = vld [vmem:[%s7 + $0xc8] sm:$0xff]
  %v2823 = vld [vmem:[%s7 + $0xd0] sm:$0xff]
  %v2824 = vld [vmem:[%s7 + $0xd8] sm:$0xff]
  %v2825 = vld [vmem:[%s7 + $0xe0] sm:$0xff]
  %v2826 = vld [vmem:[%s7 + $0xe8] sm:$0xff]
  %v2827 = vld [vmem:[%s7 + $0xf0] sm:$0xff]
  %v2828 = vld [vmem:[%s7 + $0xf8] sm:$0xff]
  %v2829 = vld [vmem:[%s7 + $0x100] sm:$0xff]
  %v2830 = vld [vmem:[%s7 + $0x108] sm:$0xff]
  %v2831 = vld [vmem:[%s7 + $0x110] sm:$0xff]
  %v2832 = vld [vmem:[%s7 + $0x118] sm:$0xff]
  %v2833 = vld [vmem:[%s7 + $0x120] sm:$0xff]
  %v2834 = vld [vmem:[%s7 + $0x128] sm:$0xff]
  %v2835 = vld [vmem:[%s7 + $0x130] sm:$0xff]
  %v2836 = vld [vmem:[%s7 + $0x138] sm:$0xff]
  %v2837 = vld [vmem:[%s7 + $0x140] sm:$0xff]
  %v2838 = vld [vmem:[%s7 + $0x148] sm:$0xff]
  %v2839 = vld [vmem:[%s7 + $0x150] sm:$0xff]
  %v2840 = vld [vmem:[%s7 + $0x158] sm:$0xff]
  %v2841 = vld [vmem:[%s7 + $0x160] sm:$0xff]
  %v2842 = vld [vmem:[%s7 + $0x168] sm:$0xff]
  %v2843 = vld [vmem:[%s7 + $0x170] sm:$0xff]
  %v2844 = vld [vmem:[%s7 + $0x178] sm:$0xff]
  %v2845 = vld [vmem:[%s8] sm:$0x7]
  %v2847 = vlaneseq
  %v2848 = vshrl.u32 %v2847, 7
  %v2849 = vsub.s32 0, %v2848
  %v2850 = vrot.slane %v2845, %v2849
  %v2851 = vlaneseq
  %v2852 = vshrl.u32 %v2851, 7
  %v2853 = vsub.s32 1, %v2852
  %v2854 = vrot.slane %v2845, %v2853
  %v2855 = vlaneseq
  %v2856 = vshrl.u32 %v2855, 7
  %v2857 = vsub.s32 2, %v2856
  %v2858 = vrot.slane %v2845, %v2857
  %2862 = vmatprep.subr.mxu0 %v2843
  %2863 = vmatpush1.msra.mxu0 %v2842
  %2864 = vmatprep.subr.mxu0 %v2840
  %2865 = vmatpush1.msra.mxu0 %v2839
  %2866 = vmatprep.subr.mxu0 %v2837
  %2867 = vmatpush1.msra.mxu0 %v2836
  %2868 = vmatprep.subr.mxu0 %v2834
  %2869 = vmatpush1.msra.mxu0 %v2833
  %2870 = vmatprep.subr.mxu0 %v2831
  %2871 = vmatpush1.msra.mxu0 %v2830
  %2872 = vmatprep.subr.mxu0 %v2828
  %2873 = vmatpush1.msra.mxu0 %v2827
  %2874 = vmatprep.subr.mxu0 %v2825
  %2875 = vmatpush1.msra.mxu0 %v2824
  %2876 = vmatprep.subr.mxu0 %v2822
  %2877 = vmatpush1.msra.mxu0 %v2821
  %2878 = vmatprep.subr.mxu0 %v2819
  %2879 = vmatpush1.msra.mxu0 %v2818
  %2880 = vmatprep.subr.mxu0 %v2816
  %2881 = vmatpush1.msra.mxu0 %v2815
  %2882 = vmatprep.subr.mxu0 %v2813
  %2883 = vmatpush1.msra.mxu0 %v2812
  %2884 = vmatprep.subr.mxu0 %v2810
  %2885 = vmatpush1.msra.mxu0 %v2809
  %2886 = vmatprep.subr.mxu0 %v2807
  %2887 = vmatpush1.msra.mxu0 %v2806
  %2888 = vmatprep.subr.mxu0 %v2804
  %2889 = vmatpush1.msra.mxu0 %v2803
  %2890 = vmatprep.subr.mxu0 %v2801
  %2891 = vmatpush1.msra.mxu0 %v2800
  %2892 = vmatprep.subr.mxu0 %v2798
  %2893 = vmatpush1.msra.mxu0 %v2797
  %2894 = vmatprep.subr.mxu0 0.0
  %2895 = vmatpush2.msra.mxu0 0.0
  %2896 = vmatprep.subr.mxu0 0.0
  %2897 = vmatpush2.msra.mxu0 0.0
  %2898 = vmatprep.subr.mxu0 0.0
  %2899 = vmatpush2.msra.mxu0 0.0
  %2900 = vmatprep.subr.mxu0 0.0
  %2901 = vmatpush2.msra.mxu0 0.0
  %2902 = vmatprep.subr.mxu0 0.0
  %2903 = vmatpush2.msra.mxu0 0.0
  %2904 = vmatprep.subr.mxu0 0.0
  %2905 = vmatpush2.msra.mxu0 0.0
  %2906 = vmatprep.subr.mxu0 0.0
  %2907 = vmatpush2.msra.mxu0 0.0
  %2908 = vmatprep.subr.mxu0 0.0
  %2909 = vmatpush2.msra.mxu0 0.0
  %2910 = vmatprep.subr.mxu0 0.0
  %2911 = vmatpush2.msra.mxu0 0.0
  %2912 = vmatprep.subr.mxu0 0.0
  %2913 = vmatpush2.msra.mxu0 0.0
  %2914 = vmatprep.subr.mxu0 0.0
  %2915 = vmatpush2.msra.mxu0 0.0
  %2916 = vmatprep.subr.mxu0 0.0
  %2917 = vmatpush2.msra.mxu0 0.0
  %2918 = vmatprep.subr.mxu0 0.0
  %2919 = vmatpush2.msra.mxu0 0.0
  %2920 = vmatprep.subr.mxu0 0.0
  %2921 = vmatpush2.msra.mxu0 0.0
  %2922 = vmatprep.subr.mxu0 0.0
  %2923 = vmatpush2.msra.mxu0 0.0
  %2924 = vmatprep.subr.mxu0 0.0
  %2925 = vmatpush2.msra.mxu0 0.0
  %2926 = vmatprep.mubr.f32.mxu0 0.0
  %2927 = vmatmul.mubr.f32.gmra.mxu0 %v2355
  %v2928 = vpop.f32.mrf.mxu0
  %v2929 = vadd.f32 %v2850, %v2928
  %v2930 = vpop.f32.mrf.mxu0
  %v2931 = vadd.f32 %v2854, %v2930
  %2932 = vdwg.mxu0
  %2933 = vmatprep.subr.mxu0 0.0
  %2934 = vmatpush1.msra.mxu0 %v2844
  %2935 = vmatprep.subr.mxu0 0.0
  %2936 = vmatpush1.msra.mxu0 %v2841
  %2937 = vmatprep.subr.mxu0 0.0
  %2938 = vmatpush1.msra.mxu0 %v2838
  %2939 = vmatprep.subr.mxu0 0.0
  %2940 = vmatpush1.msra.mxu0 %v2835
  %2941 = vmatprep.subr.mxu0 0.0
  %2942 = vmatpush1.msra.mxu0 %v2832
  %2943 = vmatprep.subr.mxu0 0.0
  %2944 = vmatpush1.msra.mxu0 %v2829
  %2945 = vmatprep.subr.mxu0 0.0
  %2946 = vmatpush1.msra.mxu0 %v2826
  %2947 = vmatprep.subr.mxu0 0.0
  %2948 = vmatpush1.msra.mxu0 %v2823
  %2949 = vmatprep.subr.mxu0 0.0
  %2950 = vmatpush1.msra.mxu0 %v2820
  %2951 = vmatprep.subr.mxu0 0.0
  %2952 = vmatpush1.msra.mxu0 %v2817
  %2953 = vmatprep.subr.mxu0 0.0
  %2954 = vmatpush1.msra.mxu0 %v2814
  %2955 = vmatprep.subr.mxu0 0.0
  %2956 = vmatpush1.msra.mxu0 %v2811
  %2957 = vmatprep.subr.mxu0 0.0
  %2958 = vmatpush1.msra.mxu0 %v2808
  %2959 = vmatprep.subr.mxu0 0.0
  %2960 = vmatpush1.msra.mxu0 %v2805
  %2961 = vmatprep.subr.mxu0 0.0
  %2962 = vmatpush1.msra.mxu0 %v2802
  %2963 = vmatprep.subr.mxu0 0.0
  %2964 = vmatpush1.msra.mxu0 %v2799
  %2965 = vmatprep.subr.mxu0 0.0
  %2966 = vmatpush2.msra.mxu0 0.0
  %2967 = vmatprep.subr.mxu0 0.0
  %2968 = vmatpush2.msra.mxu0 0.0
  %2969 = vmatprep.subr.mxu0 0.0
  %2970 = vmatpush2.msra.mxu0 0.0
  %2971 = vmatprep.subr.mxu0 0.0
  %2972 = vmatpush2.msra.mxu0 0.0
  %2973 = vmatprep.subr.mxu0 0.0
  %2974 = vmatpush2.msra.mxu0 0.0
  %2975 = vmatprep.subr.mxu0 0.0
  %2976 = vmatpush2.msra.mxu0 0.0
  %2977 = vmatprep.subr.mxu0 0.0
  %2978 = vmatpush2.msra.mxu0 0.0
  %2979 = vmatprep.subr.mxu0 0.0
  %2980 = vmatpush2.msra.mxu0 0.0
  %2981 = vmatprep.subr.mxu0 0.0
  %2982 = vmatpush2.msra.mxu0 0.0
  %2983 = vmatprep.subr.mxu0 0.0
  %2984 = vmatpush2.msra.mxu0 0.0
  %2985 = vmatprep.subr.mxu0 0.0
  %2986 = vmatpush2.msra.mxu0 0.0
  %2987 = vmatprep.subr.mxu0 0.0
  %2988 = vmatpush2.msra.mxu0 0.0
  %2989 = vmatprep.subr.mxu0 0.0
  %2990 = vmatpush2.msra.mxu0 0.0
  %2991 = vmatprep.subr.mxu0 0.0
  %2992 = vmatpush2.msra.mxu0 0.0
  %2993 = vmatprep.subr.mxu0 0.0
  %2994 = vmatpush2.msra.mxu0 0.0
  %2995 = vmatprep.subr.mxu0 0.0
  %2996 = vmatpush2.msra.mxu0 0.0
  %2997 = vmatprep.mubr.f32.mxu0 0.0
  %2998 = vmatmul.mubr.f32.gmra.mxu0 %v2355
  %v2999 = vpop.f32.mrf.mxu0
  %v3000 = vadd.f32 %v2858, %v2999
  %v3001 = vpop.f32.mrf.mxu0
  %3002 = vdwg.mxu0
  %v3003 = vadd.f32 %v2723, %v2929
  %v3004 = vxor.u32 %v3003, 2147483648
  %v3005 = vmul.f32 %v3004, 1.442695
  %v3006 = vpow.pop %v3005
  %v3007 = vadd.f32 %v3006, 1.0
  %v3008 = vrcp.pop %v3007
  %v3009 = vmul.f32 1.0, %v3008
  %v3010 = vadd.f32 %v2725, %v2931
  %v3011 = vxor.u32 %v3010, 2147483648
  %v3012 = vmul.f32 %v3011, 1.442695
  %v3013 = vpow.pop %v3012
  %v3014 = vadd.f32 %v3013, 1.0
  %v3015 = vrcp.pop %v3014
  %v3016 = vmul.f32 1.0, %v3015
  %v3017 = vmul.f32 %v3009, %v3000
  %v3018 = vadd.f32 %v2794, %v3017
  %v3019 = vtanh.pop %v3018
  %v3020 = vsub.f32 1.0, %v3016
  %v3021 = vmul.f32 %v3020, %v3019
  %v3022 = vmul.f32 %v3016, %v2355
  %v3023 = vadd.f32 %v3021, %v3022
  %s3024 = scalar_lea.vmem %s11, 24
  %3025 = vst [vmem:[%s3024] sm:$0xff] %v3023
  %s3026 = smul.u32 4, 3
  %s3027 = smul.addr %s3026, 8
  %s3028 = scalar_lea.vmem [#allocation2], %s3027
  %v3029 = vld [vmem:[%s3028] sm:$0xff]
  %v3030 = vld [vmem:[%s3028 + $0x8] sm:$0xff]
  %v3031 = vld [vmem:[%s3028 + $0x10] sm:$0xff]
  %v3032 = vld [vmem:[%s3] sm:$0xff]
  %v3033 = vld [vmem:[%s3 + $0x8] sm:$0xff]
  %v3034 = vld [vmem:[%s3 + $0x10] sm:$0xff]
  %v3035 = vld [vmem:[%s3 + $0x18] sm:$0xff]
  %v3036 = vld [vmem:[%s3 + $0x20] sm:$0xff]
  %v3037 = vld [vmem:[%s3 + $0x28] sm:$0xff]
  %v3038 = vld [vmem:[%s3 + $0x30] sm:$0xff]
  %v3039 = vld [vmem:[%s3 + $0x38] sm:$0xff]
  %v3040 = vld [vmem:[%s3 + $0x40] sm:$0xff]
  %v3041 = vld [vmem:[%s3 + $0x48] sm:$0xff]
  %v3042 = vld [vmem:[%s3 + $0x50] sm:$0xff]
  %v3043 = vld [vmem:[%s3 + $0x58] sm:$0xff]
  %v3044 = vld [vmem:[%s3 + $0x60] sm:$0xff]
  %v3045 = vld [vmem:[%s3 + $0x68] sm:$0xff]
  %v3046 = vld [vmem:[%s3 + $0x70] sm:$0xff]
  %v3047 = vld [vmem:[%s3 + $0x78] sm:$0xff]
  %v3048 = vld [vmem:[%s3 + $0x80] sm:$0xff]
  %v3049 = vld [vmem:[%s3 + $0x88] sm:$0xff]
  %v3050 = vld [vmem:[%s3 + $0x90] sm:$0xff]
  %v3051 = vld [vmem:[%s3 + $0x98] sm:$0xff]
  %v3052 = vld [vmem:[%s3 + $0xa0] sm:$0xff]
  %v3053 = vld [vmem:[%s3 + $0xa8] sm:$0xff]
  %v3054 = vld [vmem:[%s3 + $0xb0] sm:$0xff]
  %v3055 = vld [vmem:[%s3 + $0xb8] sm:$0xff]
  %v3056 = vld [vmem:[%s3 + $0xc0] sm:$0xff]
  %v3057 = vld [vmem:[%s3 + $0xc8] sm:$0xff]
  %v3058 = vld [vmem:[%s3 + $0xd0] sm:$0xff]
  %v3059 = vld [vmem:[%s3 + $0xd8] sm:$0xff]
  %v3060 = vld [vmem:[%s3 + $0xe0] sm:$0xff]
  %v3061 = vld [vmem:[%s3 + $0xe8] sm:$0xff]
  %v3062 = vld [vmem:[%s3 + $0xf0] sm:$0xff]
  %v3063 = vld [vmem:[%s3 + $0xf8] sm:$0xff]
  %v3064 = vld [vmem:[%s3 + $0x100] sm:$0xff]
  %v3065 = vld [vmem:[%s3 + $0x108] sm:$0xff]
  %v3066 = vld [vmem:[%s3 + $0x110] sm:$0xff]
  %v3067 = vld [vmem:[%s3 + $0x118] sm:$0xff]
  %v3068 = vld [vmem:[%s3 + $0x120] sm:$0xff]
  %v3069 = vld [vmem:[%s3 + $0x128] sm:$0xff]
  %v3070 = vld [vmem:[%s3 + $0x130] sm:$0xff]
  %v3071 = vld [vmem:[%s3 + $0x138] sm:$0xff]
  %v3072 = vld [vmem:[%s3 + $0x140] sm:$0xff]
  %v3073 = vld [vmem:[%s3 + $0x148] sm:$0xff]
  %v3074 = vld [vmem:[%s3 + $0x150] sm:$0xff]
  %v3075 = vld [vmem:[%s3 + $0x158] sm:$0xff]
  %v3076 = vld [vmem:[%s3 + $0x160] sm:$0xff]
  %v3077 = vld [vmem:[%s3 + $0x168] sm:$0xff]
  %v3078 = vld [vmem:[%s3 + $0x170] sm:$0xff]
  %v3079 = vld [vmem:[%s3 + $0x178] sm:$0xff]
  %v3080 = vld [vmem:[%s4] sm:$0x7]
  %v3082 = vlaneseq
  %v3083 = vshrl.u32 %v3082, 7
  %v3084 = vsub.s32 0, %v3083
  %v3085 = vrot.slane %v3080, %v3084
  %v3086 = vlaneseq
  %v3087 = vshrl.u32 %v3086, 7
  %v3088 = vsub.s32 1, %v3087
  %v3089 = vrot.slane %v3080, %v3088
  %v3090 = vlaneseq
  %v3091 = vshrl.u32 %v3090, 7
  %v3092 = vsub.s32 2, %v3091
  %v3093 = vrot.slane %v3080, %v3092
  %3097 = vmatprep.subr.mxu0 %v3078
  %3098 = vmatpush1.msra.mxu0 %v3077
  %3099 = vmatprep.subr.mxu0 %v3075
  %3100 = vmatpush1.msra.mxu0 %v3074
  %3101 = vmatprep.subr.mxu0 %v3072
  %3102 = vmatpush1.msra.mxu0 %v3071
  %3103 = vmatprep.subr.mxu0 %v3069
  %3104 = vmatpush1.msra.mxu0 %v3068
  %3105 = vmatprep.subr.mxu0 %v3066
  %3106 = vmatpush1.msra.mxu0 %v3065
  %3107 = vmatprep.subr.mxu0 %v3063
  %3108 = vmatpush1.msra.mxu0 %v3062
  %3109 = vmatprep.subr.mxu0 %v3060
  %3110 = vmatpush1.msra.mxu0 %v3059
  %3111 = vmatprep.subr.mxu0 %v3057
  %3112 = vmatpush1.msra.mxu0 %v3056
  %3113 = vmatprep.subr.mxu0 %v3054
  %3114 = vmatpush1.msra.mxu0 %v3053
  %3115 = vmatprep.subr.mxu0 %v3051
  %3116 = vmatpush1.msra.mxu0 %v3050
  %3117 = vmatprep.subr.mxu0 %v3048
  %3118 = vmatpush1.msra.mxu0 %v3047
  %3119 = vmatprep.subr.mxu0 %v3045
  %3120 = vmatpush1.msra.mxu0 %v3044
  %3121 = vmatprep.subr.mxu0 %v3042
  %3122 = vmatpush1.msra.mxu0 %v3041
  %3123 = vmatprep.subr.mxu0 %v3039
  %3124 = vmatpush1.msra.mxu0 %v3038
  %3125 = vmatprep.subr.mxu0 %v3036
  %3126 = vmatpush1.msra.mxu0 %v3035
  %3127 = vmatprep.subr.mxu0 %v3033
  %3128 = vmatpush1.msra.mxu0 %v3032
  %3129 = vmatprep.subr.mxu0 0.0
  %3130 = vmatpush2.msra.mxu0 0.0
  %3131 = vmatprep.subr.mxu0 0.0
  %3132 = vmatpush2.msra.mxu0 0.0
  %3133 = vmatprep.subr.mxu0 0.0
  %3134 = vmatpush2.msra.mxu0 0.0
  %3135 = vmatprep.subr.mxu0 0.0
  %3136 = vmatpush2.msra.mxu0 0.0
  %3137 = vmatprep.subr.mxu0 0.0
  %3138 = vmatpush2.msra.mxu0 0.0
  %3139 = vmatprep.subr.mxu0 0.0
  %3140 = vmatpush2.msra.mxu0 0.0
  %3141 = vmatprep.subr.mxu0 0.0
  %3142 = vmatpush2.msra.mxu0 0.0
  %3143 = vmatprep.subr.mxu0 0.0
  %3144 = vmatpush2.msra.mxu0 0.0
  %3145 = vmatprep.subr.mxu0 0.0
  %3146 = vmatpush2.msra.mxu0 0.0
  %3147 = vmatprep.subr.mxu0 0.0
  %3148 = vmatpush2.msra.mxu0 0.0
  %3149 = vmatprep.subr.mxu0 0.0
  %3150 = vmatpush2.msra.mxu0 0.0
  %3151 = vmatprep.subr.mxu0 0.0
  %3152 = vmatpush2.msra.mxu0 0.0
  %3153 = vmatprep.subr.mxu0 0.0
  %3154 = vmatpush2.msra.mxu0 0.0
  %3155 = vmatprep.subr.mxu0 0.0
  %3156 = vmatpush2.msra.mxu0 0.0
  %3157 = vmatprep.subr.mxu0 0.0
  %3158 = vmatpush2.msra.mxu0 0.0
  %3159 = vmatprep.subr.mxu0 0.0
  %3160 = vmatpush2.msra.mxu0 0.0
  %3161 = vmatprep.mubr.f32.mxu0 0.0
  %3162 = vmatmul.mubr.f32.gmra.mxu0 %v2590
  %v3163 = vpop.f32.mrf.mxu0
  %v3164 = vadd.f32 %v3085, %v3163
  %v3165 = vpop.f32.mrf.mxu0
  %v3166 = vadd.f32 %v3089, %v3165
  %3167 = vdwg.mxu0
  %3168 = vmatprep.subr.mxu0 0.0
  %3169 = vmatpush1.msra.mxu0 %v3079
  %3170 = vmatprep.subr.mxu0 0.0
  %3171 = vmatpush1.msra.mxu0 %v3076
  %3172 = vmatprep.subr.mxu0 0.0
  %3173 = vmatpush1.msra.mxu0 %v3073
  %3174 = vmatprep.subr.mxu0 0.0
  %3175 = vmatpush1.msra.mxu0 %v3070
  %3176 = vmatprep.subr.mxu0 0.0
  %3177 = vmatpush1.msra.mxu0 %v3067
  %3178 = vmatprep.subr.mxu0 0.0
  %3179 = vmatpush1.msra.mxu0 %v3064
  %3180 = vmatprep.subr.mxu0 0.0
  %3181 = vmatpush1.msra.mxu0 %v3061
  %3182 = vmatprep.subr.mxu0 0.0
  %3183 = vmatpush1.msra.mxu0 %v3058
  %3184 = vmatprep.subr.mxu0 0.0
  %3185 = vmatpush1.msra.mxu0 %v3055
  %3186 = vmatprep.subr.mxu0 0.0
  %3187 = vmatpush1.msra.mxu0 %v3052
  %3188 = vmatprep.subr.mxu0 0.0
  %3189 = vmatpush1.msra.mxu0 %v3049
  %3190 = vmatprep.subr.mxu0 0.0
  %3191 = vmatpush1.msra.mxu0 %v3046
  %3192 = vmatprep.subr.mxu0 0.0
  %3193 = vmatpush1.msra.mxu0 %v3043
  %3194 = vmatprep.subr.mxu0 0.0
  %3195 = vmatpush1.msra.mxu0 %v3040
  %3196 = vmatprep.subr.mxu0 0.0
  %3197 = vmatpush1.msra.mxu0 %v3037
  %3198 = vmatprep.subr.mxu0 0.0
  %3199 = vmatpush1.msra.mxu0 %v3034
  %3200 = vmatprep.subr.mxu0 0.0
  %3201 = vmatpush2.msra.mxu0 0.0
  %3202 = vmatprep.subr.mxu0 0.0
  %3203 = vmatpush2.msra.mxu0 0.0
  %3204 = vmatprep.subr.mxu0 0.0
  %3205 = vmatpush2.msra.mxu0 0.0
  %3206 = vmatprep.subr.mxu0 0.0
  %3207 = vmatpush2.msra.mxu0 0.0
  %3208 = vmatprep.subr.mxu0 0.0
  %3209 = vmatpush2.msra.mxu0 0.0
  %3210 = vmatprep.subr.mxu0 0.0
  %3211 = vmatpush2.msra.mxu0 0.0
  %3212 = vmatprep.subr.mxu0 0.0
  %3213 = vmatpush2.msra.mxu0 0.0
  %3214 = vmatprep.subr.mxu0 0.0
  %3215 = vmatpush2.msra.mxu0 0.0
  %3216 = vmatprep.subr.mxu0 0.0
  %3217 = vmatpush2.msra.mxu0 0.0
  %3218 = vmatprep.subr.mxu0 0.0
  %3219 = vmatpush2.msra.mxu0 0.0
  %3220 = vmatprep.subr.mxu0 0.0
  %3221 = vmatpush2.msra.mxu0 0.0
  %3222 = vmatprep.subr.mxu0 0.0
  %3223 = vmatpush2.msra.mxu0 0.0
  %3224 = vmatprep.subr.mxu0 0.0
  %3225 = vmatpush2.msra.mxu0 0.0
  %3226 = vmatprep.subr.mxu0 0.0
  %3227 = vmatpush2.msra.mxu0 0.0
  %3228 = vmatprep.subr.mxu0 0.0
  %3229 = vmatpush2.msra.mxu0 0.0
  %3230 = vmatprep.subr.mxu0 0.0
  %3231 = vmatpush2.msra.mxu0 0.0
  %3232 = vmatprep.mubr.f32.mxu0 0.0
  %3233 = vmatmul.mubr.f32.gmra.mxu0 %v2590
  %v3234 = vpop.f32.mrf.mxu0
  %v3235 = vadd.f32 %v3093, %v3234
  %v3236 = vpop.f32.mrf.mxu0
  %3237 = vdwg.mxu0
  %v3238 = vadd.f32 %v3029, %v3164
  %v3239 = vxor.u32 %v3238, 2147483648
  %v3240 = vmul.f32 %v3239, 1.442695
  %v3241 = vpow.pop %v3240
  %v3242 = vadd.f32 %v3241, 1.0
  %v3243 = vrcp.pop %v3242
  %v3244 = vmul.f32 1.0, %v3243
  %v3245 = vadd.f32 %v3030, %v3166
  %v3246 = vxor.u32 %v3245, 2147483648
  %v3247 = vmul.f32 %v3246, 1.442695
  %v3248 = vpow.pop %v3247
  %v3249 = vadd.f32 %v3248, 1.0
  %v3250 = vrcp.pop %v3249
  %v3251 = vmul.f32 1.0, %v3250
  %v3252 = vmul.f32 %v3244, %v3235
  %v3253 = vadd.f32 %v3031, %v3252
  %v3254 = vtanh.pop %v3253
  %v3255 = vsub.f32 1.0, %v3251
  %v3256 = vmul.f32 %v3255, %v3254
  %v3257 = vmul.f32 %v3251, %v2590
  %v3258 = vadd.f32 %v3256, %v3257
  %v3259 = vld [vmem:[%s5] sm:$0xff]
  %v3260 = vld [vmem:[%s5 + $0x8] sm:$0xff]
  %v3261 = vld [vmem:[%s5 + $0x10] sm:$0xff]
  %v3262 = vld [vmem:[%s5 + $0x18] sm:$0xff]
  %v3263 = vld [vmem:[%s5 + $0x20] sm:$0xff]
  %v3264 = vld [vmem:[%s5 + $0x28] sm:$0xff]
  %v3265 = vld [vmem:[%s5 + $0x30] sm:$0xff]
  %v3266 = vld [vmem:[%s5 + $0x38] sm:$0xff]
  %v3267 = vld [vmem:[%s5 + $0x40] sm:$0xff]
  %v3268 = vld [vmem:[%s5 + $0x48] sm:$0xff]
  %v3269 = vld [vmem:[%s5 + $0x50] sm:$0xff]
  %v3270 = vld [vmem:[%s5 + $0x58] sm:$0xff]
  %v3271 = vld [vmem:[%s5 + $0x60] sm:$0xff]
  %v3272 = vld [vmem:[%s5 + $0x68] sm:$0xff]
  %v3273 = vld [vmem:[%s5 + $0x70] sm:$0xff]
  %v3274 = vld [vmem:[%s5 + $0x78] sm:$0xff]
  %v3275 = vld [vmem:[%s5 + $0x80] sm:$0xff]
  %v3276 = vld [vmem:[%s5 + $0x88] sm:$0xff]
  %v3277 = vld [vmem:[%s5 + $0x90] sm:$0xff]
  %v3278 = vld [vmem:[%s5 + $0x98] sm:$0xff]
  %v3279 = vld [vmem:[%s5 + $0xa0] sm:$0xff]
  %v3280 = vld [vmem:[%s5 + $0xa8] sm:$0xff]
  %v3281 = vld [vmem:[%s5 + $0xb0] sm:$0xff]
  %v3282 = vld [vmem:[%s5 + $0xb8] sm:$0xff]
  %v3283 = vld [vmem:[%s5 + $0xc0] sm:$0xff]
  %v3284 = vld [vmem:[%s5 + $0xc8] sm:$0xff]
  %v3285 = vld [vmem:[%s5 + $0xd0] sm:$0xff]
  %v3286 = vld [vmem:[%s5 + $0xd8] sm:$0xff]
  %v3287 = vld [vmem:[%s5 + $0xe0] sm:$0xff]
  %v3288 = vld [vmem:[%s5 + $0xe8] sm:$0xff]
  %v3289 = vld [vmem:[%s5 + $0xf0] sm:$0xff]
  %v3290 = vld [vmem:[%s5 + $0xf8] sm:$0xff]
  %v3291 = vld [vmem:[%s5 + $0x100] sm:$0xff]
  %v3292 = vld [vmem:[%s5 + $0x108] sm:$0xff]
  %v3293 = vld [vmem:[%s5 + $0x110] sm:$0xff]
  %v3294 = vld [vmem:[%s5 + $0x118] sm:$0xff]
  %v3295 = vld [vmem:[%s5 + $0x120] sm:$0xff]
  %v3296 = vld [vmem:[%s5 + $0x128] sm:$0xff]
  %v3297 = vld [vmem:[%s5 + $0x130] sm:$0xff]
  %v3298 = vld [vmem:[%s5 + $0x138] sm:$0xff]
  %v3299 = vld [vmem:[%s5 + $0x140] sm:$0xff]
  %v3300 = vld [vmem:[%s5 + $0x148] sm:$0xff]
  %v3301 = vld [vmem:[%s5 + $0x150] sm:$0xff]
  %v3302 = vld [vmem:[%s5 + $0x158] sm:$0xff]
  %v3303 = vld [vmem:[%s5 + $0x160] sm:$0xff]
  %v3304 = vld [vmem:[%s5 + $0x168] sm:$0xff]
  %v3305 = vld [vmem:[%s5 + $0x170] sm:$0xff]
  %v3306 = vld [vmem:[%s5 + $0x178] sm:$0xff]
  %v3307 = vld [vmem:[%s6] sm:$0x7]
  %v3309 = vlaneseq
  %v3310 = vshrl.u32 %v3309, 7
  %v3311 = vsub.s32 0, %v3310
  %v3312 = vrot.slane %v3307, %v3311
  %v3313 = vlaneseq
  %v3314 = vshrl.u32 %v3313, 7
  %v3315 = vsub.s32 1, %v3314
  %v3316 = vrot.slane %v3307, %v3315
  %v3317 = vlaneseq
  %v3318 = vshrl.u32 %v3317, 7
  %v3319 = vsub.s32 2, %v3318
  %v3320 = vrot.slane %v3307, %v3319
  %3324 = vmatprep.subr.mxu0 %v3305
  %3325 = vmatpush1.msra.mxu0 %v3304
  %3326 = vmatprep.subr.mxu0 %v3302
  %3327 = vmatpush1.msra.mxu0 %v3301
  %3328 = vmatprep.subr.mxu0 %v3299
  %3329 = vmatpush1.msra.mxu0 %v3298
  %3330 = vmatprep.subr.mxu0 %v3296
  %3331 = vmatpush1.msra.mxu0 %v3295
  %3332 = vmatprep.subr.mxu0 %v3293
  %3333 = vmatpush1.msra.mxu0 %v3292
  %3334 = vmatprep.subr.mxu0 %v3290
  %3335 = vmatpush1.msra.mxu0 %v3289
  %3336 = vmatprep.subr.mxu0 %v3287
  %3337 = vmatpush1.msra.mxu0 %v3286
  %3338 = vmatprep.subr.mxu0 %v3284
  %3339 = vmatpush1.msra.mxu0 %v3283
  %3340 = vmatprep.subr.mxu0 %v3281
  %3341 = vmatpush1.msra.mxu0 %v3280
  %3342 = vmatprep.subr.mxu0 %v3278
  %3343 = vmatpush1.msra.mxu0 %v3277
  %3344 = vmatprep.subr.mxu0 %v3275
  %3345 = vmatpush1.msra.mxu0 %v3274
  %3346 = vmatprep.subr.mxu0 %v3272
  %3347 = vmatpush1.msra.mxu0 %v3271
  %3348 = vmatprep.subr.mxu0 %v3269
  %3349 = vmatpush1.msra.mxu0 %v3268
  %3350 = vmatprep.subr.mxu0 %v3266
  %3351 = vmatpush1.msra.mxu0 %v3265
  %3352 = vmatprep.subr.mxu0 %v3263
  %3353 = vmatpush1.msra.mxu0 %v3262
  %3354 = vmatprep.subr.mxu0 %v3260
  %3355 = vmatpush1.msra.mxu0 %v3259
  %3356 = vmatprep.subr.mxu0 0.0
  %3357 = vmatpush2.msra.mxu0 0.0
  %3358 = vmatprep.subr.mxu0 0.0
  %3359 = vmatpush2.msra.mxu0 0.0
  %3360 = vmatprep.subr.mxu0 0.0
  %3361 = vmatpush2.msra.mxu0 0.0
  %3362 = vmatprep.subr.mxu0 0.0
  %3363 = vmatpush2.msra.mxu0 0.0
  %3364 = vmatprep.subr.mxu0 0.0
  %3365 = vmatpush2.msra.mxu0 0.0
  %3366 = vmatprep.subr.mxu0 0.0
  %3367 = vmatpush2.msra.mxu0 0.0
  %3368 = vmatprep.subr.mxu0 0.0
  %3369 = vmatpush2.msra.mxu0 0.0
  %3370 = vmatprep.subr.mxu0 0.0
  %3371 = vmatpush2.msra.mxu0 0.0
  %3372 = vmatprep.subr.mxu0 0.0
  %3373 = vmatpush2.msra.mxu0 0.0
  %3374 = vmatprep.subr.mxu0 0.0
  %3375 = vmatpush2.msra.mxu0 0.0
  %3376 = vmatprep.subr.mxu0 0.0
  %3377 = vmatpush2.msra.mxu0 0.0
  %3378 = vmatprep.subr.mxu0 0.0
  %3379 = vmatpush2.msra.mxu0 0.0
  %3380 = vmatprep.subr.mxu0 0.0
  %3381 = vmatpush2.msra.mxu0 0.0
  %3382 = vmatprep.subr.mxu0 0.0
  %3383 = vmatpush2.msra.mxu0 0.0
  %3384 = vmatprep.subr.mxu0 0.0
  %3385 = vmatpush2.msra.mxu0 0.0
  %3386 = vmatprep.subr.mxu0 0.0
  %3387 = vmatpush2.msra.mxu0 0.0
  %3388 = vmatprep.mubr.f32.mxu0 0.0
  %3389 = vmatmul.mubr.f32.gmra.mxu0 %v3258
  %v3390 = vpop.f32.mrf.mxu0
  %v3391 = vadd.f32 %v3312, %v3390
  %v3392 = vpop.f32.mrf.mxu0
  %v3393 = vadd.f32 %v3316, %v3392
  %3394 = vdwg.mxu0
  %3395 = vmatprep.subr.mxu0 0.0
  %3396 = vmatpush1.msra.mxu0 %v3306
  %3397 = vmatprep.subr.mxu0 0.0
  %3398 = vmatpush1.msra.mxu0 %v3303
  %3399 = vmatprep.subr.mxu0 0.0
  %3400 = vmatpush1.msra.mxu0 %v3300
  %3401 = vmatprep.subr.mxu0 0.0
  %3402 = vmatpush1.msra.mxu0 %v3297
  %3403 = vmatprep.subr.mxu0 0.0
  %3404 = vmatpush1.msra.mxu0 %v3294
  %3405 = vmatprep.subr.mxu0 0.0
  %3406 = vmatpush1.msra.mxu0 %v3291
  %3407 = vmatprep.subr.mxu0 0.0
  %3408 = vmatpush1.msra.mxu0 %v3288
  %3409 = vmatprep.subr.mxu0 0.0
  %3410 = vmatpush1.msra.mxu0 %v3285
  %3411 = vmatprep.subr.mxu0 0.0
  %3412 = vmatpush1.msra.mxu0 %v3282
  %3413 = vmatprep.subr.mxu0 0.0
  %3414 = vmatpush1.msra.mxu0 %v3279
  %3415 = vmatprep.subr.mxu0 0.0
  %3416 = vmatpush1.msra.mxu0 %v3276
  %3417 = vmatprep.subr.mxu0 0.0
  %3418 = vmatpush1.msra.mxu0 %v3273
  %3419 = vmatprep.subr.mxu0 0.0
  %3420 = vmatpush1.msra.mxu0 %v3270
  %3421 = vmatprep.subr.mxu0 0.0
  %3422 = vmatpush1.msra.mxu0 %v3267
  %3423 = vmatprep.subr.mxu0 0.0
  %3424 = vmatpush1.msra.mxu0 %v3264
  %3425 = vmatprep.subr.mxu0 0.0
  %3426 = vmatpush1.msra.mxu0 %v3261
  %3427 = vmatprep.subr.mxu0 0.0
  %3428 = vmatpush2.msra.mxu0 0.0
  %3429 = vmatprep.subr.mxu0 0.0
  %3430 = vmatpush2.msra.mxu0 0.0
  %3431 = vmatprep.subr.mxu0 0.0
  %3432 = vmatpush2.msra.mxu0 0.0
  %3433 = vmatprep.subr.mxu0 0.0
  %3434 = vmatpush2.msra.mxu0 0.0
  %3435 = vmatprep.subr.mxu0 0.0
  %3436 = vmatpush2.msra.mxu0 0.0
  %3437 = vmatprep.subr.mxu0 0.0
  %3438 = vmatpush2.msra.mxu0 0.0
  %3439 = vmatprep.subr.mxu0 0.0
  %3440 = vmatpush2.msra.mxu0 0.0
  %3441 = vmatprep.subr.mxu0 0.0
  %3442 = vmatpush2.msra.mxu0 0.0
  %3443 = vmatprep.subr.mxu0 0.0
  %3444 = vmatpush2.msra.mxu0 0.0
  %3445 = vmatprep.subr.mxu0 0.0
  %3446 = vmatpush2.msra.mxu0 0.0
  %3447 = vmatprep.subr.mxu0 0.0
  %3448 = vmatpush2.msra.mxu0 0.0
  %3449 = vmatprep.subr.mxu0 0.0
  %3450 = vmatpush2.msra.mxu0 0.0
  %3451 = vmatprep.subr.mxu0 0.0
  %3452 = vmatpush2.msra.mxu0 0.0
  %3453 = vmatprep.subr.mxu0 0.0
  %3454 = vmatpush2.msra.mxu0 0.0
  %3455 = vmatprep.subr.mxu0 0.0
  %3456 = vmatpush2.msra.mxu0 0.0
  %3457 = vmatprep.subr.mxu0 0.0
  %3458 = vmatpush2.msra.mxu0 0.0
  %3459 = vmatprep.mubr.f32.mxu0 0.0
  %3460 = vmatmul.mubr.f32.gmra.mxu0 %v3258
  %v3461 = vpop.f32.mrf.mxu0
  %v3462 = vadd.f32 %v3320, %v3461
  %v3463 = vpop.f32.mrf.mxu0
  %3464 = vdwg.mxu0
  %v3465 = vld [vmem:[%s7] sm:$0xff]
  %v3466 = vld [vmem:[%s7 + $0x8] sm:$0xff]
  %v3467 = vld [vmem:[%s7 + $0x10] sm:$0xff]
  %v3468 = vld [vmem:[%s7 + $0x18] sm:$0xff]
  %v3469 = vld [vmem:[%s7 + $0x20] sm:$0xff]
  %v3470 = vld [vmem:[%s7 + $0x28] sm:$0xff]
  %v3471 = vld [vmem:[%s7 + $0x30] sm:$0xff]
  %v3472 = vld [vmem:[%s7 + $0x38] sm:$0xff]
  %v3473 = vld [vmem:[%s7 + $0x40] sm:$0xff]
  %v3474 = vld [vmem:[%s7 + $0x48] sm:$0xff]
  %v3475 = vld [vmem:[%s7 + $0x50] sm:$0xff]
  %v3476 = vld [vmem:[%s7 + $0x58] sm:$0xff]
  %v3477 = vld [vmem:[%s7 + $0x60] sm:$0xff]
  %v3478 = vld [vmem:[%s7 + $0x68] sm:$0xff]
  %v3479 = vld [vmem:[%s7 + $0x70] sm:$0xff]
  %v3480 = vld [vmem:[%s7 + $0x78] sm:$0xff]
  %v3481 = vld [vmem:[%s7 + $0x80] sm:$0xff]
  %v3482 = vld [vmem:[%s7 + $0x88] sm:$0xff]
  %v3483 = vld [vmem:[%s7 + $0x90] sm:$0xff]
  %v3484 = vld [vmem:[%s7 + $0x98] sm:$0xff]
  %v3485 = vld [vmem:[%s7 + $0xa0] sm:$0xff]
  %v3486 = vld [vmem:[%s7 + $0xa8] sm:$0xff]
  %v3487 = vld [vmem:[%s7 + $0xb0] sm:$0xff]
  %v3488 = vld [vmem:[%s7 + $0xb8] sm:$0xff]
  %v3489 = vld [vmem:[%s7 + $0xc0] sm:$0xff]
  %v3490 = vld [vmem:[%s7 + $0xc8] sm:$0xff]
  %v3491 = vld [vmem:[%s7 + $0xd0] sm:$0xff]
  %v3492 = vld [vmem:[%s7 + $0xd8] sm:$0xff]
  %v3493 = vld [vmem:[%s7 + $0xe0] sm:$0xff]
  %v3494 = vld [vmem:[%s7 + $0xe8] sm:$0xff]
  %v3495 = vld [vmem:[%s7 + $0xf0] sm:$0xff]
  %v3496 = vld [vmem:[%s7 + $0xf8] sm:$0xff]
  %v3497 = vld [vmem:[%s7 + $0x100] sm:$0xff]
  %v3498 = vld [vmem:[%s7 + $0x108] sm:$0xff]
  %v3499 = vld [vmem:[%s7 + $0x110] sm:$0xff]
  %v3500 = vld [vmem:[%s7 + $0x118] sm:$0xff]
  %v3501 = vld [vmem:[%s7 + $0x120] sm:$0xff]
  %v3502 = vld [vmem:[%s7 + $0x128] sm:$0xff]
  %v3503 = vld [vmem:[%s7 + $0x130] sm:$0xff]
  %v3504 = vld [vmem:[%s7 + $0x138] sm:$0xff]
  %v3505 = vld [vmem:[%s7 + $0x140] sm:$0xff]
  %v3506 = vld [vmem:[%s7 + $0x148] sm:$0xff]
  %v3507 = vld [vmem:[%s7 + $0x150] sm:$0xff]
  %v3508 = vld [vmem:[%s7 + $0x158] sm:$0xff]
  %v3509 = vld [vmem:[%s7 + $0x160] sm:$0xff]
  %v3510 = vld [vmem:[%s7 + $0x168] sm:$0xff]
  %v3511 = vld [vmem:[%s7 + $0x170] sm:$0xff]
  %v3512 = vld [vmem:[%s7 + $0x178] sm:$0xff]
  %v3513 = vld [vmem:[%s8] sm:$0x7]
  %v3515 = vlaneseq
  %v3516 = vshrl.u32 %v3515, 7
  %v3517 = vsub.s32 0, %v3516
  %v3518 = vrot.slane %v3513, %v3517
  %v3519 = vlaneseq
  %v3520 = vshrl.u32 %v3519, 7
  %v3521 = vsub.s32 1, %v3520
  %v3522 = vrot.slane %v3513, %v3521
  %v3523 = vlaneseq
  %v3524 = vshrl.u32 %v3523, 7
  %v3525 = vsub.s32 2, %v3524
  %v3526 = vrot.slane %v3513, %v3525
  %3530 = vmatprep.subr.mxu0 %v3511
  %3531 = vmatpush1.msra.mxu0 %v3510
  %3532 = vmatprep.subr.mxu0 %v3508
  %3533 = vmatpush1.msra.mxu0 %v3507
  %3534 = vmatprep.subr.mxu0 %v3505
  %3535 = vmatpush1.msra.mxu0 %v3504
  %3536 = vmatprep.subr.mxu0 %v3502
  %3537 = vmatpush1.msra.mxu0 %v3501
  %3538 = vmatprep.subr.mxu0 %v3499
  %3539 = vmatpush1.msra.mxu0 %v3498
  %3540 = vmatprep.subr.mxu0 %v3496
  %3541 = vmatpush1.msra.mxu0 %v3495
  %3542 = vmatprep.subr.mxu0 %v3493
  %3543 = vmatpush1.msra.mxu0 %v3492
  %3544 = vmatprep.subr.mxu0 %v3490
  %3545 = vmatpush1.msra.mxu0 %v3489
  %3546 = vmatprep.subr.mxu0 %v3487
  %3547 = vmatpush1.msra.mxu0 %v3486
  %3548 = vmatprep.subr.mxu0 %v3484
  %3549 = vmatpush1.msra.mxu0 %v3483
  %3550 = vmatprep.subr.mxu0 %v3481
  %3551 = vmatpush1.msra.mxu0 %v3480
  %3552 = vmatprep.subr.mxu0 %v3478
  %3553 = vmatpush1.msra.mxu0 %v3477
  %3554 = vmatprep.subr.mxu0 %v3475
  %3555 = vmatpush1.msra.mxu0 %v3474
  %3556 = vmatprep.subr.mxu0 %v3472
  %3557 = vmatpush1.msra.mxu0 %v3471
  %3558 = vmatprep.subr.mxu0 %v3469
  %3559 = vmatpush1.msra.mxu0 %v3468
  %3560 = vmatprep.subr.mxu0 %v3466
  %3561 = vmatpush1.msra.mxu0 %v3465
  %3562 = vmatprep.subr.mxu0 0.0
  %3563 = vmatpush2.msra.mxu0 0.0
  %3564 = vmatprep.subr.mxu0 0.0
  %3565 = vmatpush2.msra.mxu0 0.0
  %3566 = vmatprep.subr.mxu0 0.0
  %3567 = vmatpush2.msra.mxu0 0.0
  %3568 = vmatprep.subr.mxu0 0.0
  %3569 = vmatpush2.msra.mxu0 0.0
  %3570 = vmatprep.subr.mxu0 0.0
  %3571 = vmatpush2.msra.mxu0 0.0
  %3572 = vmatprep.subr.mxu0 0.0
  %3573 = vmatpush2.msra.mxu0 0.0
  %3574 = vmatprep.subr.mxu0 0.0
  %3575 = vmatpush2.msra.mxu0 0.0
  %3576 = vmatprep.subr.mxu0 0.0
  %3577 = vmatpush2.msra.mxu0 0.0
  %3578 = vmatprep.subr.mxu0 0.0
  %3579 = vmatpush2.msra.mxu0 0.0
  %3580 = vmatprep.subr.mxu0 0.0
  %3581 = vmatpush2.msra.mxu0 0.0
  %3582 = vmatprep.subr.mxu0 0.0
  %3583 = vmatpush2.msra.mxu0 0.0
  %3584 = vmatprep.subr.mxu0 0.0
  %3585 = vmatpush2.msra.mxu0 0.0
  %3586 = vmatprep.subr.mxu0 0.0
  %3587 = vmatpush2.msra.mxu0 0.0
  %3588 = vmatprep.subr.mxu0 0.0
  %3589 = vmatpush2.msra.mxu0 0.0
  %3590 = vmatprep.subr.mxu0 0.0
  %3591 = vmatpush2.msra.mxu0 0.0
  %3592 = vmatprep.subr.mxu0 0.0
  %3593 = vmatpush2.msra.mxu0 0.0
  %3594 = vmatprep.mubr.f32.mxu0 0.0
  %3595 = vmatmul.mubr.f32.gmra.mxu0 %v3023
  %v3596 = vpop.f32.mrf.mxu0
  %v3597 = vadd.f32 %v3518, %v3596
  %v3598 = vpop.f32.mrf.mxu0
  %v3599 = vadd.f32 %v3522, %v3598
  %3600 = vdwg.mxu0
  %3601 = vmatprep.subr.mxu0 0.0
  %3602 = vmatpush1.msra.mxu0 %v3512
  %3603 = vmatprep.subr.mxu0 0.0
  %3604 = vmatpush1.msra.mxu0 %v3509
  %3605 = vmatprep.subr.mxu0 0.0
  %3606 = vmatpush1.msra.mxu0 %v3506
  %3607 = vmatprep.subr.mxu0 0.0
  %3608 = vmatpush1.msra.mxu0 %v3503
  %3609 = vmatprep.subr.mxu0 0.0
  %3610 = vmatpush1.msra.mxu0 %v3500
  %3611 = vmatprep.subr.mxu0 0.0
  %3612 = vmatpush1.msra.mxu0 %v3497
  %3613 = vmatprep.subr.mxu0 0.0
  %3614 = vmatpush1.msra.mxu0 %v3494
  %3615 = vmatprep.subr.mxu0 0.0
  %3616 = vmatpush1.msra.mxu0 %v3491
  %3617 = vmatprep.subr.mxu0 0.0
  %3618 = vmatpush1.msra.mxu0 %v3488
  %3619 = vmatprep.subr.mxu0 0.0
  %3620 = vmatpush1.msra.mxu0 %v3485
  %3621 = vmatprep.subr.mxu0 0.0
  %3622 = vmatpush1.msra.mxu0 %v3482
  %3623 = vmatprep.subr.mxu0 0.0
  %3624 = vmatpush1.msra.mxu0 %v3479
  %3625 = vmatprep.subr.mxu0 0.0
  %3626 = vmatpush1.msra.mxu0 %v3476
  %3627 = vmatprep.subr.mxu0 0.0
  %3628 = vmatpush1.msra.mxu0 %v3473
  %3629 = vmatprep.subr.mxu0 0.0
  %3630 = vmatpush1.msra.mxu0 %v3470
  %3631 = vmatprep.subr.mxu0 0.0
  %3632 = vmatpush1.msra.mxu0 %v3467
  %3633 = vmatprep.subr.mxu0 0.0
  %3634 = vmatpush2.msra.mxu0 0.0
  %3635 = vmatprep.subr.mxu0 0.0
  %3636 = vmatpush2.msra.mxu0 0.0
  %3637 = vmatprep.subr.mxu0 0.0
  %3638 = vmatpush2.msra.mxu0 0.0
  %3639 = vmatprep.subr.mxu0 0.0
  %3640 = vmatpush2.msra.mxu0 0.0
  %3641 = vmatprep.subr.mxu0 0.0
  %3642 = vmatpush2.msra.mxu0 0.0
  %3643 = vmatprep.subr.mxu0 0.0
  %3644 = vmatpush2.msra.mxu0 0.0
  %3645 = vmatprep.subr.mxu0 0.0
  %3646 = vmatpush2.msra.mxu0 0.0
  %3647 = vmatprep.subr.mxu0 0.0
  %3648 = vmatpush2.msra.mxu0 0.0
  %3649 = vmatprep.subr.mxu0 0.0
  %3650 = vmatpush2.msra.mxu0 0.0
  %3651 = vmatprep.subr.mxu0 0.0
  %3652 = vmatpush2.msra.mxu0 0.0
  %3653 = vmatprep.subr.mxu0 0.0
  %3654 = vmatpush2.msra.mxu0 0.0
  %3655 = vmatprep.subr.mxu0 0.0
  %3656 = vmatpush2.msra.mxu0 0.0
  %3657 = vmatprep.subr.mxu0 0.0
  %3658 = vmatpush2.msra.mxu0 0.0
  %3659 = vmatprep.subr.mxu0 0.0
  %3660 = vmatpush2.msra.mxu0 0.0
  %3661 = vmatprep.subr.mxu0 0.0
  %3662 = vmatpush2.msra.mxu0 0.0
  %3663 = vmatprep.subr.mxu0 0.0
  %3664 = vmatpush2.msra.mxu0 0.0
  %3665 = vmatprep.mubr.f32.mxu0 0.0
  %3666 = vmatmul.mubr.f32.gmra.mxu0 %v3023
  %v3667 = vpop.f32.mrf.mxu0
  %v3668 = vadd.f32 %v3526, %v3667
  %v3669 = vpop.f32.mrf.mxu0
  %3670 = vdwg.mxu0
  %v3671 = vadd.f32 %v3391, %v3597
  %v3672 = vxor.u32 %v3671, 2147483648
  %v3673 = vmul.f32 %v3672, 1.442695
  %v3674 = vpow.pop %v3673
  %v3675 = vadd.f32 %v3674, 1.0
  %v3676 = vrcp.pop %v3675
  %v3677 = vmul.f32 1.0, %v3676
  %v3678 = vadd.f32 %v3393, %v3599
  %v3679 = vxor.u32 %v3678, 2147483648
  %v3680 = vmul.f32 %v3679, 1.442695
  %v3681 = vpow.pop %v3680
  %v3682 = vadd.f32 %v3681, 1.0
  %v3683 = vrcp.pop %v3682
  %v3684 = vmul.f32 1.0, %v3683
  %v3685 = vmul.f32 %v3677, %v3668
  %v3686 = vadd.f32 %v3462, %v3685
  %v3687 = vtanh.pop %v3686
  %v3688 = vsub.f32 1.0, %v3684
  %v3689 = vmul.f32 %v3688, %v3687
  %v3690 = vmul.f32 %v3684, %v3023
  %v3691 = vadd.f32 %v3689, %v3690
  %s3692 = scalar_lea.vmem %s11, 32
  %3693 = vst [vmem:[%s3692] sm:$0xff] %v3691
  %s3694 = smul.u32 5, 3
  %s3695 = smul.addr %s3694, 8
  %s3696 = scalar_lea.vmem [#allocation2], %s3695
  %v3697 = vld [vmem:[%s3696] sm:$0xff]
  %v3698 = vld [vmem:[%s3696 + $0x8] sm:$0xff]
  %v3699 = vld [vmem:[%s3696 + $0x10] sm:$0xff]
  %v3700 = vld [vmem:[%s3] sm:$0xff]
  %v3701 = vld [vmem:[%s3 + $0x8] sm:$0xff]
  %v3702 = vld [vmem:[%s3 + $0x10] sm:$0xff]
  %v3703 = vld [vmem:[%s3 + $0x18] sm:$0xff]
  %v3704 = vld [vmem:[%s3 + $0x20] sm:$0xff]
  %v3705 = vld [vmem:[%s3 + $0x28] sm:$0xff]
  %v3706 = vld [vmem:[%s3 + $0x30] sm:$0xff]
  %v3707 = vld [vmem:[%s3 + $0x38] sm:$0xff]
  %v3708 = vld [vmem:[%s3 + $0x40] sm:$0xff]
  %v3709 = vld [vmem:[%s3 + $0x48] sm:$0xff]
  %v3710 = vld [vmem:[%s3 + $0x50] sm:$0xff]
  %v3711 = vld [vmem:[%s3 + $0x58] sm:$0xff]
  %v3712 = vld [vmem:[%s3 + $0x60] sm:$0xff]
  %v3713 = vld [vmem:[%s3 + $0x68] sm:$0xff]
  %v3714 = vld [vmem:[%s3 + $0x70] sm:$0xff]
  %v3715 = vld [vmem:[%s3 + $0x78] sm:$0xff]
  %v3716 = vld [vmem:[%s3 + $0x80] sm:$0xff]
  %v3717 = vld [vmem:[%s3 + $0x88] sm:$0xff]
  %v3718 = vld [vmem:[%s3 + $0x90] sm:$0xff]
  %v3719 = vld [vmem:[%s3 + $0x98] sm:$0xff]
  %v3720 = vld [vmem:[%s3 + $0xa0] sm:$0xff]
  %v3721 = vld [vmem:[%s3 + $0xa8] sm:$0xff]
  %v3722 = vld [vmem:[%s3 + $0xb0] sm:$0xff]
  %v3723 = vld [vmem:[%s3 + $0xb8] sm:$0xff]
  %v3724 = vld [vmem:[%s3 + $0xc0] sm:$0xff]
  %v3725 = vld [vmem:[%s3 + $0xc8] sm:$0xff]
  %v3726 = vld [vmem:[%s3 + $0xd0] sm:$0xff]
  %v3727 = vld [vmem:[%s3 + $0xd8] sm:$0xff]
  %v3728 = vld [vmem:[%s3 + $0xe0] sm:$0xff]
  %v3729 = vld [vmem:[%s3 + $0xe8] sm:$0xff]
  %v3730 = vld [vmem:[%s3 + $0xf0] sm:$0xff]
  %v3731 = vld [vmem:[%s3 + $0xf8] sm:$0xff]
  %v3732 = vld [vmem:[%s3 + $0x100] sm:$0xff]
  %v3733 = vld [vmem:[%s3 + $0x108] sm:$0xff]
  %v3734 = vld [vmem:[%s3 + $0x110] sm:$0xff]
  %v3735 = vld [vmem:[%s3 + $0x118] sm:$0xff]
  %v3736 = vld [vmem:[%s3 + $0x120] sm:$0xff]
  %v3737 = vld [vmem:[%s3 + $0x128] sm:$0xff]
  %v3738 = vld [vmem:[%s3 + $0x130] sm:$0xff]
  %v3739 = vld [vmem:[%s3 + $0x138] sm:$0xff]
  %v3740 = vld [vmem:[%s3 + $0x140] sm:$0xff]
  %v3741 = vld [vmem:[%s3 + $0x148] sm:$0xff]
  %v3742 = vld [vmem:[%s3 + $0x150] sm:$0xff]
  %v3743 = vld [vmem:[%s3 + $0x158] sm:$0xff]
  %v3744 = vld [vmem:[%s3 + $0x160] sm:$0xff]
  %v3745 = vld [vmem:[%s3 + $0x168] sm:$0xff]
  %v3746 = vld [vmem:[%s3 + $0x170] sm:$0xff]
  %v3747 = vld [vmem:[%s3 + $0x178] sm:$0xff]
  %v3748 = vld [vmem:[%s4] sm:$0x7]
  %v3750 = vlaneseq
  %v3751 = vshrl.u32 %v3750, 7
  %v3752 = vsub.s32 0, %v3751
  %v3753 = vrot.slane %v3748, %v3752
  %v3754 = vlaneseq
  %v3755 = vshrl.u32 %v3754, 7
  %v3756 = vsub.s32 1, %v3755
  %v3757 = vrot.slane %v3748, %v3756
  %v3758 = vlaneseq
  %v3759 = vshrl.u32 %v3758, 7
  %v3760 = vsub.s32 2, %v3759
  %v3761 = vrot.slane %v3748, %v3760
  %3765 = vmatprep.subr.mxu0 %v3746
  %3766 = vmatpush1.msra.mxu0 %v3745
  %3767 = vmatprep.subr.mxu0 %v3743
  %3768 = vmatpush1.msra.mxu0 %v3742
  %3769 = vmatprep.subr.mxu0 %v3740
  %3770 = vmatpush1.msra.mxu0 %v3739
  %3771 = vmatprep.subr.mxu0 %v3737
  %3772 = vmatpush1.msra.mxu0 %v3736
  %3773 = vmatprep.subr.mxu0 %v3734
  %3774 = vmatpush1.msra.mxu0 %v3733
  %3775 = vmatprep.subr.mxu0 %v3731
  %3776 = vmatpush1.msra.mxu0 %v3730
  %3777 = vmatprep.subr.mxu0 %v3728
  %3778 = vmatpush1.msra.mxu0 %v3727
  %3779 = vmatprep.subr.mxu0 %v3725
  %3780 = vmatpush1.msra.mxu0 %v3724
  %3781 = vmatprep.subr.mxu0 %v3722
  %3782 = vmatpush1.msra.mxu0 %v3721
  %3783 = vmatprep.subr.mxu0 %v3719
  %3784 = vmatpush1.msra.mxu0 %v3718
  %3785 = vmatprep.subr.mxu0 %v3716
  %3786 = vmatpush1.msra.mxu0 %v3715
  %3787 = vmatprep.subr.mxu0 %v3713
  %3788 = vmatpush1.msra.mxu0 %v3712
  %3789 = vmatprep.subr.mxu0 %v3710
  %3790 = vmatpush1.msra.mxu0 %v3709
  %3791 = vmatprep.subr.mxu0 %v3707
  %3792 = vmatpush1.msra.mxu0 %v3706
  %3793 = vmatprep.subr.mxu0 %v3704
  %3794 = vmatpush1.msra.mxu0 %v3703
  %3795 = vmatprep.subr.mxu0 %v3701
  %3796 = vmatpush1.msra.mxu0 %v3700
  %3797 = vmatprep.subr.mxu0 0.0
  %3798 = vmatpush2.msra.mxu0 0.0
  %3799 = vmatprep.subr.mxu0 0.0
  %3800 = vmatpush2.msra.mxu0 0.0
  %3801 = vmatprep.subr.mxu0 0.0
  %3802 = vmatpush2.msra.mxu0 0.0
  %3803 = vmatprep.subr.mxu0 0.0
  %3804 = vmatpush2.msra.mxu0 0.0
  %3805 = vmatprep.subr.mxu0 0.0
  %3806 = vmatpush2.msra.mxu0 0.0
  %3807 = vmatprep.subr.mxu0 0.0
  %3808 = vmatpush2.msra.mxu0 0.0
  %3809 = vmatprep.subr.mxu0 0.0
  %3810 = vmatpush2.msra.mxu0 0.0
  %3811 = vmatprep.subr.mxu0 0.0
  %3812 = vmatpush2.msra.mxu0 0.0
  %3813 = vmatprep.subr.mxu0 0.0
  %3814 = vmatpush2.msra.mxu0 0.0
  %3815 = vmatprep.subr.mxu0 0.0
  %3816 = vmatpush2.msra.mxu0 0.0
  %3817 = vmatprep.subr.mxu0 0.0
  %3818 = vmatpush2.msra.mxu0 0.0
  %3819 = vmatprep.subr.mxu0 0.0
  %3820 = vmatpush2.msra.mxu0 0.0
  %3821 = vmatprep.subr.mxu0 0.0
  %3822 = vmatpush2.msra.mxu0 0.0
  %3823 = vmatprep.subr.mxu0 0.0
  %3824 = vmatpush2.msra.mxu0 0.0
  %3825 = vmatprep.subr.mxu0 0.0
  %3826 = vmatpush2.msra.mxu0 0.0
  %3827 = vmatprep.subr.mxu0 0.0
  %3828 = vmatpush2.msra.mxu0 0.0
  %3829 = vmatprep.mubr.f32.mxu0 0.0
  %3830 = vmatmul.mubr.f32.gmra.mxu0 %v3258
  %v3831 = vpop.f32.mrf.mxu0
  %v3832 = vadd.f32 %v3753, %v3831
  %v3833 = vpop.f32.mrf.mxu0
  %v3834 = vadd.f32 %v3757, %v3833
  %3835 = vdwg.mxu0
  %3836 = vmatprep.subr.mxu0 0.0
  %3837 = vmatpush1.msra.mxu0 %v3747
  %3838 = vmatprep.subr.mxu0 0.0
  %3839 = vmatpush1.msra.mxu0 %v3744
  %3840 = vmatprep.subr.mxu0 0.0
  %3841 = vmatpush1.msra.mxu0 %v3741
  %3842 = vmatprep.subr.mxu0 0.0
  %3843 = vmatpush1.msra.mxu0 %v3738
  %3844 = vmatprep.subr.mxu0 0.0
  %3845 = vmatpush1.msra.mxu0 %v3735
  %3846 = vmatprep.subr.mxu0 0.0
  %3847 = vmatpush1.msra.mxu0 %v3732
  %3848 = vmatprep.subr.mxu0 0.0
  %3849 = vmatpush1.msra.mxu0 %v3729
  %3850 = vmatprep.subr.mxu0 0.0
  %3851 = vmatpush1.msra.mxu0 %v3726
  %3852 = vmatprep.subr.mxu0 0.0
  %3853 = vmatpush1.msra.mxu0 %v3723
  %3854 = vmatprep.subr.mxu0 0.0
  %3855 = vmatpush1.msra.mxu0 %v3720
  %3856 = vmatprep.subr.mxu0 0.0
  %3857 = vmatpush1.msra.mxu0 %v3717
  %3858 = vmatprep.subr.mxu0 0.0
  %3859 = vmatpush1.msra.mxu0 %v3714
  %3860 = vmatprep.subr.mxu0 0.0
  %3861 = vmatpush1.msra.mxu0 %v3711
  %3862 = vmatprep.subr.mxu0 0.0
  %3863 = vmatpush1.msra.mxu0 %v3708
  %3864 = vmatprep.subr.mxu0 0.0
  %3865 = vmatpush1.msra.mxu0 %v3705
  %3866 = vmatprep.subr.mxu0 0.0
  %3867 = vmatpush1.msra.mxu0 %v3702
  %3868 = vmatprep.subr.mxu0 0.0
  %3869 = vmatpush2.msra.mxu0 0.0
  %3870 = vmatprep.subr.mxu0 0.0
  %3871 = vmatpush2.msra.mxu0 0.0
  %3872 = vmatprep.subr.mxu0 0.0
  %3873 = vmatpush2.msra.mxu0 0.0
  %3874 = vmatprep.subr.mxu0 0.0
  %3875 = vmatpush2.msra.mxu0 0.0
  %3876 = vmatprep.subr.mxu0 0.0
  %3877 = vmatpush2.msra.mxu0 0.0
  %3878 = vmatprep.subr.mxu0 0.0
  %3879 = vmatpush2.msra.mxu0 0.0
  %3880 = vmatprep.subr.mxu0 0.0
  %3881 = vmatpush2.msra.mxu0 0.0
  %3882 = vmatprep.subr.mxu0 0.0
  %3883 = vmatpush2.msra.mxu0 0.0
  %3884 = vmatprep.subr.mxu0 0.0
  %3885 = vmatpush2.msra.mxu0 0.0
  %3886 = vmatprep.subr.mxu0 0.0
  %3887 = vmatpush2.msra.mxu0 0.0
  %3888 = vmatprep.subr.mxu0 0.0
  %3889 = vmatpush2.msra.mxu0 0.0
  %3890 = vmatprep.subr.mxu0 0.0
  %3891 = vmatpush2.msra.mxu0 0.0
  %3892 = vmatprep.subr.mxu0 0.0
  %3893 = vmatpush2.msra.mxu0 0.0
  %3894 = vmatprep.subr.mxu0 0.0
  %3895 = vmatpush2.msra.mxu0 0.0
  %3896 = vmatprep.subr.mxu0 0.0
  %3897 = vmatpush2.msra.mxu0 0.0
  %3898 = vmatprep.subr.mxu0 0.0
  %3899 = vmatpush2.msra.mxu0 0.0
  %3900 = vmatprep.mubr.f32.mxu0 0.0
  %3901 = vmatmul.mubr.f32.gmra.mxu0 %v3258
  %v3902 = vpop.f32.mrf.mxu0
  %v3903 = vadd.f32 %v3761, %v3902
  %v3904 = vpop.f32.mrf.mxu0
  %3905 = vdwg.mxu0
  %v3906 = vadd.f32 %v3697, %v3832
  %v3907 = vxor.u32 %v3906, 2147483648
  %v3908 = vmul.f32 %v3907, 1.442695
  %v3909 = vpow.pop %v3908
  %v3910 = vadd.f32 %v3909, 1.0
  %v3911 = vrcp.pop %v3910
  %v3912 = vmul.f32 1.0, %v3911
  %v3913 = vadd.f32 %v3698, %v3834
  %v3914 = vxor.u32 %v3913, 2147483648
  %v3915 = vmul.f32 %v3914, 1.442695
  %v3916 = vpow.pop %v3915
  %v3917 = vadd.f32 %v3916, 1.0
  %v3918 = vrcp.pop %v3917
  %v3919 = vmul.f32 1.0, %v3918
  %v3920 = vmul.f32 %v3912, %v3903
  %v3921 = vadd.f32 %v3699, %v3920
  %v3922 = vtanh.pop %v3921
  %v3923 = vsub.f32 1.0, %v3919
  %v3924 = vmul.f32 %v3923, %v3922
  %v3925 = vmul.f32 %v3919, %v3258
  %v3926 = vadd.f32 %v3924, %v3925
  %v3927 = vld [vmem:[%s5] sm:$0xff]
  %v3928 = vld [vmem:[%s5 + $0x8] sm:$0xff]
  %v3929 = vld [vmem:[%s5 + $0x10] sm:$0xff]
  %v3930 = vld [vmem:[%s5 + $0x18] sm:$0xff]
  %v3931 = vld [vmem:[%s5 + $0x20] sm:$0xff]
  %v3932 = vld [vmem:[%s5 + $0x28] sm:$0xff]
  %v3933 = vld [vmem:[%s5 + $0x30] sm:$0xff]
  %v3934 = vld [vmem:[%s5 + $0x38] sm:$0xff]
  %v3935 = vld [vmem:[%s5 + $0x40] sm:$0xff]
  %v3936 = vld [vmem:[%s5 + $0x48] sm:$0xff]
  %v3937 = vld [vmem:[%s5 + $0x50] sm:$0xff]
  %v3938 = vld [vmem:[%s5 + $0x58] sm:$0xff]
  %v3939 = vld [vmem:[%s5 + $0x60] sm:$0xff]
  %v3940 = vld [vmem:[%s5 + $0x68] sm:$0xff]
  %v3941 = vld [vmem:[%s5 + $0x70] sm:$0xff]
  %v3942 = vld [vmem:[%s5 + $0x78] sm:$0xff]
  %v3943 = vld [vmem:[%s5 + $0x80] sm:$0xff]
  %v3944 = vld [vmem:[%s5 + $0x88] sm:$0xff]
  %v3945 = vld [vmem:[%s5 + $0x90] sm:$0xff]
  %v3946 = vld [vmem:[%s5 + $0x98] sm:$0xff]
  %v3947 = vld [vmem:[%s5 + $0xa0] sm:$0xff]
  %v3948 = vld [vmem:[%s5 + $0xa8] sm:$0xff]
  %v3949 = vld [vmem:[%s5 + $0xb0] sm:$0xff]
  %v3950 = vld [vmem:[%s5 + $0xb8] sm:$0xff]
  %v3951 = vld [vmem:[%s5 + $0xc0] sm:$0xff]
  %v3952 = vld [vmem:[%s5 + $0xc8] sm:$0xff]
  %v3953 = vld [vmem:[%s5 + $0xd0] sm:$0xff]
  %v3954 = vld [vmem:[%s5 + $0xd8] sm:$0xff]
  %v3955 = vld [vmem:[%s5 + $0xe0] sm:$0xff]
  %v3956 = vld [vmem:[%s5 + $0xe8] sm:$0xff]
  %v3957 = vld [vmem:[%s5 + $0xf0] sm:$0xff]
  %v3958 = vld [vmem:[%s5 + $0xf8] sm:$0xff]
  %v3959 = vld [vmem:[%s5 + $0x100] sm:$0xff]
  %v3960 = vld [vmem:[%s5 + $0x108] sm:$0xff]
  %v3961 = vld [vmem:[%s5 + $0x110] sm:$0xff]
  %v3962 = vld [vmem:[%s5 + $0x118] sm:$0xff]
  %v3963 = vld [vmem:[%s5 + $0x120] sm:$0xff]
  %v3964 = vld [vmem:[%s5 + $0x128] sm:$0xff]
  %v3965 = vld [vmem:[%s5 + $0x130] sm:$0xff]
  %v3966 = vld [vmem:[%s5 + $0x138] sm:$0xff]
  %v3967 = vld [vmem:[%s5 + $0x140] sm:$0xff]
  %v3968 = vld [vmem:[%s5 + $0x148] sm:$0xff]
  %v3969 = vld [vmem:[%s5 + $0x150] sm:$0xff]
  %v3970 = vld [vmem:[%s5 + $0x158] sm:$0xff]
  %v3971 = vld [vmem:[%s5 + $0x160] sm:$0xff]
  %v3972 = vld [vmem:[%s5 + $0x168] sm:$0xff]
  %v3973 = vld [vmem:[%s5 + $0x170] sm:$0xff]
  %v3974 = vld [vmem:[%s5 + $0x178] sm:$0xff]
  %v3975 = vld [vmem:[%s6] sm:$0x7]
  %v3977 = vlaneseq
  %v3978 = vshrl.u32 %v3977, 7
  %v3979 = vsub.s32 0, %v3978
  %v3980 = vrot.slane %v3975, %v3979
  %v3981 = vlaneseq
  %v3982 = vshrl.u32 %v3981, 7
  %v3983 = vsub.s32 1, %v3982
  %v3984 = vrot.slane %v3975, %v3983
  %v3985 = vlaneseq
  %v3986 = vshrl.u32 %v3985, 7
  %v3987 = vsub.s32 2, %v3986
  %v3988 = vrot.slane %v3975, %v3987
  %3992 = vmatprep.subr.mxu0 %v3973
  %3993 = vmatpush1.msra.mxu0 %v3972
  %3994 = vmatprep.subr.mxu0 %v3970
  %3995 = vmatpush1.msra.mxu0 %v3969
  %3996 = vmatprep.subr.mxu0 %v3967
  %3997 = vmatpush1.msra.mxu0 %v3966
  %3998 = vmatprep.subr.mxu0 %v3964
  %3999 = vmatpush1.msra.mxu0 %v3963
  %4000 = vmatprep.subr.mxu0 %v3961
  %4001 = vmatpush1.msra.mxu0 %v3960
  %4002 = vmatprep.subr.mxu0 %v3958
  %4003 = vmatpush1.msra.mxu0 %v3957
  %4004 = vmatprep.subr.mxu0 %v3955
  %4005 = vmatpush1.msra.mxu0 %v3954
  %4006 = vmatprep.subr.mxu0 %v3952
  %4007 = vmatpush1.msra.mxu0 %v3951
  %4008 = vmatprep.subr.mxu0 %v3949
  %4009 = vmatpush1.msra.mxu0 %v3948
  %4010 = vmatprep.subr.mxu0 %v3946
  %4011 = vmatpush1.msra.mxu0 %v3945
  %4012 = vmatprep.subr.mxu0 %v3943
  %4013 = vmatpush1.msra.mxu0 %v3942
  %4014 = vmatprep.subr.mxu0 %v3940
  %4015 = vmatpush1.msra.mxu0 %v3939
  %4016 = vmatprep.subr.mxu0 %v3937
  %4017 = vmatpush1.msra.mxu0 %v3936
  %4018 = vmatprep.subr.mxu0 %v3934
  %4019 = vmatpush1.msra.mxu0 %v3933
  %4020 = vmatprep.subr.mxu0 %v3931
  %4021 = vmatpush1.msra.mxu0 %v3930
  %4022 = vmatprep.subr.mxu0 %v3928
  %4023 = vmatpush1.msra.mxu0 %v3927
  %4024 = vmatprep.subr.mxu0 0.0
  %4025 = vmatpush2.msra.mxu0 0.0
  %4026 = vmatprep.subr.mxu0 0.0
  %4027 = vmatpush2.msra.mxu0 0.0
  %4028 = vmatprep.subr.mxu0 0.0
  %4029 = vmatpush2.msra.mxu0 0.0
  %4030 = vmatprep.subr.mxu0 0.0
  %4031 = vmatpush2.msra.mxu0 0.0
  %4032 = vmatprep.subr.mxu0 0.0
  %4033 = vmatpush2.msra.mxu0 0.0
  %4034 = vmatprep.subr.mxu0 0.0
  %4035 = vmatpush2.msra.mxu0 0.0
  %4036 = vmatprep.subr.mxu0 0.0
  %4037 = vmatpush2.msra.mxu0 0.0
  %4038 = vmatprep.subr.mxu0 0.0
  %4039 = vmatpush2.msra.mxu0 0.0
  %4040 = vmatprep.subr.mxu0 0.0
  %4041 = vmatpush2.msra.mxu0 0.0
  %4042 = vmatprep.subr.mxu0 0.0
  %4043 = vmatpush2.msra.mxu0 0.0
  %4044 = vmatprep.subr.mxu0 0.0
  %4045 = vmatpush2.msra.mxu0 0.0
  %4046 = vmatprep.subr.mxu0 0.0
  %4047 = vmatpush2.msra.mxu0 0.0
  %4048 = vmatprep.subr.mxu0 0.0
  %4049 = vmatpush2.msra.mxu0 0.0
  %4050 = vmatprep.subr.mxu0 0.0
  %4051 = vmatpush2.msra.mxu0 0.0
  %4052 = vmatprep.subr.mxu0 0.0
  %4053 = vmatpush2.msra.mxu0 0.0
  %4054 = vmatprep.subr.mxu0 0.0
  %4055 = vmatpush2.msra.mxu0 0.0
  %4056 = vmatprep.mubr.f32.mxu0 0.0
  %4057 = vmatmul.mubr.f32.gmra.mxu0 %v3926
  %v4058 = vpop.f32.mrf.mxu0
  %v4059 = vadd.f32 %v3980, %v4058
  %v4060 = vpop.f32.mrf.mxu0
  %v4061 = vadd.f32 %v3984, %v4060
  %4062 = vdwg.mxu0
  %4063 = vmatprep.subr.mxu0 0.0
  %4064 = vmatpush1.msra.mxu0 %v3974
  %4065 = vmatprep.subr.mxu0 0.0
  %4066 = vmatpush1.msra.mxu0 %v3971
  %4067 = vmatprep.subr.mxu0 0.0
  %4068 = vmatpush1.msra.mxu0 %v3968
  %4069 = vmatprep.subr.mxu0 0.0
  %4070 = vmatpush1.msra.mxu0 %v3965
  %4071 = vmatprep.subr.mxu0 0.0
  %4072 = vmatpush1.msra.mxu0 %v3962
  %4073 = vmatprep.subr.mxu0 0.0
  %4074 = vmatpush1.msra.mxu0 %v3959
  %4075 = vmatprep.subr.mxu0 0.0
  %4076 = vmatpush1.msra.mxu0 %v3956
  %4077 = vmatprep.subr.mxu0 0.0
  %4078 = vmatpush1.msra.mxu0 %v3953
  %4079 = vmatprep.subr.mxu0 0.0
  %4080 = vmatpush1.msra.mxu0 %v3950
  %4081 = vmatprep.subr.mxu0 0.0
  %4082 = vmatpush1.msra.mxu0 %v3947
  %4083 = vmatprep.subr.mxu0 0.0
  %4084 = vmatpush1.msra.mxu0 %v3944
  %4085 = vmatprep.subr.mxu0 0.0
  %4086 = vmatpush1.msra.mxu0 %v3941
  %4087 = vmatprep.subr.mxu0 0.0
  %4088 = vmatpush1.msra.mxu0 %v3938
  %4089 = vmatprep.subr.mxu0 0.0
  %4090 = vmatpush1.msra.mxu0 %v3935
  %4091 = vmatprep.subr.mxu0 0.0
  %4092 = vmatpush1.msra.mxu0 %v3932
  %4093 = vmatprep.subr.mxu0 0.0
  %4094 = vmatpush1.msra.mxu0 %v3929
  %4095 = vmatprep.subr.mxu0 0.0
  %4096 = vmatpush2.msra.mxu0 0.0
  %4097 = vmatprep.subr.mxu0 0.0
  %4098 = vmatpush2.msra.mxu0 0.0
  %4099 = vmatprep.subr.mxu0 0.0
  %4100 = vmatpush2.msra.mxu0 0.0
  %4101 = vmatprep.subr.mxu0 0.0
  %4102 = vmatpush2.msra.mxu0 0.0
  %4103 = vmatprep.subr.mxu0 0.0
  %4104 = vmatpush2.msra.mxu0 0.0
  %4105 = vmatprep.subr.mxu0 0.0
  %4106 = vmatpush2.msra.mxu0 0.0
  %4107 = vmatprep.subr.mxu0 0.0
  %4108 = vmatpush2.msra.mxu0 0.0
  %4109 = vmatprep.subr.mxu0 0.0
  %4110 = vmatpush2.msra.mxu0 0.0
  %4111 = vmatprep.subr.mxu0 0.0
  %4112 = vmatpush2.msra.mxu0 0.0
  %4113 = vmatprep.subr.mxu0 0.0
  %4114 = vmatpush2.msra.mxu0 0.0
  %4115 = vmatprep.subr.mxu0 0.0
  %4116 = vmatpush2.msra.mxu0 0.0
  %4117 = vmatprep.subr.mxu0 0.0
  %4118 = vmatpush2.msra.mxu0 0.0
  %4119 = vmatprep.subr.mxu0 0.0
  %4120 = vmatpush2.msra.mxu0 0.0
  %4121 = vmatprep.subr.mxu0 0.0
  %4122 = vmatpush2.msra.mxu0 0.0
  %4123 = vmatprep.subr.mxu0 0.0
  %4124 = vmatpush2.msra.mxu0 0.0
  %4125 = vmatprep.subr.mxu0 0.0
  %4126 = vmatpush2.msra.mxu0 0.0
  %4127 = vmatprep.mubr.f32.mxu0 0.0
  %4128 = vmatmul.mubr.f32.gmra.mxu0 %v3926
  %v4129 = vpop.f32.mrf.mxu0
  %v4130 = vadd.f32 %v3988, %v4129
  %v4131 = vpop.f32.mrf.mxu0
  %4132 = vdwg.mxu0
  %v4133 = vld [vmem:[%s7] sm:$0xff]
  %v4134 = vld [vmem:[%s7 + $0x8] sm:$0xff]
  %v4135 = vld [vmem:[%s7 + $0x10] sm:$0xff]
  %v4136 = vld [vmem:[%s7 + $0x18] sm:$0xff]
  %v4137 = vld [vmem:[%s7 + $0x20] sm:$0xff]
  %v4138 = vld [vmem:[%s7 + $0x28] sm:$0xff]
  %v4139 = vld [vmem:[%s7 + $0x30] sm:$0xff]
  %v4140 = vld [vmem:[%s7 + $0x38] sm:$0xff]
  %v4141 = vld [vmem:[%s7 + $0x40] sm:$0xff]
  %v4142 = vld [vmem:[%s7 + $0x48] sm:$0xff]
  %v4143 = vld [vmem:[%s7 + $0x50] sm:$0xff]
  %v4144 = vld [vmem:[%s7 + $0x58] sm:$0xff]
  %v4145 = vld [vmem:[%s7 + $0x60] sm:$0xff]
  %v4146 = vld [vmem:[%s7 + $0x68] sm:$0xff]
  %v4147 = vld [vmem:[%s7 + $0x70] sm:$0xff]
  %v4148 = vld [vmem:[%s7 + $0x78] sm:$0xff]
  %v4149 = vld [vmem:[%s7 + $0x80] sm:$0xff]
  %v4150 = vld [vmem:[%s7 + $0x88] sm:$0xff]
  %v4151 = vld [vmem:[%s7 + $0x90] sm:$0xff]
  %v4152 = vld [vmem:[%s7 + $0x98] sm:$0xff]
  %v4153 = vld [vmem:[%s7 + $0xa0] sm:$0xff]
  %v4154 = vld [vmem:[%s7 + $0xa8] sm:$0xff]
  %v4155 = vld [vmem:[%s7 + $0xb0] sm:$0xff]
  %v4156 = vld [vmem:[%s7 + $0xb8] sm:$0xff]
  %v4157 = vld [vmem:[%s7 + $0xc0] sm:$0xff]
  %v4158 = vld [vmem:[%s7 + $0xc8] sm:$0xff]
  %v4159 = vld [vmem:[%s7 + $0xd0] sm:$0xff]
  %v4160 = vld [vmem:[%s7 + $0xd8] sm:$0xff]
  %v4161 = vld [vmem:[%s7 + $0xe0] sm:$0xff]
  %v4162 = vld [vmem:[%s7 + $0xe8] sm:$0xff]
  %v4163 = vld [vmem:[%s7 + $0xf0] sm:$0xff]
  %v4164 = vld [vmem:[%s7 + $0xf8] sm:$0xff]
  %v4165 = vld [vmem:[%s7 + $0x100] sm:$0xff]
  %v4166 = vld [vmem:[%s7 + $0x108] sm:$0xff]
  %v4167 = vld [vmem:[%s7 + $0x110] sm:$0xff]
  %v4168 = vld [vmem:[%s7 + $0x118] sm:$0xff]
  %v4169 = vld [vmem:[%s7 + $0x120] sm:$0xff]
  %v4170 = vld [vmem:[%s7 + $0x128] sm:$0xff]
  %v4171 = vld [vmem:[%s7 + $0x130] sm:$0xff]
  %v4172 = vld [vmem:[%s7 + $0x138] sm:$0xff]
  %v4173 = vld [vmem:[%s7 + $0x140] sm:$0xff]
  %v4174 = vld [vmem:[%s7 + $0x148] sm:$0xff]
  %v4175 = vld [vmem:[%s7 + $0x150] sm:$0xff]
  %v4176 = vld [vmem:[%s7 + $0x158] sm:$0xff]
  %v4177 = vld [vmem:[%s7 + $0x160] sm:$0xff]
  %v4178 = vld [vmem:[%s7 + $0x168] sm:$0xff]
  %v4179 = vld [vmem:[%s7 + $0x170] sm:$0xff]
  %v4180 = vld [vmem:[%s7 + $0x178] sm:$0xff]
  %v4181 = vld [vmem:[%s8] sm:$0x7]
  %v4183 = vlaneseq
  %v4184 = vshrl.u32 %v4183, 7
  %v4185 = vsub.s32 0, %v4184
  %v4186 = vrot.slane %v4181, %v4185
  %v4187 = vlaneseq
  %v4188 = vshrl.u32 %v4187, 7
  %v4189 = vsub.s32 1, %v4188
  %v4190 = vrot.slane %v4181, %v4189
  %v4191 = vlaneseq
  %v4192 = vshrl.u32 %v4191, 7
  %v4193 = vsub.s32 2, %v4192
  %v4194 = vrot.slane %v4181, %v4193
  %4198 = vmatprep.subr.mxu0 %v4179
  %4199 = vmatpush1.msra.mxu0 %v4178
  %4200 = vmatprep.subr.mxu0 %v4176
  %4201 = vmatpush1.msra.mxu0 %v4175
  %4202 = vmatprep.subr.mxu0 %v4173
  %4203 = vmatpush1.msra.mxu0 %v4172
  %4204 = vmatprep.subr.mxu0 %v4170
  %4205 = vmatpush1.msra.mxu0 %v4169
  %4206 = vmatprep.subr.mxu0 %v4167
  %4207 = vmatpush1.msra.mxu0 %v4166
  %4208 = vmatprep.subr.mxu0 %v4164
  %4209 = vmatpush1.msra.mxu0 %v4163
  %4210 = vmatprep.subr.mxu0 %v4161
  %4211 = vmatpush1.msra.mxu0 %v4160
  %4212 = vmatprep.subr.mxu0 %v4158
  %4213 = vmatpush1.msra.mxu0 %v4157
  %4214 = vmatprep.subr.mxu0 %v4155
  %4215 = vmatpush1.msra.mxu0 %v4154
  %4216 = vmatprep.subr.mxu0 %v4152
  %4217 = vmatpush1.msra.mxu0 %v4151
  %4218 = vmatprep.subr.mxu0 %v4149
  %4219 = vmatpush1.msra.mxu0 %v4148
  %4220 = vmatprep.subr.mxu0 %v4146
  %4221 = vmatpush1.msra.mxu0 %v4145
  %4222 = vmatprep.subr.mxu0 %v4143
  %4223 = vmatpush1.msra.mxu0 %v4142
  %4224 = vmatprep.subr.mxu0 %v4140
  %4225 = vmatpush1.msra.mxu0 %v4139
  %4226 = vmatprep.subr.mxu0 %v4137
  %4227 = vmatpush1.msra.mxu0 %v4136
  %4228 = vmatprep.subr.mxu0 %v4134
  %4229 = vmatpush1.msra.mxu0 %v4133
  %4230 = vmatprep.subr.mxu0 0.0
  %4231 = vmatpush2.msra.mxu0 0.0
  %4232 = vmatprep.subr.mxu0 0.0
  %4233 = vmatpush2.msra.mxu0 0.0
  %4234 = vmatprep.subr.mxu0 0.0
  %4235 = vmatpush2.msra.mxu0 0.0
  %4236 = vmatprep.subr.mxu0 0.0
  %4237 = vmatpush2.msra.mxu0 0.0
  %4238 = vmatprep.subr.mxu0 0.0
  %4239 = vmatpush2.msra.mxu0 0.0
  %4240 = vmatprep.subr.mxu0 0.0
  %4241 = vmatpush2.msra.mxu0 0.0
  %4242 = vmatprep.subr.mxu0 0.0
  %4243 = vmatpush2.msra.mxu0 0.0
  %4244 = vmatprep.subr.mxu0 0.0
  %4245 = vmatpush2.msra.mxu0 0.0
  %4246 = vmatprep.subr.mxu0 0.0
  %4247 = vmatpush2.msra.mxu0 0.0
  %4248 = vmatprep.subr.mxu0 0.0
  %4249 = vmatpush2.msra.mxu0 0.0
  %4250 = vmatprep.subr.mxu0 0.0
  %4251 = vmatpush2.msra.mxu0 0.0
  %4252 = vmatprep.subr.mxu0 0.0
  %4253 = vmatpush2.msra.mxu0 0.0
  %4254 = vmatprep.subr.mxu0 0.0
  %4255 = vmatpush2.msra.mxu0 0.0
  %4256 = vmatprep.subr.mxu0 0.0
  %4257 = vmatpush2.msra.mxu0 0.0
  %4258 = vmatprep.subr.mxu0 0.0
  %4259 = vmatpush2.msra.mxu0 0.0
  %4260 = vmatprep.subr.mxu0 0.0
  %4261 = vmatpush2.msra.mxu0 0.0
  %4262 = vmatprep.mubr.f32.mxu0 0.0
  %4263 = vmatmul.mubr.f32.gmra.mxu0 %v3691
  %v4264 = vpop.f32.mrf.mxu0
  %v4265 = vadd.f32 %v4186, %v4264
  %v4266 = vpop.f32.mrf.mxu0
  %v4267 = vadd.f32 %v4190, %v4266
  %4268 = vdwg.mxu0
  %4269 = vmatprep.subr.mxu0 0.0
  %4270 = vmatpush1.msra.mxu0 %v4180
  %4271 = vmatprep.subr.mxu0 0.0
  %4272 = vmatpush1.msra.mxu0 %v4177
  %4273 = vmatprep.subr.mxu0 0.0
  %4274 = vmatpush1.msra.mxu0 %v4174
  %4275 = vmatprep.subr.mxu0 0.0
  %4276 = vmatpush1.msra.mxu0 %v4171
  %4277 = vmatprep.subr.mxu0 0.0
  %4278 = vmatpush1.msra.mxu0 %v4168
  %4279 = vmatprep.subr.mxu0 0.0
  %4280 = vmatpush1.msra.mxu0 %v4165
  %4281 = vmatprep.subr.mxu0 0.0
  %4282 = vmatpush1.msra.mxu0 %v4162
  %4283 = vmatprep.subr.mxu0 0.0
  %4284 = vmatpush1.msra.mxu0 %v4159
  %4285 = vmatprep.subr.mxu0 0.0
  %4286 = vmatpush1.msra.mxu0 %v4156
  %4287 = vmatprep.subr.mxu0 0.0
  %4288 = vmatpush1.msra.mxu0 %v4153
  %4289 = vmatprep.subr.mxu0 0.0
  %4290 = vmatpush1.msra.mxu0 %v4150
  %4291 = vmatprep.subr.mxu0 0.0
  %4292 = vmatpush1.msra.mxu0 %v4147
  %4293 = vmatprep.subr.mxu0 0.0
  %4294 = vmatpush1.msra.mxu0 %v4144
  %4295 = vmatprep.subr.mxu0 0.0
  %4296 = vmatpush1.msra.mxu0 %v4141
  %4297 = vmatprep.subr.mxu0 0.0
  %4298 = vmatpush1.msra.mxu0 %v4138
  %4299 = vmatprep.subr.mxu0 0.0
  %4300 = vmatpush1.msra.mxu0 %v4135
  %4301 = vmatprep.subr.mxu0 0.0
  %4302 = vmatpush2.msra.mxu0 0.0
  %4303 = vmatprep.subr.mxu0 0.0
  %4304 = vmatpush2.msra.mxu0 0.0
  %4305 = vmatprep.subr.mxu0 0.0
  %4306 = vmatpush2.msra.mxu0 0.0
  %4307 = vmatprep.subr.mxu0 0.0
  %4308 = vmatpush2.msra.mxu0 0.0
  %4309 = vmatprep.subr.mxu0 0.0
  %4310 = vmatpush2.msra.mxu0 0.0
  %4311 = vmatprep.subr.mxu0 0.0
  %4312 = vmatpush2.msra.mxu0 0.0
  %4313 = vmatprep.subr.mxu0 0.0
  %4314 = vmatpush2.msra.mxu0 0.0
  %4315 = vmatprep.subr.mxu0 0.0
  %4316 = vmatpush2.msra.mxu0 0.0
  %4317 = vmatprep.subr.mxu0 0.0
  %4318 = vmatpush2.msra.mxu0 0.0
  %4319 = vmatprep.subr.mxu0 0.0
  %4320 = vmatpush2.msra.mxu0 0.0
  %4321 = vmatprep.subr.mxu0 0.0
  %4322 = vmatpush2.msra.mxu0 0.0
  %4323 = vmatprep.subr.mxu0 0.0
  %4324 = vmatpush2.msra.mxu0 0.0
  %4325 = vmatprep.subr.mxu0 0.0
  %4326 = vmatpush2.msra.mxu0 0.0
  %4327 = vmatprep.subr.mxu0 0.0
  %4328 = vmatpush2.msra.mxu0 0.0
  %4329 = vmatprep.subr.mxu0 0.0
  %4330 = vmatpush2.msra.mxu0 0.0
  %4331 = vmatprep.subr.mxu0 0.0
  %4332 = vmatpush2.msra.mxu0 0.0
  %4333 = vmatprep.mubr.f32.mxu0 0.0
  %4334 = vmatmul.mubr.f32.gmra.mxu0 %v3691
  %v4335 = vpop.f32.mrf.mxu0
  %v4336 = vadd.f32 %v4194, %v4335
  %v4337 = vpop.f32.mrf.mxu0
  %4338 = vdwg.mxu0
  %v4339 = vadd.f32 %v4059, %v4265
  %v4340 = vxor.u32 %v4339, 2147483648
  %v4341 = vmul.f32 %v4340, 1.442695
  %v4342 = vpow.pop %v4341
  %v4343 = vadd.f32 %v4342, 1.0
  %v4344 = vrcp.pop %v4343
  %v4345 = vmul.f32 1.0, %v4344
  %v4346 = vadd.f32 %v4061, %v4267
  %v4347 = vxor.u32 %v4346, 2147483648
  %v4348 = vmul.f32 %v4347, 1.442695
  %v4349 = vpow.pop %v4348
  %v4350 = vadd.f32 %v4349, 1.0
  %v4351 = vrcp.pop %v4350
  %v4352 = vmul.f32 1.0, %v4351
  %v4353 = vmul.f32 %v4345, %v4336
  %v4354 = vadd.f32 %v4130, %v4353
  %v4355 = vtanh.pop %v4354
  %v4356 = vsub.f32 1.0, %v4352
  %v4357 = vmul.f32 %v4356, %v4355
  %v4358 = vmul.f32 %v4352, %v3691
  %v4359 = vadd.f32 %v4357, %v4358
  %s4360 = scalar_lea.vmem %s11, 40
  %4361 = vst [vmem:[%s4360] sm:$0xff] %v4359
  %s4362 = smul.u32 6, 3
  %s4363 = smul.addr %s4362, 8
  %s4364 = scalar_lea.vmem [#allocation2], %s4363
  %v4365 = vld [vmem:[%s4364] sm:$0xff]
  %v4366 = vld [vmem:[%s4364 + $0x8] sm:$0xff]
  %v4367 = vld [vmem:[%s4364 + $0x10] sm:$0xff]
  %v4368 = vld [vmem:[%s3] sm:$0xff]
  %v4369 = vld [vmem:[%s3 + $0x8] sm:$0xff]
  %v4370 = vld [vmem:[%s3 + $0x10] sm:$0xff]
  %v4371 = vld [vmem:[%s3 + $0x18] sm:$0xff]
  %v4372 = vld [vmem:[%s3 + $0x20] sm:$0xff]
  %v4373 = vld [vmem:[%s3 + $0x28] sm:$0xff]
  %v4374 = vld [vmem:[%s3 + $0x30] sm:$0xff]
  %v4375 = vld [vmem:[%s3 + $0x38] sm:$0xff]
  %v4376 = vld [vmem:[%s3 + $0x40] sm:$0xff]
  %v4377 = vld [vmem:[%s3 + $0x48] sm:$0xff]
  %v4378 = vld [vmem:[%s3 + $0x50] sm:$0xff]
  %v4379 = vld [vmem:[%s3 + $0x58] sm:$0xff]
  %v4380 = vld [vmem:[%s3 + $0x60] sm:$0xff]
  %v4381 = vld [vmem:[%s3 + $0x68] sm:$0xff]
  %v4382 = vld [vmem:[%s3 + $0x70] sm:$0xff]
  %v4383 = vld [vmem:[%s3 + $0x78] sm:$0xff]
  %v4384 = vld [vmem:[%s3 + $0x80] sm:$0xff]
  %v4385 = vld [vmem:[%s3 + $0x88] sm:$0xff]
  %v4386 = vld [vmem:[%s3 + $0x90] sm:$0xff]
  %v4387 = vld [vmem:[%s3 + $0x98] sm:$0xff]
  %v4388 = vld [vmem:[%s3 + $0xa0] sm:$0xff]
  %v4389 = vld [vmem:[%s3 + $0xa8] sm:$0xff]
  %v4390 = vld [vmem:[%s3 + $0xb0] sm:$0xff]
  %v4391 = vld [vmem:[%s3 + $0xb8] sm:$0xff]
  %v4392 = vld [vmem:[%s3 + $0xc0] sm:$0xff]
  %v4393 = vld [vmem:[%s3 + $0xc8] sm:$0xff]
  %v4394 = vld [vmem:[%s3 + $0xd0] sm:$0xff]
  %v4395 = vld [vmem:[%s3 + $0xd8] sm:$0xff]
  %v4396 = vld [vmem:[%s3 + $0xe0] sm:$0xff]
  %v4397 = vld [vmem:[%s3 + $0xe8] sm:$0xff]
  %v4398 = vld [vmem:[%s3 + $0xf0] sm:$0xff]
  %v4399 = vld [vmem:[%s3 + $0xf8] sm:$0xff]
  %v4400 = vld [vmem:[%s3 + $0x100] sm:$0xff]
  %v4401 = vld [vmem:[%s3 + $0x108] sm:$0xff]
  %v4402 = vld [vmem:[%s3 + $0x110] sm:$0xff]
  %v4403 = vld [vmem:[%s3 + $0x118] sm:$0xff]
  %v4404 = vld [vmem:[%s3 + $0x120] sm:$0xff]
  %v4405 = vld [vmem:[%s3 + $0x128] sm:$0xff]
  %v4406 = vld [vmem:[%s3 + $0x130] sm:$0xff]
  %v4407 = vld [vmem:[%s3 + $0x138] sm:$0xff]
  %v4408 = vld [vmem:[%s3 + $0x140] sm:$0xff]
  %v4409 = vld [vmem:[%s3 + $0x148] sm:$0xff]
  %v4410 = vld [vmem:[%s3 + $0x150] sm:$0xff]
  %v4411 = vld [vmem:[%s3 + $0x158] sm:$0xff]
  %v4412 = vld [vmem:[%s3 + $0x160] sm:$0xff]
  %v4413 = vld [vmem:[%s3 + $0x168] sm:$0xff]
  %v4414 = vld [vmem:[%s3 + $0x170] sm:$0xff]
  %v4415 = vld [vmem:[%s3 + $0x178] sm:$0xff]
  %v4416 = vld [vmem:[%s4] sm:$0x7]
  %v4418 = vlaneseq
  %v4419 = vshrl.u32 %v4418, 7
  %v4420 = vsub.s32 0, %v4419
  %v4421 = vrot.slane %v4416, %v4420
  %v4422 = vlaneseq
  %v4423 = vshrl.u32 %v4422, 7
  %v4424 = vsub.s32 1, %v4423
  %v4425 = vrot.slane %v4416, %v4424
  %v4426 = vlaneseq
  %v4427 = vshrl.u32 %v4426, 7
  %v4428 = vsub.s32 2, %v4427
  %v4429 = vrot.slane %v4416, %v4428
  %4433 = vmatprep.subr.mxu0 %v4414
  %4434 = vmatpush1.msra.mxu0 %v4413
  %4435 = vmatprep.subr.mxu0 %v4411
  %4436 = vmatpush1.msra.mxu0 %v4410
  %4437 = vmatprep.subr.mxu0 %v4408
  %4438 = vmatpush1.msra.mxu0 %v4407
  %4439 = vmatprep.subr.mxu0 %v4405
  %4440 = vmatpush1.msra.mxu0 %v4404
  %4441 = vmatprep.subr.mxu0 %v4402
  %4442 = vmatpush1.msra.mxu0 %v4401
  %4443 = vmatprep.subr.mxu0 %v4399
  %4444 = vmatpush1.msra.mxu0 %v4398
  %4445 = vmatprep.subr.mxu0 %v4396
  %4446 = vmatpush1.msra.mxu0 %v4395
  %4447 = vmatprep.subr.mxu0 %v4393
  %4448 = vmatpush1.msra.mxu0 %v4392
  %4449 = vmatprep.subr.mxu0 %v4390
  %4450 = vmatpush1.msra.mxu0 %v4389
  %4451 = vmatprep.subr.mxu0 %v4387
  %4452 = vmatpush1.msra.mxu0 %v4386
  %4453 = vmatprep.subr.mxu0 %v4384
  %4454 = vmatpush1.msra.mxu0 %v4383
  %4455 = vmatprep.subr.mxu0 %v4381
  %4456 = vmatpush1.msra.mxu0 %v4380
  %4457 = vmatprep.subr.mxu0 %v4378
  %4458 = vmatpush1.msra.mxu0 %v4377
  %4459 = vmatprep.subr.mxu0 %v4375
  %4460 = vmatpush1.msra.mxu0 %v4374
  %4461 = vmatprep.subr.mxu0 %v4372
  %4462 = vmatpush1.msra.mxu0 %v4371
  %4463 = vmatprep.subr.mxu0 %v4369
  %4464 = vmatpush1.msra.mxu0 %v4368
  %4465 = vmatprep.subr.mxu0 0.0
  %4466 = vmatpush2.msra.mxu0 0.0
  %4467 = vmatprep.subr.mxu0 0.0
  %4468 = vmatpush2.msra.mxu0 0.0
  %4469 = vmatprep.subr.mxu0 0.0
  %4470 = vmatpush2.msra.mxu0 0.0
  %4471 = vmatprep.subr.mxu0 0.0
  %4472 = vmatpush2.msra.mxu0 0.0
  %4473 = vmatprep.subr.mxu0 0.0
  %4474 = vmatpush2.msra.mxu0 0.0
  %4475 = vmatprep.subr.mxu0 0.0
  %4476 = vmatpush2.msra.mxu0 0.0
  %4477 = vmatprep.subr.mxu0 0.0
  %4478 = vmatpush2.msra.mxu0 0.0
  %4479 = vmatprep.subr.mxu0 0.0
  %4480 = vmatpush2.msra.mxu0 0.0
  %4481 = vmatprep.subr.mxu0 0.0
  %4482 = vmatpush2.msra.mxu0 0.0
  %4483 = vmatprep.subr.mxu0 0.0
  %4484 = vmatpush2.msra.mxu0 0.0
  %4485 = vmatprep.subr.mxu0 0.0
  %4486 = vmatpush2.msra.mxu0 0.0
  %4487 = vmatprep.subr.mxu0 0.0
  %4488 = vmatpush2.msra.mxu0 0.0
  %4489 = vmatprep.subr.mxu0 0.0
  %4490 = vmatpush2.msra.mxu0 0.0
  %4491 = vmatprep.subr.mxu0 0.0
  %4492 = vmatpush2.msra.mxu0 0.0
  %4493 = vmatprep.subr.mxu0 0.0
  %4494 = vmatpush2.msra.mxu0 0.0
  %4495 = vmatprep.subr.mxu0 0.0
  %4496 = vmatpush2.msra.mxu0 0.0
  %4497 = vmatprep.mubr.f32.mxu0 0.0
  %4498 = vmatmul.mubr.f32.gmra.mxu0 %v3926
  %v4499 = vpop.f32.mrf.mxu0
  %v4500 = vadd.f32 %v4421, %v4499
  %v4501 = vpop.f32.mrf.mxu0
  %v4502 = vadd.f32 %v4425, %v4501
  %4503 = vdwg.mxu0
  %4504 = vmatprep.subr.mxu0 0.0
  %4505 = vmatpush1.msra.mxu0 %v4415
  %4506 = vmatprep.subr.mxu0 0.0
  %4507 = vmatpush1.msra.mxu0 %v4412
  %4508 = vmatprep.subr.mxu0 0.0
  %4509 = vmatpush1.msra.mxu0 %v4409
  %4510 = vmatprep.subr.mxu0 0.0
  %4511 = vmatpush1.msra.mxu0 %v4406
  %4512 = vmatprep.subr.mxu0 0.0
  %4513 = vmatpush1.msra.mxu0 %v4403
  %4514 = vmatprep.subr.mxu0 0.0
  %4515 = vmatpush1.msra.mxu0 %v4400
  %4516 = vmatprep.subr.mxu0 0.0
  %4517 = vmatpush1.msra.mxu0 %v4397
  %4518 = vmatprep.subr.mxu0 0.0
  %4519 = vmatpush1.msra.mxu0 %v4394
  %4520 = vmatprep.subr.mxu0 0.0
  %4521 = vmatpush1.msra.mxu0 %v4391
  %4522 = vmatprep.subr.mxu0 0.0
  %4523 = vmatpush1.msra.mxu0 %v4388
  %4524 = vmatprep.subr.mxu0 0.0
  %4525 = vmatpush1.msra.mxu0 %v4385
  %4526 = vmatprep.subr.mxu0 0.0
  %4527 = vmatpush1.msra.mxu0 %v4382
  %4528 = vmatprep.subr.mxu0 0.0
  %4529 = vmatpush1.msra.mxu0 %v4379
  %4530 = vmatprep.subr.mxu0 0.0
  %4531 = vmatpush1.msra.mxu0 %v4376
  %4532 = vmatprep.subr.mxu0 0.0
  %4533 = vmatpush1.msra.mxu0 %v4373
  %4534 = vmatprep.subr.mxu0 0.0
  %4535 = vmatpush1.msra.mxu0 %v4370
  %4536 = vmatprep.subr.mxu0 0.0
  %4537 = vmatpush2.msra.mxu0 0.0
  %4538 = vmatprep.subr.mxu0 0.0
  %4539 = vmatpush2.msra.mxu0 0.0
  %4540 = vmatprep.subr.mxu0 0.0
  %4541 = vmatpush2.msra.mxu0 0.0
  %4542 = vmatprep.subr.mxu0 0.0
  %4543 = vmatpush2.msra.mxu0 0.0
  %4544 = vmatprep.subr.mxu0 0.0
  %4545 = vmatpush2.msra.mxu0 0.0
  %4546 = vmatprep.subr.mxu0 0.0
  %4547 = vmatpush2.msra.mxu0 0.0
  %4548 = vmatprep.subr.mxu0 0.0
  %4549 = vmatpush2.msra.mxu0 0.0
  %4550 = vmatprep.subr.mxu0 0.0
  %4551 = vmatpush2.msra.mxu0 0.0
  %4552 = vmatprep.subr.mxu0 0.0
  %4553 = vmatpush2.msra.mxu0 0.0
  %4554 = vmatprep.subr.mxu0 0.0
  %4555 = vmatpush2.msra.mxu0 0.0
  %4556 = vmatprep.subr.mxu0 0.0
  %4557 = vmatpush2.msra.mxu0 0.0
  %4558 = vmatprep.subr.mxu0 0.0
  %4559 = vmatpush2.msra.mxu0 0.0
  %4560 = vmatprep.subr.mxu0 0.0
  %4561 = vmatpush2.msra.mxu0 0.0
  %4562 = vmatprep.subr.mxu0 0.0
  %4563 = vmatpush2.msra.mxu0 0.0
  %4564 = vmatprep.subr.mxu0 0.0
  %4565 = vmatpush2.msra.mxu0 0.0
  %4566 = vmatprep.subr.mxu0 0.0
  %4567 = vmatpush2.msra.mxu0 0.0
  %4568 = vmatprep.mubr.f32.mxu0 0.0
  %4569 = vmatmul.mubr.f32.gmra.mxu0 %v3926
  %v4570 = vpop.f32.mrf.mxu0
  %v4571 = vadd.f32 %v4429, %v4570
  %v4572 = vpop.f32.mrf.mxu0
  %4573 = vdwg.mxu0
  %v4574 = vadd.f32 %v4365, %v4500
  %v4575 = vxor.u32 %v4574, 2147483648
  %v4576 = vmul.f32 %v4575, 1.442695
  %v4577 = vpow.pop %v4576
  %v4578 = vadd.f32 %v4577, 1.0
  %v4579 = vrcp.pop %v4578
  %v4580 = vmul.f32 1.0, %v4579
  %v4581 = vadd.f32 %v4366, %v4502
  %v4582 = vxor.u32 %v4581, 2147483648
  %v4583 = vmul.f32 %v4582, 1.442695
  %v4584 = vpow.pop %v4583
  %v4585 = vadd.f32 %v4584, 1.0
  %v4586 = vrcp.pop %v4585
  %v4587 = vmul.f32 1.0, %v4586
  %v4588 = vmul.f32 %v4580, %v4571
  %v4589 = vadd.f32 %v4367, %v4588
  %v4590 = vtanh.pop %v4589
  %v4591 = vsub.f32 1.0, %v4587
  %v4592 = vmul.f32 %v4591, %v4590
  %v4593 = vmul.f32 %v4587, %v3926
  %v4594 = vadd.f32 %v4592, %v4593
  %v4595 = vld [vmem:[%s5] sm:$0xff]
  %v4596 = vld [vmem:[%s5 + $0x8] sm:$0xff]
  %v4597 = vld [vmem:[%s5 + $0x10] sm:$0xff]
  %v4598 = vld [vmem:[%s5 + $0x18] sm:$0xff]
  %v4599 = vld [vmem:[%s5 + $0x20] sm:$0xff]
  %v4600 = vld [vmem:[%s5 + $0x28] sm:$0xff]
  %v4601 = vld [vmem:[%s5 + $0x30] sm:$0xff]
  %v4602 = vld [vmem:[%s5 + $0x38] sm:$0xff]
  %v4603 = vld [vmem:[%s5 + $0x40] sm:$0xff]
  %v4604 = vld [vmem:[%s5 + $0x48] sm:$0xff]
  %v4605 = vld [vmem:[%s5 + $0x50] sm:$0xff]
  %v4606 = vld [vmem:[%s5 + $0x58] sm:$0xff]
  %v4607 = vld [vmem:[%s5 + $0x60] sm:$0xff]
  %v4608 = vld [vmem:[%s5 + $0x68] sm:$0xff]
  %v4609 = vld [vmem:[%s5 + $0x70] sm:$0xff]
  %v4610 = vld [vmem:[%s5 + $0x78] sm:$0xff]
  %v4611 = vld [vmem:[%s5 + $0x80] sm:$0xff]
  %v4612 = vld [vmem:[%s5 + $0x88] sm:$0xff]
  %v4613 = vld [vmem:[%s5 + $0x90] sm:$0xff]
  %v4614 = vld [vmem:[%s5 + $0x98] sm:$0xff]
  %v4615 = vld [vmem:[%s5 + $0xa0] sm:$0xff]
  %v4616 = vld [vmem:[%s5 + $0xa8] sm:$0xff]
  %v4617 = vld [vmem:[%s5 + $0xb0] sm:$0xff]
  %v4618 = vld [vmem:[%s5 + $0xb8] sm:$0xff]
  %v4619 = vld [vmem:[%s5 + $0xc0] sm:$0xff]
  %v4620 = vld [vmem:[%s5 + $0xc8] sm:$0xff]
  %v4621 = vld [vmem:[%s5 + $0xd0] sm:$0xff]
  %v4622 = vld [vmem:[%s5 + $0xd8] sm:$0xff]
  %v4623 = vld [vmem:[%s5 + $0xe0] sm:$0xff]
  %v4624 = vld [vmem:[%s5 + $0xe8] sm:$0xff]
  %v4625 = vld [vmem:[%s5 + $0xf0] sm:$0xff]
  %v4626 = vld [vmem:[%s5 + $0xf8] sm:$0xff]
  %v4627 = vld [vmem:[%s5 + $0x100] sm:$0xff]
  %v4628 = vld [vmem:[%s5 + $0x108] sm:$0xff]
  %v4629 = vld [vmem:[%s5 + $0x110] sm:$0xff]
  %v4630 = vld [vmem:[%s5 + $0x118] sm:$0xff]
  %v4631 = vld [vmem:[%s5 + $0x120] sm:$0xff]
  %v4632 = vld [vmem:[%s5 + $0x128] sm:$0xff]
  %v4633 = vld [vmem:[%s5 + $0x130] sm:$0xff]
  %v4634 = vld [vmem:[%s5 + $0x138] sm:$0xff]
  %v4635 = vld [vmem:[%s5 + $0x140] sm:$0xff]
  %v4636 = vld [vmem:[%s5 + $0x148] sm:$0xff]
  %v4637 = vld [vmem:[%s5 + $0x150] sm:$0xff]
  %v4638 = vld [vmem:[%s5 + $0x158] sm:$0xff]
  %v4639 = vld [vmem:[%s5 + $0x160] sm:$0xff]
  %v4640 = vld [vmem:[%s5 + $0x168] sm:$0xff]
  %v4641 = vld [vmem:[%s5 + $0x170] sm:$0xff]
  %v4642 = vld [vmem:[%s5 + $0x178] sm:$0xff]
  %v4643 = vld [vmem:[%s6] sm:$0x7]
  %v4645 = vlaneseq
  %v4646 = vshrl.u32 %v4645, 7
  %v4647 = vsub.s32 0, %v4646
  %v4648 = vrot.slane %v4643, %v4647
  %v4649 = vlaneseq
  %v4650 = vshrl.u32 %v4649, 7
  %v4651 = vsub.s32 1, %v4650
  %v4652 = vrot.slane %v4643, %v4651
  %v4653 = vlaneseq
  %v4654 = vshrl.u32 %v4653, 7
  %v4655 = vsub.s32 2, %v4654
  %v4656 = vrot.slane %v4643, %v4655
  %4660 = vmatprep.subr.mxu0 %v4641
  %4661 = vmatpush1.msra.mxu0 %v4640
  %4662 = vmatprep.subr.mxu0 %v4638
  %4663 = vmatpush1.msra.mxu0 %v4637
  %4664 = vmatprep.subr.mxu0 %v4635
  %4665 = vmatpush1.msra.mxu0 %v4634
  %4666 = vmatprep.subr.mxu0 %v4632
  %4667 = vmatpush1.msra.mxu0 %v4631
  %4668 = vmatprep.subr.mxu0 %v4629
  %4669 = vmatpush1.msra.mxu0 %v4628
  %4670 = vmatprep.subr.mxu0 %v4626
  %4671 = vmatpush1.msra.mxu0 %v4625
  %4672 = vmatprep.subr.mxu0 %v4623
  %4673 = vmatpush1.msra.mxu0 %v4622
  %4674 = vmatprep.subr.mxu0 %v4620
  %4675 = vmatpush1.msra.mxu0 %v4619
  %4676 = vmatprep.subr.mxu0 %v4617
  %4677 = vmatpush1.msra.mxu0 %v4616
  %4678 = vmatprep.subr.mxu0 %v4614
  %4679 = vmatpush1.msra.mxu0 %v4613
  %4680 = vmatprep.subr.mxu0 %v4611
  %4681 = vmatpush1.msra.mxu0 %v4610
  %4682 = vmatprep.subr.mxu0 %v4608
  %4683 = vmatpush1.msra.mxu0 %v4607
  %4684 = vmatprep.subr.mxu0 %v4605
  %4685 = vmatpush1.msra.mxu0 %v4604
  %4686 = vmatprep.subr.mxu0 %v4602
  %4687 = vmatpush1.msra.mxu0 %v4601
  %4688 = vmatprep.subr.mxu0 %v4599
  %4689 = vmatpush1.msra.mxu0 %v4598
  %4690 = vmatprep.subr.mxu0 %v4596
  %4691 = vmatpush1.msra.mxu0 %v4595
  %4692 = vmatprep.subr.mxu0 0.0
  %4693 = vmatpush2.msra.mxu0 0.0
  %4694 = vmatprep.subr.mxu0 0.0
  %4695 = vmatpush2.msra.mxu0 0.0
  %4696 = vmatprep.subr.mxu0 0.0
  %4697 = vmatpush2.msra.mxu0 0.0
  %4698 = vmatprep.subr.mxu0 0.0
  %4699 = vmatpush2.msra.mxu0 0.0
  %4700 = vmatprep.subr.mxu0 0.0
  %4701 = vmatpush2.msra.mxu0 0.0
  %4702 = vmatprep.subr.mxu0 0.0
  %4703 = vmatpush2.msra.mxu0 0.0
  %4704 = vmatprep.subr.mxu0 0.0
  %4705 = vmatpush2.msra.mxu0 0.0
  %4706 = vmatprep.subr.mxu0 0.0
  %4707 = vmatpush2.msra.mxu0 0.0
  %4708 = vmatprep.subr.mxu0 0.0
  %4709 = vmatpush2.msra.mxu0 0.0
  %4710 = vmatprep.subr.mxu0 0.0
  %4711 = vmatpush2.msra.mxu0 0.0
  %4712 = vmatprep.subr.mxu0 0.0
  %4713 = vmatpush2.msra.mxu0 0.0
  %4714 = vmatprep.subr.mxu0 0.0
  %4715 = vmatpush2.msra.mxu0 0.0
  %4716 = vmatprep.subr.mxu0 0.0
  %4717 = vmatpush2.msra.mxu0 0.0
  %4718 = vmatprep.subr.mxu0 0.0
  %4719 = vmatpush2.msra.mxu0 0.0
  %4720 = vmatprep.subr.mxu0 0.0
  %4721 = vmatpush2.msra.mxu0 0.0
  %4722 = vmatprep.subr.mxu0 0.0
  %4723 = vmatpush2.msra.mxu0 0.0
  %4724 = vmatprep.mubr.f32.mxu0 0.0
  %4725 = vmatmul.mubr.f32.gmra.mxu0 %v4594
  %v4726 = vpop.f32.mrf.mxu0
  %v4727 = vadd.f32 %v4648, %v4726
  %v4728 = vpop.f32.mrf.mxu0
  %v4729 = vadd.f32 %v4652, %v4728
  %4730 = vdwg.mxu0
  %4731 = vmatprep.subr.mxu0 0.0
  %4732 = vmatpush1.msra.mxu0 %v4642
  %4733 = vmatprep.subr.mxu0 0.0
  %4734 = vmatpush1.msra.mxu0 %v4639
  %4735 = vmatprep.subr.mxu0 0.0
  %4736 = vmatpush1.msra.mxu0 %v4636
  %4737 = vmatprep.subr.mxu0 0.0
  %4738 = vmatpush1.msra.mxu0 %v4633
  %4739 = vmatprep.subr.mxu0 0.0
  %4740 = vmatpush1.msra.mxu0 %v4630
  %4741 = vmatprep.subr.mxu0 0.0
  %4742 = vmatpush1.msra.mxu0 %v4627
  %4743 = vmatprep.subr.mxu0 0.0
  %4744 = vmatpush1.msra.mxu0 %v4624
  %4745 = vmatprep.subr.mxu0 0.0
  %4746 = vmatpush1.msra.mxu0 %v4621
  %4747 = vmatprep.subr.mxu0 0.0
  %4748 = vmatpush1.msra.mxu0 %v4618
  %4749 = vmatprep.subr.mxu0 0.0
  %4750 = vmatpush1.msra.mxu0 %v4615
  %4751 = vmatprep.subr.mxu0 0.0
  %4752 = vmatpush1.msra.mxu0 %v4612
  %4753 = vmatprep.subr.mxu0 0.0
  %4754 = vmatpush1.msra.mxu0 %v4609
  %4755 = vmatprep.subr.mxu0 0.0
  %4756 = vmatpush1.msra.mxu0 %v4606
  %4757 = vmatprep.subr.mxu0 0.0
  %4758 = vmatpush1.msra.mxu0 %v4603
  %4759 = vmatprep.subr.mxu0 0.0
  %4760 = vmatpush1.msra.mxu0 %v4600
  %4761 = vmatprep.subr.mxu0 0.0
  %4762 = vmatpush1.msra.mxu0 %v4597
  %4763 = vmatprep.subr.mxu0 0.0
  %4764 = vmatpush2.msra.mxu0 0.0
  %4765 = vmatprep.subr.mxu0 0.0
  %4766 = vmatpush2.msra.mxu0 0.0
  %4767 = vmatprep.subr.mxu0 0.0
  %4768 = vmatpush2.msra.mxu0 0.0
  %4769 = vmatprep.subr.mxu0 0.0
  %4770 = vmatpush2.msra.mxu0 0.0
  %4771 = vmatprep.subr.mxu0 0.0
  %4772 = vmatpush2.msra.mxu0 0.0
  %4773 = vmatprep.subr.mxu0 0.0
  %4774 = vmatpush2.msra.mxu0 0.0
  %4775 = vmatprep.subr.mxu0 0.0
  %4776 = vmatpush2.msra.mxu0 0.0
  %4777 = vmatprep.subr.mxu0 0.0
  %4778 = vmatpush2.msra.mxu0 0.0
  %4779 = vmatprep.subr.mxu0 0.0
  %4780 = vmatpush2.msra.mxu0 0.0
  %4781 = vmatprep.subr.mxu0 0.0
  %4782 = vmatpush2.msra.mxu0 0.0
  %4783 = vmatprep.subr.mxu0 0.0
  %4784 = vmatpush2.msra.mxu0 0.0
  %4785 = vmatprep.subr.mxu0 0.0
  %4786 = vmatpush2.msra.mxu0 0.0
  %4787 = vmatprep.subr.mxu0 0.0
  %4788 = vmatpush2.msra.mxu0 0.0
  %4789 = vmatprep.subr.mxu0 0.0
  %4790 = vmatpush2.msra.mxu0 0.0
  %4791 = vmatprep.subr.mxu0 0.0
  %4792 = vmatpush2.msra.mxu0 0.0
  %4793 = vmatprep.subr.mxu0 0.0
  %4794 = vmatpush2.msra.mxu0 0.0
  %4795 = vmatprep.mubr.f32.mxu0 0.0
  %4796 = vmatmul.mubr.f32.gmra.mxu0 %v4594
  %v4797 = vpop.f32.mrf.mxu0
  %v4798 = vadd.f32 %v4656, %v4797
  %v4799 = vpop.f32.mrf.mxu0
  %4800 = vdwg.mxu0
  %v4801 = vld [vmem:[%s7] sm:$0xff]
  %v4802 = vld [vmem:[%s7 + $0x8] sm:$0xff]
  %v4803 = vld [vmem:[%s7 + $0x10] sm:$0xff]
  %v4804 = vld [vmem:[%s7 + $0x18] sm:$0xff]
  %v4805 = vld [vmem:[%s7 + $0x20] sm:$0xff]
  %v4806 = vld [vmem:[%s7 + $0x28] sm:$0xff]
  %v4807 = vld [vmem:[%s7 + $0x30] sm:$0xff]
  %v4808 = vld [vmem:[%s7 + $0x38] sm:$0xff]
  %v4809 = vld [vmem:[%s7 + $0x40] sm:$0xff]
  %v4810 = vld [vmem:[%s7 + $0x48] sm:$0xff]
  %v4811 = vld [vmem:[%s7 + $0x50] sm:$0xff]
  %v4812 = vld [vmem:[%s7 + $0x58] sm:$0xff]
  %v4813 = vld [vmem:[%s7 + $0x60] sm:$0xff]
  %v4814 = vld [vmem:[%s7 + $0x68] sm:$0xff]
  %v4815 = vld [vmem:[%s7 + $0x70] sm:$0xff]
  %v4816 = vld [vmem:[%s7 + $0x78] sm:$0xff]
  %v4817 = vld [vmem:[%s7 + $0x80] sm:$0xff]
  %v4818 = vld [vmem:[%s7 + $0x88] sm:$0xff]
  %v4819 = vld [vmem:[%s7 + $0x90] sm:$0xff]
  %v4820 = vld [vmem:[%s7 + $0x98] sm:$0xff]
  %v4821 = vld [vmem:[%s7 + $0xa0] sm:$0xff]
  %v4822 = vld [vmem:[%s7 + $0xa8] sm:$0xff]
  %v4823 = vld [vmem:[%s7 + $0xb0] sm:$0xff]
  %v4824 = vld [vmem:[%s7 + $0xb8] sm:$0xff]
  %v4825 = vld [vmem:[%s7 + $0xc0] sm:$0xff]
  %v4826 = vld [vmem:[%s7 + $0xc8] sm:$0xff]
  %v4827 = vld [vmem:[%s7 + $0xd0] sm:$0xff]
  %v4828 = vld [vmem:[%s7 + $0xd8] sm:$0xff]
  %v4829 = vld [vmem:[%s7 + $0xe0] sm:$0xff]
  %v4830 = vld [vmem:[%s7 + $0xe8] sm:$0xff]
  %v4831 = vld [vmem:[%s7 + $0xf0] sm:$0xff]
  %v4832 = vld [vmem:[%s7 + $0xf8] sm:$0xff]
  %v4833 = vld [vmem:[%s7 + $0x100] sm:$0xff]
  %v4834 = vld [vmem:[%s7 + $0x108] sm:$0xff]
  %v4835 = vld [vmem:[%s7 + $0x110] sm:$0xff]
  %v4836 = vld [vmem:[%s7 + $0x118] sm:$0xff]
  %v4837 = vld [vmem:[%s7 + $0x120] sm:$0xff]
  %v4838 = vld [vmem:[%s7 + $0x128] sm:$0xff]
  %v4839 = vld [vmem:[%s7 + $0x130] sm:$0xff]
  %v4840 = vld [vmem:[%s7 + $0x138] sm:$0xff]
  %v4841 = vld [vmem:[%s7 + $0x140] sm:$0xff]
  %v4842 = vld [vmem:[%s7 + $0x148] sm:$0xff]
  %v4843 = vld [vmem:[%s7 + $0x150] sm:$0xff]
  %v4844 = vld [vmem:[%s7 + $0x158] sm:$0xff]
  %v4845 = vld [vmem:[%s7 + $0x160] sm:$0xff]
  %v4846 = vld [vmem:[%s7 + $0x168] sm:$0xff]
  %v4847 = vld [vmem:[%s7 + $0x170] sm:$0xff]
  %v4848 = vld [vmem:[%s7 + $0x178] sm:$0xff]
  %v4849 = vld [vmem:[%s8] sm:$0x7]
  %v4851 = vlaneseq
  %v4852 = vshrl.u32 %v4851, 7
  %v4853 = vsub.s32 0, %v4852
  %v4854 = vrot.slane %v4849, %v4853
  %v4855 = vlaneseq
  %v4856 = vshrl.u32 %v4855, 7
  %v4857 = vsub.s32 1, %v4856
  %v4858 = vrot.slane %v4849, %v4857
  %v4859 = vlaneseq
  %v4860 = vshrl.u32 %v4859, 7
  %v4861 = vsub.s32 2, %v4860
  %v4862 = vrot.slane %v4849, %v4861
  %4866 = vmatprep.subr.mxu0 %v4847
  %4867 = vmatpush1.msra.mxu0 %v4846
  %4868 = vmatprep.subr.mxu0 %v4844
  %4869 = vmatpush1.msra.mxu0 %v4843
  %4870 = vmatprep.subr.mxu0 %v4841
  %4871 = vmatpush1.msra.mxu0 %v4840
  %4872 = vmatprep.subr.mxu0 %v4838
  %4873 = vmatpush1.msra.mxu0 %v4837
  %4874 = vmatprep.subr.mxu0 %v4835
  %4875 = vmatpush1.msra.mxu0 %v4834
  %4876 = vmatprep.subr.mxu0 %v4832
  %4877 = vmatpush1.msra.mxu0 %v4831
  %4878 = vmatprep.subr.mxu0 %v4829
  %4879 = vmatpush1.msra.mxu0 %v4828
  %4880 = vmatprep.subr.mxu0 %v4826
  %4881 = vmatpush1.msra.mxu0 %v4825
  %4882 = vmatprep.subr.mxu0 %v4823
  %4883 = vmatpush1.msra.mxu0 %v4822
  %4884 = vmatprep.subr.mxu0 %v4820
  %4885 = vmatpush1.msra.mxu0 %v4819
  %4886 = vmatprep.subr.mxu0 %v4817
  %4887 = vmatpush1.msra.mxu0 %v4816
  %4888 = vmatprep.subr.mxu0 %v4814
  %4889 = vmatpush1.msra.mxu0 %v4813
  %4890 = vmatprep.subr.mxu0 %v4811
  %4891 = vmatpush1.msra.mxu0 %v4810
  %4892 = vmatprep.subr.mxu0 %v4808
  %4893 = vmatpush1.msra.mxu0 %v4807
  %4894 = vmatprep.subr.mxu0 %v4805
  %4895 = vmatpush1.msra.mxu0 %v4804
  %4896 = vmatprep.subr.mxu0 %v4802
  %4897 = vmatpush1.msra.mxu0 %v4801
  %4898 = vmatprep.subr.mxu0 0.0
  %4899 = vmatpush2.msra.mxu0 0.0
  %4900 = vmatprep.subr.mxu0 0.0
  %4901 = vmatpush2.msra.mxu0 0.0
  %4902 = vmatprep.subr.mxu0 0.0
  %4903 = vmatpush2.msra.mxu0 0.0
  %4904 = vmatprep.subr.mxu0 0.0
  %4905 = vmatpush2.msra.mxu0 0.0
  %4906 = vmatprep.subr.mxu0 0.0
  %4907 = vmatpush2.msra.mxu0 0.0
  %4908 = vmatprep.subr.mxu0 0.0
  %4909 = vmatpush2.msra.mxu0 0.0
  %4910 = vmatprep.subr.mxu0 0.0
  %4911 = vmatpush2.msra.mxu0 0.0
  %4912 = vmatprep.subr.mxu0 0.0
  %4913 = vmatpush2.msra.mxu0 0.0
  %4914 = vmatprep.subr.mxu0 0.0
  %4915 = vmatpush2.msra.mxu0 0.0
  %4916 = vmatprep.subr.mxu0 0.0
  %4917 = vmatpush2.msra.mxu0 0.0
  %4918 = vmatprep.subr.mxu0 0.0
  %4919 = vmatpush2.msra.mxu0 0.0
  %4920 = vmatprep.subr.mxu0 0.0
  %4921 = vmatpush2.msra.mxu0 0.0
  %4922 = vmatprep.subr.mxu0 0.0
  %4923 = vmatpush2.msra.mxu0 0.0
  %4924 = vmatprep.subr.mxu0 0.0
  %4925 = vmatpush2.msra.mxu0 0.0
  %4926 = vmatprep.subr.mxu0 0.0
  %4927 = vmatpush2.msra.mxu0 0.0
  %4928 = vmatprep.subr.mxu0 0.0
  %4929 = vmatpush2.msra.mxu0 0.0
  %4930 = vmatprep.mubr.f32.mxu0 0.0
  %4931 = vmatmul.mubr.f32.gmra.mxu0 %v4359
  %v4932 = vpop.f32.mrf.mxu0
  %v4933 = vadd.f32 %v4854, %v4932
  %v4934 = vpop.f32.mrf.mxu0
  %v4935 = vadd.f32 %v4858, %v4934
  %4936 = vdwg.mxu0
  %4937 = vmatprep.subr.mxu0 0.0
  %4938 = vmatpush1.msra.mxu0 %v4848
  %4939 = vmatprep.subr.mxu0 0.0
  %4940 = vmatpush1.msra.mxu0 %v4845
  %4941 = vmatprep.subr.mxu0 0.0
  %4942 = vmatpush1.msra.mxu0 %v4842
  %4943 = vmatprep.subr.mxu0 0.0
  %4944 = vmatpush1.msra.mxu0 %v4839
  %4945 = vmatprep.subr.mxu0 0.0
  %4946 = vmatpush1.msra.mxu0 %v4836
  %4947 = vmatprep.subr.mxu0 0.0
  %4948 = vmatpush1.msra.mxu0 %v4833
  %4949 = vmatprep.subr.mxu0 0.0
  %4950 = vmatpush1.msra.mxu0 %v4830
  %4951 = vmatprep.subr.mxu0 0.0
  %4952 = vmatpush1.msra.mxu0 %v4827
  %4953 = vmatprep.subr.mxu0 0.0
  %4954 = vmatpush1.msra.mxu0 %v4824
  %4955 = vmatprep.subr.mxu0 0.0
  %4956 = vmatpush1.msra.mxu0 %v4821
  %4957 = vmatprep.subr.mxu0 0.0
  %4958 = vmatpush1.msra.mxu0 %v4818
  %4959 = vmatprep.subr.mxu0 0.0
  %4960 = vmatpush1.msra.mxu0 %v4815
  %4961 = vmatprep.subr.mxu0 0.0
  %4962 = vmatpush1.msra.mxu0 %v4812
  %4963 = vmatprep.subr.mxu0 0.0
  %4964 = vmatpush1.msra.mxu0 %v4809
  %4965 = vmatprep.subr.mxu0 0.0
  %4966 = vmatpush1.msra.mxu0 %v4806
  %4967 = vmatprep.subr.mxu0 0.0
  %4968 = vmatpush1.msra.mxu0 %v4803
  %4969 = vmatprep.subr.mxu0 0.0
  %4970 = vmatpush2.msra.mxu0 0.0
  %4971 = vmatprep.subr.mxu0 0.0
  %4972 = vmatpush2.msra.mxu0 0.0
  %4973 = vmatprep.subr.mxu0 0.0
  %4974 = vmatpush2.msra.mxu0 0.0
  %4975 = vmatprep.subr.mxu0 0.0
  %4976 = vmatpush2.msra.mxu0 0.0
  %4977 = vmatprep.subr.mxu0 0.0
  %4978 = vmatpush2.msra.mxu0 0.0
  %4979 = vmatprep.subr.mxu0 0.0
  %4980 = vmatpush2.msra.mxu0 0.0
  %4981 = vmatprep.subr.mxu0 0.0
  %4982 = vmatpush2.msra.mxu0 0.0
  %4983 = vmatprep.subr.mxu0 0.0
  %4984 = vmatpush2.msra.mxu0 0.0
  %4985 = vmatprep.subr.mxu0 0.0
  %4986 = vmatpush2.msra.mxu0 0.0
  %4987 = vmatprep.subr.mxu0 0.0
  %4988 = vmatpush2.msra.mxu0 0.0
  %4989 = vmatprep.subr.mxu0 0.0
  %4990 = vmatpush2.msra.mxu0 0.0
  %4991 = vmatprep.subr.mxu0 0.0
  %4992 = vmatpush2.msra.mxu0 0.0
  %4993 = vmatprep.subr.mxu0 0.0
  %4994 = vmatpush2.msra.mxu0 0.0
  %4995 = vmatprep.subr.mxu0 0.0
  %4996 = vmatpush2.msra.mxu0 0.0
  %4997 = vmatprep.subr.mxu0 0.0
  %4998 = vmatpush2.msra.mxu0 0.0
  %4999 = vmatprep.subr.mxu0 0.0
  %5000 = vmatpush2.msra.mxu0 0.0
  %5001 = vmatprep.mubr.f32.mxu0 0.0
  %5002 = vmatmul.mubr.f32.gmra.mxu0 %v4359
  %v5003 = vpop.f32.mrf.mxu0
  %v5004 = vadd.f32 %v4862, %v5003
  %v5005 = vpop.f32.mrf.mxu0
  %5006 = vdwg.mxu0
  %v5007 = vadd.f32 %v4727, %v4933
  %v5008 = vxor.u32 %v5007, 2147483648
  %v5009 = vmul.f32 %v5008, 1.442695
  %v5010 = vpow.pop %v5009
  %v5011 = vadd.f32 %v5010, 1.0
  %v5012 = vrcp.pop %v5011
  %v5013 = vmul.f32 1.0, %v5012
  %v5014 = vadd.f32 %v4729, %v4935
  %v5015 = vxor.u32 %v5014, 2147483648
  %v5016 = vmul.f32 %v5015, 1.442695
  %v5017 = vpow.pop %v5016
  %v5018 = vadd.f32 %v5017, 1.0
  %v5019 = vrcp.pop %v5018
  %v5020 = vmul.f32 1.0, %v5019
  %v5021 = vmul.f32 %v5013, %v5004
  %v5022 = vadd.f32 %v4798, %v5021
  %v5023 = vtanh.pop %v5022
  %v5024 = vsub.f32 1.0, %v5020
  %v5025 = vmul.f32 %v5024, %v5023
  %v5026 = vmul.f32 %v5020, %v4359
  %v5027 = vadd.f32 %v5025, %v5026
  %s5028 = scalar_lea.vmem %s11, 48
  %5029 = vst [vmem:[%s5028] sm:$0xff] %v5027
  %s5030 = smul.u32 7, 3
  %s5031 = smul.addr %s5030, 8
  %s5032 = scalar_lea.vmem [#allocation2], %s5031
  %v5033 = vld [vmem:[%s5032] sm:$0xff]
  %v5034 = vld [vmem:[%s5032 + $0x8] sm:$0xff]
  %v5035 = vld [vmem:[%s5032 + $0x10] sm:$0xff]
  %v5036 = vld [vmem:[%s3] sm:$0xff]
  %v5037 = vld [vmem:[%s3 + $0x8] sm:$0xff]
  %v5038 = vld [vmem:[%s3 + $0x10] sm:$0xff]
  %v5039 = vld [vmem:[%s3 + $0x18] sm:$0xff]
  %v5040 = vld [vmem:[%s3 + $0x20] sm:$0xff]
  %v5041 = vld [vmem:[%s3 + $0x28] sm:$0xff]
  %v5042 = vld [vmem:[%s3 + $0x30] sm:$0xff]
  %v5043 = vld [vmem:[%s3 + $0x38] sm:$0xff]
  %v5044 = vld [vmem:[%s3 + $0x40] sm:$0xff]
  %v5045 = vld [vmem:[%s3 + $0x48] sm:$0xff]
  %v5046 = vld [vmem:[%s3 + $0x50] sm:$0xff]
  %v5047 = vld [vmem:[%s3 + $0x58] sm:$0xff]
  %v5048 = vld [vmem:[%s3 + $0x60] sm:$0xff]
  %v5049 = vld [vmem:[%s3 + $0x68] sm:$0xff]
  %v5050 = vld [vmem:[%s3 + $0x70] sm:$0xff]
  %v5051 = vld [vmem:[%s3 + $0x78] sm:$0xff]
  %v5052 = vld [vmem:[%s3 + $0x80] sm:$0xff]
  %v5053 = vld [vmem:[%s3 + $0x88] sm:$0xff]
  %v5054 = vld [vmem:[%s3 + $0x90] sm:$0xff]
  %v5055 = vld [vmem:[%s3 + $0x98] sm:$0xff]
  %v5056 = vld [vmem:[%s3 + $0xa0] sm:$0xff]
  %v5057 = vld [vmem:[%s3 + $0xa8] sm:$0xff]
  %v5058 = vld [vmem:[%s3 + $0xb0] sm:$0xff]
  %v5059 = vld [vmem:[%s3 + $0xb8] sm:$0xff]
  %v5060 = vld [vmem:[%s3 + $0xc0] sm:$0xff]
  %v5061 = vld [vmem:[%s3 + $0xc8] sm:$0xff]
  %v5062 = vld [vmem:[%s3 + $0xd0] sm:$0xff]
  %v5063 = vld [vmem:[%s3 + $0xd8] sm:$0xff]
  %v5064 = vld [vmem:[%s3 + $0xe0] sm:$0xff]
  %v5065 = vld [vmem:[%s3 + $0xe8] sm:$0xff]
  %v5066 = vld [vmem:[%s3 + $0xf0] sm:$0xff]
  %v5067 = vld [vmem:[%s3 + $0xf8] sm:$0xff]
  %v5068 = vld [vmem:[%s3 + $0x100] sm:$0xff]
  %v5069 = vld [vmem:[%s3 + $0x108] sm:$0xff]
  %v5070 = vld [vmem:[%s3 + $0x110] sm:$0xff]
  %v5071 = vld [vmem:[%s3 + $0x118] sm:$0xff]
  %v5072 = vld [vmem:[%s3 + $0x120] sm:$0xff]
  %v5073 = vld [vmem:[%s3 + $0x128] sm:$0xff]
  %v5074 = vld [vmem:[%s3 + $0x130] sm:$0xff]
  %v5075 = vld [vmem:[%s3 + $0x138] sm:$0xff]
  %v5076 = vld [vmem:[%s3 + $0x140] sm:$0xff]
  %v5077 = vld [vmem:[%s3 + $0x148] sm:$0xff]
  %v5078 = vld [vmem:[%s3 + $0x150] sm:$0xff]
  %v5079 = vld [vmem:[%s3 + $0x158] sm:$0xff]
  %v5080 = vld [vmem:[%s3 + $0x160] sm:$0xff]
  %v5081 = vld [vmem:[%s3 + $0x168] sm:$0xff]
  %v5082 = vld [vmem:[%s3 + $0x170] sm:$0xff]
  %v5083 = vld [vmem:[%s3 + $0x178] sm:$0xff]
  %v5084 = vld [vmem:[%s4] sm:$0x7]
  %v5086 = vlaneseq
  %v5087 = vshrl.u32 %v5086, 7
  %v5088 = vsub.s32 0, %v5087
  %v5089 = vrot.slane %v5084, %v5088
  %v5090 = vlaneseq
  %v5091 = vshrl.u32 %v5090, 7
  %v5092 = vsub.s32 1, %v5091
  %v5093 = vrot.slane %v5084, %v5092
  %v5094 = vlaneseq
  %v5095 = vshrl.u32 %v5094, 7
  %v5096 = vsub.s32 2, %v5095
  %v5097 = vrot.slane %v5084, %v5096
  %5101 = vmatprep.subr.mxu0 %v5082
  %5102 = vmatpush1.msra.mxu0 %v5081
  %5103 = vmatprep.subr.mxu0 %v5079
  %5104 = vmatpush1.msra.mxu0 %v5078
  %5105 = vmatprep.subr.mxu0 %v5076
  %5106 = vmatpush1.msra.mxu0 %v5075
  %5107 = vmatprep.subr.mxu0 %v5073
  %5108 = vmatpush1.msra.mxu0 %v5072
  %5109 = vmatprep.subr.mxu0 %v5070
  %5110 = vmatpush1.msra.mxu0 %v5069
  %5111 = vmatprep.subr.mxu0 %v5067
  %5112 = vmatpush1.msra.mxu0 %v5066
  %5113 = vmatprep.subr.mxu0 %v5064
  %5114 = vmatpush1.msra.mxu0 %v5063
  %5115 = vmatprep.subr.mxu0 %v5061
  %5116 = vmatpush1.msra.mxu0 %v5060
  %5117 = vmatprep.subr.mxu0 %v5058
  %5118 = vmatpush1.msra.mxu0 %v5057
  %5119 = vmatprep.subr.mxu0 %v5055
  %5120 = vmatpush1.msra.mxu0 %v5054
  %5121 = vmatprep.subr.mxu0 %v5052
  %5122 = vmatpush1.msra.mxu0 %v5051
  %5123 = vmatprep.subr.mxu0 %v5049
  %5124 = vmatpush1.msra.mxu0 %v5048
  %5125 = vmatprep.subr.mxu0 %v5046
  %5126 = vmatpush1.msra.mxu0 %v5045
  %5127 = vmatprep.subr.mxu0 %v5043
  %5128 = vmatpush1.msra.mxu0 %v5042
  %5129 = vmatprep.subr.mxu0 %v5040
  %5130 = vmatpush1.msra.mxu0 %v5039
  %5131 = vmatprep.subr.mxu0 %v5037
  %5132 = vmatpush1.msra.mxu0 %v5036
  %5133 = vmatprep.subr.mxu0 0.0
  %5134 = vmatpush2.msra.mxu0 0.0
  %5135 = vmatprep.subr.mxu0 0.0
  %5136 = vmatpush2.msra.mxu0 0.0
  %5137 = vmatprep.subr.mxu0 0.0
  %5138 = vmatpush2.msra.mxu0 0.0
  %5139 = vmatprep.subr.mxu0 0.0
  %5140 = vmatpush2.msra.mxu0 0.0
  %5141 = vmatprep.subr.mxu0 0.0
  %5142 = vmatpush2.msra.mxu0 0.0
  %5143 = vmatprep.subr.mxu0 0.0
  %5144 = vmatpush2.msra.mxu0 0.0
  %5145 = vmatprep.subr.mxu0 0.0
  %5146 = vmatpush2.msra.mxu0 0.0
  %5147 = vmatprep.subr.mxu0 0.0
  %5148 = vmatpush2.msra.mxu0 0.0
  %5149 = vmatprep.subr.mxu0 0.0
  %5150 = vmatpush2.msra.mxu0 0.0
  %5151 = vmatprep.subr.mxu0 0.0
  %5152 = vmatpush2.msra.mxu0 0.0
  %5153 = vmatprep.subr.mxu0 0.0
  %5154 = vmatpush2.msra.mxu0 0.0
  %5155 = vmatprep.subr.mxu0 0.0
  %5156 = vmatpush2.msra.mxu0 0.0
  %5157 = vmatprep.subr.mxu0 0.0
  %5158 = vmatpush2.msra.mxu0 0.0
  %5159 = vmatprep.subr.mxu0 0.0
  %5160 = vmatpush2.msra.mxu0 0.0
  %5161 = vmatprep.subr.mxu0 0.0
  %5162 = vmatpush2.msra.mxu0 0.0
  %5163 = vmatprep.subr.mxu0 0.0
  %5164 = vmatpush2.msra.mxu0 0.0
  %5165 = vmatprep.mubr.f32.mxu0 0.0
  %5166 = vmatmul.mubr.f32.gmra.mxu0 %v4594
  %v5167 = vpop.f32.mrf.mxu0
  %v5168 = vadd.f32 %v5089, %v5167
  %v5169 = vpop.f32.mrf.mxu0
  %v5170 = vadd.f32 %v5093, %v5169
  %5171 = vdwg.mxu0
  %5172 = vmatprep.subr.mxu0 0.0
  %5173 = vmatpush1.msra.mxu0 %v5083
  %5174 = vmatprep.subr.mxu0 0.0
  %5175 = vmatpush1.msra.mxu0 %v5080
  %5176 = vmatprep.subr.mxu0 0.0
  %5177 = vmatpush1.msra.mxu0 %v5077
  %5178 = vmatprep.subr.mxu0 0.0
  %5179 = vmatpush1.msra.mxu0 %v5074
  %5180 = vmatprep.subr.mxu0 0.0
  %5181 = vmatpush1.msra.mxu0 %v5071
  %5182 = vmatprep.subr.mxu0 0.0
  %5183 = vmatpush1.msra.mxu0 %v5068
  %5184 = vmatprep.subr.mxu0 0.0
  %5185 = vmatpush1.msra.mxu0 %v5065
  %5186 = vmatprep.subr.mxu0 0.0
  %5187 = vmatpush1.msra.mxu0 %v5062
  %5188 = vmatprep.subr.mxu0 0.0
  %5189 = vmatpush1.msra.mxu0 %v5059
  %5190 = vmatprep.subr.mxu0 0.0
  %5191 = vmatpush1.msra.mxu0 %v5056
  %5192 = vmatprep.subr.mxu0 0.0
  %5193 = vmatpush1.msra.mxu0 %v5053
  %5194 = vmatprep.subr.mxu0 0.0
  %5195 = vmatpush1.msra.mxu0 %v5050
  %5196 = vmatprep.subr.mxu0 0.0
  %5197 = vmatpush1.msra.mxu0 %v5047
  %5198 = vmatprep.subr.mxu0 0.0
  %5199 = vmatpush1.msra.mxu0 %v5044
  %5200 = vmatprep.subr.mxu0 0.0
  %5201 = vmatpush1.msra.mxu0 %v5041
  %5202 = vmatprep.subr.mxu0 0.0
  %5203 = vmatpush1.msra.mxu0 %v5038
  %5204 = vmatprep.subr.mxu0 0.0
  %5205 = vmatpush2.msra.mxu0 0.0
  %5206 = vmatprep.subr.mxu0 0.0
  %5207 = vmatpush2.msra.mxu0 0.0
  %5208 = vmatprep.subr.mxu0 0.0
  %5209 = vmatpush2.msra.mxu0 0.0
  %5210 = vmatprep.subr.mxu0 0.0
  %5211 = vmatpush2.msra.mxu0 0.0
  %5212 = vmatprep.subr.mxu0 0.0
  %5213 = vmatpush2.msra.mxu0 0.0
  %5214 = vmatprep.subr.mxu0 0.0
  %5215 = vmatpush2.msra.mxu0 0.0
  %5216 = vmatprep.subr.mxu0 0.0
  %5217 = vmatpush2.msra.mxu0 0.0
  %5218 = vmatprep.subr.mxu0 0.0
  %5219 = vmatpush2.msra.mxu0 0.0
  %5220 = vmatprep.subr.mxu0 0.0
  %5221 = vmatpush2.msra.mxu0 0.0
  %5222 = vmatprep.subr.mxu0 0.0
  %5223 = vmatpush2.msra.mxu0 0.0
  %5224 = vmatprep.subr.mxu0 0.0
  %5225 = vmatpush2.msra.mxu0 0.0
  %5226 = vmatprep.subr.mxu0 0.0
  %5227 = vmatpush2.msra.mxu0 0.0
  %5228 = vmatprep.subr.mxu0 0.0
  %5229 = vmatpush2.msra.mxu0 0.0
  %5230 = vmatprep.subr.mxu0 0.0
  %5231 = vmatpush2.msra.mxu0 0.0
  %5232 = vmatprep.subr.mxu0 0.0
  %5233 = vmatpush2.msra.mxu0 0.0
  %5234 = vmatprep.subr.mxu0 0.0
  %5235 = vmatpush2.msra.mxu0 0.0
  %5236 = vmatprep.mubr.f32.mxu0 0.0
  %5237 = vmatmul.mubr.f32.gmra.mxu0 %v4594
  %v5238 = vpop.f32.mrf.mxu0
  %v5239 = vadd.f32 %v5097, %v5238
  %v5240 = vpop.f32.mrf.mxu0
  %5241 = vdwg.mxu0
  %v5242 = vadd.f32 %v5033, %v5168
  %v5243 = vxor.u32 %v5242, 2147483648
  %v5244 = vmul.f32 %v5243, 1.442695
  %v5245 = vpow.pop %v5244
  %v5246 = vadd.f32 %v5245, 1.0
  %v5247 = vrcp.pop %v5246
  %v5248 = vmul.f32 1.0, %v5247
  %v5249 = vadd.f32 %v5034, %v5170
  %v5250 = vxor.u32 %v5249, 2147483648
  %v5251 = vmul.f32 %v5250, 1.442695
  %v5252 = vpow.pop %v5251
  %v5253 = vadd.f32 %v5252, 1.0
  %v5254 = vrcp.pop %v5253
  %v5255 = vmul.f32 1.0, %v5254
  %v5256 = vmul.f32 %v5248, %v5239
  %v5257 = vadd.f32 %v5035, %v5256
  %v5258 = vtanh.pop %v5257
  %v5259 = vsub.f32 1.0, %v5255
  %v5260 = vmul.f32 %v5259, %v5258
  %v5261 = vmul.f32 %v5255, %v4594
  %v5262 = vadd.f32 %v5260, %v5261
  %v5263 = vld [vmem:[%s5] sm:$0xff]
  %v5264 = vld [vmem:[%s5 + $0x8] sm:$0xff]
  %v5265 = vld [vmem:[%s5 + $0x10] sm:$0xff]
  %v5266 = vld [vmem:[%s5 + $0x18] sm:$0xff]
  %v5267 = vld [vmem:[%s5 + $0x20] sm:$0xff]
  %v5268 = vld [vmem:[%s5 + $0x28] sm:$0xff]
  %v5269 = vld [vmem:[%s5 + $0x30] sm:$0xff]
  %v5270 = vld [vmem:[%s5 + $0x38] sm:$0xff]
  %v5271 = vld [vmem:[%s5 + $0x40] sm:$0xff]
  %v5272 = vld [vmem:[%s5 + $0x48] sm:$0xff]
  %v5273 = vld [vmem:[%s5 + $0x50] sm:$0xff]
  %v5274 = vld [vmem:[%s5 + $0x58] sm:$0xff]
  %v5275 = vld [vmem:[%s5 + $0x60] sm:$0xff]
  %v5276 = vld [vmem:[%s5 + $0x68] sm:$0xff]
  %v5277 = vld [vmem:[%s5 + $0x70] sm:$0xff]
  %v5278 = vld [vmem:[%s5 + $0x78] sm:$0xff]
  %v5279 = vld [vmem:[%s5 + $0x80] sm:$0xff]
  %v5280 = vld [vmem:[%s5 + $0x88] sm:$0xff]
  %v5281 = vld [vmem:[%s5 + $0x90] sm:$0xff]
  %v5282 = vld [vmem:[%s5 + $0x98] sm:$0xff]
  %v5283 = vld [vmem:[%s5 + $0xa0] sm:$0xff]
  %v5284 = vld [vmem:[%s5 + $0xa8] sm:$0xff]
  %v5285 = vld [vmem:[%s5 + $0xb0] sm:$0xff]
  %v5286 = vld [vmem:[%s5 + $0xb8] sm:$0xff]
  %v5287 = vld [vmem:[%s5 + $0xc0] sm:$0xff]
  %v5288 = vld [vmem:[%s5 + $0xc8] sm:$0xff]
  %v5289 = vld [vmem:[%s5 + $0xd0] sm:$0xff]
  %v5290 = vld [vmem:[%s5 + $0xd8] sm:$0xff]
  %v5291 = vld [vmem:[%s5 + $0xe0] sm:$0xff]
  %v5292 = vld [vmem:[%s5 + $0xe8] sm:$0xff]
  %v5293 = vld [vmem:[%s5 + $0xf0] sm:$0xff]
  %v5294 = vld [vmem:[%s5 + $0xf8] sm:$0xff]
  %v5295 = vld [vmem:[%s5 + $0x100] sm:$0xff]
  %v5296 = vld [vmem:[%s5 + $0x108] sm:$0xff]
  %v5297 = vld [vmem:[%s5 + $0x110] sm:$0xff]
  %v5298 = vld [vmem:[%s5 + $0x118] sm:$0xff]
  %v5299 = vld [vmem:[%s5 + $0x120] sm:$0xff]
  %v5300 = vld [vmem:[%s5 + $0x128] sm:$0xff]
  %v5301 = vld [vmem:[%s5 + $0x130] sm:$0xff]
  %v5302 = vld [vmem:[%s5 + $0x138] sm:$0xff]
  %v5303 = vld [vmem:[%s5 + $0x140] sm:$0xff]
  %v5304 = vld [vmem:[%s5 + $0x148] sm:$0xff]
  %v5305 = vld [vmem:[%s5 + $0x150] sm:$0xff]
  %v5306 = vld [vmem:[%s5 + $0x158] sm:$0xff]
  %v5307 = vld [vmem:[%s5 + $0x160] sm:$0xff]
  %v5308 = vld [vmem:[%s5 + $0x168] sm:$0xff]
  %v5309 = vld [vmem:[%s5 + $0x170] sm:$0xff]
  %v5310 = vld [vmem:[%s5 + $0x178] sm:$0xff]
  %v5311 = vld [vmem:[%s6] sm:$0x7]
  %v5313 = vlaneseq
  %v5314 = vshrl.u32 %v5313, 7
  %v5315 = vsub.s32 0, %v5314
  %v5316 = vrot.slane %v5311, %v5315
  %v5317 = vlaneseq
  %v5318 = vshrl.u32 %v5317, 7
  %v5319 = vsub.s32 1, %v5318
  %v5320 = vrot.slane %v5311, %v5319
  %v5321 = vlaneseq
  %v5322 = vshrl.u32 %v5321, 7
  %v5323 = vsub.s32 2, %v5322
  %v5324 = vrot.slane %v5311, %v5323
  %5328 = vmatprep.subr.mxu0 %v5309
  %5329 = vmatpush1.msra.mxu0 %v5308
  %5330 = vmatprep.subr.mxu0 %v5306
  %5331 = vmatpush1.msra.mxu0 %v5305
  %5332 = vmatprep.subr.mxu0 %v5303
  %5333 = vmatpush1.msra.mxu0 %v5302
  %5334 = vmatprep.subr.mxu0 %v5300
  %5335 = vmatpush1.msra.mxu0 %v5299
  %5336 = vmatprep.subr.mxu0 %v5297
  %5337 = vmatpush1.msra.mxu0 %v5296
  %5338 = vmatprep.subr.mxu0 %v5294
  %5339 = vmatpush1.msra.mxu0 %v5293
  %5340 = vmatprep.subr.mxu0 %v5291
  %5341 = vmatpush1.msra.mxu0 %v5290
  %5342 = vmatprep.subr.mxu0 %v5288
  %5343 = vmatpush1.msra.mxu0 %v5287
  %5344 = vmatprep.subr.mxu0 %v5285
  %5345 = vmatpush1.msra.mxu0 %v5284
  %5346 = vmatprep.subr.mxu0 %v5282
  %5347 = vmatpush1.msra.mxu0 %v5281
  %5348 = vmatprep.subr.mxu0 %v5279
  %5349 = vmatpush1.msra.mxu0 %v5278
  %5350 = vmatprep.subr.mxu0 %v5276
  %5351 = vmatpush1.msra.mxu0 %v5275
  %5352 = vmatprep.subr.mxu0 %v5273
  %5353 = vmatpush1.msra.mxu0 %v5272
  %5354 = vmatprep.subr.mxu0 %v5270
  %5355 = vmatpush1.msra.mxu0 %v5269
  %5356 = vmatprep.subr.mxu0 %v5267
  %5357 = vmatpush1.msra.mxu0 %v5266
  %5358 = vmatprep.subr.mxu0 %v5264
  %5359 = vmatpush1.msra.mxu0 %v5263
  %5360 = vmatprep.subr.mxu0 0.0
  %5361 = vmatpush2.msra.mxu0 0.0
  %5362 = vmatprep.subr.mxu0 0.0
  %5363 = vmatpush2.msra.mxu0 0.0
  %5364 = vmatprep.subr.mxu0 0.0
  %5365 = vmatpush2.msra.mxu0 0.0
  %5366 = vmatprep.subr.mxu0 0.0
  %5367 = vmatpush2.msra.mxu0 0.0
  %5368 = vmatprep.subr.mxu0 0.0
  %5369 = vmatpush2.msra.mxu0 0.0
  %5370 = vmatprep.subr.mxu0 0.0
  %5371 = vmatpush2.msra.mxu0 0.0
  %5372 = vmatprep.subr.mxu0 0.0
  %5373 = vmatpush2.msra.mxu0 0.0
  %5374 = vmatprep.subr.mxu0 0.0
  %5375 = vmatpush2.msra.mxu0 0.0
  %5376 = vmatprep.subr.mxu0 0.0
  %5377 = vmatpush2.msra.mxu0 0.0
  %5378 = vmatprep.subr.mxu0 0.0
  %5379 = vmatpush2.msra.mxu0 0.0
  %5380 = vmatprep.subr.mxu0 0.0
  %5381 = vmatpush2.msra.mxu0 0.0
  %5382 = vmatprep.subr.mxu0 0.0
  %5383 = vmatpush2.msra.mxu0 0.0
  %5384 = vmatprep.subr.mxu0 0.0
  %5385 = vmatpush2.msra.mxu0 0.0
  %5386 = vmatprep.subr.mxu0 0.0
  %5387 = vmatpush2.msra.mxu0 0.0
  %5388 = vmatprep.subr.mxu0 0.0
  %5389 = vmatpush2.msra.mxu0 0.0
  %5390 = vmatprep.subr.mxu0 0.0
  %5391 = vmatpush2.msra.mxu0 0.0
  %5392 = vmatprep.mubr.f32.mxu0 0.0
  %5393 = vmatmul.mubr.f32.gmra.mxu0 %v5262
  %v5394 = vpop.f32.mrf.mxu0
  %v5395 = vadd.f32 %v5316, %v5394
  %v5396 = vpop.f32.mrf.mxu0
  %v5397 = vadd.f32 %v5320, %v5396
  %5398 = vdwg.mxu0
  %5399 = vmatprep.subr.mxu0 0.0
  %5400 = vmatpush1.msra.mxu0 %v5310
  %5401 = vmatprep.subr.mxu0 0.0
  %5402 = vmatpush1.msra.mxu0 %v5307
  %5403 = vmatprep.subr.mxu0 0.0
  %5404 = vmatpush1.msra.mxu0 %v5304
  %5405 = vmatprep.subr.mxu0 0.0
  %5406 = vmatpush1.msra.mxu0 %v5301
  %5407 = vmatprep.subr.mxu0 0.0
  %5408 = vmatpush1.msra.mxu0 %v5298
  %5409 = vmatprep.subr.mxu0 0.0
  %5410 = vmatpush1.msra.mxu0 %v5295
  %5411 = vmatprep.subr.mxu0 0.0
  %5412 = vmatpush1.msra.mxu0 %v5292
  %5413 = vmatprep.subr.mxu0 0.0
  %5414 = vmatpush1.msra.mxu0 %v5289
  %5415 = vmatprep.subr.mxu0 0.0
  %5416 = vmatpush1.msra.mxu0 %v5286
  %5417 = vmatprep.subr.mxu0 0.0
  %5418 = vmatpush1.msra.mxu0 %v5283
  %5419 = vmatprep.subr.mxu0 0.0
  %5420 = vmatpush1.msra.mxu0 %v5280
  %5421 = vmatprep.subr.mxu0 0.0
  %5422 = vmatpush1.msra.mxu0 %v5277
  %5423 = vmatprep.subr.mxu0 0.0
  %5424 = vmatpush1.msra.mxu0 %v5274
  %5425 = vmatprep.subr.mxu0 0.0
  %5426 = vmatpush1.msra.mxu0 %v5271
  %5427 = vmatprep.subr.mxu0 0.0
  %5428 = vmatpush1.msra.mxu0 %v5268
  %5429 = vmatprep.subr.mxu0 0.0
  %5430 = vmatpush1.msra.mxu0 %v5265
  %5431 = vmatprep.subr.mxu0 0.0
  %5432 = vmatpush2.msra.mxu0 0.0
  %5433 = vmatprep.subr.mxu0 0.0
  %5434 = vmatpush2.msra.mxu0 0.0
  %5435 = vmatprep.subr.mxu0 0.0
  %5436 = vmatpush2.msra.mxu0 0.0
  %5437 = vmatprep.subr.mxu0 0.0
  %5438 = vmatpush2.msra.mxu0 0.0
  %5439 = vmatprep.subr.mxu0 0.0
  %5440 = vmatpush2.msra.mxu0 0.0
  %5441 = vmatprep.subr.mxu0 0.0
  %5442 = vmatpush2.msra.mxu0 0.0
  %5443 = vmatprep.subr.mxu0 0.0
  %5444 = vmatpush2.msra.mxu0 0.0
  %5445 = vmatprep.subr.mxu0 0.0
  %5446 = vmatpush2.msra.mxu0 0.0
  %5447 = vmatprep.subr.mxu0 0.0
  %5448 = vmatpush2.msra.mxu0 0.0
  %5449 = vmatprep.subr.mxu0 0.0
  %5450 = vmatpush2.msra.mxu0 0.0
  %5451 = vmatprep.subr.mxu0 0.0
  %5452 = vmatpush2.msra.mxu0 0.0
  %5453 = vmatprep.subr.mxu0 0.0
  %5454 = vmatpush2.msra.mxu0 0.0
  %5455 = vmatprep.subr.mxu0 0.0
  %5456 = vmatpush2.msra.mxu0 0.0
  %5457 = vmatprep.subr.mxu0 0.0
  %5458 = vmatpush2.msra.mxu0 0.0
  %5459 = vmatprep.subr.mxu0 0.0
  %5460 = vmatpush2.msra.mxu0 0.0
  %5461 = vmatprep.subr.mxu0 0.0
  %5462 = vmatpush2.msra.mxu0 0.0
  %5463 = vmatprep.mubr.f32.mxu0 0.0
  %5464 = vmatmul.mubr.f32.gmra.mxu0 %v5262
  %v5465 = vpop.f32.mrf.mxu0
  %v5466 = vadd.f32 %v5324, %v5465
  %v5467 = vpop.f32.mrf.mxu0
  %5468 = vdwg.mxu0
  %v5469 = vld [vmem:[%s7] sm:$0xff]
  %v5470 = vld [vmem:[%s7 + $0x8] sm:$0xff]
  %v5471 = vld [vmem:[%s7 + $0x10] sm:$0xff]
  %v5472 = vld [vmem:[%s7 + $0x18] sm:$0xff]
  %v5473 = vld [vmem:[%s7 + $0x20] sm:$0xff]
  %v5474 = vld [vmem:[%s7 + $0x28] sm:$0xff]
  %v5475 = vld [vmem:[%s7 + $0x30] sm:$0xff]
  %v5476 = vld [vmem:[%s7 + $0x38] sm:$0xff]
  %v5477 = vld [vmem:[%s7 + $0x40] sm:$0xff]
  %v5478 = vld [vmem:[%s7 + $0x48] sm:$0xff]
  %v5479 = vld [vmem:[%s7 + $0x50] sm:$0xff]
  %v5480 = vld [vmem:[%s7 + $0x58] sm:$0xff]
  %v5481 = vld [vmem:[%s7 + $0x60] sm:$0xff]
  %v5482 = vld [vmem:[%s7 + $0x68] sm:$0xff]
  %v5483 = vld [vmem:[%s7 + $0x70] sm:$0xff]
  %v5484 = vld [vmem:[%s7 + $0x78] sm:$0xff]
  %v5485 = vld [vmem:[%s7 + $0x80] sm:$0xff]
  %v5486 = vld [vmem:[%s7 + $0x88] sm:$0xff]
  %v5487 = vld [vmem:[%s7 + $0x90] sm:$0xff]
  %v5488 = vld [vmem:[%s7 + $0x98] sm:$0xff]
  %v5489 = vld [vmem:[%s7 + $0xa0] sm:$0xff]
  %v5490 = vld [vmem:[%s7 + $0xa8] sm:$0xff]
  %v5491 = vld [vmem:[%s7 + $0xb0] sm:$0xff]
  %v5492 = vld [vmem:[%s7 + $0xb8] sm:$0xff]
  %v5493 = vld [vmem:[%s7 + $0xc0] sm:$0xff]
  %v5494 = vld [vmem:[%s7 + $0xc8] sm:$0xff]
  %v5495 = vld [vmem:[%s7 + $0xd0] sm:$0xff]
  %v5496 = vld [vmem:[%s7 + $0xd8] sm:$0xff]
  %v5497 = vld [vmem:[%s7 + $0xe0] sm:$0xff]
  %v5498 = vld [vmem:[%s7 + $0xe8] sm:$0xff]
  %v5499 = vld [vmem:[%s7 + $0xf0] sm:$0xff]
  %v5500 = vld [vmem:[%s7 + $0xf8] sm:$0xff]
  %v5501 = vld [vmem:[%s7 + $0x100] sm:$0xff]
  %v5502 = vld [vmem:[%s7 + $0x108] sm:$0xff]
  %v5503 = vld [vmem:[%s7 + $0x110] sm:$0xff]
  %v5504 = vld [vmem:[%s7 + $0x118] sm:$0xff]
  %v5505 = vld [vmem:[%s7 + $0x120] sm:$0xff]
  %v5506 = vld [vmem:[%s7 + $0x128] sm:$0xff]
  %v5507 = vld [vmem:[%s7 + $0x130] sm:$0xff]
  %v5508 = vld [vmem:[%s7 + $0x138] sm:$0xff]
  %v5509 = vld [vmem:[%s7 + $0x140] sm:$0xff]
  %v5510 = vld [vmem:[%s7 + $0x148] sm:$0xff]
  %v5511 = vld [vmem:[%s7 + $0x150] sm:$0xff]
  %v5512 = vld [vmem:[%s7 + $0x158] sm:$0xff]
  %v5513 = vld [vmem:[%s7 + $0x160] sm:$0xff]
  %v5514 = vld [vmem:[%s7 + $0x168] sm:$0xff]
  %v5515 = vld [vmem:[%s7 + $0x170] sm:$0xff]
  %v5516 = vld [vmem:[%s7 + $0x178] sm:$0xff]
  %v5517 = vld [vmem:[%s8] sm:$0x7]
  %v5519 = vlaneseq
  %v5520 = vshrl.u32 %v5519, 7
  %v5521 = vsub.s32 0, %v5520
  %v5522 = vrot.slane %v5517, %v5521
  %v5523 = vlaneseq
  %v5524 = vshrl.u32 %v5523, 7
  %v5525 = vsub.s32 1, %v5524
  %v5526 = vrot.slane %v5517, %v5525
  %v5527 = vlaneseq
  %v5528 = vshrl.u32 %v5527, 7
  %v5529 = vsub.s32 2, %v5528
  %v5530 = vrot.slane %v5517, %v5529
  %5534 = vmatprep.subr.mxu0 %v5515
  %5535 = vmatpush1.msra.mxu0 %v5514
  %5536 = vmatprep.subr.mxu0 %v5512
  %5537 = vmatpush1.msra.mxu0 %v5511
  %5538 = vmatprep.subr.mxu0 %v5509
  %5539 = vmatpush1.msra.mxu0 %v5508
  %5540 = vmatprep.subr.mxu0 %v5506
  %5541 = vmatpush1.msra.mxu0 %v5505
  %5542 = vmatprep.subr.mxu0 %v5503
  %5543 = vmatpush1.msra.mxu0 %v5502
  %5544 = vmatprep.subr.mxu0 %v5500
  %5545 = vmatpush1.msra.mxu0 %v5499
  %5546 = vmatprep.subr.mxu0 %v5497
  %5547 = vmatpush1.msra.mxu0 %v5496
  %5548 = vmatprep.subr.mxu0 %v5494
  %5549 = vmatpush1.msra.mxu0 %v5493
  %5550 = vmatprep.subr.mxu0 %v5491
  %5551 = vmatpush1.msra.mxu0 %v5490
  %5552 = vmatprep.subr.mxu0 %v5488
  %5553 = vmatpush1.msra.mxu0 %v5487
  %5554 = vmatprep.subr.mxu0 %v5485
  %5555 = vmatpush1.msra.mxu0 %v5484
  %5556 = vmatprep.subr.mxu0 %v5482
  %5557 = vmatpush1.msra.mxu0 %v5481
  %5558 = vmatprep.subr.mxu0 %v5479
  %5559 = vmatpush1.msra.mxu0 %v5478
  %5560 = vmatprep.subr.mxu0 %v5476
  %5561 = vmatpush1.msra.mxu0 %v5475
  %5562 = vmatprep.subr.mxu0 %v5473
  %5563 = vmatpush1.msra.mxu0 %v5472
  %5564 = vmatprep.subr.mxu0 %v5470
  %5565 = vmatpush1.msra.mxu0 %v5469
  %5566 = vmatprep.subr.mxu0 0.0
  %5567 = vmatpush2.msra.mxu0 0.0
  %5568 = vmatprep.subr.mxu0 0.0
  %5569 = vmatpush2.msra.mxu0 0.0
  %5570 = vmatprep.subr.mxu0 0.0
  %5571 = vmatpush2.msra.mxu0 0.0
  %5572 = vmatprep.subr.mxu0 0.0
  %5573 = vmatpush2.msra.mxu0 0.0
  %5574 = vmatprep.subr.mxu0 0.0
  %5575 = vmatpush2.msra.mxu0 0.0
  %5576 = vmatprep.subr.mxu0 0.0
  %5577 = vmatpush2.msra.mxu0 0.0
  %5578 = vmatprep.subr.mxu0 0.0
  %5579 = vmatpush2.msra.mxu0 0.0
  %5580 = vmatprep.subr.mxu0 0.0
  %5581 = vmatpush2.msra.mxu0 0.0
  %5582 = vmatprep.subr.mxu0 0.0
  %5583 = vmatpush2.msra.mxu0 0.0
  %5584 = vmatprep.subr.mxu0 0.0
  %5585 = vmatpush2.msra.mxu0 0.0
  %5586 = vmatprep.subr.mxu0 0.0
  %5587 = vmatpush2.msra.mxu0 0.0
  %5588 = vmatprep.subr.mxu0 0.0
  %5589 = vmatpush2.msra.mxu0 0.0
  %5590 = vmatprep.subr.mxu0 0.0
  %5591 = vmatpush2.msra.mxu0 0.0
  %5592 = vmatprep.subr.mxu0 0.0
  %5593 = vmatpush2.msra.mxu0 0.0
  %5594 = vmatprep.subr.mxu0 0.0
  %5595 = vmatpush2.msra.mxu0 0.0
  %5596 = vmatprep.subr.mxu0 0.0
  %5597 = vmatpush2.msra.mxu0 0.0
  %5598 = vmatprep.mubr.f32.mxu0 0.0
  %5599 = vmatmul.mubr.f32.gmra.mxu0 %v5027
  %v5600 = vpop.f32.mrf.mxu0
  %v5601 = vadd.f32 %v5522, %v5600
  %v5602 = vpop.f32.mrf.mxu0
  %v5603 = vadd.f32 %v5526, %v5602
  %5604 = vdwg.mxu0
  %5605 = vmatprep.subr.mxu0 0.0
  %5606 = vmatpush1.msra.mxu0 %v5516
  %5607 = vmatprep.subr.mxu0 0.0
  %5608 = vmatpush1.msra.mxu0 %v5513
  %5609 = vmatprep.subr.mxu0 0.0
  %5610 = vmatpush1.msra.mxu0 %v5510
  %5611 = vmatprep.subr.mxu0 0.0
  %5612 = vmatpush1.msra.mxu0 %v5507
  %5613 = vmatprep.subr.mxu0 0.0
  %5614 = vmatpush1.msra.mxu0 %v5504
  %5615 = vmatprep.subr.mxu0 0.0
  %5616 = vmatpush1.msra.mxu0 %v5501
  %5617 = vmatprep.subr.mxu0 0.0
  %5618 = vmatpush1.msra.mxu0 %v5498
  %5619 = vmatprep.subr.mxu0 0.0
  %5620 = vmatpush1.msra.mxu0 %v5495
  %5621 = vmatprep.subr.mxu0 0.0
  %5622 = vmatpush1.msra.mxu0 %v5492
  %5623 = vmatprep.subr.mxu0 0.0
  %5624 = vmatpush1.msra.mxu0 %v5489
  %5625 = vmatprep.subr.mxu0 0.0
  %5626 = vmatpush1.msra.mxu0 %v5486
  %5627 = vmatprep.subr.mxu0 0.0
  %5628 = vmatpush1.msra.mxu0 %v5483
  %5629 = vmatprep.subr.mxu0 0.0
  %5630 = vmatpush1.msra.mxu0 %v5480
  %5631 = vmatprep.subr.mxu0 0.0
  %5632 = vmatpush1.msra.mxu0 %v5477
  %5633 = vmatprep.subr.mxu0 0.0
  %5634 = vmatpush1.msra.mxu0 %v5474
  %5635 = vmatprep.subr.mxu0 0.0
  %5636 = vmatpush1.msra.mxu0 %v5471
  %5637 = vmatprep.subr.mxu0 0.0
  %5638 = vmatpush2.msra.mxu0 0.0
  %5639 = vmatprep.subr.mxu0 0.0
  %5640 = vmatpush2.msra.mxu0 0.0
  %5641 = vmatprep.subr.mxu0 0.0
  %5642 = vmatpush2.msra.mxu0 0.0
  %5643 = vmatprep.subr.mxu0 0.0
  %5644 = vmatpush2.msra.mxu0 0.0
  %5645 = vmatprep.subr.mxu0 0.0
  %5646 = vmatpush2.msra.mxu0 0.0
  %5647 = vmatprep.subr.mxu0 0.0
  %5648 = vmatpush2.msra.mxu0 0.0
  %5649 = vmatprep.subr.mxu0 0.0
  %5650 = vmatpush2.msra.mxu0 0.0
  %5651 = vmatprep.subr.mxu0 0.0
  %5652 = vmatpush2.msra.mxu0 0.0
  %5653 = vmatprep.subr.mxu0 0.0
  %5654 = vmatpush2.msra.mxu0 0.0
  %5655 = vmatprep.subr.mxu0 0.0
  %5656 = vmatpush2.msra.mxu0 0.0
  %5657 = vmatprep.subr.mxu0 0.0
  %5658 = vmatpush2.msra.mxu0 0.0
  %5659 = vmatprep.subr.mxu0 0.0
  %5660 = vmatpush2.msra.mxu0 0.0
  %5661 = vmatprep.subr.mxu0 0.0
  %5662 = vmatpush2.msra.mxu0 0.0
  %5663 = vmatprep.subr.mxu0 0.0
  %5664 = vmatpush2.msra.mxu0 0.0
  %5665 = vmatprep.subr.mxu0 0.0
  %5666 = vmatpush2.msra.mxu0 0.0
  %5667 = vmatprep.subr.mxu0 0.0
  %5668 = vmatpush2.msra.mxu0 0.0
  %5669 = vmatprep.mubr.f32.mxu0 0.0
  %5670 = vmatmul.mubr.f32.gmra.mxu0 %v5027
  %v5671 = vpop.f32.mrf.mxu0
  %v5672 = vadd.f32 %v5530, %v5671
  %v5673 = vpop.f32.mrf.mxu0
  %5674 = vdwg.mxu0
  %v5675 = vadd.f32 %v5395, %v5601
  %v5676 = vxor.u32 %v5675, 2147483648
  %v5677 = vmul.f32 %v5676, 1.442695
  %v5678 = vpow.pop %v5677
  %v5679 = vadd.f32 %v5678, 1.0
  %v5680 = vrcp.pop %v5679
  %v5681 = vmul.f32 1.0, %v5680
  %v5682 = vadd.f32 %v5397, %v5603
  %v5683 = vxor.u32 %v5682, 2147483648
  %v5684 = vmul.f32 %v5683, 1.442695
  %v5685 = vpow.pop %v5684
  %v5686 = vadd.f32 %v5685, 1.0
  %v5687 = vrcp.pop %v5686
  %v5688 = vmul.f32 1.0, %v5687
  %v5689 = vmul.f32 %v5681, %v5672
  %v5690 = vadd.f32 %v5466, %v5689
  %v5691 = vtanh.pop %v5690
  %v5692 = vsub.f32 1.0, %v5688
  %v5693 = vmul.f32 %v5692, %v5691
  %v5694 = vmul.f32 %v5688, %v5027
  %v5695 = vadd.f32 %v5693, %v5694
  %s5696 = scalar_lea.vmem %s11, 56
  %5697 = vst [vmem:[%s5696] sm:$0xff] %v5695
  %v5698 = vld [vmem:[%s9] sm:$0xff]
  %v5699 = vld [vmem:[%s9 + $0x8] sm:$0xff]
  %v5700 = vld [vmem:[%s9 + $0x10] sm:$0xff]
  %v5701 = vld [vmem:[%s9 + $0x18] sm:$0xff]
  %v5702 = vld [vmem:[%s9 + $0x20] sm:$0xff]
  %v5703 = vld [vmem:[%s9 + $0x28] sm:$0xff]
  %v5704 = vld [vmem:[%s9 + $0x30] sm:$0xff]
  %v5705 = vld [vmem:[%s9 + $0x38] sm:$0xff]
  %v5706 = vld [vmem:[%s9 + $0x40] sm:$0xff]
  %v5707 = vld [vmem:[%s9 + $0x48] sm:$0xff]
  %v5708 = vld [vmem:[%s9 + $0x50] sm:$0xff]
  %v5709 = vld [vmem:[%s9 + $0x58] sm:$0xff]
  %v5710 = vld [vmem:[%s9 + $0x60] sm:$0xff]
  %v5711 = vld [vmem:[%s9 + $0x68] sm:$0xff]
  %v5712 = vld [vmem:[%s9 + $0x70] sm:$0xff]
  %v5713 = vld [vmem:[%s9 + $0x78] sm:$0xff]
  %v5714 = vld [vmem:[%s9 + $0x80] sm:$0xff]
  %v5715 = vld [vmem:[%s9 + $0x88] sm:$0xff]
  %v5716 = vld [vmem:[%s9 + $0x90] sm:$0xff]
  %v5717 = vld [vmem:[%s9 + $0x98] sm:$0xff]
  %v5718 = vld [vmem:[%s9 + $0xa0] sm:$0xff]
  %v5719 = vld [vmem:[%s9 + $0xa8] sm:$0xff]
  %v5720 = vld [vmem:[%s9 + $0xb0] sm:$0xff]
  %v5721 = vld [vmem:[%s9 + $0xb8] sm:$0xff]
  %v5722 = vld [vmem:[%s9 + $0xc0] sm:$0xff]
  %v5723 = vld [vmem:[%s9 + $0xc8] sm:$0xff]
  %v5724 = vld [vmem:[%s9 + $0xd0] sm:$0xff]
  %v5725 = vld [vmem:[%s9 + $0xd8] sm:$0xff]
  %v5726 = vld [vmem:[%s9 + $0xe0] sm:$0xff]
  %v5727 = vld [vmem:[%s9 + $0xe8] sm:$0xff]
  %v5728 = vld [vmem:[%s9 + $0xf0] sm:$0xff]
  %v5729 = vld [vmem:[%s9 + $0xf8] sm:$0xff]
  %v5730 = vld [vmem:[%s10] sm:$0x1]
  %v5732 = vlaneseq
  %v5733 = vshrl.u32 %v5732, 7
  %v5734 = vsub.s32 0, %v5733
  %v5735 = vrot.slane %v5730, %v5734
  %5737 = vmatprep.subr.mxu0 0.0
  %5738 = vmatpush1.msra.mxu0 %v5713
  %5739 = vmatprep.subr.mxu0 0.0
  %5740 = vmatpush1.msra.mxu0 %v5712
  %5741 = vmatprep.subr.mxu0 0.0
  %5742 = vmatpush1.msra.mxu0 %v5711
  %5743 = vmatprep.subr.mxu0 0.0
  %5744 = vmatpush1.msra.mxu0 %v5710
  %5745 = vmatprep.subr.mxu0 0.0
  %5746 = vmatpush1.msra.mxu0 %v5709
  %5747 = vmatprep.subr.mxu0 0.0
  %5748 = vmatpush1.msra.mxu0 %v5708
  %5749 = vmatprep.subr.mxu0 0.0
  %5750 = vmatpush1.msra.mxu0 %v5707
  %5751 = vmatprep.subr.mxu0 0.0
  %5752 = vmatpush1.msra.mxu0 %v5706
  %5753 = vmatprep.subr.mxu0 0.0
  %5754 = vmatpush1.msra.mxu0 %v5705
  %5755 = vmatprep.subr.mxu0 0.0
  %5756 = vmatpush1.msra.mxu0 %v5704
  %5757 = vmatprep.subr.mxu0 0.0
  %5758 = vmatpush1.msra.mxu0 %v5703
  %5759 = vmatprep.subr.mxu0 0.0
  %5760 = vmatpush1.msra.mxu0 %v5702
  %5761 = vmatprep.subr.mxu0 0.0
  %5762 = vmatpush1.msra.mxu0 %v5701
  %5763 = vmatprep.subr.mxu0 0.0
  %5764 = vmatpush1.msra.mxu0 %v5700
  %5765 = vmatprep.subr.mxu0 0.0
  %5766 = vmatpush1.msra.mxu0 %v5699
  %5767 = vmatprep.subr.mxu0 0.0
  %5768 = vmatpush1.msra.mxu0 %v5698
  %5769 = vmatprep.subr.mxu0 0.0
  %5770 = vmatpush2.msra.mxu0 %v5729
  %5771 = vmatprep.subr.mxu0 0.0
  %5772 = vmatpush2.msra.mxu0 %v5728
  %5773 = vmatprep.subr.mxu0 0.0
  %5774 = vmatpush2.msra.mxu0 %v5727
  %5775 = vmatprep.subr.mxu0 0.0
  %5776 = vmatpush2.msra.mxu0 %v5726
  %5777 = vmatprep.subr.mxu0 0.0
  %5778 = vmatpush2.msra.mxu0 %v5725
  %5779 = vmatprep.subr.mxu0 0.0
  %5780 = vmatpush2.msra.mxu0 %v5724
  %5781 = vmatprep.subr.mxu0 0.0
  %5782 = vmatpush2.msra.mxu0 %v5723
  %5783 = vmatprep.subr.mxu0 0.0
  %5784 = vmatpush2.msra.mxu0 %v5722
  %5785 = vmatprep.subr.mxu0 0.0
  %5786 = vmatpush2.msra.mxu0 %v5721
  %5787 = vmatprep.subr.mxu0 0.0
  %5788 = vmatpush2.msra.mxu0 %v5720
  %5789 = vmatprep.subr.mxu0 0.0
  %5790 = vmatpush2.msra.mxu0 %v5719
  %5791 = vmatprep.subr.mxu0 0.0
  %5792 = vmatpush2.msra.mxu0 %v5718
  %5793 = vmatprep.subr.mxu0 0.0
  %5794 = vmatpush2.msra.mxu0 %v5717
  %5795 = vmatprep.subr.mxu0 0.0
  %5796 = vmatpush2.msra.mxu0 %v5716
  %5797 = vmatprep.subr.mxu0 0.0
  %5798 = vmatpush2.msra.mxu0 %v5715
  %5799 = vmatprep.subr.mxu0 0.0
  %5800 = vmatpush2.msra.mxu0 %v5714
  %5801 = vmatprep.mubr.f32.mxu0 %v5695
  %5802 = vmatmul.mubr.f32.gmra.mxu0 %v5262
  %v5803 = vpop.f32.mrf.mxu0
  %v5804 = vadd.f32 %v5735, %v5803
  %v5805 = vpop.f32.mrf.mxu0
  %5806 = vdwg.mxu0
  %v5807 = vtanh.pop %v5804
  %5808 = vst [vmem:[%s12] sm:$0xff] %v5807
  // Predicated region
  $region46: #{encoder_forward.1} parent=0 // pred_check
    _
  $region47: #{encoder_forward.1} parent=0 // pred_check_branch
    %5810 = sbr.rel (0) target = $region49
  $region48: #{encoder_forward.1} parent=0 // pred_region
    _
  $region49: #{encoder_forward.1} parent=0 // pred_fallthru
    _
  // Predicated region
  $region50: #{encoder_forward.1} parent=0 // pred_check
    _
  $region51: #{encoder_forward.1} parent=0 // pred_check_branch
    %5812 = sbr.rel (0) target = $region53
  $region52: #{encoder_forward.1} parent=0 // pred_region
    _
  $region53: #{encoder_forward.1} parent=0 // pred_fallthru
    _
  // Predicated region
  $region54: #{encoder_forward.1} parent=0 // pred_check
    _
  $region55: #{encoder_forward.1} parent=0 // pred_check_branch
    %5814 = sbr.rel (0) target = $region57
  $region56: #{encoder_forward.1} parent=0 // pred_region
    _
  $region57: #{encoder_forward.1} parent=0 // pred_fallthru
    _
  // Predicated region
  $region58: #{encoder_forward.1} parent=0 // pred_check
    _
  $region59: #{encoder_forward.1} parent=0 // pred_check_branch
    %5816 = sbr.rel (0) target = $region61
  $region60: #{encoder_forward.1} parent=0 // pred_region
    _
  $region61: #{encoder_forward.1} parent=0 // pred_fallthru
    _

</llo_original>
